<compile_context>
chip_gen: v7x
topology: tpu7x:2x2x1
jax: 0.10.0
libtpu: 0.0.40
codegen_flags: <defaults>
</compile_context>

<pallas_src>
import itertools
import math

import numpy as np
import jax
import jax.numpy as jnp
from jax import lax
from jax.experimental import pallas as pl
from jax.experimental.pallas import tpu as pltpu

# ----------------------------------------------------------------------------
# Config consistent with TinyViTAdapterBlock(dim, (H, W), num_heads, ...)
# ----------------------------------------------------------------------------
B = 2
H = W = 8                      # input_resolution
WS = 4                         # window_size (divides H, W -> no padding branch)
DIM = 32                       # dim
NUM_HEADS = 2
HEAD_DIM = DIM // NUM_HEADS    # key_dim = 16; attn_ratio = 1 -> d = 16, dh = 32
MLP_RATIO = 4.0
MLP_HID = int(DIM * MLP_RATIO)       # 128
ADPT_HID = int(DIM * 0.25)           # 8  (Adapter hidden)
L = H * W                            # 64 tokens per image
BL = B * L                           # 128 tokens total (one kernel step)
N_WIN = WS * WS                      # 16 tokens per window
NH_WIN = H // WS
NW_WIN = W // WS
BW = B * NH_WIN * NW_WIN             # 8 windows
GRAD_C = 10                          # extra channels of `gradient`
BN_EPS = 1e-5
LN_EPS = 1e-5
SCALE = HEAD_DIM ** -0.5
NEG_INF = -1e9                       # cross-window / cross-batch mask value

PAD = 16                             # >= W + 1, multiple of 8 (aligned stores)
GAP = 16                             # inter-batch zero gap, >= W + 1, mult. of 8
PADL = PAD + L + GAP + L + PAD       # 176-row zero-padded token buffer


def _gelu(x):
    # exact (erf) GELU, matching torch.nn.GELU default
    return 0.5 * x * (1.0 + lax.erf(x * (1.0 / math.sqrt(2.0))))


def _rep_spec(shape):
    """BlockSpec for an array that is fully resident (single grid step)."""
    nd = len(shape)
    return pl.BlockSpec(shape, lambda i: (0,) * nd)


# ----------------------------------------------------------------------------
# The fused kernel: one grid step == the whole batch (B*L tokens)
# ----------------------------------------------------------------------------
def block_kernel(
    x_ref, g_ref,                                      # activations (BL, .)
    aln_g_ref, aln_b_ref,                              # attn LayerNorm
    wq_ref, wk_ref, wv_ref, bq_ref, bk_ref, bv_ref,    # head-split qkv
    wp_ref, bp_ref, bias_ref,                          # head-split proj, masked bias
    sa_w1_ref, sa_b1_ref, sa_w2_ref, sa_b2_ref,        # Space_Adapter
    dw_w_ref, dw_b_ref, cmask_ref,                     # depthwise conv (BN folded)
    hc_wx_ref, hc_wg_ref, hc_b_ref,                    # conv_han 1x1 (BN folded)
    mln_g_ref, mln_b_ref,                              # Mlp LayerNorm
    mw1_ref, mb1_ref, mw2_ref, mb2_ref,                # Mlp
    ma_w1_ref, ma_b1_ref, ma_w2_ref, ma_b2_ref,        # MLP_Adapter
    ca_w1_ref, ca_b1_ref, ca_w2_ref, ca_b2_ref,        # channel_Adapter
    o_ref,                                             # output (BL, DIM)
    xp_ref,                                            # VMEM scratch (PADL, DIM)
    xc_ref,                                            # VMEM scratch (BL, DIM)
):
    x = x_ref[...]                                     # (BL, DIM)
    g = g_ref[...]                                     # (BL, GRAD_C)

    # ---- attn.norm (LayerNorm) ----
    mu = jnp.mean(x, axis=-1, keepdims=True)
    var = jnp.mean((x - mu) ** 2, axis=-1, keepdims=True)
    xn = (x - mu) * lax.rsqrt(var + LN_EPS) * aln_g_ref[...] + aln_b_ref[...]

    # ---- window attention as masked full-sequence attention + proj ----
    xa = jnp.zeros((BL, DIM), jnp.float32)
    for h in range(NUM_HEADS):                         # static unroll (2 heads)
        q = jnp.dot(xn, wq_ref[h], preferred_element_type=jnp.float32) + bq_ref[h]
        k = jnp.dot(xn, wk_ref[h], preferred_element_type=jnp.float32) + bk_ref[h]
        v = jnp.dot(xn, wv_ref[h], preferred_element_type=jnp.float32) + bv_ref[h]
        s = jnp.dot(q, k.T, preferred_element_type=jnp.float32) * SCALE + bias_ref[h]
        s = s - jnp.max(s, axis=-1, keepdims=True)
        e = jnp.exp(s)
        p = e / jnp.sum(e, axis=-1, keepdims=True)
        oh = jnp.dot(p, v, preferred_element_type=jnp.float32)
        xa = xa + jnp.dot(oh, wp_ref[h], preferred_element_type=jnp.float32)
    xa = xa + bp_ref[...]

    # ---- Space_Adapter (skip_connect=True) ----
    sa = _gelu(jnp.dot(xa, sa_w1_ref[...], preferred_element_type=jnp.float32)
               + sa_b1_ref[...])
    xa = xa + jnp.dot(sa, sa_w2_ref[...], preferred_element_type=jnp.float32) + sa_b2_ref[...]

    # ---- residual (drop_path = identity) ----
    x1 = x + xa

    # ---- local_conv: depthwise 3x3 + BN (folded), flat-token formulation ----
    # Zero-padded buffer [pad | batch0 | gap | batch1 | pad] handles the row
    # (height) boundary for both batches; per-token masks handle the width
    # boundary.  Per-batch loop because the two batches are not contiguous in
    # the padded buffer.
    xp_ref[...] = jnp.zeros(xp_ref.shape, xp_ref.dtype)
    for b in range(B):
        xp_ref[pl.ds(PAD + b * (L + GAP), L), :] = x1[b * L:(b + 1) * L]
    for b in range(B):
        base = PAD + b * (L + GAP)
        acc = jnp.zeros((L, DIM), jnp.float32)
        for dx in range(3):
            col = jnp.zeros((L, DIM), jnp.float32)
            for dy in range(3):
                off = (dy - 1) * W + (dx - 1)
                col = col + xp_ref[pl.ds(base + off, L), :] * dw_w_ref[dy * 3 + dx]
            if dx == 0:
                col = col * cmask_ref[0]               # needs valid left neighbor
            elif dx == 2:
                col = col * cmask_ref[1]               # needs valid right neighbor
            acc = acc + col
        xc_ref[pl.ds(b * L, L), :] = acc + dw_b_ref[...]
    xc = xc_ref[...]                                   # (BL, DIM) post local_conv+BN

    # ---- conv_han_Adapter: 1x1 conv over cat([x, gradient]) + BN (folded) ----
    xh = (jnp.dot(xc, hc_wx_ref[...], preferred_element_type=jnp.float32)
          + jnp.dot(g, hc_wg_ref[...], preferred_element_type=jnp.float32)
          + hc_b_ref[...])

    # ---- Mlp: LayerNorm -> fc1 -> GELU -> fc2 (dropout = identity) ----
    mu2 = jnp.mean(xc, axis=-1, keepdims=True)
    var2 = jnp.mean((xc - mu2) ** 2, axis=-1, keepdims=True)
    xn2 = (xc - mu2) * lax.rsqrt(var2 + LN_EPS) * mln_g_ref[...] + mln_b_ref[...]
    m = _gelu(jnp.dot(xn2, mw1_ref[...], preferred_element_type=jnp.float32) + mb1_ref[...])
    m = jnp.dot(m, mw2_ref[...], preferred_element_type=jnp.float32) + mb2_ref[...]

    # ---- MLP_Adapter (skip_connect=False) ----
    a = _gelu(jnp.dot(xc, ma_w1_ref[...], preferred_element_type=jnp.float32) + ma_b1_ref[...])
    a = jnp.dot(a, ma_w2_ref[...], preferred_element_type=jnp.float32) + ma_b2_ref[...]

    # ---- channel_Adapter on x_han (skip_connect=False) ----
    c = _gelu(jnp.dot(xh, ca_w1_ref[...], preferred_element_type=jnp.float32) + ca_b1_ref[...])
    c = jnp.dot(c, ca_w2_ref[...], preferred_element_type=jnp.float32) + ca_b2_ref[...]

    o_ref[...] = xc + m + 0.35 * a + 0.15 * c


def tinyvit_adapter_block(x, gradient, kp):
    """x: (B, L, DIM); gradient: (B, GRAD_C, H, W) (NCHW, like the module)."""
    x_tok = x.reshape(BL, DIM)
    g_tok = jnp.transpose(gradient, (0, 2, 3, 1)).reshape(BL, GRAD_C)
    weights = (
        kp['attn_ln_g'], kp['attn_ln_b'],
        kp['wq'], kp['wk'], kp['wv'], kp['bq'], kp['bk'], kp['bv'],
        kp['wproj'], kp['bproj'], kp['bias_full'],
        kp['sa_w1'], kp['sa_b1'], kp['sa_w2'], kp['sa_b2'],
        kp['dw_w'], kp['dw_b'], kp['cmask'],
        kp['hc_wx'], kp['hc_wg'], kp['hc_b'],
        kp['mlp_ln_g'], kp['mlp_ln_b'],
        kp['mlp_w1'], kp['mlp_b1'], kp['mlp_w2'], kp['mlp_b2'],
        kp['ma_w1'], kp['ma_b1'], kp['ma_w2'], kp['ma_b2'],
        kp['ca_w1'], kp['ca_b1'], kp['ca_w2'], kp['ca_b2'],
    )
    in_specs = [_rep_spec((BL, DIM)), _rep_spec((BL, GRAD_C))]
    in_specs += [_rep_spec(w.shape) for w in weights]
    out = pl.pallas_call(
        block_kernel,
        out_shape=jax.ShapeDtypeStruct((BL, DIM), jnp.float32),
        grid=(1,),
        in_specs=in_specs,
        out_specs=_rep_spec((BL, DIM)),
        scratch_shapes=[pltpu.VMEM((PADL, DIM), jnp.float32),
                        pltpu.VMEM((BL, DIM), jnp.float32)],
        compiler_params=pltpu.CompilerParams(dimension_semantics=("arbitrary",)),
    )(x_tok, g_tok, *weights)
    return out.reshape(B, L, DIM)


# ----------------------------------------------------------------------------
# Parameters: "raw" module-style params + host-side prep for the kernel
# ----------------------------------------------------------------------------
def build_attention_bias_idxs(ws):
    points = list(itertools.product(range(ws), range(ws)))
    n = len(points)
    offsets = {}
    idxs = []
    for p1 in points:
        for p2 in points:
            off = (abs(p1[0] - p2[0]), abs(p1[1] - p2[1]))
            if off not in offsets:
                offsets[off] = len(offsets)
            idxs.append(offsets[off])
    return np.array(idxs, dtype=np.int32).reshape(n, n), len(offsets)


def init_raw_params(key):
    ks = iter(jax.random.split(key, 48))

    def nrm(shape, s=0.02):
        return jax.random.normal(next(ks), shape, jnp.float32) * s

    _, n_off = build_attention_bias_idxs(WS)
    h_qkv = NUM_HEADS * 3 * HEAD_DIM
    p = {}
    # Attention: norm + qkv + proj + relative position biases
    p['attn_ln_g'] = jnp.ones((DIM,), jnp.float32)
    p['attn_ln_b'] = jnp.zeros((DIM,), jnp.float32)
    p['wqkv'] = nrm((DIM, h_qkv))                      # per-head blocks [q | k | v]
    p['bqkv'] = nrm((h_qkv,))
    p['wproj'] = nrm((NUM_HEADS * HEAD_DIM, DIM))
    p['bproj'] = nrm((DIM,))
    p['attn_biases'] = nrm((NUM_HEADS, n_off), s=0.1)
    # Space_Adapter (skip_connect=True)
    p['sa_w1'] = nrm((DIM, ADPT_HID)); p['sa_b1'] = nrm((ADPT_HID,))
    p['sa_w2'] = nrm((ADPT_HID, DIM)); p['sa_b2'] = nrm((DIM,))
    # local_conv: depthwise 3x3 (no bias) + BatchNorm (eval, __init__ stats)
    p['dw_w'] = nrm((3, 3, DIM), s=0.1)                # w[ky, kx, c]
    p['dw_bn'] = dict(gamma=jnp.ones((DIM,), jnp.float32),
                      beta=jnp.zeros((DIM,), jnp.float32),
                      mean=jnp.zeros((DIM,), jnp.float32),
                      var=jnp.ones((DIM,), jnp.float32))
    # conv_han_Adapter: 1x1 conv (DIM+10 -> DIM, no bias) + BatchNorm
    p['hc_w'] = nrm((DIM + GRAD_C, DIM), s=0.05)
    p['hc_bn'] = dict(gamma=jnp.ones((DIM,), jnp.float32),
                      beta=jnp.zeros((DIM,), jnp.float32),
                      mean=jnp.zeros((DIM,), jnp.float32),
                      var=jnp.ones((DIM,), jnp.float32))
    # Mlp
    p['mlp_ln_g'] = jnp.ones((DIM,), jnp.float32)
    p['mlp_ln_b'] = jnp.zeros((DIM,), jnp.float32)
    p['mlp_w1'] = nrm((DIM, MLP_HID)); p['mlp_b1'] = nrm((MLP_HID,))
    p['mlp_w2'] = nrm((MLP_HID, DIM)); p['mlp_b2'] = nrm((DIM,))
    # MLP_Adapter (skip_connect=False)
    p['ma_w1'] = nrm((DIM, ADPT_HID)); p['ma_b1'] = nrm((ADPT_HID,))
    p['ma_w2'] = nrm((ADPT_HID, DIM)); p['ma_b2'] = nrm((DIM,))
    # channel_Adapter (Adapter_han, skip_connect=False)
    p['ca_w1'] = nrm((DIM, ADPT_HID)); p['ca_b1'] = nrm((ADPT_HID,))
    p['ca_w2'] = nrm((ADPT_HID, DIM)); p['ca_b2'] = nrm((DIM,))
    # NOTE: Depth_Adapter exists in __init__ but is never used in forward().
    return p


def prep_kernel_params(p):
    """Host-side re-layout: head-split qkv/proj, masked full-sequence bias over
    all B*L tokens, eval-mode BN folding, (1, C) biases, conv boundary masks."""
    idxs, _ = build_attention_bias_idxs(WS)
    kp = {}
    kp['attn_ln_g'] = p['attn_ln_g'].reshape(1, DIM)
    kp['attn_ln_b'] = p['attn_ln_b'].reshape(1, DIM)

    wqkv = np.asarray(p['wqkv'])
    bqkv = np.asarray(p['bqkv'])
    ph = 3 * HEAD_DIM
    kp['wq'] = jnp.asarray(np.stack(
        [wqkv[:, h * ph:h * ph + HEAD_DIM] for h in range(NUM_HEADS)]))
    kp['wk'] = jnp.asarray(np.stack(
        [wqkv[:, h * ph + HEAD_DIM:h * ph + 2 * HEAD_DIM] for h in range(NUM_HEADS)]))
    kp['wv'] = jnp.asarray(np.stack(
        [wqkv[:, h * ph + 2 * HEAD_DIM:h * ph + 3 * HEAD_DIM] for h in range(NUM_HEADS)]))
    kp['bq'] = jnp.asarray(np.stack(
        [bqkv[h * ph:h * ph + HEAD_DIM] for h in range(NUM_HEADS)])[:, None, :])
    kp['bk'] = jnp.asarray(np.stack(
        [bqkv[h * ph + HEAD_DIM:h * ph + 2 * HEAD_DIM] for h in range(NUM_HEADS)])[:, None, :])
    kp['bv'] = jnp.asarray(np.stack(
        [bqkv[h * ph + 2 * HEAD_DIM:h * ph + 3 * HEAD_DIM] for h in range(NUM_HEADS)])[:, None, :])
    kp['wproj'] = jnp.asarray(np.asarray(p['wproj']).reshape(NUM_HEADS, HEAD_DIM, DIM))
    kp['bproj'] = p['bproj'].reshape(1, DIM)

    # relative-position bias inside each window, -1e9 across windows and batches
    ab = np.asarray(p['attn_biases'])[:, idxs]                    # (nh, N_WIN, N_WIN)
    bias_full = np.full((NUM_HEADS, BL, BL), NEG_INF, np.float32)
    for b in range(B):
        for wh in range(NH_WIN):
            for ww in range(NW_WIN):
                toks = b * L + np.array([(wh * WS + i) * W + (ww * WS + j)
                                         for i in range(WS) for j in range(WS)])
                bias_full[:, toks[:, None], toks[None, :]] = ab
    kp['bias_full'] = jnp.asarray(bias_full)

    kp['sa_w1'] = p['sa_w1']; kp['sa_b1'] = p['sa_b1'].reshape(1, ADPT_HID)
    kp['sa_w2'] = p['sa_w2']; kp['sa_b2'] = p['sa_b2'].reshape(1, DIM)

    # fold eval-mode BN into the depthwise conv (per-channel scale/bias)
    bn = p['dw_bn']
    s = bn['gamma'] / jnp.sqrt(bn['var'] + BN_EPS)
    kp['dw_w'] = (p['dw_w'] * s).reshape(9, 1, DIM)               # row = ky*3 + kx
    kp['dw_b'] = (bn['beta'] - bn['mean'] * s).reshape(1, DIM)
    # width-boundary masks for the flat-token conv taps (dx = -1 / +1)
    wcol = np.arange(L) % W
    cmask = np.stack([(wcol >= 1), (wcol <= W - 2)]).astype(np.float32)
    kp['cmask'] = jnp.asarray(cmask.reshape(2, L, 1))

    # fold eval-mode BN into the conv_han 1x1 conv
    bn = p['hc_bn']
    s = bn['gamma'] / jnp.sqrt(bn['var'] + BN_EPS)
    hc_w = p['hc_w'] * s[None, :]
    kp['hc_wx'] = hc_w[:DIM]
    kp['hc_wg'] = hc_w[DIM:]
    kp['hc_b'] = (bn['beta'] - bn['mean'] * s).reshape(1, DIM)

    kp['mlp_ln_g'] = p['mlp_ln_g'].reshape(1, DIM)
    kp['mlp_ln_b'] = p['mlp_ln_b'].reshape(1, DIM)
    kp['mlp_w1'] = p['mlp_w1']; kp['mlp_b1'] = p['mlp_b1'].reshape(1, MLP_HID)
    kp['mlp_w2'] = p['mlp_w2']; kp['mlp_b2'] = p['mlp_b2'].reshape(1, DIM)
    kp['ma_w1'] = p['ma_w1']; kp['ma_b1'] = p['ma_b1'].reshape(1, ADPT_HID)
    kp['ma_w2'] = p['ma_w2']; kp['ma_b2'] = p['ma_b2'].reshape(1, DIM)
    kp['ca_w1'] = p['ca_w1']; kp['ca_b1'] = p['ca_b1'].reshape(1, ADPT_HID)
    kp['ca_w2'] = p['ca_w2']; kp['ca_b2'] = p['ca_b2'].reshape(1, DIM)
    return kp


# ----------------------------------------------------------------------------
# Pure-JAX reference (PyTorch-faithful windowed form, raw params)
# ----------------------------------------------------------------------------
def reference(x, gradient, p):
    def gelu(v):
        return 0.5 * v * (1.0 + lax.erf(v / jnp.sqrt(2.0)))

    def ln(v, g, b):
        mu = v.mean(-1, keepdims=True)
        var = ((v - mu) ** 2).mean(-1, keepdims=True)
        return (v - mu) / jnp.sqrt(var + LN_EPS) * g + b

    idxs, _ = build_attention_bias_idxs(WS)
    ab = p['attn_biases'][:, jnp.asarray(idxs)]                   # (nh, N, N)

    res = x
    xw = x.reshape(B, NH_WIN, WS, NW_WIN, WS, DIM).transpose(0, 1, 3, 2, 4, 5)
    xw = xw.reshape(BW, N_WIN, DIM)
    xn = ln(xw, p['attn_ln_g'], p['attn_ln_b'])
    qkv = (xn @ p['wqkv'] + p['bqkv']).reshape(BW, N_WIN, NUM_HEADS, 3 * HEAD_DIM)
    q = qkv[..., :HEAD_DIM].transpose(0, 2, 1, 3)
    k = qkv[..., HEAD_DIM:2 * HEAD_DIM].transpose(0, 2, 1, 3)
    v = qkv[..., 2 * HEAD_DIM:].transpose(0, 2, 1, 3)
    attn = jnp.einsum('bhnd,bhmd->bhnm', q, k) * SCALE + ab[None]
    attn = jax.nn.softmax(attn, axis=-1)
    o = jnp.einsum('bhnm,bhmd->bhnd', attn, v).transpose(0, 2, 1, 3)
    o = o.reshape(BW, N_WIN, NUM_HEADS * HEAD_DIM) @ p['wproj'] + p['bproj']
    o = o + (gelu(o @ p['sa_w1'] + p['sa_b1']) @ p['sa_w2'] + p['sa_b2'])
    o = o.reshape(B, NH_WIN, NW_WIN, WS, WS, DIM).transpose(0, 1, 3, 2, 4, 5)
    x1 = res + o.reshape(B, L, DIM)

    ximg = x1.reshape(B, H, W, DIM)
    xp = jnp.pad(ximg, ((0, 0), (1, 1), (1, 1), (0, 0)))
    acc = jnp.zeros((B, H, W, DIM), jnp.float32)
    for ky in range(3):
        for kx in range(3):
            acc = acc + xp[:, ky:ky + H, kx:kx + W, :] * p['dw_w'][ky, kx]
    bn = p['dw_bn']
    xc = (acc - bn['mean']) / jnp.sqrt(bn['var'] + BN_EPS) * bn['gamma'] + bn['beta']

    g_hwc = jnp.transpose(gradient, (0, 2, 3, 1))
    xt = xc.reshape(B * L, DIM)
    gt = g_hwc.reshape(B * L, GRAD_C)
    bn = p['hc_bn']
    xh = jnp.concatenate([xt, gt], axis=-1) @ p['hc_w']
    xh = (xh - bn['mean']) / jnp.sqrt(bn['var'] + BN_EPS) * bn['gamma'] + bn['beta']

    m = gelu(ln(xt, p['mlp_ln_g'], p['mlp_ln_b']) @ p['mlp_w1'] + p['mlp_b1']) @ p['mlp_w2'] + p['mlp_b2']
    a = gelu(xt @ p['ma_w1'] + p['ma_b1']) @ p['ma_w2'] + p['ma_b2']
    c = gelu(xh @ p['ca_w1'] + p['ca_b1']) @ p['ca_w2'] + p['ca_b2']
    out = xt + m + 0.35 * a + 0.15 * c
    return out.reshape(B, L, DIM)


if __name__ == "__main__":
    key = jax.random.PRNGKey(0)
    kx, kg, kparam = jax.random.split(key, 3)
    x = jax.random.normal(kx, (B, L, DIM), jnp.float32)
    gradient = jax.random.normal(kg, (B, GRAD_C, H, W), jnp.float32)
    raw = init_raw_params(kparam)
    kparams = prep_kernel_params(raw)

    out = jax.block_until_ready(tinyvit_adapter_block(x, gradient, kparams))
    ref = jax.block_until_ready(reference(x, gradient, raw))

    assert out.shape == (B, L, DIM), out.shape
    max_err = float(jnp.max(jnp.abs(out - ref)))
    assert jnp.allclose(out, ref, atol=1e-4, rtol=1e-4), f"max err {max_err}"
    print("KERNEL_OK")
</pallas_src>

<mosaic_0001>
module attributes {stable_mosaic.version = 11 : i64} {
  func.func @block_kernel(%arg0: i32, %arg1: memref<128x32xf32, #tpu.memory_space<vmem>>, %arg2: memref<128x10xf32, #tpu.memory_space<vmem>>, %arg3: memref<1x32xf32, #tpu.memory_space<vmem>>, %arg4: memref<1x32xf32, #tpu.memory_space<vmem>>, %arg5: memref<2x32x16xf32, #tpu.memory_space<vmem>>, %arg6: memref<2x32x16xf32, #tpu.memory_space<vmem>>, %arg7: memref<2x32x16xf32, #tpu.memory_space<vmem>>, %arg8: memref<2x1x16xf32, #tpu.memory_space<vmem>>, %arg9: memref<2x1x16xf32, #tpu.memory_space<vmem>>, %arg10: memref<2x1x16xf32, #tpu.memory_space<vmem>>, %arg11: memref<2x16x32xf32, #tpu.memory_space<vmem>>, %arg12: memref<1x32xf32, #tpu.memory_space<vmem>>, %arg13: memref<2x128x128xf32, #tpu.memory_space<vmem>>, %arg14: memref<32x8xf32, #tpu.memory_space<vmem>>, %arg15: memref<1x8xf32, #tpu.memory_space<vmem>>, %arg16: memref<8x32xf32, #tpu.memory_space<vmem>>, %arg17: memref<1x32xf32, #tpu.memory_space<vmem>>, %arg18: memref<9x1x32xf32, #tpu.memory_space<vmem>>, %arg19: memref<1x32xf32, #tpu.memory_space<vmem>>, %arg20: memref<2x64x1xf32, #tpu.memory_space<vmem>>, %arg21: memref<32x32xf32, #tpu.memory_space<vmem>>, %arg22: memref<10x32xf32, #tpu.memory_space<vmem>>, %arg23: memref<1x32xf32, #tpu.memory_space<vmem>>, %arg24: memref<1x32xf32, #tpu.memory_space<vmem>>, %arg25: memref<1x32xf32, #tpu.memory_space<vmem>>, %arg26: memref<32x128xf32, #tpu.memory_space<vmem>>, %arg27: memref<1x128xf32, #tpu.memory_space<vmem>>, %arg28: memref<128x32xf32, #tpu.memory_space<vmem>>, %arg29: memref<1x32xf32, #tpu.memory_space<vmem>>, %arg30: memref<32x8xf32, #tpu.memory_space<vmem>>, %arg31: memref<1x8xf32, #tpu.memory_space<vmem>>, %arg32: memref<8x32xf32, #tpu.memory_space<vmem>>, %arg33: memref<1x32xf32, #tpu.memory_space<vmem>>, %arg34: memref<32x8xf32, #tpu.memory_space<vmem>>, %arg35: memref<1x8xf32, #tpu.memory_space<vmem>>, %arg36: memref<8x32xf32, #tpu.memory_space<vmem>>, %arg37: memref<1x32xf32, #tpu.memory_space<vmem>>, %arg38: memref<128x32xf32, #tpu.memory_space<vmem>>, %arg39: memref<176x32xf32, #tpu.memory_space<vmem>>, %arg40: memref<128x32xf32, #tpu.memory_space<vmem>>) attributes {dimension_semantics = [#tpu.dimension_semantics<arbitrary>], iteration_bounds = array<i64: 1>, scalar_prefetch = 0 : i64, scratch_operands = 2 : i64, tpu.core_type = #tpu.core_type<tc>, window_params = [{pipeline_mode = #tpu.pipeline_mode<synchronous>, transform_indices = @transform_0, window_bounds = array<i64: 128, 32>}, {pipeline_mode = #tpu.pipeline_mode<synchronous>, transform_indices = @transform_1, window_bounds = array<i64: 128, 10>}, {pipeline_mode = #tpu.pipeline_mode<synchronous>, transform_indices = @transform_2, window_bounds = array<i64: 1, 32>}, {pipeline_mode = #tpu.pipeline_mode<synchronous>, transform_indices = @transform_3, window_bounds = array<i64: 1, 32>}, {pipeline_mode = #tpu.pipeline_mode<synchronous>, transform_indices = @transform_4, window_bounds = array<i64: 2, 32, 16>}, {pipeline_mode = #tpu.pipeline_mode<synchronous>, transform_indices = @transform_5, window_bounds = array<i64: 2, 32, 16>}, {pipeline_mode = #tpu.pipeline_mode<synchronous>, transform_indices = @transform_6, window_bounds = array<i64: 2, 32, 16>}, {pipeline_mode = #tpu.pipeline_mode<synchronous>, transform_indices = @transform_7, window_bounds = array<i64: 2, 1, 16>}, {pipeline_mode = #tpu.pipeline_mode<synchronous>, transform_indices = @transform_8, window_bounds = array<i64: 2, 1, 16>}, {pipeline_mode = #tpu.pipeline_mode<synchronous>, transform_indices = @transform_9, window_bounds = array<i64: 2, 1, 16>}, {pipeline_mode = #tpu.pipeline_mode<synchronous>, transform_indices = @transform_10, window_bounds = array<i64: 2, 16, 32>}, {pipeline_mode = #tpu.pipeline_mode<synchronous>, transform_indices = @transform_11, window_bounds = array<i64: 1, 32>}, {pipeline_mode = #tpu.pipeline_mode<synchronous>, transform_indices = @transform_12, window_bounds = array<i64: 2, 128, 128>}, {pipeline_mode = #tpu.pipeline_mode<synchronous>, transform_indices = @transform_13, window_bounds = array<i64: 32, 8>}, {pipeline_mode = #tpu.pipeline_mode<synchronous>, transform_indices = @transform_14, window_bounds = array<i64: 1, 8>}, {pipeline_mode = #tpu.pipeline_mode<synchronous>, transform_indices = @transform_15, window_bounds = array<i64: 8, 32>}, {pipeline_mode = #tpu.pipeline_mode<synchronous>, transform_indices = @transform_16, window_bounds = array<i64: 1, 32>}, {pipeline_mode = #tpu.pipeline_mode<synchronous>, transform_indices = @transform_17, window_bounds = array<i64: 9, 1, 32>}, {pipeline_mode = #tpu.pipeline_mode<synchronous>, transform_indices = @transform_18, window_bounds = array<i64: 1, 32>}, {pipeline_mode = #tpu.pipeline_mode<synchronous>, transform_indices = @transform_19, window_bounds = array<i64: 2, 64, 1>}, {pipeline_mode = #tpu.pipeline_mode<synchronous>, transform_indices = @transform_20, window_bounds = array<i64: 32, 32>}, {pipeline_mode = #tpu.pipeline_mode<synchronous>, transform_indices = @transform_21, window_bounds = array<i64: 10, 32>}, {pipeline_mode = #tpu.pipeline_mode<synchronous>, transform_indices = @transform_22, window_bounds = array<i64: 1, 32>}, {pipeline_mode = #tpu.pipeline_mode<synchronous>, transform_indices = @transform_23, window_bounds = array<i64: 1, 32>}, {pipeline_mode = #tpu.pipeline_mode<synchronous>, transform_indices = @transform_24, window_bounds = array<i64: 1, 32>}, {pipeline_mode = #tpu.pipeline_mode<synchronous>, transform_indices = @transform_25, window_bounds = array<i64: 32, 128>}, {pipeline_mode = #tpu.pipeline_mode<synchronous>, transform_indices = @transform_26, window_bounds = array<i64: 1, 128>}, {pipeline_mode = #tpu.pipeline_mode<synchronous>, transform_indices = @transform_27, window_bounds = array<i64: 128, 32>}, {pipeline_mode = #tpu.pipeline_mode<synchronous>, transform_indices = @transform_28, window_bounds = array<i64: 1, 32>}, {pipeline_mode = #tpu.pipeline_mode<synchronous>, transform_indices = @transform_29, window_bounds = array<i64: 32, 8>}, {pipeline_mode = #tpu.pipeline_mode<synchronous>, transform_indices = @transform_30, window_bounds = array<i64: 1, 8>}, {pipeline_mode = #tpu.pipeline_mode<synchronous>, transform_indices = @transform_31, window_bounds = array<i64: 8, 32>}, {pipeline_mode = #tpu.pipeline_mode<synchronous>, transform_indices = @transform_32, window_bounds = array<i64: 1, 32>}, {pipeline_mode = #tpu.pipeline_mode<synchronous>, transform_indices = @transform_33, window_bounds = array<i64: 32, 8>}, {pipeline_mode = #tpu.pipeline_mode<synchronous>, transform_indices = @transform_34, window_bounds = array<i64: 1, 8>}, {pipeline_mode = #tpu.pipeline_mode<synchronous>, transform_indices = @transform_35, window_bounds = array<i64: 8, 32>}, {pipeline_mode = #tpu.pipeline_mode<synchronous>, transform_indices = @transform_36, window_bounds = array<i64: 1, 32>}, {pipeline_mode = #tpu.pipeline_mode<synchronous>, transform_indices = @transform_37, window_bounds = array<i64: 128, 32>}]} {
    %c0 = arith.constant 0 : index
    %c0_0 = arith.constant 0 : index
    %0 = vector.load %arg1[%c0, %c0_0] : memref<128x32xf32, #tpu.memory_space<vmem>>, vector<128x32xf32>
    %c0_1 = arith.constant 0 : index
    %c0_2 = arith.constant 0 : index
    %1 = vector.load %arg2[%c0_1, %c0_2] : memref<128x10xf32, #tpu.memory_space<vmem>>, vector<128x10xf32>
    %cst = arith.constant dense<0.000000e+00> : vector<128xf32>
    %2 = vector.multi_reduction <add>, %0, %cst [1] : vector<128x32xf32> to vector<128xf32>
    %3 = vector.shape_cast %2 : vector<128xf32> to vector<128x1xf32>
    %cst_3 = arith.constant 3.200000e+01 : f32
    %4 = vector.broadcast %cst_3 : f32 to vector<128x1xf32>
    %5 = arith.divf %3, %4 : vector<128x1xf32>
    %6 = vector.broadcast %5 : vector<128x1xf32> to vector<128x32xf32>
    %7 = arith.subf %0, %6 : vector<128x32xf32>
    %8 = arith.mulf %7, %7 : vector<128x32xf32>
    %cst_4 = arith.constant dense<0.000000e+00> : vector<128xf32>
    %9 = vector.multi_reduction <add>, %8, %cst_4 [1] : vector<128x32xf32> to vector<128xf32>
    %10 = vector.shape_cast %9 : vector<128xf32> to vector<128x1xf32>
    %cst_5 = arith.constant 3.200000e+01 : f32
    %11 = vector.broadcast %cst_5 : f32 to vector<128x1xf32>
    %12 = arith.divf %10, %11 : vector<128x1xf32>
    %13 = vector.broadcast %5 : vector<128x1xf32> to vector<128x32xf32>
    %14 = arith.subf %0, %13 : vector<128x32xf32>
    %cst_6 = arith.constant 9.99999974E-6 : f32
    %15 = vector.broadcast %cst_6 : f32 to vector<128x1xf32>
    %16 = arith.addf %12, %15 : vector<128x1xf32>
    %17 = math.rsqrt %16 : vector<128x1xf32>
    %18 = vector.broadcast %17 : vector<128x1xf32> to vector<128x32xf32>
    %19 = arith.mulf %14, %18 : vector<128x32xf32>
    %c0_7 = arith.constant 0 : index
    %c0_8 = arith.constant 0 : index
    %20 = vector.load %arg3[%c0_7, %c0_8] : memref<1x32xf32, #tpu.memory_space<vmem>>, vector<1x32xf32>
    %21 = vector.broadcast %20 : vector<1x32xf32> to vector<128x32xf32>
    %22 = arith.mulf %19, %21 : vector<128x32xf32>
    %c0_9 = arith.constant 0 : index
    %c0_10 = arith.constant 0 : index
    %23 = vector.load %arg4[%c0_9, %c0_10] : memref<1x32xf32, #tpu.memory_space<vmem>>, vector<1x32xf32>
    %24 = vector.broadcast %23 : vector<1x32xf32> to vector<128x32xf32>
    %25 = arith.addf %22, %24 : vector<128x32xf32>
    %cst_11 = arith.constant 0.000000e+00 : f32
    %26 = vector.broadcast %cst_11 : f32 to vector<128x32xf32>
    %c0_12 = arith.constant 0 : index
    %c0_13 = arith.constant 0 : index
    %c0_14 = arith.constant 0 : index
    %27 = vector.load %arg5[%c0_12, %c0_13, %c0_14] : memref<2x32x16xf32, #tpu.memory_space<vmem>>, vector<1x32x16xf32>
    %28 = vector.shape_cast %27 : vector<1x32x16xf32> to vector<32x16xf32>
    %cst_15 = arith.constant dense<0.000000e+00> : vector<128x16xf32>
    %29 = tpu.matmul %25, %28, %cst_15 {dimension_numbers = #tpu.dot_dimension_numbers<[1], [0], [0], [1], [0, 0, 1, 1], [], []>} : vector<128x32xf32>, vector<32x16xf32>, vector<128x16xf32> -> vector<128x16xf32>
    %c0_16 = arith.constant 0 : index
    %c0_17 = arith.constant 0 : index
    %c0_18 = arith.constant 0 : index
    %30 = vector.load %arg8[%c0_16, %c0_17, %c0_18] : memref<2x1x16xf32, #tpu.memory_space<vmem>>, vector<1x1x16xf32>
    %31 = vector.shape_cast %30 : vector<1x1x16xf32> to vector<1x16xf32>
    %32 = vector.broadcast %31 : vector<1x16xf32> to vector<128x16xf32>
    %33 = arith.addf %29, %32 : vector<128x16xf32>
    %c0_19 = arith.constant 0 : index
    %c0_20 = arith.constant 0 : index
    %c0_21 = arith.constant 0 : index
    %34 = vector.load %arg6[%c0_19, %c0_20, %c0_21] : memref<2x32x16xf32, #tpu.memory_space<vmem>>, vector<1x32x16xf32>
    %35 = vector.shape_cast %34 : vector<1x32x16xf32> to vector<32x16xf32>
    %cst_22 = arith.constant dense<0.000000e+00> : vector<128x16xf32>
    %36 = tpu.matmul %25, %35, %cst_22 {dimension_numbers = #tpu.dot_dimension_numbers<[1], [0], [0], [1], [0, 0, 1, 1], [], []>} : vector<128x32xf32>, vector<32x16xf32>, vector<128x16xf32> -> vector<128x16xf32>
    %c0_23 = arith.constant 0 : index
    %c0_24 = arith.constant 0 : index
    %c0_25 = arith.constant 0 : index
    %37 = vector.load %arg9[%c0_23, %c0_24, %c0_25] : memref<2x1x16xf32, #tpu.memory_space<vmem>>, vector<1x1x16xf32>
    %38 = vector.shape_cast %37 : vector<1x1x16xf32> to vector<1x16xf32>
    %39 = vector.broadcast %38 : vector<1x16xf32> to vector<128x16xf32>
    %40 = arith.addf %36, %39 : vector<128x16xf32>
    %c0_26 = arith.constant 0 : index
    %c0_27 = arith.constant 0 : index
    %c0_28 = arith.constant 0 : index
    %41 = vector.load %arg7[%c0_26, %c0_27, %c0_28] : memref<2x32x16xf32, #tpu.memory_space<vmem>>, vector<1x32x16xf32>
    %42 = vector.shape_cast %41 : vector<1x32x16xf32> to vector<32x16xf32>
    %cst_29 = arith.constant dense<0.000000e+00> : vector<128x16xf32>
    %43 = tpu.matmul %25, %42, %cst_29 {dimension_numbers = #tpu.dot_dimension_numbers<[1], [0], [0], [1], [0, 0, 1, 1], [], []>} : vector<128x32xf32>, vector<32x16xf32>, vector<128x16xf32> -> vector<128x16xf32>
    %c0_30 = arith.constant 0 : index
    %c0_31 = arith.constant 0 : index
    %c0_32 = arith.constant 0 : index
    %44 = vector.load %arg10[%c0_30, %c0_31, %c0_32] : memref<2x1x16xf32, #tpu.memory_space<vmem>>, vector<1x1x16xf32>
    %45 = vector.shape_cast %44 : vector<1x1x16xf32> to vector<1x16xf32>
    %46 = vector.broadcast %45 : vector<1x16xf32> to vector<128x16xf32>
    %47 = arith.addf %43, %46 : vector<128x16xf32>
    %48 = tpu.transpose %40, [1, 0] : vector<128x16xf32> -> vector<16x128xf32>
    %cst_33 = arith.constant dense<0.000000e+00> : vector<128x128xf32>
    %49 = tpu.matmul %33, %48, %cst_33 {dimension_numbers = #tpu.dot_dimension_numbers<[1], [0], [0], [1], [0, 0, 1, 1], [], []>} : vector<128x16xf32>, vector<16x128xf32>, vector<128x128xf32> -> vector<128x128xf32>
    %cst_34 = arith.constant 2.500000e-01 : f32
    %50 = vector.broadcast %cst_34 : f32 to vector<128x128xf32>
    %51 = arith.mulf %49, %50 : vector<128x128xf32>
    %c0_35 = arith.constant 0 : index
    %c0_36 = arith.constant 0 : index
    %c0_37 = arith.constant 0 : index
    %52 = vector.load %arg13[%c0_35, %c0_36, %c0_37] : memref<2x128x128xf32, #tpu.memory_space<vmem>>, vector<1x128x128xf32>
    %53 = vector.shape_cast %52 : vector<1x128x128xf32> to vector<128x128xf32>
    %54 = arith.addf %51, %53 : vector<128x128xf32>
    %cst_38 = arith.constant dense<0xFF800000> : vector<128xf32>
    %55 = vector.multi_reduction <maximumf>, %54, %cst_38 [1] : vector<128x128xf32> to vector<128xf32>
    %56 = vector.shape_cast %55 : vector<128xf32> to vector<128x1xf32>
    %57 = vector.broadcast %56 : vector<128x1xf32> to vector<128x128xf32>
    %58 = arith.subf %54, %57 : vector<128x128xf32>
    %59 = math.exp %58 : vector<128x128xf32>
    %cst_39 = arith.constant dense<0.000000e+00> : vector<128xf32>
    %60 = vector.multi_reduction <add>, %59, %cst_39 [1] : vector<128x128xf32> to vector<128xf32>
    %61 = vector.shape_cast %60 : vector<128xf32> to vector<128x1xf32>
    %62 = vector.broadcast %61 : vector<128x1xf32> to vector<128x128xf32>
    %63 = arith.divf %59, %62 : vector<128x128xf32>
    %cst_40 = arith.constant dense<0.000000e+00> : vector<128x16xf32>
    %64 = tpu.matmul %63, %47, %cst_40 {dimension_numbers = #tpu.dot_dimension_numbers<[1], [0], [0], [1], [0, 0, 1, 1], [], []>} : vector<128x128xf32>, vector<128x16xf32>, vector<128x16xf32> -> vector<128x16xf32>
    %c0_41 = arith.constant 0 : index
    %c0_42 = arith.constant 0 : index
    %c0_43 = arith.constant 0 : index
    %65 = vector.load %arg11[%c0_41, %c0_42, %c0_43] : memref<2x16x32xf32, #tpu.memory_space<vmem>>, vector<1x16x32xf32>
    %66 = vector.shape_cast %65 : vector<1x16x32xf32> to vector<16x32xf32>
    %cst_44 = arith.constant dense<0.000000e+00> : vector<128x32xf32>
    %67 = tpu.matmul %64, %66, %cst_44 {dimension_numbers = #tpu.dot_dimension_numbers<[1], [0], [0], [1], [0, 0, 1, 1], [], []>} : vector<128x16xf32>, vector<16x32xf32>, vector<128x32xf32> -> vector<128x32xf32>
    %68 = arith.addf %26, %67 : vector<128x32xf32>
    %c1 = arith.constant 1 : index
    %c0_45 = arith.constant 0 : index
    %c0_46 = arith.constant 0 : index
    %69 = vector.load %arg5[%c1, %c0_45, %c0_46] : memref<2x32x16xf32, #tpu.memory_space<vmem>>, vector<1x32x16xf32>
    %70 = vector.shape_cast %69 : vector<1x32x16xf32> to vector<32x16xf32>
    %cst_47 = arith.constant dense<0.000000e+00> : vector<128x16xf32>
    %71 = tpu.matmul %25, %70, %cst_47 {dimension_numbers = #tpu.dot_dimension_numbers<[1], [0], [0], [1], [0, 0, 1, 1], [], []>} : vector<128x32xf32>, vector<32x16xf32>, vector<128x16xf32> -> vector<128x16xf32>
    %c1_48 = arith.constant 1 : index
    %c0_49 = arith.constant 0 : index
    %c0_50 = arith.constant 0 : index
    %72 = vector.load %arg8[%c1_48, %c0_49, %c0_50] : memref<2x1x16xf32, #tpu.memory_space<vmem>>, vector<1x1x16xf32>
    %73 = vector.shape_cast %72 : vector<1x1x16xf32> to vector<1x16xf32>
    %74 = vector.broadcast %73 : vector<1x16xf32> to vector<128x16xf32>
    %75 = arith.addf %71, %74 : vector<128x16xf32>
    %c1_51 = arith.constant 1 : index
    %c0_52 = arith.constant 0 : index
    %c0_53 = arith.constant 0 : index
    %76 = vector.load %arg6[%c1_51, %c0_52, %c0_53] : memref<2x32x16xf32, #tpu.memory_space<vmem>>, vector<1x32x16xf32>
    %77 = vector.shape_cast %76 : vector<1x32x16xf32> to vector<32x16xf32>
    %cst_54 = arith.constant dense<0.000000e+00> : vector<128x16xf32>
    %78 = tpu.matmul %25, %77, %cst_54 {dimension_numbers = #tpu.dot_dimension_numbers<[1], [0], [0], [1], [0, 0, 1, 1], [], []>} : vector<128x32xf32>, vector<32x16xf32>, vector<128x16xf32> -> vector<128x16xf32>
    %c1_55 = arith.constant 1 : index
    %c0_56 = arith.constant 0 : index
    %c0_57 = arith.constant 0 : index
    %79 = vector.load %arg9[%c1_55, %c0_56, %c0_57] : memref<2x1x16xf32, #tpu.memory_space<vmem>>, vector<1x1x16xf32>
    %80 = vector.shape_cast %79 : vector<1x1x16xf32> to vector<1x16xf32>
    %81 = vector.broadcast %80 : vector<1x16xf32> to vector<128x16xf32>
    %82 = arith.addf %78, %81 : vector<128x16xf32>
    %c1_58 = arith.constant 1 : index
    %c0_59 = arith.constant 0 : index
    %c0_60 = arith.constant 0 : index
    %83 = vector.load %arg7[%c1_58, %c0_59, %c0_60] : memref<2x32x16xf32, #tpu.memory_space<vmem>>, vector<1x32x16xf32>
    %84 = vector.shape_cast %83 : vector<1x32x16xf32> to vector<32x16xf32>
    %cst_61 = arith.constant dense<0.000000e+00> : vector<128x16xf32>
    %85 = tpu.matmul %25, %84, %cst_61 {dimension_numbers = #tpu.dot_dimension_numbers<[1], [0], [0], [1], [0, 0, 1, 1], [], []>} : vector<128x32xf32>, vector<32x16xf32>, vector<128x16xf32> -> vector<128x16xf32>
    %c1_62 = arith.constant 1 : index
    %c0_63 = arith.constant 0 : index
    %c0_64 = arith.constant 0 : index
    %86 = vector.load %arg10[%c1_62, %c0_63, %c0_64] : memref<2x1x16xf32, #tpu.memory_space<vmem>>, vector<1x1x16xf32>
    %87 = vector.shape_cast %86 : vector<1x1x16xf32> to vector<1x16xf32>
    %88 = vector.broadcast %87 : vector<1x16xf32> to vector<128x16xf32>
    %89 = arith.addf %85, %88 : vector<128x16xf32>
    %90 = tpu.transpose %82, [1, 0] : vector<128x16xf32> -> vector<16x128xf32>
    %cst_65 = arith.constant dense<0.000000e+00> : vector<128x128xf32>
    %91 = tpu.matmul %75, %90, %cst_65 {dimension_numbers = #tpu.dot_dimension_numbers<[1], [0], [0], [1], [0, 0, 1, 1], [], []>} : vector<128x16xf32>, vector<16x128xf32>, vector<128x128xf32> -> vector<128x128xf32>
    %cst_66 = arith.constant 2.500000e-01 : f32
    %92 = vector.broadcast %cst_66 : f32 to vector<128x128xf32>
    %93 = arith.mulf %91, %92 : vector<128x128xf32>
    %c1_67 = arith.constant 1 : index
    %c0_68 = arith.constant 0 : index
    %c0_69 = arith.constant 0 : index
    %94 = vector.load %arg13[%c1_67, %c0_68, %c0_69] : memref<2x128x128xf32, #tpu.memory_space<vmem>>, vector<1x128x128xf32>
    %95 = vector.shape_cast %94 : vector<1x128x128xf32> to vector<128x128xf32>
    %96 = arith.addf %93, %95 : vector<128x128xf32>
    %cst_70 = arith.constant dense<0xFF800000> : vector<128xf32>
    %97 = vector.multi_reduction <maximumf>, %96, %cst_70 [1] : vector<128x128xf32> to vector<128xf32>
    %98 = vector.shape_cast %97 : vector<128xf32> to vector<128x1xf32>
    %99 = vector.broadcast %98 : vector<128x1xf32> to vector<128x128xf32>
    %100 = arith.subf %96, %99 : vector<128x128xf32>
    %101 = math.exp %100 : vector<128x128xf32>
    %cst_71 = arith.constant dense<0.000000e+00> : vector<128xf32>
    %102 = vector.multi_reduction <add>, %101, %cst_71 [1] : vector<128x128xf32> to vector<128xf32>
    %103 = vector.shape_cast %102 : vector<128xf32> to vector<128x1xf32>
    %104 = vector.broadcast %103 : vector<128x1xf32> to vector<128x128xf32>
    %105 = arith.divf %101, %104 : vector<128x128xf32>
    %cst_72 = arith.constant dense<0.000000e+00> : vector<128x16xf32>
    %106 = tpu.matmul %105, %89, %cst_72 {dimension_numbers = #tpu.dot_dimension_numbers<[1], [0], [0], [1], [0, 0, 1, 1], [], []>} : vector<128x128xf32>, vector<128x16xf32>, vector<128x16xf32> -> vector<128x16xf32>
    %c1_73 = arith.constant 1 : index
    %c0_74 = arith.constant 0 : index
    %c0_75 = arith.constant 0 : index
    %107 = vector.load %arg11[%c1_73, %c0_74, %c0_75] : memref<2x16x32xf32, #tpu.memory_space<vmem>>, vector<1x16x32xf32>
    %108 = vector.shape_cast %107 : vector<1x16x32xf32> to vector<16x32xf32>
    %cst_76 = arith.constant dense<0.000000e+00> : vector<128x32xf32>
    %109 = tpu.matmul %106, %108, %cst_76 {dimension_numbers = #tpu.dot_dimension_numbers<[1], [0], [0], [1], [0, 0, 1, 1], [], []>} : vector<128x16xf32>, vector<16x32xf32>, vector<128x32xf32> -> vector<128x32xf32>
    %110 = arith.addf %68, %109 : vector<128x32xf32>
    %c0_77 = arith.constant 0 : index
    %c0_78 = arith.constant 0 : index
    %111 = vector.load %arg12[%c0_77, %c0_78] : memref<1x32xf32, #tpu.memory_space<vmem>>, vector<1x32xf32>
    %112 = vector.broadcast %111 : vector<1x32xf32> to vector<128x32xf32>
    %113 = arith.addf %110, %112 : vector<128x32xf32>
    %c0_79 = arith.constant 0 : index
    %c0_80 = arith.constant 0 : index
    %114 = vector.load %arg14[%c0_79, %c0_80] : memref<32x8xf32, #tpu.memory_space<vmem>>, vector<32x8xf32>
    %cst_81 = arith.constant dense<0.000000e+00> : vector<128x8xf32>
    %115 = tpu.matmul %113, %114, %cst_81 {dimension_numbers = #tpu.dot_dimension_numbers<[1], [0], [0], [1], [0, 0, 1, 1], [], []>} : vector<128x32xf32>, vector<32x8xf32>, vector<128x8xf32> -> vector<128x8xf32>
    %c0_82 = arith.constant 0 : index
    %c0_83 = arith.constant 0 : index
    %116 = vector.load %arg15[%c0_82, %c0_83] : memref<1x8xf32, #tpu.memory_space<vmem>>, vector<1x8xf32>
    %117 = vector.broadcast %116 : vector<1x8xf32> to vector<128x8xf32>
    %118 = arith.addf %115, %117 : vector<128x8xf32>
    %cst_84 = arith.constant 5.000000e-01 : f32
    %119 = vector.broadcast %cst_84 : f32 to vector<128x8xf32>
    %120 = arith.mulf %119, %118 : vector<128x8xf32>
    %cst_85 = arith.constant 0.707106769 : f32
    %121 = vector.broadcast %cst_85 : f32 to vector<128x8xf32>
    %122 = arith.mulf %118, %121 : vector<128x8xf32>
    %123 = math.erf %122 : vector<128x8xf32>
    %cst_86 = arith.constant 1.000000e+00 : f32
    %124 = vector.broadcast %cst_86 : f32 to vector<128x8xf32>
    %125 = arith.addf %124, %123 : vector<128x8xf32>
    %126 = arith.mulf %120, %125 : vector<128x8xf32>
    %c0_87 = arith.constant 0 : index
    %c0_88 = arith.constant 0 : index
    %127 = vector.load %arg16[%c0_87, %c0_88] : memref<8x32xf32, #tpu.memory_space<vmem>>, vector<8x32xf32>
    %cst_89 = arith.constant dense<0.000000e+00> : vector<128x32xf32>
    %128 = tpu.matmul %126, %127, %cst_89 {dimension_numbers = #tpu.dot_dimension_numbers<[1], [0], [0], [1], [0, 0, 1, 1], [], []>} : vector<128x8xf32>, vector<8x32xf32>, vector<128x32xf32> -> vector<128x32xf32>
    %129 = arith.addf %113, %128 : vector<128x32xf32>
    %c0_90 = arith.constant 0 : index
    %c0_91 = arith.constant 0 : index
    %130 = vector.load %arg17[%c0_90, %c0_91] : memref<1x32xf32, #tpu.memory_space<vmem>>, vector<1x32xf32>
    %131 = vector.broadcast %130 : vector<1x32xf32> to vector<128x32xf32>
    %132 = arith.addf %129, %131 : vector<128x32xf32>
    %133 = arith.addf %0, %132 : vector<128x32xf32>
    %cst_92 = arith.constant 0.000000e+00 : f32
    %134 = vector.broadcast %cst_92 : f32 to vector<176x32xf32>
    %c0_93 = arith.constant 0 : index
    %c0_94 = arith.constant 0 : index
    %135 = vector.load %arg39[%c0_93, %c0_94] : memref<176x32xf32, #tpu.memory_space<vmem>>, vector<176x32xf32>
    tpu.vector_store %arg39[%c0_93, %c0_94], %134 {strides = array<i32>} : memref<176x32xf32, #tpu.memory_space<vmem>>, vector<176x32xf32>,
    %136 = vector.extract_strided_slice %133 {offsets = [0, 0], sizes = [64, 32], strides = [1, 1]} : vector<128x32xf32> to vector<64x32xf32>
    %c16 = arith.constant 16 : index
    %c0_95 = arith.constant 0 : index
    %137 = vector.load %arg39[%c16, %c0_95] : memref<176x32xf32, #tpu.memory_space<vmem>>, vector<64x32xf32>
    tpu.vector_store %arg39[%c16, %c0_95], %136 {strides = array<i32>} : memref<176x32xf32, #tpu.memory_space<vmem>>, vector<64x32xf32>,
    %138 = vector.extract_strided_slice %133 {offsets = [64, 0], sizes = [64, 32], strides = [1, 1]} : vector<128x32xf32> to vector<64x32xf32>
    %c96 = arith.constant 96 : index
    %c0_96 = arith.constant 0 : index
    %139 = vector.load %arg39[%c96, %c0_96] : memref<176x32xf32, #tpu.memory_space<vmem>>, vector<64x32xf32>
    tpu.vector_store %arg39[%c96, %c0_96], %138 {strides = array<i32>} : memref<176x32xf32, #tpu.memory_space<vmem>>, vector<64x32xf32>,
    %cst_97 = arith.constant 0.000000e+00 : f32
    %140 = vector.broadcast %cst_97 : f32 to vector<64x32xf32>
    %cst_98 = arith.constant 0.000000e+00 : f32
    %141 = vector.broadcast %cst_98 : f32 to vector<64x32xf32>
    %c7 = arith.constant 7 : index
    %c0_99 = arith.constant 0 : index
    %142 = vector.load %arg39[%c7, %c0_99] : memref<176x32xf32, #tpu.memory_space<vmem>>, vector<64x32xf32>
    %c0_100 = arith.constant 0 : index
    %c0_101 = arith.constant 0 : index
    %c0_102 = arith.constant 0 : index
    %143 = vector.load %arg18[%c0_100, %c0_101, %c0_102] : memref<9x1x32xf32, #tpu.memory_space<vmem>>, vector<1x1x32xf32>
    %144 = vector.shape_cast %143 : vector<1x1x32xf32> to vector<1x32xf32>
    %145 = vector.broadcast %144 : vector<1x32xf32> to vector<64x32xf32>
    %146 = arith.mulf %142, %145 : vector<64x32xf32>
    %147 = arith.addf %141, %146 : vector<64x32xf32>
    %c15 = arith.constant 15 : index
    %c0_103 = arith.constant 0 : index
    %148 = vector.load %arg39[%c15, %c0_103] : memref<176x32xf32, #tpu.memory_space<vmem>>, vector<64x32xf32>
    %c3 = arith.constant 3 : index
    %c0_104 = arith.constant 0 : index
    %c0_105 = arith.constant 0 : index
    %149 = vector.load %arg18[%c3, %c0_104, %c0_105] : memref<9x1x32xf32, #tpu.memory_space<vmem>>, vector<1x1x32xf32>
    %150 = vector.shape_cast %149 : vector<1x1x32xf32> to vector<1x32xf32>
    %151 = vector.broadcast %150 : vector<1x32xf32> to vector<64x32xf32>
    %152 = arith.mulf %148, %151 : vector<64x32xf32>
    %153 = arith.addf %147, %152 : vector<64x32xf32>
    %c23 = arith.constant 23 : index
    %c0_106 = arith.constant 0 : index
    %154 = vector.load %arg39[%c23, %c0_106] : memref<176x32xf32, #tpu.memory_space<vmem>>, vector<64x32xf32>
    %c6 = arith.constant 6 : index
    %c0_107 = arith.constant 0 : index
    %c0_108 = arith.constant 0 : index
    %155 = vector.load %arg18[%c6, %c0_107, %c0_108] : memref<9x1x32xf32, #tpu.memory_space<vmem>>, vector<1x1x32xf32>
    %156 = vector.shape_cast %155 : vector<1x1x32xf32> to vector<1x32xf32>
    %157 = vector.broadcast %156 : vector<1x32xf32> to vector<64x32xf32>
    %158 = arith.mulf %154, %157 : vector<64x32xf32>
    %159 = arith.addf %153, %158 : vector<64x32xf32>
    %c0_109 = arith.constant 0 : index
    %c0_110 = arith.constant 0 : index
    %c0_111 = arith.constant 0 : index
    %160 = vector.load %arg20[%c0_109, %c0_110, %c0_111] : memref<2x64x1xf32, #tpu.memory_space<vmem>>, vector<1x64x1xf32>
    %161 = vector.shape_cast %160 : vector<1x64x1xf32> to vector<64x1xf32>
    %162 = vector.broadcast %161 : vector<64x1xf32> to vector<64x32xf32>
    %163 = arith.mulf %159, %162 : vector<64x32xf32>
    %164 = arith.addf %140, %163 : vector<64x32xf32>
    %cst_112 = arith.constant 0.000000e+00 : f32
    %165 = vector.broadcast %cst_112 : f32 to vector<64x32xf32>
    %c8 = arith.constant 8 : index
    %c0_113 = arith.constant 0 : index
    %166 = vector.load %arg39[%c8, %c0_113] : memref<176x32xf32, #tpu.memory_space<vmem>>, vector<64x32xf32>
    %c1_114 = arith.constant 1 : index
    %c0_115 = arith.constant 0 : index
    %c0_116 = arith.constant 0 : index
    %167 = vector.load %arg18[%c1_114, %c0_115, %c0_116] : memref<9x1x32xf32, #tpu.memory_space<vmem>>, vector<1x1x32xf32>
    %168 = vector.shape_cast %167 : vector<1x1x32xf32> to vector<1x32xf32>
    %169 = vector.broadcast %168 : vector<1x32xf32> to vector<64x32xf32>
    %170 = arith.mulf %166, %169 : vector<64x32xf32>
    %171 = arith.addf %165, %170 : vector<64x32xf32>
    %c16_117 = arith.constant 16 : index
    %c0_118 = arith.constant 0 : index
    %172 = vector.load %arg39[%c16_117, %c0_118] : memref<176x32xf32, #tpu.memory_space<vmem>>, vector<64x32xf32>
    %c4 = arith.constant 4 : index
    %c0_119 = arith.constant 0 : index
    %c0_120 = arith.constant 0 : index
    %173 = vector.load %arg18[%c4, %c0_119, %c0_120] : memref<9x1x32xf32, #tpu.memory_space<vmem>>, vector<1x1x32xf32>
    %174 = vector.shape_cast %173 : vector<1x1x32xf32> to vector<1x32xf32>
    %175 = vector.broadcast %174 : vector<1x32xf32> to vector<64x32xf32>
    %176 = arith.mulf %172, %175 : vector<64x32xf32>
    %177 = arith.addf %171, %176 : vector<64x32xf32>
    %c24 = arith.constant 24 : index
    %c0_121 = arith.constant 0 : index
    %178 = vector.load %arg39[%c24, %c0_121] : memref<176x32xf32, #tpu.memory_space<vmem>>, vector<64x32xf32>
    %c7_122 = arith.constant 7 : index
    %c0_123 = arith.constant 0 : index
    %c0_124 = arith.constant 0 : index
    %179 = vector.load %arg18[%c7_122, %c0_123, %c0_124] : memref<9x1x32xf32, #tpu.memory_space<vmem>>, vector<1x1x32xf32>
    %180 = vector.shape_cast %179 : vector<1x1x32xf32> to vector<1x32xf32>
    %181 = vector.broadcast %180 : vector<1x32xf32> to vector<64x32xf32>
    %182 = arith.mulf %178, %181 : vector<64x32xf32>
    %183 = arith.addf %177, %182 : vector<64x32xf32>
    %184 = arith.addf %164, %183 : vector<64x32xf32>
    %cst_125 = arith.constant 0.000000e+00 : f32
    %185 = vector.broadcast %cst_125 : f32 to vector<64x32xf32>
    %c9 = arith.constant 9 : index
    %c0_126 = arith.constant 0 : index
    %186 = vector.load %arg39[%c9, %c0_126] : memref<176x32xf32, #tpu.memory_space<vmem>>, vector<64x32xf32>
    %c2 = arith.constant 2 : index
    %c0_127 = arith.constant 0 : index
    %c0_128 = arith.constant 0 : index
    %187 = vector.load %arg18[%c2, %c0_127, %c0_128] : memref<9x1x32xf32, #tpu.memory_space<vmem>>, vector<1x1x32xf32>
    %188 = vector.shape_cast %187 : vector<1x1x32xf32> to vector<1x32xf32>
    %189 = vector.broadcast %188 : vector<1x32xf32> to vector<64x32xf32>
    %190 = arith.mulf %186, %189 : vector<64x32xf32>
    %191 = arith.addf %185, %190 : vector<64x32xf32>
    %c17 = arith.constant 17 : index
    %c0_129 = arith.constant 0 : index
    %192 = vector.load %arg39[%c17, %c0_129] : memref<176x32xf32, #tpu.memory_space<vmem>>, vector<64x32xf32>
    %c5 = arith.constant 5 : index
    %c0_130 = arith.constant 0 : index
    %c0_131 = arith.constant 0 : index
    %193 = vector.load %arg18[%c5, %c0_130, %c0_131] : memref<9x1x32xf32, #tpu.memory_space<vmem>>, vector<1x1x32xf32>
    %194 = vector.shape_cast %193 : vector<1x1x32xf32> to vector<1x32xf32>
    %195 = vector.broadcast %194 : vector<1x32xf32> to vector<64x32xf32>
    %196 = arith.mulf %192, %195 : vector<64x32xf32>
    %197 = arith.addf %191, %196 : vector<64x32xf32>
    %c25 = arith.constant 25 : index
    %c0_132 = arith.constant 0 : index
    %198 = vector.load %arg39[%c25, %c0_132] : memref<176x32xf32, #tpu.memory_space<vmem>>, vector<64x32xf32>
    %c8_133 = arith.constant 8 : index
    %c0_134 = arith.constant 0 : index
    %c0_135 = arith.constant 0 : index
    %199 = vector.load %arg18[%c8_133, %c0_134, %c0_135] : memref<9x1x32xf32, #tpu.memory_space<vmem>>, vector<1x1x32xf32>
    %200 = vector.shape_cast %199 : vector<1x1x32xf32> to vector<1x32xf32>
    %201 = vector.broadcast %200 : vector<1x32xf32> to vector<64x32xf32>
    %202 = arith.mulf %198, %201 : vector<64x32xf32>
    %203 = arith.addf %197, %202 : vector<64x32xf32>
    %c1_136 = arith.constant 1 : index
    %c0_137 = arith.constant 0 : index
    %c0_138 = arith.constant 0 : index
    %204 = vector.load %arg20[%c1_136, %c0_137, %c0_138] : memref<2x64x1xf32, #tpu.memory_space<vmem>>, vector<1x64x1xf32>
    %205 = vector.shape_cast %204 : vector<1x64x1xf32> to vector<64x1xf32>
    %206 = vector.broadcast %205 : vector<64x1xf32> to vector<64x32xf32>
    %207 = arith.mulf %203, %206 : vector<64x32xf32>
    %208 = arith.addf %184, %207 : vector<64x32xf32>
    %c0_139 = arith.constant 0 : index
    %c0_140 = arith.constant 0 : index
    %209 = vector.load %arg19[%c0_139, %c0_140] : memref<1x32xf32, #tpu.memory_space<vmem>>, vector<1x32xf32>
    %210 = vector.broadcast %209 : vector<1x32xf32> to vector<64x32xf32>
    %211 = arith.addf %208, %210 : vector<64x32xf32>
    %c0_141 = arith.constant 0 : index
    %c0_142 = arith.constant 0 : index
    %212 = vector.load %arg40[%c0_141, %c0_142] : memref<128x32xf32, #tpu.memory_space<vmem>>, vector<64x32xf32>
    tpu.vector_store %arg40[%c0_141, %c0_142], %211 {strides = array<i32>} : memref<128x32xf32, #tpu.memory_space<vmem>>, vector<64x32xf32>,
    %cst_143 = arith.constant 0.000000e+00 : f32
    %213 = vector.broadcast %cst_143 : f32 to vector<64x32xf32>
    %cst_144 = arith.constant 0.000000e+00 : f32
    %214 = vector.broadcast %cst_144 : f32 to vector<64x32xf32>
    %c87 = arith.constant 87 : index
    %c0_145 = arith.constant 0 : index
    %215 = vector.load %arg39[%c87, %c0_145] : memref<176x32xf32, #tpu.memory_space<vmem>>, vector<64x32xf32>
    %c0_146 = arith.constant 0 : index
    %c0_147 = arith.constant 0 : index
    %c0_148 = arith.constant 0 : index
    %216 = vector.load %arg18[%c0_146, %c0_147, %c0_148] : memref<9x1x32xf32, #tpu.memory_space<vmem>>, vector<1x1x32xf32>
    %217 = vector.shape_cast %216 : vector<1x1x32xf32> to vector<1x32xf32>
    %218 = vector.broadcast %217 : vector<1x32xf32> to vector<64x32xf32>
    %219 = arith.mulf %215, %218 : vector<64x32xf32>
    %220 = arith.addf %214, %219 : vector<64x32xf32>
    %c95 = arith.constant 95 : index
    %c0_149 = arith.constant 0 : index
    %221 = vector.load %arg39[%c95, %c0_149] : memref<176x32xf32, #tpu.memory_space<vmem>>, vector<64x32xf32>
    %c3_150 = arith.constant 3 : index
    %c0_151 = arith.constant 0 : index
    %c0_152 = arith.constant 0 : index
    %222 = vector.load %arg18[%c3_150, %c0_151, %c0_152] : memref<9x1x32xf32, #tpu.memory_space<vmem>>, vector<1x1x32xf32>
    %223 = vector.shape_cast %222 : vector<1x1x32xf32> to vector<1x32xf32>
    %224 = vector.broadcast %223 : vector<1x32xf32> to vector<64x32xf32>
    %225 = arith.mulf %221, %224 : vector<64x32xf32>
    %226 = arith.addf %220, %225 : vector<64x32xf32>
    %c103 = arith.constant 103 : index
    %c0_153 = arith.constant 0 : index
    %227 = vector.load %arg39[%c103, %c0_153] : memref<176x32xf32, #tpu.memory_space<vmem>>, vector<64x32xf32>
    %c6_154 = arith.constant 6 : index
    %c0_155 = arith.constant 0 : index
    %c0_156 = arith.constant 0 : index
    %228 = vector.load %arg18[%c6_154, %c0_155, %c0_156] : memref<9x1x32xf32, #tpu.memory_space<vmem>>, vector<1x1x32xf32>
    %229 = vector.shape_cast %228 : vector<1x1x32xf32> to vector<1x32xf32>
    %230 = vector.broadcast %229 : vector<1x32xf32> to vector<64x32xf32>
    %231 = arith.mulf %227, %230 : vector<64x32xf32>
    %232 = arith.addf %226, %231 : vector<64x32xf32>
    %c0_157 = arith.constant 0 : index
    %c0_158 = arith.constant 0 : index
    %c0_159 = arith.constant 0 : index
    %233 = vector.load %arg20[%c0_157, %c0_158, %c0_159] : memref<2x64x1xf32, #tpu.memory_space<vmem>>, vector<1x64x1xf32>
    %234 = vector.shape_cast %233 : vector<1x64x1xf32> to vector<64x1xf32>
    %235 = vector.broadcast %234 : vector<64x1xf32> to vector<64x32xf32>
    %236 = arith.mulf %232, %235 : vector<64x32xf32>
    %237 = arith.addf %213, %236 : vector<64x32xf32>
    %cst_160 = arith.constant 0.000000e+00 : f32
    %238 = vector.broadcast %cst_160 : f32 to vector<64x32xf32>
    %c88 = arith.constant 88 : index
    %c0_161 = arith.constant 0 : index
    %239 = vector.load %arg39[%c88, %c0_161] : memref<176x32xf32, #tpu.memory_space<vmem>>, vector<64x32xf32>
    %c1_162 = arith.constant 1 : index
    %c0_163 = arith.constant 0 : index
    %c0_164 = arith.constant 0 : index
    %240 = vector.load %arg18[%c1_162, %c0_163, %c0_164] : memref<9x1x32xf32, #tpu.memory_space<vmem>>, vector<1x1x32xf32>
    %241 = vector.shape_cast %240 : vector<1x1x32xf32> to vector<1x32xf32>
    %242 = vector.broadcast %241 : vector<1x32xf32> to vector<64x32xf32>
    %243 = arith.mulf %239, %242 : vector<64x32xf32>
    %244 = arith.addf %238, %243 : vector<64x32xf32>
    %c96_165 = arith.constant 96 : index
    %c0_166 = arith.constant 0 : index
    %245 = vector.load %arg39[%c96_165, %c0_166] : memref<176x32xf32, #tpu.memory_space<vmem>>, vector<64x32xf32>
    %c4_167 = arith.constant 4 : index
    %c0_168 = arith.constant 0 : index
    %c0_169 = arith.constant 0 : index
    %246 = vector.load %arg18[%c4_167, %c0_168, %c0_169] : memref<9x1x32xf32, #tpu.memory_space<vmem>>, vector<1x1x32xf32>
    %247 = vector.shape_cast %246 : vector<1x1x32xf32> to vector<1x32xf32>
    %248 = vector.broadcast %247 : vector<1x32xf32> to vector<64x32xf32>
    %249 = arith.mulf %245, %248 : vector<64x32xf32>
    %250 = arith.addf %244, %249 : vector<64x32xf32>
    %c104 = arith.constant 104 : index
    %c0_170 = arith.constant 0 : index
    %251 = vector.load %arg39[%c104, %c0_170] : memref<176x32xf32, #tpu.memory_space<vmem>>, vector<64x32xf32>
    %c7_171 = arith.constant 7 : index
    %c0_172 = arith.constant 0 : index
    %c0_173 = arith.constant 0 : index
    %252 = vector.load %arg18[%c7_171, %c0_172, %c0_173] : memref<9x1x32xf32, #tpu.memory_space<vmem>>, vector<1x1x32xf32>
    %253 = vector.shape_cast %252 : vector<1x1x32xf32> to vector<1x32xf32>
    %254 = vector.broadcast %253 : vector<1x32xf32> to vector<64x32xf32>
    %255 = arith.mulf %251, %254 : vector<64x32xf32>
    %256 = arith.addf %250, %255 : vector<64x32xf32>
    %257 = arith.addf %237, %256 : vector<64x32xf32>
    %cst_174 = arith.constant 0.000000e+00 : f32
    %258 = vector.broadcast %cst_174 : f32 to vector<64x32xf32>
    %c89 = arith.constant 89 : index
    %c0_175 = arith.constant 0 : index
    %259 = vector.load %arg39[%c89, %c0_175] : memref<176x32xf32, #tpu.memory_space<vmem>>, vector<64x32xf32>
    %c2_176 = arith.constant 2 : index
    %c0_177 = arith.constant 0 : index
    %c0_178 = arith.constant 0 : index
    %260 = vector.load %arg18[%c2_176, %c0_177, %c0_178] : memref<9x1x32xf32, #tpu.memory_space<vmem>>, vector<1x1x32xf32>
    %261 = vector.shape_cast %260 : vector<1x1x32xf32> to vector<1x32xf32>
    %262 = vector.broadcast %261 : vector<1x32xf32> to vector<64x32xf32>
    %263 = arith.mulf %259, %262 : vector<64x32xf32>
    %264 = arith.addf %258, %263 : vector<64x32xf32>
    %c97 = arith.constant 97 : index
    %c0_179 = arith.constant 0 : index
    %265 = vector.load %arg39[%c97, %c0_179] : memref<176x32xf32, #tpu.memory_space<vmem>>, vector<64x32xf32>
    %c5_180 = arith.constant 5 : index
    %c0_181 = arith.constant 0 : index
    %c0_182 = arith.constant 0 : index
    %266 = vector.load %arg18[%c5_180, %c0_181, %c0_182] : memref<9x1x32xf32, #tpu.memory_space<vmem>>, vector<1x1x32xf32>
    %267 = vector.shape_cast %266 : vector<1x1x32xf32> to vector<1x32xf32>
    %268 = vector.broadcast %267 : vector<1x32xf32> to vector<64x32xf32>
    %269 = arith.mulf %265, %268 : vector<64x32xf32>
    %270 = arith.addf %264, %269 : vector<64x32xf32>
    %c105 = arith.constant 105 : index
    %c0_183 = arith.constant 0 : index
    %271 = vector.load %arg39[%c105, %c0_183] : memref<176x32xf32, #tpu.memory_space<vmem>>, vector<64x32xf32>
    %c8_184 = arith.constant 8 : index
    %c0_185 = arith.constant 0 : index
    %c0_186 = arith.constant 0 : index
    %272 = vector.load %arg18[%c8_184, %c0_185, %c0_186] : memref<9x1x32xf32, #tpu.memory_space<vmem>>, vector<1x1x32xf32>
    %273 = vector.shape_cast %272 : vector<1x1x32xf32> to vector<1x32xf32>
    %274 = vector.broadcast %273 : vector<1x32xf32> to vector<64x32xf32>
    %275 = arith.mulf %271, %274 : vector<64x32xf32>
    %276 = arith.addf %270, %275 : vector<64x32xf32>
    %c1_187 = arith.constant 1 : index
    %c0_188 = arith.constant 0 : index
    %c0_189 = arith.constant 0 : index
    %277 = vector.load %arg20[%c1_187, %c0_188, %c0_189] : memref<2x64x1xf32, #tpu.memory_space<vmem>>, vector<1x64x1xf32>
    %278 = vector.shape_cast %277 : vector<1x64x1xf32> to vector<64x1xf32>
    %279 = vector.broadcast %278 : vector<64x1xf32> to vector<64x32xf32>
    %280 = arith.mulf %276, %279 : vector<64x32xf32>
    %281 = arith.addf %257, %280 : vector<64x32xf32>
    %c0_190 = arith.constant 0 : index
    %c0_191 = arith.constant 0 : index
    %282 = vector.load %arg19[%c0_190, %c0_191] : memref<1x32xf32, #tpu.memory_space<vmem>>, vector<1x32xf32>
    %283 = vector.broadcast %282 : vector<1x32xf32> to vector<64x32xf32>
    %284 = arith.addf %281, %283 : vector<64x32xf32>
    %c64 = arith.constant 64 : index
    %c0_192 = arith.constant 0 : index
    %285 = vector.load %arg40[%c64, %c0_192] : memref<128x32xf32, #tpu.memory_space<vmem>>, vector<64x32xf32>
    tpu.vector_store %arg40[%c64, %c0_192], %284 {strides = array<i32>} : memref<128x32xf32, #tpu.memory_space<vmem>>, vector<64x32xf32>,
    %c0_193 = arith.constant 0 : index
    %c0_194 = arith.constant 0 : index
    %286 = vector.load %arg40[%c0_193, %c0_194] : memref<128x32xf32, #tpu.memory_space<vmem>>, vector<128x32xf32>
    %c0_195 = arith.constant 0 : index
    %c0_196 = arith.constant 0 : index
    %287 = vector.load %arg21[%c0_195, %c0_196] : memref<32x32xf32, #tpu.memory_space<vmem>>, vector<32x32xf32>
    %cst_197 = arith.constant dense<0.000000e+00> : vector<128x32xf32>
    %288 = tpu.matmul %286, %287, %cst_197 {dimension_numbers = #tpu.dot_dimension_numbers<[1], [0], [0], [1], [0, 0, 1, 1], [], []>} : vector<128x32xf32>, vector<32x32xf32>, vector<128x32xf32> -> vector<128x32xf32>
    %c0_198 = arith.constant 0 : index
    %c0_199 = arith.constant 0 : index
    %289 = vector.load %arg22[%c0_198, %c0_199] : memref<10x32xf32, #tpu.memory_space<vmem>>, vector<10x32xf32>
    %cst_200 = arith.constant dense<0.000000e+00> : vector<128x32xf32>
    %290 = tpu.matmul %1, %289, %cst_200 {dimension_numbers = #tpu.dot_dimension_numbers<[1], [0], [0], [1], [0, 0, 1, 1], [], []>} : vector<128x10xf32>, vector<10x32xf32>, vector<128x32xf32> -> vector<128x32xf32>
    %291 = arith.addf %288, %290 : vector<128x32xf32>
    %c0_201 = arith.constant 0 : index
    %c0_202 = arith.constant 0 : index
    %292 = vector.load %arg23[%c0_201, %c0_202] : memref<1x32xf32, #tpu.memory_space<vmem>>, vector<1x32xf32>
    %293 = vector.broadcast %292 : vector<1x32xf32> to vector<128x32xf32>
    %294 = arith.addf %291, %293 : vector<128x32xf32>
    %cst_203 = arith.constant dense<0.000000e+00> : vector<128xf32>
    %295 = vector.multi_reduction <add>, %286, %cst_203 [1] : vector<128x32xf32> to vector<128xf32>
    %296 = vector.shape_cast %295 : vector<128xf32> to vector<128x1xf32>
    %cst_204 = arith.constant 3.200000e+01 : f32
    %297 = vector.broadcast %cst_204 : f32 to vector<128x1xf32>
    %298 = arith.divf %296, %297 : vector<128x1xf32>
    %299 = vector.broadcast %298 : vector<128x1xf32> to vector<128x32xf32>
    %300 = arith.subf %286, %299 : vector<128x32xf32>
    %301 = arith.mulf %300, %300 : vector<128x32xf32>
    %cst_205 = arith.constant dense<0.000000e+00> : vector<128xf32>
    %302 = vector.multi_reduction <add>, %301, %cst_205 [1] : vector<128x32xf32> to vector<128xf32>
    %303 = vector.shape_cast %302 : vector<128xf32> to vector<128x1xf32>
    %cst_206 = arith.constant 3.200000e+01 : f32
    %304 = vector.broadcast %cst_206 : f32 to vector<128x1xf32>
    %305 = arith.divf %303, %304 : vector<128x1xf32>
    %306 = vector.broadcast %298 : vector<128x1xf32> to vector<128x32xf32>
    %307 = arith.subf %286, %306 : vector<128x32xf32>
    %cst_207 = arith.constant 9.99999974E-6 : f32
    %308 = vector.broadcast %cst_207 : f32 to vector<128x1xf32>
    %309 = arith.addf %305, %308 : vector<128x1xf32>
    %310 = math.rsqrt %309 : vector<128x1xf32>
    %311 = vector.broadcast %310 : vector<128x1xf32> to vector<128x32xf32>
    %312 = arith.mulf %307, %311 : vector<128x32xf32>
    %c0_208 = arith.constant 0 : index
    %c0_209 = arith.constant 0 : index
    %313 = vector.load %arg24[%c0_208, %c0_209] : memref<1x32xf32, #tpu.memory_space<vmem>>, vector<1x32xf32>
    %314 = vector.broadcast %313 : vector<1x32xf32> to vector<128x32xf32>
    %315 = arith.mulf %312, %314 : vector<128x32xf32>
    %c0_210 = arith.constant 0 : index
    %c0_211 = arith.constant 0 : index
    %316 = vector.load %arg25[%c0_210, %c0_211] : memref<1x32xf32, #tpu.memory_space<vmem>>, vector<1x32xf32>
    %317 = vector.broadcast %316 : vector<1x32xf32> to vector<128x32xf32>
    %318 = arith.addf %315, %317 : vector<128x32xf32>
    %c0_212 = arith.constant 0 : index
    %c0_213 = arith.constant 0 : index
    %319 = vector.load %arg26[%c0_212, %c0_213] : memref<32x128xf32, #tpu.memory_space<vmem>>, vector<32x128xf32>
    %cst_214 = arith.constant dense<0.000000e+00> : vector<128x128xf32>
    %320 = tpu.matmul %318, %319, %cst_214 {dimension_numbers = #tpu.dot_dimension_numbers<[1], [0], [0], [1], [0, 0, 1, 1], [], []>} : vector<128x32xf32>, vector<32x128xf32>, vector<128x128xf32> -> vector<128x128xf32>
    %c0_215 = arith.constant 0 : index
    %c0_216 = arith.constant 0 : index
    %321 = vector.load %arg27[%c0_215, %c0_216] : memref<1x128xf32, #tpu.memory_space<vmem>>, vector<1x128xf32>
    %322 = vector.broadcast %321 : vector<1x128xf32> to vector<128x128xf32>
    %323 = arith.addf %320, %322 : vector<128x128xf32>
    %cst_217 = arith.constant 5.000000e-01 : f32
    %324 = vector.broadcast %cst_217 : f32 to vector<128x128xf32>
    %325 = arith.mulf %324, %323 : vector<128x128xf32>
    %cst_218 = arith.constant 0.707106769 : f32
    %326 = vector.broadcast %cst_218 : f32 to vector<128x128xf32>
    %327 = arith.mulf %323, %326 : vector<128x128xf32>
    %328 = math.erf %327 : vector<128x128xf32>
    %cst_219 = arith.constant 1.000000e+00 : f32
    %329 = vector.broadcast %cst_219 : f32 to vector<128x128xf32>
    %330 = arith.addf %329, %328 : vector<128x128xf32>
    %331 = arith.mulf %325, %330 : vector<128x128xf32>
    %c0_220 = arith.constant 0 : index
    %c0_221 = arith.constant 0 : index
    %332 = vector.load %arg28[%c0_220, %c0_221] : memref<128x32xf32, #tpu.memory_space<vmem>>, vector<128x32xf32>
    %cst_222 = arith.constant dense<0.000000e+00> : vector<128x32xf32>
    %333 = tpu.matmul %331, %332, %cst_222 {dimension_numbers = #tpu.dot_dimension_numbers<[1], [0], [0], [1], [0, 0, 1, 1], [], []>} : vector<128x128xf32>, vector<128x32xf32>, vector<128x32xf32> -> vector<128x32xf32>
    %c0_223 = arith.constant 0 : index
    %c0_224 = arith.constant 0 : index
    %334 = vector.load %arg29[%c0_223, %c0_224] : memref<1x32xf32, #tpu.memory_space<vmem>>, vector<1x32xf32>
    %335 = vector.broadcast %334 : vector<1x32xf32> to vector<128x32xf32>
    %336 = arith.addf %333, %335 : vector<128x32xf32>
    %c0_225 = arith.constant 0 : index
    %c0_226 = arith.constant 0 : index
    %337 = vector.load %arg30[%c0_225, %c0_226] : memref<32x8xf32, #tpu.memory_space<vmem>>, vector<32x8xf32>
    %cst_227 = arith.constant dense<0.000000e+00> : vector<128x8xf32>
    %338 = tpu.matmul %286, %337, %cst_227 {dimension_numbers = #tpu.dot_dimension_numbers<[1], [0], [0], [1], [0, 0, 1, 1], [], []>} : vector<128x32xf32>, vector<32x8xf32>, vector<128x8xf32> -> vector<128x8xf32>
    %c0_228 = arith.constant 0 : index
    %c0_229 = arith.constant 0 : index
    %339 = vector.load %arg31[%c0_228, %c0_229] : memref<1x8xf32, #tpu.memory_space<vmem>>, vector<1x8xf32>
    %340 = vector.broadcast %339 : vector<1x8xf32> to vector<128x8xf32>
    %341 = arith.addf %338, %340 : vector<128x8xf32>
    %cst_230 = arith.constant 5.000000e-01 : f32
    %342 = vector.broadcast %cst_230 : f32 to vector<128x8xf32>
    %343 = arith.mulf %342, %341 : vector<128x8xf32>
    %cst_231 = arith.constant 0.707106769 : f32
    %344 = vector.broadcast %cst_231 : f32 to vector<128x8xf32>
    %345 = arith.mulf %341, %344 : vector<128x8xf32>
    %346 = math.erf %345 : vector<128x8xf32>
    %cst_232 = arith.constant 1.000000e+00 : f32
    %347 = vector.broadcast %cst_232 : f32 to vector<128x8xf32>
    %348 = arith.addf %347, %346 : vector<128x8xf32>
    %349 = arith.mulf %343, %348 : vector<128x8xf32>
    %c0_233 = arith.constant 0 : index
    %c0_234 = arith.constant 0 : index
    %350 = vector.load %arg32[%c0_233, %c0_234] : memref<8x32xf32, #tpu.memory_space<vmem>>, vector<8x32xf32>
    %cst_235 = arith.constant dense<0.000000e+00> : vector<128x32xf32>
    %351 = tpu.matmul %349, %350, %cst_235 {dimension_numbers = #tpu.dot_dimension_numbers<[1], [0], [0], [1], [0, 0, 1, 1], [], []>} : vector<128x8xf32>, vector<8x32xf32>, vector<128x32xf32> -> vector<128x32xf32>
    %c0_236 = arith.constant 0 : index
    %c0_237 = arith.constant 0 : index
    %352 = vector.load %arg33[%c0_236, %c0_237] : memref<1x32xf32, #tpu.memory_space<vmem>>, vector<1x32xf32>
    %353 = vector.broadcast %352 : vector<1x32xf32> to vector<128x32xf32>
    %354 = arith.addf %351, %353 : vector<128x32xf32>
    %c0_238 = arith.constant 0 : index
    %c0_239 = arith.constant 0 : index
    %355 = vector.load %arg34[%c0_238, %c0_239] : memref<32x8xf32, #tpu.memory_space<vmem>>, vector<32x8xf32>
    %cst_240 = arith.constant dense<0.000000e+00> : vector<128x8xf32>
    %356 = tpu.matmul %294, %355, %cst_240 {dimension_numbers = #tpu.dot_dimension_numbers<[1], [0], [0], [1], [0, 0, 1, 1], [], []>} : vector<128x32xf32>, vector<32x8xf32>, vector<128x8xf32> -> vector<128x8xf32>
    %c0_241 = arith.constant 0 : index
    %c0_242 = arith.constant 0 : index
    %357 = vector.load %arg35[%c0_241, %c0_242] : memref<1x8xf32, #tpu.memory_space<vmem>>, vector<1x8xf32>
    %358 = vector.broadcast %357 : vector<1x8xf32> to vector<128x8xf32>
    %359 = arith.addf %356, %358 : vector<128x8xf32>
    %cst_243 = arith.constant 5.000000e-01 : f32
    %360 = vector.broadcast %cst_243 : f32 to vector<128x8xf32>
    %361 = arith.mulf %360, %359 : vector<128x8xf32>
    %cst_244 = arith.constant 0.707106769 : f32
    %362 = vector.broadcast %cst_244 : f32 to vector<128x8xf32>
    %363 = arith.mulf %359, %362 : vector<128x8xf32>
    %364 = math.erf %363 : vector<128x8xf32>
    %cst_245 = arith.constant 1.000000e+00 : f32
    %365 = vector.broadcast %cst_245 : f32 to vector<128x8xf32>
    %366 = arith.addf %365, %364 : vector<128x8xf32>
    %367 = arith.mulf %361, %366 : vector<128x8xf32>
    %c0_246 = arith.constant 0 : index
    %c0_247 = arith.constant 0 : index
    %368 = vector.load %arg36[%c0_246, %c0_247] : memref<8x32xf32, #tpu.memory_space<vmem>>, vector<8x32xf32>
    %cst_248 = arith.constant dense<0.000000e+00> : vector<128x32xf32>
    %369 = tpu.matmul %367, %368, %cst_248 {dimension_numbers = #tpu.dot_dimension_numbers<[1], [0], [0], [1], [0, 0, 1, 1], [], []>} : vector<128x8xf32>, vector<8x32xf32>, vector<128x32xf32> -> vector<128x32xf32>
    %c0_249 = arith.constant 0 : index
    %c0_250 = arith.constant 0 : index
    %370 = vector.load %arg37[%c0_249, %c0_250] : memref<1x32xf32, #tpu.memory_space<vmem>>, vector<1x32xf32>
    %371 = vector.broadcast %370 : vector<1x32xf32> to vector<128x32xf32>
    %372 = arith.addf %369, %371 : vector<128x32xf32>
    %373 = arith.addf %286, %336 : vector<128x32xf32>
    %cst_251 = arith.constant 3.500000e-01 : f32
    %374 = vector.broadcast %cst_251 : f32 to vector<128x32xf32>
    %375 = arith.mulf %374, %354 : vector<128x32xf32>
    %376 = arith.addf %373, %375 : vector<128x32xf32>
    %cst_252 = arith.constant 1.500000e-01 : f32
    %377 = vector.broadcast %cst_252 : f32 to vector<128x32xf32>
    %378 = arith.mulf %377, %372 : vector<128x32xf32>
    %379 = arith.addf %376, %378 : vector<128x32xf32>
    %c0_253 = arith.constant 0 : index
    %c0_254 = arith.constant 0 : index
    %380 = vector.load %arg38[%c0_253, %c0_254] : memref<128x32xf32, #tpu.memory_space<vmem>>, vector<128x32xf32>
    tpu.vector_store %arg38[%c0_253, %c0_254], %379 {strides = array<i32>} : memref<128x32xf32, #tpu.memory_space<vmem>>, vector<128x32xf32>,
    return
  }
  func.func @transform_0(%arg0: i32) -> (i32, i32) {
    %c0_i32 = arith.constant 0 : i32
    %c0_i32_0 = arith.constant 0 : i32
    %c0_i32_1 = arith.constant 0 : i32
    return %c0_i32, %c0_i32_0 : i32, i32
  }
  func.func @transform_1(%arg0: i32) -> (i32, i32) {
    %c0_i32 = arith.constant 0 : i32
    %c0_i32_0 = arith.constant 0 : i32
    %c0_i32_1 = arith.constant 0 : i32
    return %c0_i32, %c0_i32_0 : i32, i32
  }
  func.func @transform_2(%arg0: i32) -> (i32, i32) {
    %c0_i32 = arith.constant 0 : i32
    %c0_i32_0 = arith.constant 0 : i32
    %c0_i32_1 = arith.constant 0 : i32
    return %c0_i32, %c0_i32_0 : i32, i32
  }
  func.func @transform_3(%arg0: i32) -> (i32, i32) {
    %c0_i32 = arith.constant 0 : i32
    %c0_i32_0 = arith.constant 0 : i32
    %c0_i32_1 = arith.constant 0 : i32
    return %c0_i32, %c0_i32_0 : i32, i32
  }
  func.func @transform_4(%arg0: i32) -> (i32, i32, i32) {
    %c0_i32 = arith.constant 0 : i32
    %c0_i32_0 = arith.constant 0 : i32
    %c0_i32_1 = arith.constant 0 : i32
    %c0_i32_2 = arith.constant 0 : i32
    return %c0_i32, %c0_i32_0, %c0_i32_1 : i32, i32, i32
  }
  func.func @transform_5(%arg0: i32) -> (i32, i32, i32) {
    %c0_i32 = arith.constant 0 : i32
    %c0_i32_0 = arith.constant 0 : i32
    %c0_i32_1 = arith.constant 0 : i32
    %c0_i32_2 = arith.constant 0 : i32
    return %c0_i32, %c0_i32_0, %c0_i32_1 : i32, i32, i32
  }
  func.func @transform_6(%arg0: i32) -> (i32, i32, i32) {
    %c0_i32 = arith.constant 0 : i32
    %c0_i32_0 = arith.constant 0 : i32
    %c0_i32_1 = arith.constant 0 : i32
    %c0_i32_2 = arith.constant 0 : i32
    return %c0_i32, %c0_i32_0, %c0_i32_1 : i32, i32, i32
  }
  func.func @transform_7(%arg0: i32) -> (i32, i32, i32) {
    %c0_i32 = arith.constant 0 : i32
    %c0_i32_0 = arith.constant 0 : i32
    %c0_i32_1 = arith.constant 0 : i32
    %c0_i32_2 = arith.constant 0 : i32
    return %c0_i32, %c0_i32_0, %c0_i32_1 : i32, i32, i32
  }
  func.func @transform_8(%arg0: i32) -> (i32, i32, i32) {
    %c0_i32 = arith.constant 0 : i32
    %c0_i32_0 = arith.constant 0 : i32
    %c0_i32_1 = arith.constant 0 : i32
    %c0_i32_2 = arith.constant 0 : i32
    return %c0_i32, %c0_i32_0, %c0_i32_1 : i32, i32, i32
  }
  func.func @transform_9(%arg0: i32) -> (i32, i32, i32) {
    %c0_i32 = arith.constant 0 : i32
    %c0_i32_0 = arith.constant 0 : i32
    %c0_i32_1 = arith.constant 0 : i32
    %c0_i32_2 = arith.constant 0 : i32
    return %c0_i32, %c0_i32_0, %c0_i32_1 : i32, i32, i32
  }
  func.func @transform_10(%arg0: i32) -> (i32, i32, i32) {
    %c0_i32 = arith.constant 0 : i32
    %c0_i32_0 = arith.constant 0 : i32
    %c0_i32_1 = arith.constant 0 : i32
    %c0_i32_2 = arith.constant 0 : i32
    return %c0_i32, %c0_i32_0, %c0_i32_1 : i32, i32, i32
  }
  func.func @transform_11(%arg0: i32) -> (i32, i32) {
    %c0_i32 = arith.constant 0 : i32
    %c0_i32_0 = arith.constant 0 : i32
    %c0_i32_1 = arith.constant 0 : i32
    return %c0_i32, %c0_i32_0 : i32, i32
  }
  func.func @transform_12(%arg0: i32) -> (i32, i32, i32) {
    %c0_i32 = arith.constant 0 : i32
    %c0_i32_0 = arith.constant 0 : i32
    %c0_i32_1 = arith.constant 0 : i32
    %c0_i32_2 = arith.constant 0 : i32
    return %c0_i32, %c0_i32_0, %c0_i32_1 : i32, i32, i32
  }
  func.func @transform_13(%arg0: i32) -> (i32, i32) {
    %c0_i32 = arith.constant 0 : i32
    %c0_i32_0 = arith.constant 0 : i32
    %c0_i32_1 = arith.constant 0 : i32
    return %c0_i32, %c0_i32_0 : i32, i32
  }
  func.func @transform_14(%arg0: i32) -> (i32, i32) {
    %c0_i32 = arith.constant 0 : i32
    %c0_i32_0 = arith.constant 0 : i32
    %c0_i32_1 = arith.constant 0 : i32
    return %c0_i32, %c0_i32_0 : i32, i32
  }
  func.func @transform_15(%arg0: i32) -> (i32, i32) {
    %c0_i32 = arith.constant 0 : i32
    %c0_i32_0 = arith.constant 0 : i32
    %c0_i32_1 = arith.constant 0 : i32
    return %c0_i32, %c0_i32_0 : i32, i32
  }
  func.func @transform_16(%arg0: i32) -> (i32, i32) {
    %c0_i32 = arith.constant 0 : i32
    %c0_i32_0 = arith.constant 0 : i32
    %c0_i32_1 = arith.constant 0 : i32
    return %c0_i32, %c0_i32_0 : i32, i32
  }
  func.func @transform_17(%arg0: i32) -> (i32, i32, i32) {
    %c0_i32 = arith.constant 0 : i32
    %c0_i32_0 = arith.constant 0 : i32
    %c0_i32_1 = arith.constant 0 : i32
    %c0_i32_2 = arith.constant 0 : i32
    return %c0_i32, %c0_i32_0, %c0_i32_1 : i32, i32, i32
  }
  func.func @transform_18(%arg0: i32) -> (i32, i32) {
    %c0_i32 = arith.constant 0 : i32
    %c0_i32_0 = arith.constant 0 : i32
    %c0_i32_1 = arith.constant 0 : i32
    return %c0_i32, %c0_i32_0 : i32, i32
  }
  func.func @transform_19(%arg0: i32) -> (i32, i32, i32) {
    %c0_i32 = arith.constant 0 : i32
    %c0_i32_0 = arith.constant 0 : i32
    %c0_i32_1 = arith.constant 0 : i32
    %c0_i32_2 = arith.constant 0 : i32
    return %c0_i32, %c0_i32_0, %c0_i32_1 : i32, i32, i32
  }
  func.func @transform_20(%arg0: i32) -> (i32, i32) {
    %c0_i32 = arith.constant 0 : i32
    %c0_i32_0 = arith.constant 0 : i32
    %c0_i32_1 = arith.constant 0 : i32
    return %c0_i32, %c0_i32_0 : i32, i32
  }
  func.func @transform_21(%arg0: i32) -> (i32, i32) {
    %c0_i32 = arith.constant 0 : i32
    %c0_i32_0 = arith.constant 0 : i32
    %c0_i32_1 = arith.constant 0 : i32
    return %c0_i32, %c0_i32_0 : i32, i32
  }
  func.func @transform_22(%arg0: i32) -> (i32, i32) {
    %c0_i32 = arith.constant 0 : i32
    %c0_i32_0 = arith.constant 0 : i32
    %c0_i32_1 = arith.constant 0 : i32
    return %c0_i32, %c0_i32_0 : i32, i32
  }
  func.func @transform_23(%arg0: i32) -> (i32, i32) {
    %c0_i32 = arith.constant 0 : i32
    %c0_i32_0 = arith.constant 0 : i32
    %c0_i32_1 = arith.constant 0 : i32
    return %c0_i32, %c0_i32_0 : i32, i32
  }
  func.func @transform_24(%arg0: i32) -> (i32, i32) {
    %c0_i32 = arith.constant 0 : i32
    %c0_i32_0 = arith.constant 0 : i32
    %c0_i32_1 = arith.constant 0 : i32
    return %c0_i32, %c0_i32_0 : i32, i32
  }
  func.func @transform_25(%arg0: i32) -> (i32, i32) {
    %c0_i32 = arith.constant 0 : i32
    %c0_i32_0 = arith.constant 0 : i32
    %c0_i32_1 = arith.constant 0 : i32
    return %c0_i32, %c0_i32_0 : i32, i32
  }
  func.func @transform_26(%arg0: i32) -> (i32, i32) {
    %c0_i32 = arith.constant 0 : i32
    %c0_i32_0 = arith.constant 0 : i32
    %c0_i32_1 = arith.constant 0 : i32
    return %c0_i32, %c0_i32_0 : i32, i32
  }
  func.func @transform_27(%arg0: i32) -> (i32, i32) {
    %c0_i32 = arith.constant 0 : i32
    %c0_i32_0 = arith.constant 0 : i32
    %c0_i32_1 = arith.constant 0 : i32
    return %c0_i32, %c0_i32_0 : i32, i32
  }
  func.func @transform_28(%arg0: i32) -> (i32, i32) {
    %c0_i32 = arith.constant 0 : i32
    %c0_i32_0 = arith.constant 0 : i32
    %c0_i32_1 = arith.constant 0 : i32
    return %c0_i32, %c0_i32_0 : i32, i32
  }
  func.func @transform_29(%arg0: i32) -> (i32, i32) {
    %c0_i32 = arith.constant 0 : i32
    %c0_i32_0 = arith.constant 0 : i32
    %c0_i32_1 = arith.constant 0 : i32
    return %c0_i32, %c0_i32_0 : i32, i32
  }
  func.func @transform_30(%arg0: i32) -> (i32, i32) {
    %c0_i32 = arith.constant 0 : i32
    %c0_i32_0 = arith.constant 0 : i32
    %c0_i32_1 = arith.constant 0 : i32
    return %c0_i32, %c0_i32_0 : i32, i32
  }
  func.func @transform_31(%arg0: i32) -> (i32, i32) {
    %c0_i32 = arith.constant 0 : i32
    %c0_i32_0 = arith.constant 0 : i32
    %c0_i32_1 = arith.constant 0 : i32
    return %c0_i32, %c0_i32_0 : i32, i32
  }
  func.func @transform_32(%arg0: i32) -> (i32, i32) {
    %c0_i32 = arith.constant 0 : i32
    %c0_i32_0 = arith.constant 0 : i32
    %c0_i32_1 = arith.constant 0 : i32
    return %c0_i32, %c0_i32_0 : i32, i32
  }
  func.func @transform_33(%arg0: i32) -> (i32, i32) {
    %c0_i32 = arith.constant 0 : i32
    %c0_i32_0 = arith.constant 0 : i32
    %c0_i32_1 = arith.constant 0 : i32
    return %c0_i32, %c0_i32_0 : i32, i32
  }
  func.func @transform_34(%arg0: i32) -> (i32, i32) {
    %c0_i32 = arith.constant 0 : i32
    %c0_i32_0 = arith.constant 0 : i32
    %c0_i32_1 = arith.constant 0 : i32
    return %c0_i32, %c0_i32_0 : i32, i32
  }
  func.func @transform_35(%arg0: i32) -> (i32, i32) {
    %c0_i32 = arith.constant 0 : i32
    %c0_i32_0 = arith.constant 0 : i32
    %c0_i32_1 = arith.constant 0 : i32
    return %c0_i32, %c0_i32_0 : i32, i32
  }
  func.func @transform_36(%arg0: i32) -> (i32, i32) {
    %c0_i32 = arith.constant 0 : i32
    %c0_i32_0 = arith.constant 0 : i32
    %c0_i32_1 = arith.constant 0 : i32
    return %c0_i32, %c0_i32_0 : i32, i32
  }
  func.func @transform_37(%arg0: i32) -> (i32, i32) {
    %c0_i32 = arith.constant 0 : i32
    %c0_i32_0 = arith.constant 0 : i32
    %c0_i32_1 = arith.constant 0 : i32
    return %c0_i32, %c0_i32_0 : i32, i32
  }
}

</mosaic_0001>

<llo_original>
// kernel: tpu_custom_call.1
$region0: #{tpu_custom_call.1}
  #allocation0 [shape = 'u32[]', space=smem, size = 0x4, offset = 0x4, fixed_abs, tag = 'smem constant byte address 0x4 - core index']
  #allocation1 [shape = 'u32[144,128]{1,0:T(1,128)}', space=vmem, size = 0x12000, scoped, tag = 'internal scratch']
  #allocation2 [shape = 'f32[176,32]{1,0:T(8,128)}', space=vmem, size = 0x16000, scoped, tag = 'scratch operand']
  #allocation3 [shape = 'f32[128,32]{1,0:T(8,128)}', space=vmem, size = 0x10000, scoped, tag = 'scratch operand']
  %s0 = inlined_call_operand.smem [shape: u32[38], index: -1, kind: input, shape index: {}]
  %s1 = sld [smem:[%s0]]
  %s2 = scalar_lea.smem %s0, 1
  %s3 = sld [smem:[%s2]]
  %s4 = scalar_lea.smem %s0, 2
  %s5 = sld [smem:[%s4]]
  %s6 = scalar_lea.smem %s0, 3
  %s7 = sld [smem:[%s6]]
  %s8 = scalar_lea.smem %s0, 4
  %s9 = sld [smem:[%s8]]
  %s10 = scalar_lea.smem %s0, 5
  %s11 = sld [smem:[%s10]]
  %s12 = scalar_lea.smem %s0, 6
  %s13 = sld [smem:[%s12]]
  %s14 = scalar_lea.smem %s0, 7
  %s15 = sld [smem:[%s14]]
  %s16 = scalar_lea.smem %s0, 8
  %s17 = sld [smem:[%s16]]
  %s18 = scalar_lea.smem %s0, 9
  %s19 = sld [smem:[%s18]]
  %s20 = scalar_lea.smem %s0, 10
  %s21 = sld [smem:[%s20]]
  %s22 = scalar_lea.smem %s0, 11
  %s23 = sld [smem:[%s22]]
  %s24 = scalar_lea.smem %s0, 12
  %s25 = sld [smem:[%s24]]
  %s26 = scalar_lea.smem %s0, 13
  %s27 = sld [smem:[%s26]]
  %s28 = scalar_lea.smem %s0, 14
  %s29 = sld [smem:[%s28]]
  %s30 = scalar_lea.smem %s0, 15
  %s31 = sld [smem:[%s30]]
  %s32 = scalar_lea.smem %s0, 16
  %s33 = sld [smem:[%s32]]
  %s34 = scalar_lea.smem %s0, 17
  %s35 = sld [smem:[%s34]]
  %s36 = scalar_lea.smem %s0, 18
  %s37 = sld [smem:[%s36]]
  %s38 = scalar_lea.smem %s0, 19
  %s39 = sld [smem:[%s38]]
  %s40 = scalar_lea.smem %s0, 20
  %s41 = sld [smem:[%s40]]
  %s42 = scalar_lea.smem %s0, 21
  %s43 = sld [smem:[%s42]]
  %s44 = scalar_lea.smem %s0, 22
  %s45 = sld [smem:[%s44]]
  %s46 = scalar_lea.smem %s0, 23
  %s47 = sld [smem:[%s46]]
  %s48 = scalar_lea.smem %s0, 24
  %s49 = sld [smem:[%s48]]
  %s50 = scalar_lea.smem %s0, 25
  %s51 = sld [smem:[%s50]]
  %s52 = scalar_lea.smem %s0, 26
  %s53 = sld [smem:[%s52]]
  %s54 = scalar_lea.smem %s0, 27
  %s55 = sld [smem:[%s54]]
  %s56 = scalar_lea.smem %s0, 28
  %s57 = sld [smem:[%s56]]
  %s58 = scalar_lea.smem %s0, 29
  %s59 = sld [smem:[%s58]]
  %s60 = scalar_lea.smem %s0, 30
  %s61 = sld [smem:[%s60]]
  %s62 = scalar_lea.smem %s0, 31
  %s63 = sld [smem:[%s62]]
  %s64 = scalar_lea.smem %s0, 32
  %s65 = sld [smem:[%s64]]
  %s66 = scalar_lea.smem %s0, 33
  %s67 = sld [smem:[%s66]]
  %s68 = scalar_lea.smem %s0, 34
  %s69 = sld [smem:[%s68]]
  %s70 = scalar_lea.smem %s0, 35
  %s71 = sld [smem:[%s70]]
  %s72 = scalar_lea.smem %s0, 36
  %s73 = sld [smem:[%s72]]
  %s74 = scalar_lea.smem %s0, 37
  %s75 = sld [smem:[%s74]]
  %s76 = sld [smem:[#allocation0]]
  $region158: #{tpu_custom_call.1} parent=0
    _
  %s78 = ssub.s32 1, %s76
  %s79 = scalar_select 0, %s78, %s76
  // Predicated region
  $region2: #{tpu_custom_call.1} parent=0 // pred_check
    _
  $region3: #{tpu_custom_call.1} parent=0 // pred_check_branch
    %81 = sbr.rel (0) target = $region5
  $region4: #{tpu_custom_call.1} parent=0 // pred_region
    _
  $region5: #{tpu_custom_call.1} parent=0 // pred_fallthru
    _
  // Predicated region
  $region6: #{tpu_custom_call.1} parent=0 // pred_check
    _
  $region7: #{tpu_custom_call.1} parent=0 // pred_check_branch
    %83 = sbr.rel (0) target = $region9
  $region8: #{tpu_custom_call.1} parent=0 // pred_region
    _
  $region9: #{tpu_custom_call.1} parent=0 // pred_fallthru
    _
  // Predicated region
  $region10: #{tpu_custom_call.1} parent=0 // pred_check
    _
  $region11: #{tpu_custom_call.1} parent=0 // pred_check_branch
    %85 = sbr.rel (0) target = $region13
  $region12: #{tpu_custom_call.1} parent=0 // pred_region
    _
  $region13: #{tpu_custom_call.1} parent=0 // pred_fallthru
    _
  // Predicated region
  $region14: #{tpu_custom_call.1} parent=0 // pred_check
    _
  $region15: #{tpu_custom_call.1} parent=0 // pred_check_branch
    %87 = sbr.rel (0) target = $region17
  $region16: #{tpu_custom_call.1} parent=0 // pred_region
    _
  $region17: #{tpu_custom_call.1} parent=0 // pred_fallthru
    _
  // Predicated region
  $region18: #{tpu_custom_call.1} parent=0 // pred_check
    _
  $region19: #{tpu_custom_call.1} parent=0 // pred_check_branch
    %89 = sbr.rel (0) target = $region21
  $region20: #{tpu_custom_call.1} parent=0 // pred_region
    _
  $region21: #{tpu_custom_call.1} parent=0 // pred_fallthru
    _
  // Predicated region
  $region22: #{tpu_custom_call.1} parent=0 // pred_check
    _
  $region23: #{tpu_custom_call.1} parent=0 // pred_check_branch
    %91 = sbr.rel (0) target = $region25
  $region24: #{tpu_custom_call.1} parent=0 // pred_region
    _
  $region25: #{tpu_custom_call.1} parent=0 // pred_fallthru
    _
  // Predicated region
  $region26: #{tpu_custom_call.1} parent=0 // pred_check
    _
  $region27: #{tpu_custom_call.1} parent=0 // pred_check_branch
    %93 = sbr.rel (0) target = $region29
  $region28: #{tpu_custom_call.1} parent=0 // pred_region
    _
  $region29: #{tpu_custom_call.1} parent=0 // pred_fallthru
    _
  // Predicated region
  $region30: #{tpu_custom_call.1} parent=0 // pred_check
    _
  $region31: #{tpu_custom_call.1} parent=0 // pred_check_branch
    %95 = sbr.rel (0) target = $region33
  $region32: #{tpu_custom_call.1} parent=0 // pred_region
    _
  $region33: #{tpu_custom_call.1} parent=0 // pred_fallthru
    _
  // Predicated region
  $region34: #{tpu_custom_call.1} parent=0 // pred_check
    _
  $region35: #{tpu_custom_call.1} parent=0 // pred_check_branch
    %97 = sbr.rel (0) target = $region37
  $region36: #{tpu_custom_call.1} parent=0 // pred_region
    _
  $region37: #{tpu_custom_call.1} parent=0 // pred_fallthru
    _
  // Predicated region
  $region38: #{tpu_custom_call.1} parent=0 // pred_check
    _
  $region39: #{tpu_custom_call.1} parent=0 // pred_check_branch
    %99 = sbr.rel (0) target = $region41
  $region40: #{tpu_custom_call.1} parent=0 // pred_region
    _
  $region41: #{tpu_custom_call.1} parent=0 // pred_fallthru
    _
  // Predicated region
  $region42: #{tpu_custom_call.1} parent=0 // pred_check
    _
  $region43: #{tpu_custom_call.1} parent=0 // pred_check_branch
    %101 = sbr.rel (0) target = $region45
  $region44: #{tpu_custom_call.1} parent=0 // pred_region
    _
  $region45: #{tpu_custom_call.1} parent=0 // pred_fallthru
    _
  // Predicated region
  $region46: #{tpu_custom_call.1} parent=0 // pred_check
    _
  $region47: #{tpu_custom_call.1} parent=0 // pred_check_branch
    %103 = sbr.rel (0) target = $region49
  $region48: #{tpu_custom_call.1} parent=0 // pred_region
    _
  $region49: #{tpu_custom_call.1} parent=0 // pred_fallthru
    _
  // Predicated region
  $region50: #{tpu_custom_call.1} parent=0 // pred_check
    _
  $region51: #{tpu_custom_call.1} parent=0 // pred_check_branch
    %105 = sbr.rel (0) target = $region53
  $region52: #{tpu_custom_call.1} parent=0 // pred_region
    _
  $region53: #{tpu_custom_call.1} parent=0 // pred_fallthru
    _
  // Predicated region
  $region54: #{tpu_custom_call.1} parent=0 // pred_check
    _
  $region55: #{tpu_custom_call.1} parent=0 // pred_check_branch
    %107 = sbr.rel (0) target = $region57
  $region56: #{tpu_custom_call.1} parent=0 // pred_region
    _
  $region57: #{tpu_custom_call.1} parent=0 // pred_fallthru
    _
  // Predicated region
  $region58: #{tpu_custom_call.1} parent=0 // pred_check
    _
  $region59: #{tpu_custom_call.1} parent=0 // pred_check_branch
    %109 = sbr.rel (0) target = $region61
  $region60: #{tpu_custom_call.1} parent=0 // pred_region
    _
  $region61: #{tpu_custom_call.1} parent=0 // pred_fallthru
    _
  // Predicated region
  $region62: #{tpu_custom_call.1} parent=0 // pred_check
    _
  $region63: #{tpu_custom_call.1} parent=0 // pred_check_branch
    %111 = sbr.rel (0) target = $region65
  $region64: #{tpu_custom_call.1} parent=0 // pred_region
    _
  $region65: #{tpu_custom_call.1} parent=0 // pred_fallthru
    _
  // Predicated region
  $region66: #{tpu_custom_call.1} parent=0 // pred_check
    _
  $region67: #{tpu_custom_call.1} parent=0 // pred_check_branch
    %113 = sbr.rel (0) target = $region69
  $region68: #{tpu_custom_call.1} parent=0 // pred_region
    _
  $region69: #{tpu_custom_call.1} parent=0 // pred_fallthru
    _
  // Predicated region
  $region70: #{tpu_custom_call.1} parent=0 // pred_check
    _
  $region71: #{tpu_custom_call.1} parent=0 // pred_check_branch
    %115 = sbr.rel (0) target = $region73
  $region72: #{tpu_custom_call.1} parent=0 // pred_region
    _
  $region73: #{tpu_custom_call.1} parent=0 // pred_fallthru
    _
  // Predicated region
  $region74: #{tpu_custom_call.1} parent=0 // pred_check
    _
  $region75: #{tpu_custom_call.1} parent=0 // pred_check_branch
    %117 = sbr.rel (0) target = $region77
  $region76: #{tpu_custom_call.1} parent=0 // pred_region
    _
  $region77: #{tpu_custom_call.1} parent=0 // pred_fallthru
    _
  // Predicated region
  $region78: #{tpu_custom_call.1} parent=0 // pred_check
    _
  $region79: #{tpu_custom_call.1} parent=0 // pred_check_branch
    %119 = sbr.rel (0) target = $region81
  $region80: #{tpu_custom_call.1} parent=0 // pred_region
    _
  $region81: #{tpu_custom_call.1} parent=0 // pred_fallthru
    _
  // Predicated region
  $region82: #{tpu_custom_call.1} parent=0 // pred_check
    _
  $region83: #{tpu_custom_call.1} parent=0 // pred_check_branch
    %121 = sbr.rel (0) target = $region85
  $region84: #{tpu_custom_call.1} parent=0 // pred_region
    _
  $region85: #{tpu_custom_call.1} parent=0 // pred_fallthru
    _
  // Predicated region
  $region86: #{tpu_custom_call.1} parent=0 // pred_check
    _
  $region87: #{tpu_custom_call.1} parent=0 // pred_check_branch
    %123 = sbr.rel (0) target = $region89
  $region88: #{tpu_custom_call.1} parent=0 // pred_region
    _
  $region89: #{tpu_custom_call.1} parent=0 // pred_fallthru
    _
  // Predicated region
  $region90: #{tpu_custom_call.1} parent=0 // pred_check
    _
  $region91: #{tpu_custom_call.1} parent=0 // pred_check_branch
    %125 = sbr.rel (0) target = $region93
  $region92: #{tpu_custom_call.1} parent=0 // pred_region
    _
  $region93: #{tpu_custom_call.1} parent=0 // pred_fallthru
    _
  // Predicated region
  $region94: #{tpu_custom_call.1} parent=0 // pred_check
    _
  $region95: #{tpu_custom_call.1} parent=0 // pred_check_branch
    %127 = sbr.rel (0) target = $region97
  $region96: #{tpu_custom_call.1} parent=0 // pred_region
    _
  $region97: #{tpu_custom_call.1} parent=0 // pred_fallthru
    _
  // Predicated region
  $region98: #{tpu_custom_call.1} parent=0 // pred_check
    _
  $region99: #{tpu_custom_call.1} parent=0 // pred_check_branch
    %129 = sbr.rel (0) target = $region101
  $region100: #{tpu_custom_call.1} parent=0 // pred_region
    _
  $region101: #{tpu_custom_call.1} parent=0 // pred_fallthru
    _
  // Predicated region
  $region102: #{tpu_custom_call.1} parent=0 // pred_check
    _
  $region103: #{tpu_custom_call.1} parent=0 // pred_check_branch
    %131 = sbr.rel (0) target = $region105
  $region104: #{tpu_custom_call.1} parent=0 // pred_region
    _
  $region105: #{tpu_custom_call.1} parent=0 // pred_fallthru
    _
  // Predicated region
  $region106: #{tpu_custom_call.1} parent=0 // pred_check
    _
  $region107: #{tpu_custom_call.1} parent=0 // pred_check_branch
    %133 = sbr.rel (0) target = $region109
  $region108: #{tpu_custom_call.1} parent=0 // pred_region
    _
  $region109: #{tpu_custom_call.1} parent=0 // pred_fallthru
    _
  // Predicated region
  $region110: #{tpu_custom_call.1} parent=0 // pred_check
    _
  $region111: #{tpu_custom_call.1} parent=0 // pred_check_branch
    %135 = sbr.rel (0) target = $region113
  $region112: #{tpu_custom_call.1} parent=0 // pred_region
    _
  $region113: #{tpu_custom_call.1} parent=0 // pred_fallthru
    _
  // Predicated region
  $region114: #{tpu_custom_call.1} parent=0 // pred_check
    _
  $region115: #{tpu_custom_call.1} parent=0 // pred_check_branch
    %137 = sbr.rel (0) target = $region117
  $region116: #{tpu_custom_call.1} parent=0 // pred_region
    _
  $region117: #{tpu_custom_call.1} parent=0 // pred_fallthru
    _
  // Predicated region
  $region118: #{tpu_custom_call.1} parent=0 // pred_check
    _
  $region119: #{tpu_custom_call.1} parent=0 // pred_check_branch
    %139 = sbr.rel (0) target = $region121
  $region120: #{tpu_custom_call.1} parent=0 // pred_region
    _
  $region121: #{tpu_custom_call.1} parent=0 // pred_fallthru
    _
  // Predicated region
  $region122: #{tpu_custom_call.1} parent=0 // pred_check
    _
  $region123: #{tpu_custom_call.1} parent=0 // pred_check_branch
    %141 = sbr.rel (0) target = $region125
  $region124: #{tpu_custom_call.1} parent=0 // pred_region
    _
  $region125: #{tpu_custom_call.1} parent=0 // pred_fallthru
    _
  // Predicated region
  $region126: #{tpu_custom_call.1} parent=0 // pred_check
    _
  $region127: #{tpu_custom_call.1} parent=0 // pred_check_branch
    %143 = sbr.rel (0) target = $region129
  $region128: #{tpu_custom_call.1} parent=0 // pred_region
    _
  $region129: #{tpu_custom_call.1} parent=0 // pred_fallthru
    _
  // Predicated region
  $region130: #{tpu_custom_call.1} parent=0 // pred_check
    _
  $region131: #{tpu_custom_call.1} parent=0 // pred_check_branch
    %145 = sbr.rel (0) target = $region133
  $region132: #{tpu_custom_call.1} parent=0 // pred_region
    _
  $region133: #{tpu_custom_call.1} parent=0 // pred_fallthru
    _
  // Predicated region
  $region134: #{tpu_custom_call.1} parent=0 // pred_check
    _
  $region135: #{tpu_custom_call.1} parent=0 // pred_check_branch
    %147 = sbr.rel (0) target = $region137
  $region136: #{tpu_custom_call.1} parent=0 // pred_region
    _
  $region137: #{tpu_custom_call.1} parent=0 // pred_fallthru
    _
  // Predicated region
  $region138: #{tpu_custom_call.1} parent=0 // pred_check
    _
  $region139: #{tpu_custom_call.1} parent=0 // pred_check_branch
    %149 = sbr.rel (0) target = $region141
  $region140: #{tpu_custom_call.1} parent=0 // pred_region
    _
  $region141: #{tpu_custom_call.1} parent=0 // pred_fallthru
    _
  // Predicated region
  $region142: #{tpu_custom_call.1} parent=0 // pred_check
    _
  $region143: #{tpu_custom_call.1} parent=0 // pred_check_branch
    %151 = sbr.rel (0) target = $region145
  $region144: #{tpu_custom_call.1} parent=0 // pred_region
    _
  $region145: #{tpu_custom_call.1} parent=0 // pred_fallthru
    _
  // Predicated region
  $region146: #{tpu_custom_call.1} parent=0 // pred_check
    _
  $region147: #{tpu_custom_call.1} parent=0 // pred_check_branch
    %153 = sbr.rel (0) target = $region149
  $region148: #{tpu_custom_call.1} parent=0 // pred_region
    _
  $region149: #{tpu_custom_call.1} parent=0 // pred_fallthru
    _
  %v154 = vld [vmem:[%s1] sm:$0xff]
  %v155 = vld [vmem:[%s1 + $0x8] sm:$0xff]
  %v156 = vld [vmem:[%s1 + $0x10] sm:$0xff]
  %v157 = vld [vmem:[%s1 + $0x18] sm:$0xff]
  %v158 = vld [vmem:[%s1 + $0x20] sm:$0xff]
  %v159 = vld [vmem:[%s1 + $0x28] sm:$0xff]
  %v160 = vld [vmem:[%s1 + $0x30] sm:$0xff]
  %v161 = vld [vmem:[%s1 + $0x38] sm:$0xff]
  %v162 = vld [vmem:[%s1 + $0x40] sm:$0xff]
  %v163 = vld [vmem:[%s1 + $0x48] sm:$0xff]
  %v164 = vld [vmem:[%s1 + $0x50] sm:$0xff]
  %v165 = vld [vmem:[%s1 + $0x58] sm:$0xff]
  %v166 = vld [vmem:[%s1 + $0x60] sm:$0xff]
  %v167 = vld [vmem:[%s1 + $0x68] sm:$0xff]
  %v168 = vld [vmem:[%s1 + $0x70] sm:$0xff]
  %v169 = vld [vmem:[%s1 + $0x78] sm:$0xff]
  %v170 = vld [vmem:[%s3] sm:$0xff]
  %v171 = vld [vmem:[%s3 + $0x8] sm:$0xff]
  %v172 = vld [vmem:[%s3 + $0x10] sm:$0xff]
  %v173 = vld [vmem:[%s3 + $0x18] sm:$0xff]
  %v174 = vld [vmem:[%s3 + $0x20] sm:$0xff]
  %v175 = vld [vmem:[%s3 + $0x28] sm:$0xff]
  %v176 = vld [vmem:[%s3 + $0x30] sm:$0xff]
  %v177 = vld [vmem:[%s3 + $0x38] sm:$0xff]
  %v178 = vld [vmem:[%s3 + $0x40] sm:$0xff]
  %v179 = vld [vmem:[%s3 + $0x48] sm:$0xff]
  %v180 = vld [vmem:[%s3 + $0x50] sm:$0xff]
  %v181 = vld [vmem:[%s3 + $0x58] sm:$0xff]
  %v182 = vld [vmem:[%s3 + $0x60] sm:$0xff]
  %v183 = vld [vmem:[%s3 + $0x68] sm:$0xff]
  %v184 = vld [vmem:[%s3 + $0x70] sm:$0xff]
  %v185 = vld [vmem:[%s3 + $0x78] sm:$0xff]
  %vm186 = vcmask 261120
  %v187 = vsel %vm186, %v154, 0.0
  %188 = vadd.xlane.f32.xlu0 %v187
  %v189 = vpop.xlane.xlu0 %188
  %v190 = vsel %vm186, %v155, 0.0
  %191 = vadd.xlane.f32.xlu0 %v190
  %v192 = vpop.xlane.xlu0 %191
  %v193 = vsel %vm186, %v156, 0.0
  %194 = vadd.xlane.f32.xlu0 %v193
  %v195 = vpop.xlane.xlu0 %194
  %v196 = vsel %vm186, %v157, 0.0
  %197 = vadd.xlane.f32.xlu0 %v196
  %v198 = vpop.xlane.xlu0 %197
  %v199 = vsel %vm186, %v158, 0.0
  %200 = vadd.xlane.f32.xlu0 %v199
  %v201 = vpop.xlane.xlu0 %200
  %v202 = vsel %vm186, %v159, 0.0
  %203 = vadd.xlane.f32.xlu0 %v202
  %v204 = vpop.xlane.xlu0 %203
  %v205 = vsel %vm186, %v160, 0.0
  %206 = vadd.xlane.f32.xlu0 %v205
  %v207 = vpop.xlane.xlu0 %206
  %v208 = vsel %vm186, %v161, 0.0
  %209 = vadd.xlane.f32.xlu0 %v208
  %v210 = vpop.xlane.xlu0 %209
  %v211 = vsel %vm186, %v162, 0.0
  %212 = vadd.xlane.f32.xlu0 %v211
  %v213 = vpop.xlane.xlu0 %212
  %v214 = vsel %vm186, %v163, 0.0
  %215 = vadd.xlane.f32.xlu0 %v214
  %v216 = vpop.xlane.xlu0 %215
  %v217 = vsel %vm186, %v164, 0.0
  %218 = vadd.xlane.f32.xlu0 %v217
  %v219 = vpop.xlane.xlu0 %218
  %v220 = vsel %vm186, %v165, 0.0
  %221 = vadd.xlane.f32.xlu0 %v220
  %v222 = vpop.xlane.xlu0 %221
  %v223 = vsel %vm186, %v166, 0.0
  %224 = vadd.xlane.f32.xlu0 %v223
  %v225 = vpop.xlane.xlu0 %224
  %v226 = vsel %vm186, %v167, 0.0
  %227 = vadd.xlane.f32.xlu0 %v226
  %v228 = vpop.xlane.xlu0 %227
  %v229 = vsel %vm186, %v168, 0.0
  %230 = vadd.xlane.f32.xlu0 %v229
  %v231 = vpop.xlane.xlu0 %230
  %v232 = vsel %vm186, %v169, 0.0
  %233 = vadd.xlane.f32.xlu0 %v232
  %v234 = vpop.xlane.xlu0 %233
  %v235 = vrcp.pop 32.0
  %v236 = vmul.f32 %v189, %v235
  %v237 = vmul.f32 %v192, %v235
  %v238 = vmul.f32 %v195, %v235
  %v239 = vmul.f32 %v198, %v235
  %v240 = vmul.f32 %v201, %v235
  %v241 = vmul.f32 %v204, %v235
  %v242 = vmul.f32 %v207, %v235
  %v243 = vmul.f32 %v210, %v235
  %v244 = vmul.f32 %v213, %v235
  %v245 = vmul.f32 %v216, %v235
  %v246 = vmul.f32 %v219, %v235
  %v247 = vmul.f32 %v222, %v235
  %v248 = vmul.f32 %v225, %v235
  %v249 = vmul.f32 %v228, %v235
  %v250 = vmul.f32 %v231, %v235
  %v251 = vmul.f32 %v234, %v235
  %v252 = vsub.f32 %v154, %v236
  %v253 = vsub.f32 %v155, %v237
  %v254 = vsub.f32 %v156, %v238
  %v255 = vsub.f32 %v157, %v239
  %v256 = vsub.f32 %v158, %v240
  %v257 = vsub.f32 %v159, %v241
  %v258 = vsub.f32 %v160, %v242
  %v259 = vsub.f32 %v161, %v243
  %v260 = vsub.f32 %v162, %v244
  %v261 = vsub.f32 %v163, %v245
  %v262 = vsub.f32 %v164, %v246
  %v263 = vsub.f32 %v165, %v247
  %v264 = vsub.f32 %v166, %v248
  %v265 = vsub.f32 %v167, %v249
  %v266 = vsub.f32 %v168, %v250
  %v267 = vsub.f32 %v169, %v251
  %v268 = vmul.f32 %v252, %v252
  %v269 = vmul.f32 %v253, %v253
  %v270 = vmul.f32 %v254, %v254
  %v271 = vmul.f32 %v255, %v255
  %v272 = vmul.f32 %v256, %v256
  %v273 = vmul.f32 %v257, %v257
  %v274 = vmul.f32 %v258, %v258
  %v275 = vmul.f32 %v259, %v259
  %v276 = vmul.f32 %v260, %v260
  %v277 = vmul.f32 %v261, %v261
  %v278 = vmul.f32 %v262, %v262
  %v279 = vmul.f32 %v263, %v263
  %v280 = vmul.f32 %v264, %v264
  %v281 = vmul.f32 %v265, %v265
  %v282 = vmul.f32 %v266, %v266
  %v283 = vmul.f32 %v267, %v267
  %v284 = vsel %vm186, %v268, 0.0
  %285 = vadd.xlane.f32.xlu0 %v284
  %v286 = vpop.xlane.xlu0 %285
  %v287 = vsel %vm186, %v269, 0.0
  %288 = vadd.xlane.f32.xlu0 %v287
  %v289 = vpop.xlane.xlu0 %288
  %v290 = vsel %vm186, %v270, 0.0
  %291 = vadd.xlane.f32.xlu0 %v290
  %v292 = vpop.xlane.xlu0 %291
  %v293 = vsel %vm186, %v271, 0.0
  %294 = vadd.xlane.f32.xlu0 %v293
  %v295 = vpop.xlane.xlu0 %294
  %v296 = vsel %vm186, %v272, 0.0
  %297 = vadd.xlane.f32.xlu0 %v296
  %v298 = vpop.xlane.xlu0 %297
  %v299 = vsel %vm186, %v273, 0.0
  %300 = vadd.xlane.f32.xlu0 %v299
  %v301 = vpop.xlane.xlu0 %300
  %v302 = vsel %vm186, %v274, 0.0
  %303 = vadd.xlane.f32.xlu0 %v302
  %v304 = vpop.xlane.xlu0 %303
  %v305 = vsel %vm186, %v275, 0.0
  %306 = vadd.xlane.f32.xlu0 %v305
  %v307 = vpop.xlane.xlu0 %306
  %v308 = vsel %vm186, %v276, 0.0
  %309 = vadd.xlane.f32.xlu0 %v308
  %v310 = vpop.xlane.xlu0 %309
  %v311 = vsel %vm186, %v277, 0.0
  %312 = vadd.xlane.f32.xlu0 %v311
  %v313 = vpop.xlane.xlu0 %312
  %v314 = vsel %vm186, %v278, 0.0
  %315 = vadd.xlane.f32.xlu0 %v314
  %v316 = vpop.xlane.xlu0 %315
  %v317 = vsel %vm186, %v279, 0.0
  %318 = vadd.xlane.f32.xlu0 %v317
  %v319 = vpop.xlane.xlu0 %318
  %v320 = vsel %vm186, %v280, 0.0
  %321 = vadd.xlane.f32.xlu0 %v320
  %v322 = vpop.xlane.xlu0 %321
  %v323 = vsel %vm186, %v281, 0.0
  %324 = vadd.xlane.f32.xlu0 %v323
  %v325 = vpop.xlane.xlu0 %324
  %v326 = vsel %vm186, %v282, 0.0
  %327 = vadd.xlane.f32.xlu0 %v326
  %v328 = vpop.xlane.xlu0 %327
  %v329 = vsel %vm186, %v283, 0.0
  %330 = vadd.xlane.f32.xlu0 %v329
  %v331 = vpop.xlane.xlu0 %330
  %v332 = vmul.f32 %v286, %v235
  %v333 = vmul.f32 %v289, %v235
  %v334 = vmul.f32 %v292, %v235
  %v335 = vmul.f32 %v295, %v235
  %v336 = vmul.f32 %v298, %v235
  %v337 = vmul.f32 %v301, %v235
  %v338 = vmul.f32 %v304, %v235
  %v339 = vmul.f32 %v307, %v235
  %v340 = vmul.f32 %v310, %v235
  %v341 = vmul.f32 %v313, %v235
  %v342 = vmul.f32 %v316, %v235
  %v343 = vmul.f32 %v319, %v235
  %v344 = vmul.f32 %v322, %v235
  %v345 = vmul.f32 %v325, %v235
  %v346 = vmul.f32 %v328, %v235
  %v347 = vmul.f32 %v331, %v235
  %v348 = vadd.f32 %v332, 1e-05
  %v349 = vadd.f32 %v333, 1e-05
  %v350 = vadd.f32 %v334, 1e-05
  %v351 = vadd.f32 %v335, 1e-05
  %v352 = vadd.f32 %v336, 1e-05
  %v353 = vadd.f32 %v337, 1e-05
  %v354 = vadd.f32 %v338, 1e-05
  %v355 = vadd.f32 %v339, 1e-05
  %v356 = vadd.f32 %v340, 1e-05
  %v357 = vadd.f32 %v341, 1e-05
  %v358 = vadd.f32 %v342, 1e-05
  %v359 = vadd.f32 %v343, 1e-05
  %v360 = vadd.f32 %v344, 1e-05
  %v361 = vadd.f32 %v345, 1e-05
  %v362 = vadd.f32 %v346, 1e-05
  %v363 = vadd.f32 %v347, 1e-05
  %v364 = vrsqrt.pop %v348
  %v365 = vrsqrt.pop %v349
  %v366 = vrsqrt.pop %v350
  %v367 = vrsqrt.pop %v351
  %v368 = vrsqrt.pop %v352
  %v369 = vrsqrt.pop %v353
  %v370 = vrsqrt.pop %v354
  %v371 = vrsqrt.pop %v355
  %v372 = vrsqrt.pop %v356
  %v373 = vrsqrt.pop %v357
  %v374 = vrsqrt.pop %v358
  %v375 = vrsqrt.pop %v359
  %v376 = vrsqrt.pop %v360
  %v377 = vrsqrt.pop %v361
  %v378 = vrsqrt.pop %v362
  %v379 = vrsqrt.pop %v363
  %v380 = vmul.f32 %v252, %v364
  %v381 = vmul.f32 %v253, %v365
  %v382 = vmul.f32 %v254, %v366
  %v383 = vmul.f32 %v255, %v367
  %v384 = vmul.f32 %v256, %v368
  %v385 = vmul.f32 %v257, %v369
  %v386 = vmul.f32 %v258, %v370
  %v387 = vmul.f32 %v259, %v371
  %v388 = vmul.f32 %v260, %v372
  %v389 = vmul.f32 %v261, %v373
  %v390 = vmul.f32 %v262, %v374
  %v391 = vmul.f32 %v263, %v375
  %v392 = vmul.f32 %v264, %v376
  %v393 = vmul.f32 %v265, %v377
  %v394 = vmul.f32 %v266, %v378
  %v395 = vmul.f32 %v267, %v379
  %v396 = vld [vmem:[%s5] sm:$0x1]
  %v398 = vlaneseq
  %v399 = vshrl.u32 %v398, 7
  %v400 = vsub.s32 0, %v399
  %v401 = vrot.slane %v396, %v400
  %v403 = vmul.f32 %v380, %v401
  %v404 = vmul.f32 %v381, %v401
  %v405 = vmul.f32 %v382, %v401
  %v406 = vmul.f32 %v383, %v401
  %v407 = vmul.f32 %v384, %v401
  %v408 = vmul.f32 %v385, %v401
  %v409 = vmul.f32 %v386, %v401
  %v410 = vmul.f32 %v387, %v401
  %v411 = vmul.f32 %v388, %v401
  %v412 = vmul.f32 %v389, %v401
  %v413 = vmul.f32 %v390, %v401
  %v414 = vmul.f32 %v391, %v401
  %v415 = vmul.f32 %v392, %v401
  %v416 = vmul.f32 %v393, %v401
  %v417 = vmul.f32 %v394, %v401
  %v418 = vmul.f32 %v395, %v401
  %v419 = vld [vmem:[%s7] sm:$0x1]
  %v421 = vlaneseq
  %v422 = vshrl.u32 %v421, 7
  %v423 = vsub.s32 0, %v422
  %v424 = vrot.slane %v419, %v423
  %v426 = vadd.f32 %v403, %v424
  %v427 = vadd.f32 %v404, %v424
  %v428 = vadd.f32 %v405, %v424
  %v429 = vadd.f32 %v406, %v424
  %v430 = vadd.f32 %v407, %v424
  %v431 = vadd.f32 %v408, %v424
  %v432 = vadd.f32 %v409, %v424
  %v433 = vadd.f32 %v410, %v424
  %v434 = vadd.f32 %v411, %v424
  %v435 = vadd.f32 %v412, %v424
  %v436 = vadd.f32 %v413, %v424
  %v437 = vadd.f32 %v414, %v424
  %v438 = vadd.f32 %v415, %v424
  %v439 = vadd.f32 %v416, %v424
  %v440 = vadd.f32 %v417, %v424
  %v441 = vadd.f32 %v418, %v424
  %v442 = vld [vmem:[%s9] sm:$0xff]
  %v443 = vld [vmem:[%s9 + $0x8] sm:$0xff]
  %v444 = vld [vmem:[%s9 + $0x10] sm:$0xff]
  %v445 = vld [vmem:[%s9 + $0x18] sm:$0xff]
  %v446 = vld [vmem:[%s15] sm:$0x1]
  %v448 = vlaneseq
  %v449 = vshrl.u32 %v448, 7
  %v450 = vsub.s32 0, %v449
  %v451 = vrot.slane %v446, %v450
  %v454 = vsel %vm186, %v426, 0
  %v457 = vsel %vm186, %v427, 0
  %v460 = vsel %vm186, %v428, 0
  %v463 = vsel %vm186, %v429, 0
  %v466 = vsel %vm186, %v430, 0
  %v469 = vsel %vm186, %v431, 0
  %v472 = vsel %vm186, %v432, 0
  %v475 = vsel %vm186, %v433, 0
  %v478 = vsel %vm186, %v434, 0
  %v481 = vsel %vm186, %v435, 0
  %v484 = vsel %vm186, %v436, 0
  %v487 = vsel %vm186, %v437, 0
  %v490 = vsel %vm186, %v438, 0
  %v493 = vsel %vm186, %v439, 0
  %v496 = vsel %vm186, %v440, 0
  %v499 = vsel %vm186, %v441, 0
  %501 = vmatprep.subr.mxu0 0.0
  %502 = vmatpush1.msra.mxu0 %v442
  %503 = vmatprep.subr.mxu0 0.0
  %504 = vmatpush1.msra.mxu0 %v443
  %505 = vmatprep.subr.mxu0 0.0
  %506 = vmatpush1.msra.mxu0 %v444
  %507 = vmatprep.subr.mxu0 0.0
  %508 = vmatpush1.msra.mxu0 %v445
  %509 = vmatprep.subr.mxu0 0.0
  %510 = vmatpush1.msra.mxu0 0.0
  %511 = vmatprep.subr.mxu0 0.0
  %512 = vmatpush1.msra.mxu0 0.0
  %513 = vmatprep.subr.mxu0 0.0
  %514 = vmatpush1.msra.mxu0 0.0
  %515 = vmatprep.subr.mxu0 0.0
  %516 = vmatpush1.msra.mxu0 0.0
  %517 = vmatprep.subr.mxu0 0.0
  %518 = vmatpush1.msra.mxu0 0.0
  %519 = vmatprep.subr.mxu0 0.0
  %520 = vmatpush1.msra.mxu0 0.0
  %521 = vmatprep.subr.mxu0 0.0
  %522 = vmatpush1.msra.mxu0 0.0
  %523 = vmatprep.subr.mxu0 0.0
  %524 = vmatpush1.msra.mxu0 0.0
  %525 = vmatprep.subr.mxu0 0.0
  %526 = vmatpush1.msra.mxu0 0.0
  %527 = vmatprep.subr.mxu0 0.0
  %528 = vmatpush1.msra.mxu0 0.0
  %529 = vmatprep.subr.mxu0 0.0
  %530 = vmatpush1.msra.mxu0 0.0
  %531 = vmatprep.subr.mxu0 0.0
  %532 = vmatpush1.msra.mxu0 0.0
  %533 = vmatprep.subr.mxu0 0.0
  %534 = vmatpush1.msra.mxu0 0.0
  %535 = vmatprep.subr.mxu0 0.0
  %536 = vmatpush1.msra.mxu0 0.0
  %537 = vmatprep.subr.mxu0 0.0
  %538 = vmatpush1.msra.mxu0 0.0
  %539 = vmatprep.subr.mxu0 0.0
  %540 = vmatpush1.msra.mxu0 0.0
  %541 = vmatprep.subr.mxu0 0.0
  %542 = vmatpush1.msra.mxu0 0.0
  %543 = vmatprep.subr.mxu0 0.0
  %544 = vmatpush1.msra.mxu0 0.0
  %545 = vmatprep.subr.mxu0 0.0
  %546 = vmatpush1.msra.mxu0 0.0
  %547 = vmatprep.subr.mxu0 0.0
  %548 = vmatpush1.msra.mxu0 0.0
  %549 = vmatprep.subr.mxu0 0.0
  %550 = vmatpush1.msra.mxu0 0.0
  %551 = vmatprep.subr.mxu0 0.0
  %552 = vmatpush1.msra.mxu0 0.0
  %553 = vmatprep.subr.mxu0 0.0
  %554 = vmatpush1.msra.mxu0 0.0
  %555 = vmatprep.subr.mxu0 0.0
  %556 = vmatpush1.msra.mxu0 0.0
  %557 = vmatprep.subr.mxu0 0.0
  %558 = vmatpush1.msra.mxu0 0.0
  %559 = vmatprep.subr.mxu0 0.0
  %560 = vmatpush1.msra.mxu0 0.0
  %561 = vmatprep.subr.mxu0 0.0
  %562 = vmatpush1.msra.mxu0 0.0
  %563 = vmatprep.subr.mxu0 0.0
  %564 = vmatpush1.msra.mxu0 0.0
  %565 = vmatprep.mubr.f32.mxu0 0.0
  %566 = vmatmul.mubr.f32.gmra.mrb[0].mxu0 %v454
  %v567 = vpop.f32.mrb[0].mxu0
  %v568 = vadd.f32 %v451, %v567
  %v569 = vpop.f32.mrb[0].mxu0
  %570 = vmatprep.mubr.f32.mxu0 0.0
  %571 = vmatmul.mubr.f32.gmra.mrb[0].mxu0 %v457
  %v572 = vpop.f32.mrb[0].mxu0
  %v573 = vadd.f32 %v451, %v572
  %v574 = vpop.f32.mrb[0].mxu0
  %575 = vmatprep.mubr.f32.mxu0 0.0
  %576 = vmatmul.mubr.f32.gmra.mrb[0].mxu0 %v460
  %v577 = vpop.f32.mrb[0].mxu0
  %v578 = vadd.f32 %v451, %v577
  %v579 = vpop.f32.mrb[0].mxu0
  %580 = vmatprep.mubr.f32.mxu0 0.0
  %581 = vmatmul.mubr.f32.gmra.mrb[0].mxu0 %v463
  %v582 = vpop.f32.mrb[0].mxu0
  %v583 = vadd.f32 %v451, %v582
  %v584 = vpop.f32.mrb[0].mxu0
  %585 = vmatprep.mubr.f32.mxu0 0.0
  %586 = vmatmul.mubr.f32.gmra.mrb[0].mxu0 %v466
  %v587 = vpop.f32.mrb[0].mxu0
  %v588 = vadd.f32 %v451, %v587
  %v589 = vpop.f32.mrb[0].mxu0
  %590 = vmatprep.mubr.f32.mxu0 0.0
  %591 = vmatmul.mubr.f32.gmra.mrb[0].mxu0 %v469
  %v592 = vpop.f32.mrb[0].mxu0
  %v593 = vadd.f32 %v451, %v592
  %v594 = vpop.f32.mrb[0].mxu0
  %595 = vmatprep.mubr.f32.mxu0 0.0
  %596 = vmatmul.mubr.f32.gmra.mrb[0].mxu0 %v472
  %v597 = vpop.f32.mrb[0].mxu0
  %v598 = vadd.f32 %v451, %v597
  %v599 = vpop.f32.mrb[0].mxu0
  %600 = vmatprep.mubr.f32.mxu0 0.0
  %601 = vmatmul.mubr.f32.gmra.mrb[0].mxu0 %v475
  %v602 = vpop.f32.mrb[0].mxu0
  %v603 = vadd.f32 %v451, %v602
  %v604 = vpop.f32.mrb[0].mxu0
  %605 = vmatprep.mubr.f32.mxu0 0.0
  %606 = vmatmul.mubr.f32.gmra.mrb[0].mxu0 %v478
  %v607 = vpop.f32.mrb[0].mxu0
  %v608 = vadd.f32 %v451, %v607
  %v609 = vpop.f32.mrb[0].mxu0
  %610 = vmatprep.mubr.f32.mxu0 0.0
  %611 = vmatmul.mubr.f32.gmra.mrb[0].mxu0 %v481
  %v612 = vpop.f32.mrb[0].mxu0
  %v613 = vadd.f32 %v451, %v612
  %v614 = vpop.f32.mrb[0].mxu0
  %615 = vmatprep.mubr.f32.mxu0 0.0
  %616 = vmatmul.mubr.f32.gmra.mrb[0].mxu0 %v484
  %v617 = vpop.f32.mrb[0].mxu0
  %v618 = vadd.f32 %v451, %v617
  %v619 = vpop.f32.mrb[0].mxu0
  %620 = vmatprep.mubr.f32.mxu0 0.0
  %621 = vmatmul.mubr.f32.gmra.mrb[0].mxu0 %v487
  %v622 = vpop.f32.mrb[0].mxu0
  %v623 = vadd.f32 %v451, %v622
  %v624 = vpop.f32.mrb[0].mxu0
  %625 = vmatprep.mubr.f32.mxu0 0.0
  %626 = vmatmul.mubr.f32.gmra.mrb[0].mxu0 %v490
  %v627 = vpop.f32.mrb[0].mxu0
  %v628 = vadd.f32 %v451, %v627
  %v629 = vpop.f32.mrb[0].mxu0
  %630 = vmatprep.mubr.f32.mxu0 0.0
  %631 = vmatmul.mubr.f32.gmra.mrb[0].mxu0 %v493
  %v632 = vpop.f32.mrb[0].mxu0
  %v633 = vadd.f32 %v451, %v632
  %v634 = vpop.f32.mrb[0].mxu0
  %635 = vmatprep.mubr.f32.mxu0 0.0
  %636 = vmatmul.mubr.f32.gmra.mrb[0].mxu0 %v496
  %v637 = vpop.f32.mrb[0].mxu0
  %v638 = vadd.f32 %v451, %v637
  %v639 = vpop.f32.mrb[0].mxu0
  %640 = vmatprep.mubr.f32.mxu0 0.0
  %641 = vmatmul.mubr.f32.gmra.mrb[0].mxu0 %v499
  %v642 = vpop.f32.mrb[0].mxu0
  %v643 = vadd.f32 %v451, %v642
  %v644 = vpop.f32.mrb[0].mxu0
  %645 = vdwg.mxu0
  %v646 = vld [vmem:[%s11] sm:$0xff]
  %v647 = vld [vmem:[%s11 + $0x8] sm:$0xff]
  %v648 = vld [vmem:[%s11 + $0x10] sm:$0xff]
  %v649 = vld [vmem:[%s11 + $0x18] sm:$0xff]
  %v650 = vld [vmem:[%s17] sm:$0x1]
  %v652 = vlaneseq
  %v653 = vshrl.u32 %v652, 7
  %v654 = vsub.s32 0, %v653
  %v655 = vrot.slane %v650, %v654
  %657 = vmatprep.subr.mxu0 0.0
  %658 = vmatpush1.msra.mxu0 %v646
  %659 = vmatprep.subr.mxu0 0.0
  %660 = vmatpush1.msra.mxu0 %v647
  %661 = vmatprep.subr.mxu0 0.0
  %662 = vmatpush1.msra.mxu0 %v648
  %663 = vmatprep.subr.mxu0 0.0
  %664 = vmatpush1.msra.mxu0 %v649
  %665 = vmatprep.subr.mxu0 0.0
  %666 = vmatpush1.msra.mxu0 0.0
  %667 = vmatprep.subr.mxu0 0.0
  %668 = vmatpush1.msra.mxu0 0.0
  %669 = vmatprep.subr.mxu0 0.0
  %670 = vmatpush1.msra.mxu0 0.0
  %671 = vmatprep.subr.mxu0 0.0
  %672 = vmatpush1.msra.mxu0 0.0
  %673 = vmatprep.subr.mxu0 0.0
  %674 = vmatpush1.msra.mxu0 0.0
  %675 = vmatprep.subr.mxu0 0.0
  %676 = vmatpush1.msra.mxu0 0.0
  %677 = vmatprep.subr.mxu0 0.0
  %678 = vmatpush1.msra.mxu0 0.0
  %679 = vmatprep.subr.mxu0 0.0
  %680 = vmatpush1.msra.mxu0 0.0
  %681 = vmatprep.subr.mxu0 0.0
  %682 = vmatpush1.msra.mxu0 0.0
  %683 = vmatprep.subr.mxu0 0.0
  %684 = vmatpush1.msra.mxu0 0.0
  %685 = vmatprep.subr.mxu0 0.0
  %686 = vmatpush1.msra.mxu0 0.0
  %687 = vmatprep.subr.mxu0 0.0
  %688 = vmatpush1.msra.mxu0 0.0
  %689 = vmatprep.subr.mxu0 0.0
  %690 = vmatpush1.msra.mxu0 0.0
  %691 = vmatprep.subr.mxu0 0.0
  %692 = vmatpush1.msra.mxu0 0.0
  %693 = vmatprep.subr.mxu0 0.0
  %694 = vmatpush1.msra.mxu0 0.0
  %695 = vmatprep.subr.mxu0 0.0
  %696 = vmatpush1.msra.mxu0 0.0
  %697 = vmatprep.subr.mxu0 0.0
  %698 = vmatpush1.msra.mxu0 0.0
  %699 = vmatprep.subr.mxu0 0.0
  %700 = vmatpush1.msra.mxu0 0.0
  %701 = vmatprep.subr.mxu0 0.0
  %702 = vmatpush1.msra.mxu0 0.0
  %703 = vmatprep.subr.mxu0 0.0
  %704 = vmatpush1.msra.mxu0 0.0
  %705 = vmatprep.subr.mxu0 0.0
  %706 = vmatpush1.msra.mxu0 0.0
  %707 = vmatprep.subr.mxu0 0.0
  %708 = vmatpush1.msra.mxu0 0.0
  %709 = vmatprep.subr.mxu0 0.0
  %710 = vmatpush1.msra.mxu0 0.0
  %711 = vmatprep.subr.mxu0 0.0
  %712 = vmatpush1.msra.mxu0 0.0
  %713 = vmatprep.subr.mxu0 0.0
  %714 = vmatpush1.msra.mxu0 0.0
  %715 = vmatprep.subr.mxu0 0.0
  %716 = vmatpush1.msra.mxu0 0.0
  %717 = vmatprep.subr.mxu0 0.0
  %718 = vmatpush1.msra.mxu0 0.0
  %719 = vmatprep.subr.mxu0 0.0
  %720 = vmatpush1.msra.mxu0 0.0
  %721 = vmatprep.mubr.f32.mxu0 0.0
  %722 = vmatmul.mubr.f32.gmra.mrb[0].mxu0 %v454
  %v723 = vpop.f32.mrb[0].mxu0
  %v724 = vadd.f32 %v655, %v723
  %v725 = vpop.f32.mrb[0].mxu0
  %726 = vmatprep.mubr.f32.mxu0 0.0
  %727 = vmatmul.mubr.f32.gmra.mrb[0].mxu0 %v457
  %v728 = vpop.f32.mrb[0].mxu0
  %v729 = vadd.f32 %v655, %v728
  %v730 = vpop.f32.mrb[0].mxu0
  %731 = vmatprep.mubr.f32.mxu0 0.0
  %732 = vmatmul.mubr.f32.gmra.mrb[0].mxu0 %v460
  %v733 = vpop.f32.mrb[0].mxu0
  %v734 = vadd.f32 %v655, %v733
  %v735 = vpop.f32.mrb[0].mxu0
  %736 = vmatprep.mubr.f32.mxu0 0.0
  %737 = vmatmul.mubr.f32.gmra.mrb[0].mxu0 %v463
  %v738 = vpop.f32.mrb[0].mxu0
  %v739 = vadd.f32 %v655, %v738
  %v740 = vpop.f32.mrb[0].mxu0
  %741 = vmatprep.mubr.f32.mxu0 0.0
  %742 = vmatmul.mubr.f32.gmra.mrb[0].mxu0 %v466
  %v743 = vpop.f32.mrb[0].mxu0
  %v744 = vadd.f32 %v655, %v743
  %v745 = vpop.f32.mrb[0].mxu0
  %746 = vmatprep.mubr.f32.mxu0 0.0
  %747 = vmatmul.mubr.f32.gmra.mrb[0].mxu0 %v469
  %v748 = vpop.f32.mrb[0].mxu0
  %v749 = vadd.f32 %v655, %v748
  %v750 = vpop.f32.mrb[0].mxu0
  %751 = vmatprep.mubr.f32.mxu0 0.0
  %752 = vmatmul.mubr.f32.gmra.mrb[0].mxu0 %v472
  %v753 = vpop.f32.mrb[0].mxu0
  %v754 = vadd.f32 %v655, %v753
  %v755 = vpop.f32.mrb[0].mxu0
  %756 = vmatprep.mubr.f32.mxu0 0.0
  %757 = vmatmul.mubr.f32.gmra.mrb[0].mxu0 %v475
  %v758 = vpop.f32.mrb[0].mxu0
  %v759 = vadd.f32 %v655, %v758
  %v760 = vpop.f32.mrb[0].mxu0
  %761 = vmatprep.mubr.f32.mxu0 0.0
  %762 = vmatmul.mubr.f32.gmra.mrb[0].mxu0 %v478
  %v763 = vpop.f32.mrb[0].mxu0
  %v764 = vadd.f32 %v655, %v763
  %v765 = vpop.f32.mrb[0].mxu0
  %766 = vmatprep.mubr.f32.mxu0 0.0
  %767 = vmatmul.mubr.f32.gmra.mrb[0].mxu0 %v481
  %v768 = vpop.f32.mrb[0].mxu0
  %v769 = vadd.f32 %v655, %v768
  %v770 = vpop.f32.mrb[0].mxu0
  %771 = vmatprep.mubr.f32.mxu0 0.0
  %772 = vmatmul.mubr.f32.gmra.mrb[0].mxu0 %v484
  %v773 = vpop.f32.mrb[0].mxu0
  %v774 = vadd.f32 %v655, %v773
  %v775 = vpop.f32.mrb[0].mxu0
  %776 = vmatprep.mubr.f32.mxu0 0.0
  %777 = vmatmul.mubr.f32.gmra.mrb[0].mxu0 %v487
  %v778 = vpop.f32.mrb[0].mxu0
  %v779 = vadd.f32 %v655, %v778
  %v780 = vpop.f32.mrb[0].mxu0
  %781 = vmatprep.mubr.f32.mxu0 0.0
  %782 = vmatmul.mubr.f32.gmra.mrb[0].mxu0 %v490
  %v783 = vpop.f32.mrb[0].mxu0
  %v784 = vadd.f32 %v655, %v783
  %v785 = vpop.f32.mrb[0].mxu0
  %786 = vmatprep.mubr.f32.mxu0 0.0
  %787 = vmatmul.mubr.f32.gmra.mrb[0].mxu0 %v493
  %v788 = vpop.f32.mrb[0].mxu0
  %v789 = vadd.f32 %v655, %v788
  %v790 = vpop.f32.mrb[0].mxu0
  %791 = vmatprep.mubr.f32.mxu0 0.0
  %792 = vmatmul.mubr.f32.gmra.mrb[0].mxu0 %v496
  %v793 = vpop.f32.mrb[0].mxu0
  %v794 = vadd.f32 %v655, %v793
  %v795 = vpop.f32.mrb[0].mxu0
  %796 = vmatprep.mubr.f32.mxu0 0.0
  %797 = vmatmul.mubr.f32.gmra.mrb[0].mxu0 %v499
  %v798 = vpop.f32.mrb[0].mxu0
  %v799 = vadd.f32 %v655, %v798
  %v800 = vpop.f32.mrb[0].mxu0
  %801 = vdwg.mxu0
  %v802 = vld [vmem:[%s13] sm:$0xff]
  %v803 = vld [vmem:[%s13 + $0x8] sm:$0xff]
  %v804 = vld [vmem:[%s13 + $0x10] sm:$0xff]
  %v805 = vld [vmem:[%s13 + $0x18] sm:$0xff]
  %v806 = vld [vmem:[%s19] sm:$0x1]
  %v808 = vlaneseq
  %v809 = vshrl.u32 %v808, 7
  %v810 = vsub.s32 0, %v809
  %v811 = vrot.slane %v806, %v810
  %813 = vmatprep.subr.mxu0 0.0
  %814 = vmatpush1.msra.mxu0 %v802
  %815 = vmatprep.subr.mxu0 0.0
  %816 = vmatpush1.msra.mxu0 %v803
  %817 = vmatprep.subr.mxu0 0.0
  %818 = vmatpush1.msra.mxu0 %v804
  %819 = vmatprep.subr.mxu0 0.0
  %820 = vmatpush1.msra.mxu0 %v805
  %821 = vmatprep.subr.mxu0 0.0
  %822 = vmatpush1.msra.mxu0 0.0
  %823 = vmatprep.subr.mxu0 0.0
  %824 = vmatpush1.msra.mxu0 0.0
  %825 = vmatprep.subr.mxu0 0.0
  %826 = vmatpush1.msra.mxu0 0.0
  %827 = vmatprep.subr.mxu0 0.0
  %828 = vmatpush1.msra.mxu0 0.0
  %829 = vmatprep.subr.mxu0 0.0
  %830 = vmatpush1.msra.mxu0 0.0
  %831 = vmatprep.subr.mxu0 0.0
  %832 = vmatpush1.msra.mxu0 0.0
  %833 = vmatprep.subr.mxu0 0.0
  %834 = vmatpush1.msra.mxu0 0.0
  %835 = vmatprep.subr.mxu0 0.0
  %836 = vmatpush1.msra.mxu0 0.0
  %837 = vmatprep.subr.mxu0 0.0
  %838 = vmatpush1.msra.mxu0 0.0
  %839 = vmatprep.subr.mxu0 0.0
  %840 = vmatpush1.msra.mxu0 0.0
  %841 = vmatprep.subr.mxu0 0.0
  %842 = vmatpush1.msra.mxu0 0.0
  %843 = vmatprep.subr.mxu0 0.0
  %844 = vmatpush1.msra.mxu0 0.0
  %845 = vmatprep.subr.mxu0 0.0
  %846 = vmatpush1.msra.mxu0 0.0
  %847 = vmatprep.subr.mxu0 0.0
  %848 = vmatpush1.msra.mxu0 0.0
  %849 = vmatprep.subr.mxu0 0.0
  %850 = vmatpush1.msra.mxu0 0.0
  %851 = vmatprep.subr.mxu0 0.0
  %852 = vmatpush1.msra.mxu0 0.0
  %853 = vmatprep.subr.mxu0 0.0
  %854 = vmatpush1.msra.mxu0 0.0
  %855 = vmatprep.subr.mxu0 0.0
  %856 = vmatpush1.msra.mxu0 0.0
  %857 = vmatprep.subr.mxu0 0.0
  %858 = vmatpush1.msra.mxu0 0.0
  %859 = vmatprep.subr.mxu0 0.0
  %860 = vmatpush1.msra.mxu0 0.0
  %861 = vmatprep.subr.mxu0 0.0
  %862 = vmatpush1.msra.mxu0 0.0
  %863 = vmatprep.subr.mxu0 0.0
  %864 = vmatpush1.msra.mxu0 0.0
  %865 = vmatprep.subr.mxu0 0.0
  %866 = vmatpush1.msra.mxu0 0.0
  %867 = vmatprep.subr.mxu0 0.0
  %868 = vmatpush1.msra.mxu0 0.0
  %869 = vmatprep.subr.mxu0 0.0
  %870 = vmatpush1.msra.mxu0 0.0
  %871 = vmatprep.subr.mxu0 0.0
  %872 = vmatpush1.msra.mxu0 0.0
  %873 = vmatprep.subr.mxu0 0.0
  %874 = vmatpush1.msra.mxu0 0.0
  %875 = vmatprep.subr.mxu0 0.0
  %876 = vmatpush1.msra.mxu0 0.0
  %877 = vmatprep.mubr.f32.mxu0 0.0
  %878 = vmatmul.mubr.f32.gmra.mrb[0].mxu0 %v454
  %v879 = vpop.f32.mrb[0].mxu0
  %v880 = vadd.f32 %v811, %v879
  %v881 = vpop.f32.mrb[0].mxu0
  %882 = vmatprep.mubr.f32.mxu0 0.0
  %883 = vmatmul.mubr.f32.gmra.mrb[0].mxu0 %v457
  %v884 = vpop.f32.mrb[0].mxu0
  %v885 = vadd.f32 %v811, %v884
  %v886 = vpop.f32.mrb[0].mxu0
  %887 = vmatprep.mubr.f32.mxu0 0.0
  %888 = vmatmul.mubr.f32.gmra.mrb[0].mxu0 %v460
  %v889 = vpop.f32.mrb[0].mxu0
  %v890 = vadd.f32 %v811, %v889
  %v891 = vpop.f32.mrb[0].mxu0
  %892 = vmatprep.mubr.f32.mxu0 0.0
  %893 = vmatmul.mubr.f32.gmra.mrb[0].mxu0 %v463
  %v894 = vpop.f32.mrb[0].mxu0
  %v895 = vadd.f32 %v811, %v894
  %v896 = vpop.f32.mrb[0].mxu0
  %897 = vmatprep.mubr.f32.mxu0 0.0
  %898 = vmatmul.mubr.f32.gmra.mrb[0].mxu0 %v466
  %v899 = vpop.f32.mrb[0].mxu0
  %v900 = vadd.f32 %v811, %v899
  %v901 = vpop.f32.mrb[0].mxu0
  %902 = vmatprep.mubr.f32.mxu0 0.0
  %903 = vmatmul.mubr.f32.gmra.mrb[0].mxu0 %v469
  %v904 = vpop.f32.mrb[0].mxu0
  %v905 = vadd.f32 %v811, %v904
  %v906 = vpop.f32.mrb[0].mxu0
  %907 = vmatprep.mubr.f32.mxu0 0.0
  %908 = vmatmul.mubr.f32.gmra.mrb[0].mxu0 %v472
  %v909 = vpop.f32.mrb[0].mxu0
  %v910 = vadd.f32 %v811, %v909
  %v911 = vpop.f32.mrb[0].mxu0
  %912 = vmatprep.mubr.f32.mxu0 0.0
  %913 = vmatmul.mubr.f32.gmra.mrb[0].mxu0 %v475
  %v914 = vpop.f32.mrb[0].mxu0
  %v915 = vadd.f32 %v811, %v914
  %v916 = vpop.f32.mrb[0].mxu0
  %917 = vmatprep.mubr.f32.mxu0 0.0
  %918 = vmatmul.mubr.f32.gmra.mrb[0].mxu0 %v478
  %v919 = vpop.f32.mrb[0].mxu0
  %v920 = vadd.f32 %v811, %v919
  %v921 = vpop.f32.mrb[0].mxu0
  %922 = vmatprep.mubr.f32.mxu0 0.0
  %923 = vmatmul.mubr.f32.gmra.mrb[0].mxu0 %v481
  %v924 = vpop.f32.mrb[0].mxu0
  %v925 = vadd.f32 %v811, %v924
  %v926 = vpop.f32.mrb[0].mxu0
  %927 = vmatprep.mubr.f32.mxu0 0.0
  %928 = vmatmul.mubr.f32.gmra.mrb[0].mxu0 %v484
  %v929 = vpop.f32.mrb[0].mxu0
  %v930 = vadd.f32 %v811, %v929
  %v931 = vpop.f32.mrb[0].mxu0
  %932 = vmatprep.mubr.f32.mxu0 0.0
  %933 = vmatmul.mubr.f32.gmra.mrb[0].mxu0 %v487
  %v934 = vpop.f32.mrb[0].mxu0
  %v935 = vadd.f32 %v811, %v934
  %v936 = vpop.f32.mrb[0].mxu0
  %937 = vmatprep.mubr.f32.mxu0 0.0
  %938 = vmatmul.mubr.f32.gmra.mrb[0].mxu0 %v490
  %v939 = vpop.f32.mrb[0].mxu0
  %v940 = vadd.f32 %v811, %v939
  %v941 = vpop.f32.mrb[0].mxu0
  %942 = vmatprep.mubr.f32.mxu0 0.0
  %943 = vmatmul.mubr.f32.gmra.mrb[0].mxu0 %v493
  %v944 = vpop.f32.mrb[0].mxu0
  %v945 = vadd.f32 %v811, %v944
  %v946 = vpop.f32.mrb[0].mxu0
  %947 = vmatprep.mubr.f32.mxu0 0.0
  %948 = vmatmul.mubr.f32.gmra.mrb[0].mxu0 %v496
  %v949 = vpop.f32.mrb[0].mxu0
  %v950 = vadd.f32 %v811, %v949
  %v951 = vpop.f32.mrb[0].mxu0
  %952 = vmatprep.mubr.f32.mxu0 0.0
  %953 = vmatmul.mubr.f32.gmra.mrb[0].mxu0 %v499
  %v954 = vpop.f32.mrb[0].mxu0
  %v955 = vadd.f32 %v811, %v954
  %v956 = vpop.f32.mrb[0].mxu0
  %957 = vdwg.mxu0
  %vm958 = vcmask 130048
  %v960 = vsel %vm958, %v568, 0
  %v963 = vsel %vm958, %v573, 0
  %v966 = vsel %vm958, %v578, 0
  %v969 = vsel %vm958, %v583, 0
  %v972 = vsel %vm958, %v588, 0
  %v975 = vsel %vm958, %v593, 0
  %v978 = vsel %vm958, %v598, 0
  %v981 = vsel %vm958, %v603, 0
  %v984 = vsel %vm958, %v608, 0
  %v987 = vsel %vm958, %v613, 0
  %v990 = vsel %vm958, %v618, 0
  %v993 = vsel %vm958, %v623, 0
  %v996 = vsel %vm958, %v628, 0
  %v999 = vsel %vm958, %v633, 0
  %v1002 = vsel %vm958, %v638, 0
  %v1005 = vsel %vm958, %v643, 0
  %v1008 = vsel %vm958, %v724, 0
  %v1011 = vsel %vm958, %v729, 0
  %v1014 = vsel %vm958, %v734, 0
  %v1017 = vsel %vm958, %v739, 0
  %v1020 = vsel %vm958, %v744, 0
  %v1023 = vsel %vm958, %v749, 0
  %v1026 = vsel %vm958, %v754, 0
  %v1029 = vsel %vm958, %v759, 0
  %v1032 = vsel %vm958, %v764, 0
  %v1035 = vsel %vm958, %v769, 0
  %v1038 = vsel %vm958, %v774, 0
  %v1041 = vsel %vm958, %v779, 0
  %v1044 = vsel %vm958, %v784, 0
  %v1047 = vsel %vm958, %v789, 0
  %v1050 = vsel %vm958, %v794, 0
  %v1053 = vsel %vm958, %v799, 0
  %1055 = vmatprep.subr.mxu0 0.0
  %1056 = vmatpush1.xpose.msra.mxu0 %v1008
  %1057 = vmatprep.subr.mxu0 0.0
  %1058 = vmatpush1.xpose.msra.mxu0 %v1011
  %1059 = vmatprep.subr.mxu0 0.0
  %1060 = vmatpush1.xpose.msra.mxu0 %v1014
  %1061 = vmatprep.subr.mxu0 0.0
  %1062 = vmatpush1.xpose.msra.mxu0 %v1017
  %1063 = vmatprep.subr.mxu0 0.0
  %1064 = vmatpush1.xpose.msra.mxu0 %v1020
  %1065 = vmatprep.subr.mxu0 0.0
  %1066 = vmatpush1.xpose.msra.mxu0 %v1023
  %1067 = vmatprep.subr.mxu0 0.0
  %1068 = vmatpush1.xpose.msra.mxu0 %v1026
  %1069 = vmatprep.subr.mxu0 0.0
  %1070 = vmatpush1.xpose.msra.mxu0 %v1029
  %1071 = vmatprep.subr.mxu0 0.0
  %1072 = vmatpush1.xpose.msra.mxu0 %v1032
  %1073 = vmatprep.subr.mxu0 0.0
  %1074 = vmatpush1.xpose.msra.mxu0 %v1035
  %1075 = vmatprep.subr.mxu0 0.0
  %1076 = vmatpush1.xpose.msra.mxu0 %v1038
  %1077 = vmatprep.subr.mxu0 0.0
  %1078 = vmatpush1.xpose.msra.mxu0 %v1041
  %1079 = vmatprep.subr.mxu0 0.0
  %1080 = vmatpush1.xpose.msra.mxu0 %v1044
  %1081 = vmatprep.subr.mxu0 0.0
  %1082 = vmatpush1.xpose.msra.mxu0 %v1047
  %1083 = vmatprep.subr.mxu0 0.0
  %1084 = vmatpush1.xpose.msra.mxu0 %v1050
  %1085 = vmatprep.subr.mxu0 0.0
  %1086 = vmatpush1.xpose.msra.mxu0 %v1053
  %1087 = vmatprep.subr.mxu0 0.0
  %1088 = vmatpush1.xpose.msra.mxu0 0.0
  %1089 = vmatprep.subr.mxu0 0.0
  %1090 = vmatpush1.xpose.msra.mxu0 0.0
  %1091 = vmatprep.subr.mxu0 0.0
  %1092 = vmatpush1.xpose.msra.mxu0 0.0
  %1093 = vmatprep.subr.mxu0 0.0
  %1094 = vmatpush1.xpose.msra.mxu0 0.0
  %1095 = vmatprep.subr.mxu0 0.0
  %1096 = vmatpush1.xpose.msra.mxu0 0.0
  %1097 = vmatprep.subr.mxu0 0.0
  %1098 = vmatpush1.xpose.msra.mxu0 0.0
  %1099 = vmatprep.subr.mxu0 0.0
  %1100 = vmatpush1.xpose.msra.mxu0 0.0
  %1101 = vmatprep.subr.mxu0 0.0
  %1102 = vmatpush1.xpose.msra.mxu0 0.0
  %1103 = vmatprep.subr.mxu0 0.0
  %1104 = vmatpush1.xpose.msra.mxu0 0.0
  %1105 = vmatprep.subr.mxu0 0.0
  %1106 = vmatpush1.xpose.msra.mxu0 0.0
  %1107 = vmatprep.subr.mxu0 0.0
  %1108 = vmatpush1.xpose.msra.mxu0 0.0
  %1109 = vmatprep.subr.mxu0 0.0
  %1110 = vmatpush1.xpose.msra.mxu0 0.0
  %1111 = vmatprep.subr.mxu0 0.0
  %1112 = vmatpush1.xpose.msra.mxu0 0.0
  %1113 = vmatprep.subr.mxu0 0.0
  %1114 = vmatpush1.xpose.msra.mxu0 0.0
  %1115 = vmatprep.subr.mxu0 0.0
  %1116 = vmatpush1.xpose.msra.mxu0 0.0
  %1117 = vmatprep.subr.mxu0 0.0
  %1118 = vmatpush1.xpose.msra.mxu0 0.0
  %1119 = vmatprep.mubr.f32.mxu0 0.0
  %1120 = vmatmul.mubr.f32.gmra.mrb[0].mxu0 %v960
  %v1121 = vpop.f32.mrb[0].mxu0
  %v1122 = vadd.f32 0.0, %v1121
  %v1123 = vpop.f32.mrb[0].mxu0
  %1124 = vmatprep.mubr.f32.mxu0 0.0
  %1125 = vmatmul.mubr.f32.gmra.mrb[0].mxu0 %v963
  %v1126 = vpop.f32.mrb[0].mxu0
  %v1127 = vadd.f32 0.0, %v1126
  %v1128 = vpop.f32.mrb[0].mxu0
  %1129 = vmatprep.mubr.f32.mxu0 0.0
  %1130 = vmatmul.mubr.f32.gmra.mrb[0].mxu0 %v966
  %v1131 = vpop.f32.mrb[0].mxu0
  %v1132 = vadd.f32 0.0, %v1131
  %v1133 = vpop.f32.mrb[0].mxu0
  %1134 = vmatprep.mubr.f32.mxu0 0.0
  %1135 = vmatmul.mubr.f32.gmra.mrb[0].mxu0 %v969
  %v1136 = vpop.f32.mrb[0].mxu0
  %v1137 = vadd.f32 0.0, %v1136
  %v1138 = vpop.f32.mrb[0].mxu0
  %1139 = vmatprep.mubr.f32.mxu0 0.0
  %1140 = vmatmul.mubr.f32.gmra.mrb[0].mxu0 %v972
  %v1141 = vpop.f32.mrb[0].mxu0
  %v1142 = vadd.f32 0.0, %v1141
  %v1143 = vpop.f32.mrb[0].mxu0
  %1144 = vmatprep.mubr.f32.mxu0 0.0
  %1145 = vmatmul.mubr.f32.gmra.mrb[0].mxu0 %v975
  %v1146 = vpop.f32.mrb[0].mxu0
  %v1147 = vadd.f32 0.0, %v1146
  %v1148 = vpop.f32.mrb[0].mxu0
  %1149 = vmatprep.mubr.f32.mxu0 0.0
  %1150 = vmatmul.mubr.f32.gmra.mrb[0].mxu0 %v978
  %v1151 = vpop.f32.mrb[0].mxu0
  %v1152 = vadd.f32 0.0, %v1151
  %v1153 = vpop.f32.mrb[0].mxu0
  %1154 = vmatprep.mubr.f32.mxu0 0.0
  %1155 = vmatmul.mubr.f32.gmra.mrb[0].mxu0 %v981
  %v1156 = vpop.f32.mrb[0].mxu0
  %v1157 = vadd.f32 0.0, %v1156
  %v1158 = vpop.f32.mrb[0].mxu0
  %1159 = vmatprep.mubr.f32.mxu0 0.0
  %1160 = vmatmul.mubr.f32.gmra.mrb[0].mxu0 %v984
  %v1161 = vpop.f32.mrb[0].mxu0
  %v1162 = vadd.f32 0.0, %v1161
  %v1163 = vpop.f32.mrb[0].mxu0
  %1164 = vmatprep.mubr.f32.mxu0 0.0
  %1165 = vmatmul.mubr.f32.gmra.mrb[0].mxu0 %v987
  %v1166 = vpop.f32.mrb[0].mxu0
  %v1167 = vadd.f32 0.0, %v1166
  %v1168 = vpop.f32.mrb[0].mxu0
  %1169 = vmatprep.mubr.f32.mxu0 0.0
  %1170 = vmatmul.mubr.f32.gmra.mrb[0].mxu0 %v990
  %v1171 = vpop.f32.mrb[0].mxu0
  %v1172 = vadd.f32 0.0, %v1171
  %v1173 = vpop.f32.mrb[0].mxu0
  %1174 = vmatprep.mubr.f32.mxu0 0.0
  %1175 = vmatmul.mubr.f32.gmra.mrb[0].mxu0 %v993
  %v1176 = vpop.f32.mrb[0].mxu0
  %v1177 = vadd.f32 0.0, %v1176
  %v1178 = vpop.f32.mrb[0].mxu0
  %1179 = vmatprep.mubr.f32.mxu0 0.0
  %1180 = vmatmul.mubr.f32.gmra.mrb[0].mxu0 %v996
  %v1181 = vpop.f32.mrb[0].mxu0
  %v1182 = vadd.f32 0.0, %v1181
  %v1183 = vpop.f32.mrb[0].mxu0
  %1184 = vmatprep.mubr.f32.mxu0 0.0
  %1185 = vmatmul.mubr.f32.gmra.mrb[0].mxu0 %v999
  %v1186 = vpop.f32.mrb[0].mxu0
  %v1187 = vadd.f32 0.0, %v1186
  %v1188 = vpop.f32.mrb[0].mxu0
  %1189 = vmatprep.mubr.f32.mxu0 0.0
  %1190 = vmatmul.mubr.f32.gmra.mrb[0].mxu0 %v1002
  %v1191 = vpop.f32.mrb[0].mxu0
  %v1192 = vadd.f32 0.0, %v1191
  %v1193 = vpop.f32.mrb[0].mxu0
  %1194 = vmatprep.mubr.f32.mxu0 0.0
  %1195 = vmatmul.mubr.f32.gmra.mrb[0].mxu0 %v1005
  %v1196 = vpop.f32.mrb[0].mxu0
  %v1197 = vadd.f32 0.0, %v1196
  %v1198 = vpop.f32.mrb[0].mxu0
  %1199 = vdwg.mxu0
  %v1200 = vmul.f32 %v1122, 0.25
  %v1201 = vmul.f32 %v1127, 0.25
  %v1202 = vmul.f32 %v1132, 0.25
  %v1203 = vmul.f32 %v1137, 0.25
  %v1204 = vmul.f32 %v1142, 0.25
  %v1205 = vmul.f32 %v1147, 0.25
  %v1206 = vmul.f32 %v1152, 0.25
  %v1207 = vmul.f32 %v1157, 0.25
  %v1208 = vmul.f32 %v1162, 0.25
  %v1209 = vmul.f32 %v1167, 0.25
  %v1210 = vmul.f32 %v1172, 0.25
  %v1211 = vmul.f32 %v1177, 0.25
  %v1212 = vmul.f32 %v1182, 0.25
  %v1213 = vmul.f32 %v1187, 0.25
  %v1214 = vmul.f32 %v1192, 0.25
  %v1215 = vmul.f32 %v1197, 0.25
  %v1216 = vld [vmem:[%s25] sm:$0xff]
  %v1217 = vld [vmem:[%s25 + $0x8] sm:$0xff]
  %v1218 = vld [vmem:[%s25 + $0x10] sm:$0xff]
  %v1219 = vld [vmem:[%s25 + $0x18] sm:$0xff]
  %v1220 = vld [vmem:[%s25 + $0x20] sm:$0xff]
  %v1221 = vld [vmem:[%s25 + $0x28] sm:$0xff]
  %v1222 = vld [vmem:[%s25 + $0x30] sm:$0xff]
  %v1223 = vld [vmem:[%s25 + $0x38] sm:$0xff]
  %v1224 = vld [vmem:[%s25 + $0x40] sm:$0xff]
  %v1225 = vld [vmem:[%s25 + $0x48] sm:$0xff]
  %v1226 = vld [vmem:[%s25 + $0x50] sm:$0xff]
  %v1227 = vld [vmem:[%s25 + $0x58] sm:$0xff]
  %v1228 = vld [vmem:[%s25 + $0x60] sm:$0xff]
  %v1229 = vld [vmem:[%s25 + $0x68] sm:$0xff]
  %v1230 = vld [vmem:[%s25 + $0x70] sm:$0xff]
  %v1231 = vld [vmem:[%s25 + $0x78] sm:$0xff]
  %v1232 = vadd.f32 %v1200, %v1216
  %v1233 = vadd.f32 %v1201, %v1217
  %v1234 = vadd.f32 %v1202, %v1218
  %v1235 = vadd.f32 %v1203, %v1219
  %v1236 = vadd.f32 %v1204, %v1220
  %v1237 = vadd.f32 %v1205, %v1221
  %v1238 = vadd.f32 %v1206, %v1222
  %v1239 = vadd.f32 %v1207, %v1223
  %v1240 = vadd.f32 %v1208, %v1224
  %v1241 = vadd.f32 %v1209, %v1225
  %v1242 = vadd.f32 %v1210, %v1226
  %v1243 = vadd.f32 %v1211, %v1227
  %v1244 = vadd.f32 %v1212, %v1228
  %v1245 = vadd.f32 %v1213, %v1229
  %v1246 = vadd.f32 %v1214, %v1230
  %v1247 = vadd.f32 %v1215, %v1231
  %1248 = vmax.xlane.f32.xlu0 %v1232
  %v1249 = vpop.xlane.xlu0 %1248
  %1250 = vmax.xlane.f32.xlu0 %v1233
  %v1251 = vpop.xlane.xlu0 %1250
  %1252 = vmax.xlane.f32.xlu0 %v1234
  %v1253 = vpop.xlane.xlu0 %1252
  %1254 = vmax.xlane.f32.xlu0 %v1235
  %v1255 = vpop.xlane.xlu0 %1254
  %1256 = vmax.xlane.f32.xlu0 %v1236
  %v1257 = vpop.xlane.xlu0 %1256
  %1258 = vmax.xlane.f32.xlu0 %v1237
  %v1259 = vpop.xlane.xlu0 %1258
  %1260 = vmax.xlane.f32.xlu0 %v1238
  %v1261 = vpop.xlane.xlu0 %1260
  %1262 = vmax.xlane.f32.xlu0 %v1239
  %v1263 = vpop.xlane.xlu0 %1262
  %1264 = vmax.xlane.f32.xlu0 %v1240
  %v1265 = vpop.xlane.xlu0 %1264
  %1266 = vmax.xlane.f32.xlu0 %v1241
  %v1267 = vpop.xlane.xlu0 %1266
  %1268 = vmax.xlane.f32.xlu0 %v1242
  %v1269 = vpop.xlane.xlu0 %1268
  %1270 = vmax.xlane.f32.xlu0 %v1243
  %v1271 = vpop.xlane.xlu0 %1270
  %1272 = vmax.xlane.f32.xlu0 %v1244
  %v1273 = vpop.xlane.xlu0 %1272
  %1274 = vmax.xlane.f32.xlu0 %v1245
  %v1275 = vpop.xlane.xlu0 %1274
  %1276 = vmax.xlane.f32.xlu0 %v1246
  %v1277 = vpop.xlane.xlu0 %1276
  %1278 = vmax.xlane.f32.xlu0 %v1247
  %v1279 = vpop.xlane.xlu0 %1278
  %v1280 = vsub.f32 %v1232, %v1249
  %v1281 = vsub.f32 %v1233, %v1251
  %v1282 = vsub.f32 %v1234, %v1253
  %v1283 = vsub.f32 %v1235, %v1255
  %v1284 = vsub.f32 %v1236, %v1257
  %v1285 = vsub.f32 %v1237, %v1259
  %v1286 = vsub.f32 %v1238, %v1261
  %v1287 = vsub.f32 %v1239, %v1263
  %v1288 = vsub.f32 %v1240, %v1265
  %v1289 = vsub.f32 %v1241, %v1267
  %v1290 = vsub.f32 %v1242, %v1269
  %v1291 = vsub.f32 %v1243, %v1271
  %v1292 = vsub.f32 %v1244, %v1273
  %v1293 = vsub.f32 %v1245, %v1275
  %v1294 = vsub.f32 %v1246, %v1277
  %v1295 = vsub.f32 %v1247, %v1279
  %v1296 = vmul.f32 %v1280, 1.442695
  %v1297 = vpow.pop %v1296
  %v1298 = vmul.f32 %v1281, 1.442695
  %v1299 = vpow.pop %v1298
  %v1300 = vmul.f32 %v1282, 1.442695
  %v1301 = vpow.pop %v1300
  %v1302 = vmul.f32 %v1283, 1.442695
  %v1303 = vpow.pop %v1302
  %v1304 = vmul.f32 %v1284, 1.442695
  %v1305 = vpow.pop %v1304
  %v1306 = vmul.f32 %v1285, 1.442695
  %v1307 = vpow.pop %v1306
  %v1308 = vmul.f32 %v1286, 1.442695
  %v1309 = vpow.pop %v1308
  %v1310 = vmul.f32 %v1287, 1.442695
  %v1311 = vpow.pop %v1310
  %v1312 = vmul.f32 %v1288, 1.442695
  %v1313 = vpow.pop %v1312
  %v1314 = vmul.f32 %v1289, 1.442695
  %v1315 = vpow.pop %v1314
  %v1316 = vmul.f32 %v1290, 1.442695
  %v1317 = vpow.pop %v1316
  %v1318 = vmul.f32 %v1291, 1.442695
  %v1319 = vpow.pop %v1318
  %v1320 = vmul.f32 %v1292, 1.442695
  %v1321 = vpow.pop %v1320
  %v1322 = vmul.f32 %v1293, 1.442695
  %v1323 = vpow.pop %v1322
  %v1324 = vmul.f32 %v1294, 1.442695
  %v1325 = vpow.pop %v1324
  %v1326 = vmul.f32 %v1295, 1.442695
  %v1327 = vpow.pop %v1326
  %1328 = vadd.xlane.f32.xlu0 %v1297
  %v1329 = vpop.xlane.xlu0 %1328
  %1330 = vadd.xlane.f32.xlu0 %v1299
  %v1331 = vpop.xlane.xlu0 %1330
  %1332 = vadd.xlane.f32.xlu0 %v1301
  %v1333 = vpop.xlane.xlu0 %1332
  %1334 = vadd.xlane.f32.xlu0 %v1303
  %v1335 = vpop.xlane.xlu0 %1334
  %1336 = vadd.xlane.f32.xlu0 %v1305
  %v1337 = vpop.xlane.xlu0 %1336
  %1338 = vadd.xlane.f32.xlu0 %v1307
  %v1339 = vpop.xlane.xlu0 %1338
  %1340 = vadd.xlane.f32.xlu0 %v1309
  %v1341 = vpop.xlane.xlu0 %1340
  %1342 = vadd.xlane.f32.xlu0 %v1311
  %v1343 = vpop.xlane.xlu0 %1342
  %1344 = vadd.xlane.f32.xlu0 %v1313
  %v1345 = vpop.xlane.xlu0 %1344
  %1346 = vadd.xlane.f32.xlu0 %v1315
  %v1347 = vpop.xlane.xlu0 %1346
  %1348 = vadd.xlane.f32.xlu0 %v1317
  %v1349 = vpop.xlane.xlu0 %1348
  %1350 = vadd.xlane.f32.xlu0 %v1319
  %v1351 = vpop.xlane.xlu0 %1350
  %1352 = vadd.xlane.f32.xlu0 %v1321
  %v1353 = vpop.xlane.xlu0 %1352
  %1354 = vadd.xlane.f32.xlu0 %v1323
  %v1355 = vpop.xlane.xlu0 %1354
  %1356 = vadd.xlane.f32.xlu0 %v1325
  %v1357 = vpop.xlane.xlu0 %1356
  %1358 = vadd.xlane.f32.xlu0 %v1327
  %v1359 = vpop.xlane.xlu0 %1358
  %v1360 = vrcp.pop %v1329
  %v1361 = vmul.f32 %v1297, %v1360
  %v1362 = vrcp.pop %v1331
  %v1363 = vmul.f32 %v1299, %v1362
  %v1364 = vrcp.pop %v1333
  %v1365 = vmul.f32 %v1301, %v1364
  %v1366 = vrcp.pop %v1335
  %v1367 = vmul.f32 %v1303, %v1366
  %v1368 = vrcp.pop %v1337
  %v1369 = vmul.f32 %v1305, %v1368
  %v1370 = vrcp.pop %v1339
  %v1371 = vmul.f32 %v1307, %v1370
  %v1372 = vrcp.pop %v1341
  %v1373 = vmul.f32 %v1309, %v1372
  %v1374 = vrcp.pop %v1343
  %v1375 = vmul.f32 %v1311, %v1374
  %v1376 = vrcp.pop %v1345
  %v1377 = vmul.f32 %v1313, %v1376
  %v1378 = vrcp.pop %v1347
  %v1379 = vmul.f32 %v1315, %v1378
  %v1380 = vrcp.pop %v1349
  %v1381 = vmul.f32 %v1317, %v1380
  %v1382 = vrcp.pop %v1351
  %v1383 = vmul.f32 %v1319, %v1382
  %v1384 = vrcp.pop %v1353
  %v1385 = vmul.f32 %v1321, %v1384
  %v1386 = vrcp.pop %v1355
  %v1387 = vmul.f32 %v1323, %v1386
  %v1388 = vrcp.pop %v1357
  %v1389 = vmul.f32 %v1325, %v1388
  %v1390 = vrcp.pop %v1359
  %v1391 = vmul.f32 %v1327, %v1390
  %1392 = vmatprep.subr.mxu0 0.0
  %1393 = vmatpush1.msra.mxu0 %v880
  %1394 = vmatprep.subr.mxu0 0.0
  %1395 = vmatpush1.msra.mxu0 %v885
  %1396 = vmatprep.subr.mxu0 0.0
  %1397 = vmatpush1.msra.mxu0 %v890
  %1398 = vmatprep.subr.mxu0 0.0
  %1399 = vmatpush1.msra.mxu0 %v895
  %1400 = vmatprep.subr.mxu0 0.0
  %1401 = vmatpush1.msra.mxu0 %v900
  %1402 = vmatprep.subr.mxu0 0.0
  %1403 = vmatpush1.msra.mxu0 %v905
  %1404 = vmatprep.subr.mxu0 0.0
  %1405 = vmatpush1.msra.mxu0 %v910
  %1406 = vmatprep.subr.mxu0 0.0
  %1407 = vmatpush1.msra.mxu0 %v915
  %1408 = vmatprep.subr.mxu0 0.0
  %1409 = vmatpush1.msra.mxu0 %v920
  %1410 = vmatprep.subr.mxu0 0.0
  %1411 = vmatpush1.msra.mxu0 %v925
  %1412 = vmatprep.subr.mxu0 0.0
  %1413 = vmatpush1.msra.mxu0 %v930
  %1414 = vmatprep.subr.mxu0 0.0
  %1415 = vmatpush1.msra.mxu0 %v935
  %1416 = vmatprep.subr.mxu0 0.0
  %1417 = vmatpush1.msra.mxu0 %v940
  %1418 = vmatprep.subr.mxu0 0.0
  %1419 = vmatpush1.msra.mxu0 %v945
  %1420 = vmatprep.subr.mxu0 0.0
  %1421 = vmatpush1.msra.mxu0 %v950
  %1422 = vmatprep.subr.mxu0 0.0
  %1423 = vmatpush1.msra.mxu0 %v955
  %1424 = vmatprep.subr.mxu0 0.0
  %1425 = vmatpush1.msra.mxu0 0.0
  %1426 = vmatprep.subr.mxu0 0.0
  %1427 = vmatpush1.msra.mxu0 0.0
  %1428 = vmatprep.subr.mxu0 0.0
  %1429 = vmatpush1.msra.mxu0 0.0
  %1430 = vmatprep.subr.mxu0 0.0
  %1431 = vmatpush1.msra.mxu0 0.0
  %1432 = vmatprep.subr.mxu0 0.0
  %1433 = vmatpush1.msra.mxu0 0.0
  %1434 = vmatprep.subr.mxu0 0.0
  %1435 = vmatpush1.msra.mxu0 0.0
  %1436 = vmatprep.subr.mxu0 0.0
  %1437 = vmatpush1.msra.mxu0 0.0
  %1438 = vmatprep.subr.mxu0 0.0
  %1439 = vmatpush1.msra.mxu0 0.0
  %1440 = vmatprep.subr.mxu0 0.0
  %1441 = vmatpush1.msra.mxu0 0.0
  %1442 = vmatprep.subr.mxu0 0.0
  %1443 = vmatpush1.msra.mxu0 0.0
  %1444 = vmatprep.subr.mxu0 0.0
  %1445 = vmatpush1.msra.mxu0 0.0
  %1446 = vmatprep.subr.mxu0 0.0
  %1447 = vmatpush1.msra.mxu0 0.0
  %1448 = vmatprep.subr.mxu0 0.0
  %1449 = vmatpush1.msra.mxu0 0.0
  %1450 = vmatprep.subr.mxu0 0.0
  %1451 = vmatpush1.msra.mxu0 0.0
  %1452 = vmatprep.subr.mxu0 0.0
  %1453 = vmatpush1.msra.mxu0 0.0
  %1454 = vmatprep.subr.mxu0 0.0
  %1455 = vmatpush1.msra.mxu0 0.0
  %1456 = vmatprep.mubr.f32.mxu0 0.0
  %1457 = vmatmul.mubr.f32.gmra.mrb[0].mxu0 %v1361
  %v1458 = vpop.f32.mrb[0].mxu0
  %v1459 = vadd.f32 0.0, %v1458
  %v1460 = vpop.f32.mrb[0].mxu0
  %1461 = vmatprep.mubr.f32.mxu0 0.0
  %1462 = vmatmul.mubr.f32.gmra.mrb[0].mxu0 %v1363
  %v1463 = vpop.f32.mrb[0].mxu0
  %v1464 = vadd.f32 0.0, %v1463
  %v1465 = vpop.f32.mrb[0].mxu0
  %1466 = vmatprep.mubr.f32.mxu0 0.0
  %1467 = vmatmul.mubr.f32.gmra.mrb[0].mxu0 %v1365
  %v1468 = vpop.f32.mrb[0].mxu0
  %v1469 = vadd.f32 0.0, %v1468
  %v1470 = vpop.f32.mrb[0].mxu0
  %1471 = vmatprep.mubr.f32.mxu0 0.0
  %1472 = vmatmul.mubr.f32.gmra.mrb[0].mxu0 %v1367
  %v1473 = vpop.f32.mrb[0].mxu0
  %v1474 = vadd.f32 0.0, %v1473
  %v1475 = vpop.f32.mrb[0].mxu0
  %1476 = vmatprep.mubr.f32.mxu0 0.0
  %1477 = vmatmul.mubr.f32.gmra.mrb[0].mxu0 %v1369
  %v1478 = vpop.f32.mrb[0].mxu0
  %v1479 = vadd.f32 0.0, %v1478
  %v1480 = vpop.f32.mrb[0].mxu0
  %1481 = vmatprep.mubr.f32.mxu0 0.0
  %1482 = vmatmul.mubr.f32.gmra.mrb[0].mxu0 %v1371
  %v1483 = vpop.f32.mrb[0].mxu0
  %v1484 = vadd.f32 0.0, %v1483
  %v1485 = vpop.f32.mrb[0].mxu0
  %1486 = vmatprep.mubr.f32.mxu0 0.0
  %1487 = vmatmul.mubr.f32.gmra.mrb[0].mxu0 %v1373
  %v1488 = vpop.f32.mrb[0].mxu0
  %v1489 = vadd.f32 0.0, %v1488
  %v1490 = vpop.f32.mrb[0].mxu0
  %1491 = vmatprep.mubr.f32.mxu0 0.0
  %1492 = vmatmul.mubr.f32.gmra.mrb[0].mxu0 %v1375
  %v1493 = vpop.f32.mrb[0].mxu0
  %v1494 = vadd.f32 0.0, %v1493
  %v1495 = vpop.f32.mrb[0].mxu0
  %1496 = vmatprep.mubr.f32.mxu0 0.0
  %1497 = vmatmul.mubr.f32.gmra.mrb[0].mxu0 %v1377
  %v1498 = vpop.f32.mrb[0].mxu0
  %v1499 = vadd.f32 0.0, %v1498
  %v1500 = vpop.f32.mrb[0].mxu0
  %1501 = vmatprep.mubr.f32.mxu0 0.0
  %1502 = vmatmul.mubr.f32.gmra.mrb[0].mxu0 %v1379
  %v1503 = vpop.f32.mrb[0].mxu0
  %v1504 = vadd.f32 0.0, %v1503
  %v1505 = vpop.f32.mrb[0].mxu0
  %1506 = vmatprep.mubr.f32.mxu0 0.0
  %1507 = vmatmul.mubr.f32.gmra.mrb[0].mxu0 %v1381
  %v1508 = vpop.f32.mrb[0].mxu0
  %v1509 = vadd.f32 0.0, %v1508
  %v1510 = vpop.f32.mrb[0].mxu0
  %1511 = vmatprep.mubr.f32.mxu0 0.0
  %1512 = vmatmul.mubr.f32.gmra.mrb[0].mxu0 %v1383
  %v1513 = vpop.f32.mrb[0].mxu0
  %v1514 = vadd.f32 0.0, %v1513
  %v1515 = vpop.f32.mrb[0].mxu0
  %1516 = vmatprep.mubr.f32.mxu0 0.0
  %1517 = vmatmul.mubr.f32.gmra.mrb[0].mxu0 %v1385
  %v1518 = vpop.f32.mrb[0].mxu0
  %v1519 = vadd.f32 0.0, %v1518
  %v1520 = vpop.f32.mrb[0].mxu0
  %1521 = vmatprep.mubr.f32.mxu0 0.0
  %1522 = vmatmul.mubr.f32.gmra.mrb[0].mxu0 %v1387
  %v1523 = vpop.f32.mrb[0].mxu0
  %v1524 = vadd.f32 0.0, %v1523
  %v1525 = vpop.f32.mrb[0].mxu0
  %1526 = vmatprep.mubr.f32.mxu0 0.0
  %1527 = vmatmul.mubr.f32.gmra.mrb[0].mxu0 %v1389
  %v1528 = vpop.f32.mrb[0].mxu0
  %v1529 = vadd.f32 0.0, %v1528
  %v1530 = vpop.f32.mrb[0].mxu0
  %1531 = vmatprep.mubr.f32.mxu0 0.0
  %1532 = vmatmul.mubr.f32.gmra.mrb[0].mxu0 %v1391
  %v1533 = vpop.f32.mrb[0].mxu0
  %v1534 = vadd.f32 0.0, %v1533
  %v1535 = vpop.f32.mrb[0].mxu0
  %1536 = vdwg.mxu0
  %v1537 = vld [vmem:[%s21] sm:$0xff]
  %v1538 = vld [vmem:[%s21 + $0x8] sm:$0xff]
  %s1539 = scalar_lea.vmem %s9, 32
  %v1540 = vld [vmem:[%s1539] sm:$0xff]
  %v1541 = vld [vmem:[%s1539 + $0x8] sm:$0xff]
  %v1542 = vld [vmem:[%s1539 + $0x10] sm:$0xff]
  %v1543 = vld [vmem:[%s1539 + $0x18] sm:$0xff]
  %s1544 = scalar_lea.vmem %s15, 1
  %v1545 = vld [vmem:[%s1544] sm:$0x1]
  %v1547 = vlaneseq
  %v1548 = vshrl.u32 %v1547, 7
  %v1549 = vsub.s32 0, %v1548
  %v1550 = vrot.slane %v1545, %v1549
  %1552 = vmatprep.subr.mxu0 0.0
  %1553 = vmatpush1.msra.mxu0 %v1540
  %1554 = vmatprep.subr.mxu0 0.0
  %1555 = vmatpush1.msra.mxu0 %v1541
  %1556 = vmatprep.subr.mxu0 0.0
  %1557 = vmatpush1.msra.mxu0 %v1542
  %1558 = vmatprep.subr.mxu0 0.0
  %1559 = vmatpush1.msra.mxu0 %v1543
  %1560 = vmatprep.subr.mxu0 0.0
  %1561 = vmatpush1.msra.mxu0 0.0
  %1562 = vmatprep.subr.mxu0 0.0
  %1563 = vmatpush1.msra.mxu0 0.0
  %1564 = vmatprep.subr.mxu0 0.0
  %1565 = vmatpush1.msra.mxu0 0.0
  %1566 = vmatprep.subr.mxu0 0.0
  %1567 = vmatpush1.msra.mxu0 0.0
  %1568 = vmatprep.subr.mxu0 0.0
  %1569 = vmatpush1.msra.mxu0 0.0
  %1570 = vmatprep.subr.mxu0 0.0
  %1571 = vmatpush1.msra.mxu0 0.0
  %1572 = vmatprep.subr.mxu0 0.0
  %1573 = vmatpush1.msra.mxu0 0.0
  %1574 = vmatprep.subr.mxu0 0.0
  %1575 = vmatpush1.msra.mxu0 0.0
  %1576 = vmatprep.subr.mxu0 0.0
  %1577 = vmatpush1.msra.mxu0 0.0
  %1578 = vmatprep.subr.mxu0 0.0
  %1579 = vmatpush1.msra.mxu0 0.0
  %1580 = vmatprep.subr.mxu0 0.0
  %1581 = vmatpush1.msra.mxu0 0.0
  %1582 = vmatprep.subr.mxu0 0.0
  %1583 = vmatpush1.msra.mxu0 0.0
  %1584 = vmatprep.subr.mxu0 0.0
  %1585 = vmatpush1.msra.mxu0 0.0
  %1586 = vmatprep.subr.mxu0 0.0
  %1587 = vmatpush1.msra.mxu0 0.0
  %1588 = vmatprep.subr.mxu0 0.0
  %1589 = vmatpush1.msra.mxu0 0.0
  %1590 = vmatprep.subr.mxu0 0.0
  %1591 = vmatpush1.msra.mxu0 0.0
  %1592 = vmatprep.subr.mxu0 0.0
  %1593 = vmatpush1.msra.mxu0 0.0
  %1594 = vmatprep.subr.mxu0 0.0
  %1595 = vmatpush1.msra.mxu0 0.0
  %1596 = vmatprep.subr.mxu0 0.0
  %1597 = vmatpush1.msra.mxu0 0.0
  %1598 = vmatprep.subr.mxu0 0.0
  %1599 = vmatpush1.msra.mxu0 0.0
  %1600 = vmatprep.subr.mxu0 0.0
  %1601 = vmatpush1.msra.mxu0 0.0
  %1602 = vmatprep.subr.mxu0 0.0
  %1603 = vmatpush1.msra.mxu0 0.0
  %1604 = vmatprep.subr.mxu0 0.0
  %1605 = vmatpush1.msra.mxu0 0.0
  %1606 = vmatprep.subr.mxu0 0.0
  %1607 = vmatpush1.msra.mxu0 0.0
  %1608 = vmatprep.subr.mxu0 0.0
  %1609 = vmatpush1.msra.mxu0 0.0
  %1610 = vmatprep.subr.mxu0 0.0
  %1611 = vmatpush1.msra.mxu0 0.0
  %1612 = vmatprep.subr.mxu0 0.0
  %1613 = vmatpush1.msra.mxu0 0.0
  %1614 = vmatprep.subr.mxu0 0.0
  %1615 = vmatpush1.msra.mxu0 0.0
  %1616 = vmatprep.mubr.f32.mxu0 0.0
  %1617 = vmatmul.mubr.f32.gmra.mrb[0].mxu0 %v454
  %v1618 = vpop.f32.mrb[0].mxu0
  %v1619 = vadd.f32 %v1550, %v1618
  %v1620 = vpop.f32.mrb[0].mxu0
  %1621 = vmatprep.mubr.f32.mxu0 0.0
  %1622 = vmatmul.mubr.f32.gmra.mrb[0].mxu0 %v457
  %v1623 = vpop.f32.mrb[0].mxu0
  %v1624 = vadd.f32 %v1550, %v1623
  %v1625 = vpop.f32.mrb[0].mxu0
  %1626 = vmatprep.mubr.f32.mxu0 0.0
  %1627 = vmatmul.mubr.f32.gmra.mrb[0].mxu0 %v460
  %v1628 = vpop.f32.mrb[0].mxu0
  %v1629 = vadd.f32 %v1550, %v1628
  %v1630 = vpop.f32.mrb[0].mxu0
  %1631 = vmatprep.mubr.f32.mxu0 0.0
  %1632 = vmatmul.mubr.f32.gmra.mrb[0].mxu0 %v463
  %v1633 = vpop.f32.mrb[0].mxu0
  %v1634 = vadd.f32 %v1550, %v1633
  %v1635 = vpop.f32.mrb[0].mxu0
  %1636 = vmatprep.mubr.f32.mxu0 0.0
  %1637 = vmatmul.mubr.f32.gmra.mrb[0].mxu0 %v466
  %v1638 = vpop.f32.mrb[0].mxu0
  %v1639 = vadd.f32 %v1550, %v1638
  %v1640 = vpop.f32.mrb[0].mxu0
  %1641 = vmatprep.mubr.f32.mxu0 0.0
  %1642 = vmatmul.mubr.f32.gmra.mrb[0].mxu0 %v469
  %v1643 = vpop.f32.mrb[0].mxu0
  %v1644 = vadd.f32 %v1550, %v1643
  %v1645 = vpop.f32.mrb[0].mxu0
  %1646 = vmatprep.mubr.f32.mxu0 0.0
  %1647 = vmatmul.mubr.f32.gmra.mrb[0].mxu0 %v472
  %v1648 = vpop.f32.mrb[0].mxu0
  %v1649 = vadd.f32 %v1550, %v1648
  %v1650 = vpop.f32.mrb[0].mxu0
  %1651 = vmatprep.mubr.f32.mxu0 0.0
  %1652 = vmatmul.mubr.f32.gmra.mrb[0].mxu0 %v475
  %v1653 = vpop.f32.mrb[0].mxu0
  %v1654 = vadd.f32 %v1550, %v1653
  %v1655 = vpop.f32.mrb[0].mxu0
  %1656 = vmatprep.mubr.f32.mxu0 0.0
  %1657 = vmatmul.mubr.f32.gmra.mrb[0].mxu0 %v478
  %v1658 = vpop.f32.mrb[0].mxu0
  %v1659 = vadd.f32 %v1550, %v1658
  %v1660 = vpop.f32.mrb[0].mxu0
  %1661 = vmatprep.mubr.f32.mxu0 0.0
  %1662 = vmatmul.mubr.f32.gmra.mrb[0].mxu0 %v481
  %v1663 = vpop.f32.mrb[0].mxu0
  %v1664 = vadd.f32 %v1550, %v1663
  %v1665 = vpop.f32.mrb[0].mxu0
  %1666 = vmatprep.mubr.f32.mxu0 0.0
  %1667 = vmatmul.mubr.f32.gmra.mrb[0].mxu0 %v484
  %v1668 = vpop.f32.mrb[0].mxu0
  %v1669 = vadd.f32 %v1550, %v1668
  %v1670 = vpop.f32.mrb[0].mxu0
  %1671 = vmatprep.mubr.f32.mxu0 0.0
  %1672 = vmatmul.mubr.f32.gmra.mrb[0].mxu0 %v487
  %v1673 = vpop.f32.mrb[0].mxu0
  %v1674 = vadd.f32 %v1550, %v1673
  %v1675 = vpop.f32.mrb[0].mxu0
  %1676 = vmatprep.mubr.f32.mxu0 0.0
  %1677 = vmatmul.mubr.f32.gmra.mrb[0].mxu0 %v490
  %v1678 = vpop.f32.mrb[0].mxu0
  %v1679 = vadd.f32 %v1550, %v1678
  %v1680 = vpop.f32.mrb[0].mxu0
  %1681 = vmatprep.mubr.f32.mxu0 0.0
  %1682 = vmatmul.mubr.f32.gmra.mrb[0].mxu0 %v493
  %v1683 = vpop.f32.mrb[0].mxu0
  %v1684 = vadd.f32 %v1550, %v1683
  %v1685 = vpop.f32.mrb[0].mxu0
  %1686 = vmatprep.mubr.f32.mxu0 0.0
  %1687 = vmatmul.mubr.f32.gmra.mrb[0].mxu0 %v496
  %v1688 = vpop.f32.mrb[0].mxu0
  %v1689 = vadd.f32 %v1550, %v1688
  %v1690 = vpop.f32.mrb[0].mxu0
  %1691 = vmatprep.mubr.f32.mxu0 0.0
  %1692 = vmatmul.mubr.f32.gmra.mrb[0].mxu0 %v499
  %v1693 = vpop.f32.mrb[0].mxu0
  %v1694 = vadd.f32 %v1550, %v1693
  %v1695 = vpop.f32.mrb[0].mxu0
  %1696 = vdwg.mxu0
  %s1697 = scalar_lea.vmem %s11, 32
  %v1698 = vld [vmem:[%s1697] sm:$0xff]
  %v1699 = vld [vmem:[%s1697 + $0x8] sm:$0xff]
  %v1700 = vld [vmem:[%s1697 + $0x10] sm:$0xff]
  %v1701 = vld [vmem:[%s1697 + $0x18] sm:$0xff]
  %s1702 = scalar_lea.vmem %s17, 1
  %v1703 = vld [vmem:[%s1702] sm:$0x1]
  %v1705 = vlaneseq
  %v1706 = vshrl.u32 %v1705, 7
  %v1707 = vsub.s32 0, %v1706
  %v1708 = vrot.slane %v1703, %v1707
  %1710 = vmatprep.subr.mxu0 0.0
  %1711 = vmatpush1.msra.mxu0 %v1698
  %1712 = vmatprep.subr.mxu0 0.0
  %1713 = vmatpush1.msra.mxu0 %v1699
  %1714 = vmatprep.subr.mxu0 0.0
  %1715 = vmatpush1.msra.mxu0 %v1700
  %1716 = vmatprep.subr.mxu0 0.0
  %1717 = vmatpush1.msra.mxu0 %v1701
  %1718 = vmatprep.subr.mxu0 0.0
  %1719 = vmatpush1.msra.mxu0 0.0
  %1720 = vmatprep.subr.mxu0 0.0
  %1721 = vmatpush1.msra.mxu0 0.0
  %1722 = vmatprep.subr.mxu0 0.0
  %1723 = vmatpush1.msra.mxu0 0.0
  %1724 = vmatprep.subr.mxu0 0.0
  %1725 = vmatpush1.msra.mxu0 0.0
  %1726 = vmatprep.subr.mxu0 0.0
  %1727 = vmatpush1.msra.mxu0 0.0
  %1728 = vmatprep.subr.mxu0 0.0
  %1729 = vmatpush1.msra.mxu0 0.0
  %1730 = vmatprep.subr.mxu0 0.0
  %1731 = vmatpush1.msra.mxu0 0.0
  %1732 = vmatprep.subr.mxu0 0.0
  %1733 = vmatpush1.msra.mxu0 0.0
  %1734 = vmatprep.subr.mxu0 0.0
  %1735 = vmatpush1.msra.mxu0 0.0
  %1736 = vmatprep.subr.mxu0 0.0
  %1737 = vmatpush1.msra.mxu0 0.0
  %1738 = vmatprep.subr.mxu0 0.0
  %1739 = vmatpush1.msra.mxu0 0.0
  %1740 = vmatprep.subr.mxu0 0.0
  %1741 = vmatpush1.msra.mxu0 0.0
  %1742 = vmatprep.subr.mxu0 0.0
  %1743 = vmatpush1.msra.mxu0 0.0
  %1744 = vmatprep.subr.mxu0 0.0
  %1745 = vmatpush1.msra.mxu0 0.0
  %1746 = vmatprep.subr.mxu0 0.0
  %1747 = vmatpush1.msra.mxu0 0.0
  %1748 = vmatprep.subr.mxu0 0.0
  %1749 = vmatpush1.msra.mxu0 0.0
  %1750 = vmatprep.subr.mxu0 0.0
  %1751 = vmatpush1.msra.mxu0 0.0
  %1752 = vmatprep.subr.mxu0 0.0
  %1753 = vmatpush1.msra.mxu0 0.0
  %1754 = vmatprep.subr.mxu0 0.0
  %1755 = vmatpush1.msra.mxu0 0.0
  %1756 = vmatprep.subr.mxu0 0.0
  %1757 = vmatpush1.msra.mxu0 0.0
  %1758 = vmatprep.subr.mxu0 0.0
  %1759 = vmatpush1.msra.mxu0 0.0
  %1760 = vmatprep.subr.mxu0 0.0
  %1761 = vmatpush1.msra.mxu0 0.0
  %1762 = vmatprep.subr.mxu0 0.0
  %1763 = vmatpush1.msra.mxu0 0.0
  %1764 = vmatprep.subr.mxu0 0.0
  %1765 = vmatpush1.msra.mxu0 0.0
  %1766 = vmatprep.subr.mxu0 0.0
  %1767 = vmatpush1.msra.mxu0 0.0
  %1768 = vmatprep.subr.mxu0 0.0
  %1769 = vmatpush1.msra.mxu0 0.0
  %1770 = vmatprep.subr.mxu0 0.0
  %1771 = vmatpush1.msra.mxu0 0.0
  %1772 = vmatprep.subr.mxu0 0.0
  %1773 = vmatpush1.msra.mxu0 0.0
  %1774 = vmatprep.mubr.f32.mxu0 0.0
  %1775 = vmatmul.mubr.f32.gmra.mrb[0].mxu0 %v454
  %v1776 = vpop.f32.mrb[0].mxu0
  %v1777 = vadd.f32 %v1708, %v1776
  %v1778 = vpop.f32.mrb[0].mxu0
  %1779 = vmatprep.mubr.f32.mxu0 0.0
  %1780 = vmatmul.mubr.f32.gmra.mrb[0].mxu0 %v457
  %v1781 = vpop.f32.mrb[0].mxu0
  %v1782 = vadd.f32 %v1708, %v1781
  %v1783 = vpop.f32.mrb[0].mxu0
  %1784 = vmatprep.mubr.f32.mxu0 0.0
  %1785 = vmatmul.mubr.f32.gmra.mrb[0].mxu0 %v460
  %v1786 = vpop.f32.mrb[0].mxu0
  %v1787 = vadd.f32 %v1708, %v1786
  %v1788 = vpop.f32.mrb[0].mxu0
  %1789 = vmatprep.mubr.f32.mxu0 0.0
  %1790 = vmatmul.mubr.f32.gmra.mrb[0].mxu0 %v463
  %v1791 = vpop.f32.mrb[0].mxu0
  %v1792 = vadd.f32 %v1708, %v1791
  %v1793 = vpop.f32.mrb[0].mxu0
  %1794 = vmatprep.mubr.f32.mxu0 0.0
  %1795 = vmatmul.mubr.f32.gmra.mrb[0].mxu0 %v466
  %v1796 = vpop.f32.mrb[0].mxu0
  %v1797 = vadd.f32 %v1708, %v1796
  %v1798 = vpop.f32.mrb[0].mxu0
  %1799 = vmatprep.mubr.f32.mxu0 0.0
  %1800 = vmatmul.mubr.f32.gmra.mrb[0].mxu0 %v469
  %v1801 = vpop.f32.mrb[0].mxu0
  %v1802 = vadd.f32 %v1708, %v1801
  %v1803 = vpop.f32.mrb[0].mxu0
  %1804 = vmatprep.mubr.f32.mxu0 0.0
  %1805 = vmatmul.mubr.f32.gmra.mrb[0].mxu0 %v472
  %v1806 = vpop.f32.mrb[0].mxu0
  %v1807 = vadd.f32 %v1708, %v1806
  %v1808 = vpop.f32.mrb[0].mxu0
  %1809 = vmatprep.mubr.f32.mxu0 0.0
  %1810 = vmatmul.mubr.f32.gmra.mrb[0].mxu0 %v475
  %v1811 = vpop.f32.mrb[0].mxu0
  %v1812 = vadd.f32 %v1708, %v1811
  %v1813 = vpop.f32.mrb[0].mxu0
  %1814 = vmatprep.mubr.f32.mxu0 0.0
  %1815 = vmatmul.mubr.f32.gmra.mrb[0].mxu0 %v478
  %v1816 = vpop.f32.mrb[0].mxu0
  %v1817 = vadd.f32 %v1708, %v1816
  %v1818 = vpop.f32.mrb[0].mxu0
  %1819 = vmatprep.mubr.f32.mxu0 0.0
  %1820 = vmatmul.mubr.f32.gmra.mrb[0].mxu0 %v481
  %v1821 = vpop.f32.mrb[0].mxu0
  %v1822 = vadd.f32 %v1708, %v1821
  %v1823 = vpop.f32.mrb[0].mxu0
  %1824 = vmatprep.mubr.f32.mxu0 0.0
  %1825 = vmatmul.mubr.f32.gmra.mrb[0].mxu0 %v484
  %v1826 = vpop.f32.mrb[0].mxu0
  %v1827 = vadd.f32 %v1708, %v1826
  %v1828 = vpop.f32.mrb[0].mxu0
  %1829 = vmatprep.mubr.f32.mxu0 0.0
  %1830 = vmatmul.mubr.f32.gmra.mrb[0].mxu0 %v487
  %v1831 = vpop.f32.mrb[0].mxu0
  %v1832 = vadd.f32 %v1708, %v1831
  %v1833 = vpop.f32.mrb[0].mxu0
  %1834 = vmatprep.mubr.f32.mxu0 0.0
  %1835 = vmatmul.mubr.f32.gmra.mrb[0].mxu0 %v490
  %v1836 = vpop.f32.mrb[0].mxu0
  %v1837 = vadd.f32 %v1708, %v1836
  %v1838 = vpop.f32.mrb[0].mxu0
  %1839 = vmatprep.mubr.f32.mxu0 0.0
  %1840 = vmatmul.mubr.f32.gmra.mrb[0].mxu0 %v493
  %v1841 = vpop.f32.mrb[0].mxu0
  %v1842 = vadd.f32 %v1708, %v1841
  %v1843 = vpop.f32.mrb[0].mxu0
  %1844 = vmatprep.mubr.f32.mxu0 0.0
  %1845 = vmatmul.mubr.f32.gmra.mrb[0].mxu0 %v496
  %v1846 = vpop.f32.mrb[0].mxu0
  %v1847 = vadd.f32 %v1708, %v1846
  %v1848 = vpop.f32.mrb[0].mxu0
  %1849 = vmatprep.mubr.f32.mxu0 0.0
  %1850 = vmatmul.mubr.f32.gmra.mrb[0].mxu0 %v499
  %v1851 = vpop.f32.mrb[0].mxu0
  %v1852 = vadd.f32 %v1708, %v1851
  %v1853 = vpop.f32.mrb[0].mxu0
  %1854 = vdwg.mxu0
  %s1855 = scalar_lea.vmem %s13, 32
  %v1856 = vld [vmem:[%s1855] sm:$0xff]
  %v1857 = vld [vmem:[%s1855 + $0x8] sm:$0xff]
  %v1858 = vld [vmem:[%s1855 + $0x10] sm:$0xff]
  %v1859 = vld [vmem:[%s1855 + $0x18] sm:$0xff]
  %s1860 = scalar_lea.vmem %s19, 1
  %v1861 = vld [vmem:[%s1860] sm:$0x1]
  %v1863 = vlaneseq
  %v1864 = vshrl.u32 %v1863, 7
  %v1865 = vsub.s32 0, %v1864
  %v1866 = vrot.slane %v1861, %v1865
  %1868 = vmatprep.subr.mxu0 0.0
  %1869 = vmatpush1.msra.mxu0 %v1856
  %1870 = vmatprep.subr.mxu0 0.0
  %1871 = vmatpush1.msra.mxu0 %v1857
  %1872 = vmatprep.subr.mxu0 0.0
  %1873 = vmatpush1.msra.mxu0 %v1858
  %1874 = vmatprep.subr.mxu0 0.0
  %1875 = vmatpush1.msra.mxu0 %v1859
  %1876 = vmatprep.subr.mxu0 0.0
  %1877 = vmatpush1.msra.mxu0 0.0
  %1878 = vmatprep.subr.mxu0 0.0
  %1879 = vmatpush1.msra.mxu0 0.0
  %1880 = vmatprep.subr.mxu0 0.0
  %1881 = vmatpush1.msra.mxu0 0.0
  %1882 = vmatprep.subr.mxu0 0.0
  %1883 = vmatpush1.msra.mxu0 0.0
  %1884 = vmatprep.subr.mxu0 0.0
  %1885 = vmatpush1.msra.mxu0 0.0
  %1886 = vmatprep.subr.mxu0 0.0
  %1887 = vmatpush1.msra.mxu0 0.0
  %1888 = vmatprep.subr.mxu0 0.0
  %1889 = vmatpush1.msra.mxu0 0.0
  %1890 = vmatprep.subr.mxu0 0.0
  %1891 = vmatpush1.msra.mxu0 0.0
  %1892 = vmatprep.subr.mxu0 0.0
  %1893 = vmatpush1.msra.mxu0 0.0
  %1894 = vmatprep.subr.mxu0 0.0
  %1895 = vmatpush1.msra.mxu0 0.0
  %1896 = vmatprep.subr.mxu0 0.0
  %1897 = vmatpush1.msra.mxu0 0.0
  %1898 = vmatprep.subr.mxu0 0.0
  %1899 = vmatpush1.msra.mxu0 0.0
  %1900 = vmatprep.subr.mxu0 0.0
  %1901 = vmatpush1.msra.mxu0 0.0
  %1902 = vmatprep.subr.mxu0 0.0
  %1903 = vmatpush1.msra.mxu0 0.0
  %1904 = vmatprep.subr.mxu0 0.0
  %1905 = vmatpush1.msra.mxu0 0.0
  %1906 = vmatprep.subr.mxu0 0.0
  %1907 = vmatpush1.msra.mxu0 0.0
  %1908 = vmatprep.subr.mxu0 0.0
  %1909 = vmatpush1.msra.mxu0 0.0
  %1910 = vmatprep.subr.mxu0 0.0
  %1911 = vmatpush1.msra.mxu0 0.0
  %1912 = vmatprep.subr.mxu0 0.0
  %1913 = vmatpush1.msra.mxu0 0.0
  %1914 = vmatprep.subr.mxu0 0.0
  %1915 = vmatpush1.msra.mxu0 0.0
  %1916 = vmatprep.subr.mxu0 0.0
  %1917 = vmatpush1.msra.mxu0 0.0
  %1918 = vmatprep.subr.mxu0 0.0
  %1919 = vmatpush1.msra.mxu0 0.0
  %1920 = vmatprep.subr.mxu0 0.0
  %1921 = vmatpush1.msra.mxu0 0.0
  %1922 = vmatprep.subr.mxu0 0.0
  %1923 = vmatpush1.msra.mxu0 0.0
  %1924 = vmatprep.subr.mxu0 0.0
  %1925 = vmatpush1.msra.mxu0 0.0
  %1926 = vmatprep.subr.mxu0 0.0
  %1927 = vmatpush1.msra.mxu0 0.0
  %1928 = vmatprep.subr.mxu0 0.0
  %1929 = vmatpush1.msra.mxu0 0.0
  %1930 = vmatprep.subr.mxu0 0.0
  %1931 = vmatpush1.msra.mxu0 0.0
  %1932 = vmatprep.mubr.f32.mxu0 0.0
  %1933 = vmatmul.mubr.f32.gmra.mrb[0].mxu0 %v454
  %v1934 = vpop.f32.mrb[0].mxu0
  %v1935 = vadd.f32 %v1866, %v1934
  %v1936 = vpop.f32.mrb[0].mxu0
  %1937 = vmatprep.mubr.f32.mxu0 0.0
  %1938 = vmatmul.mubr.f32.gmra.mrb[0].mxu0 %v457
  %v1939 = vpop.f32.mrb[0].mxu0
  %v1940 = vadd.f32 %v1866, %v1939
  %v1941 = vpop.f32.mrb[0].mxu0
  %1942 = vmatprep.mubr.f32.mxu0 0.0
  %1943 = vmatmul.mubr.f32.gmra.mrb[0].mxu0 %v460
  %v1944 = vpop.f32.mrb[0].mxu0
  %v1945 = vadd.f32 %v1866, %v1944
  %v1946 = vpop.f32.mrb[0].mxu0
  %1947 = vmatprep.mubr.f32.mxu0 0.0
  %1948 = vmatmul.mubr.f32.gmra.mrb[0].mxu0 %v463
  %v1949 = vpop.f32.mrb[0].mxu0
  %v1950 = vadd.f32 %v1866, %v1949
  %v1951 = vpop.f32.mrb[0].mxu0
  %1952 = vmatprep.mubr.f32.mxu0 0.0
  %1953 = vmatmul.mubr.f32.gmra.mrb[0].mxu0 %v466
  %v1954 = vpop.f32.mrb[0].mxu0
  %v1955 = vadd.f32 %v1866, %v1954
  %v1956 = vpop.f32.mrb[0].mxu0
  %1957 = vmatprep.mubr.f32.mxu0 0.0
  %1958 = vmatmul.mubr.f32.gmra.mrb[0].mxu0 %v469
  %v1959 = vpop.f32.mrb[0].mxu0
  %v1960 = vadd.f32 %v1866, %v1959
  %v1961 = vpop.f32.mrb[0].mxu0
  %1962 = vmatprep.mubr.f32.mxu0 0.0
  %1963 = vmatmul.mubr.f32.gmra.mrb[0].mxu0 %v472
  %v1964 = vpop.f32.mrb[0].mxu0
  %v1965 = vadd.f32 %v1866, %v1964
  %v1966 = vpop.f32.mrb[0].mxu0
  %1967 = vmatprep.mubr.f32.mxu0 0.0
  %1968 = vmatmul.mubr.f32.gmra.mrb[0].mxu0 %v475
  %v1969 = vpop.f32.mrb[0].mxu0
  %v1970 = vadd.f32 %v1866, %v1969
  %v1971 = vpop.f32.mrb[0].mxu0
  %1972 = vmatprep.mubr.f32.mxu0 0.0
  %1973 = vmatmul.mubr.f32.gmra.mrb[0].mxu0 %v478
  %v1974 = vpop.f32.mrb[0].mxu0
  %v1975 = vadd.f32 %v1866, %v1974
  %v1976 = vpop.f32.mrb[0].mxu0
  %1977 = vmatprep.mubr.f32.mxu0 0.0
  %1978 = vmatmul.mubr.f32.gmra.mrb[0].mxu0 %v481
  %v1979 = vpop.f32.mrb[0].mxu0
  %v1980 = vadd.f32 %v1866, %v1979
  %v1981 = vpop.f32.mrb[0].mxu0
  %1982 = vmatprep.mubr.f32.mxu0 0.0
  %1983 = vmatmul.mubr.f32.gmra.mrb[0].mxu0 %v484
  %v1984 = vpop.f32.mrb[0].mxu0
  %v1985 = vadd.f32 %v1866, %v1984
  %v1986 = vpop.f32.mrb[0].mxu0
  %1987 = vmatprep.mubr.f32.mxu0 0.0
  %1988 = vmatmul.mubr.f32.gmra.mrb[0].mxu0 %v487
  %v1989 = vpop.f32.mrb[0].mxu0
  %v1990 = vadd.f32 %v1866, %v1989
  %v1991 = vpop.f32.mrb[0].mxu0
  %1992 = vmatprep.mubr.f32.mxu0 0.0
  %1993 = vmatmul.mubr.f32.gmra.mrb[0].mxu0 %v490
  %v1994 = vpop.f32.mrb[0].mxu0
  %v1995 = vadd.f32 %v1866, %v1994
  %v1996 = vpop.f32.mrb[0].mxu0
  %1997 = vmatprep.mubr.f32.mxu0 0.0
  %1998 = vmatmul.mubr.f32.gmra.mrb[0].mxu0 %v493
  %v1999 = vpop.f32.mrb[0].mxu0
  %v2000 = vadd.f32 %v1866, %v1999
  %v2001 = vpop.f32.mrb[0].mxu0
  %2002 = vmatprep.mubr.f32.mxu0 0.0
  %2003 = vmatmul.mubr.f32.gmra.mrb[0].mxu0 %v496
  %v2004 = vpop.f32.mrb[0].mxu0
  %v2005 = vadd.f32 %v1866, %v2004
  %v2006 = vpop.f32.mrb[0].mxu0
  %2007 = vmatprep.mubr.f32.mxu0 0.0
  %2008 = vmatmul.mubr.f32.gmra.mrb[0].mxu0 %v499
  %v2009 = vpop.f32.mrb[0].mxu0
  %v2010 = vadd.f32 %v1866, %v2009
  %v2011 = vpop.f32.mrb[0].mxu0
  %2012 = vdwg.mxu0
  %v2014 = vsel %vm958, %v1619, 0
  %v2017 = vsel %vm958, %v1624, 0
  %v2020 = vsel %vm958, %v1629, 0
  %v2023 = vsel %vm958, %v1634, 0
  %v2026 = vsel %vm958, %v1639, 0
  %v2029 = vsel %vm958, %v1644, 0
  %v2032 = vsel %vm958, %v1649, 0
  %v2035 = vsel %vm958, %v1654, 0
  %v2038 = vsel %vm958, %v1659, 0
  %v2041 = vsel %vm958, %v1664, 0
  %v2044 = vsel %vm958, %v1669, 0
  %v2047 = vsel %vm958, %v1674, 0
  %v2050 = vsel %vm958, %v1679, 0
  %v2053 = vsel %vm958, %v1684, 0
  %v2056 = vsel %vm958, %v1689, 0
  %v2059 = vsel %vm958, %v1694, 0
  %v2062 = vsel %vm958, %v1777, 0
  %v2065 = vsel %vm958, %v1782, 0
  %v2068 = vsel %vm958, %v1787, 0
  %v2071 = vsel %vm958, %v1792, 0
  %v2074 = vsel %vm958, %v1797, 0
  %v2077 = vsel %vm958, %v1802, 0
  %v2080 = vsel %vm958, %v1807, 0
  %v2083 = vsel %vm958, %v1812, 0
  %v2086 = vsel %vm958, %v1817, 0
  %v2089 = vsel %vm958, %v1822, 0
  %v2092 = vsel %vm958, %v1827, 0
  %v2095 = vsel %vm958, %v1832, 0
  %v2098 = vsel %vm958, %v1837, 0
  %v2101 = vsel %vm958, %v1842, 0
  %v2104 = vsel %vm958, %v1847, 0
  %v2107 = vsel %vm958, %v1852, 0
  %2109 = vmatprep.subr.mxu0 0.0
  %2110 = vmatpush1.xpose.msra.mxu0 %v2062
  %2111 = vmatprep.subr.mxu0 0.0
  %2112 = vmatpush1.xpose.msra.mxu0 %v2065
  %2113 = vmatprep.subr.mxu0 0.0
  %2114 = vmatpush1.xpose.msra.mxu0 %v2068
  %2115 = vmatprep.subr.mxu0 0.0
  %2116 = vmatpush1.xpose.msra.mxu0 %v2071
  %2117 = vmatprep.subr.mxu0 0.0
  %2118 = vmatpush1.xpose.msra.mxu0 %v2074
  %2119 = vmatprep.subr.mxu0 0.0
  %2120 = vmatpush1.xpose.msra.mxu0 %v2077
  %2121 = vmatprep.subr.mxu0 0.0
  %2122 = vmatpush1.xpose.msra.mxu0 %v2080
  %2123 = vmatprep.subr.mxu0 0.0
  %2124 = vmatpush1.xpose.msra.mxu0 %v2083
  %2125 = vmatprep.subr.mxu0 0.0
  %2126 = vmatpush1.xpose.msra.mxu0 %v2086
  %2127 = vmatprep.subr.mxu0 0.0
  %2128 = vmatpush1.xpose.msra.mxu0 %v2089
  %2129 = vmatprep.subr.mxu0 0.0
  %2130 = vmatpush1.xpose.msra.mxu0 %v2092
  %2131 = vmatprep.subr.mxu0 0.0
  %2132 = vmatpush1.xpose.msra.mxu0 %v2095
  %2133 = vmatprep.subr.mxu0 0.0
  %2134 = vmatpush1.xpose.msra.mxu0 %v2098
  %2135 = vmatprep.subr.mxu0 0.0
  %2136 = vmatpush1.xpose.msra.mxu0 %v2101
  %2137 = vmatprep.subr.mxu0 0.0
  %2138 = vmatpush1.xpose.msra.mxu0 %v2104
  %2139 = vmatprep.subr.mxu0 0.0
  %2140 = vmatpush1.xpose.msra.mxu0 %v2107
  %2141 = vmatprep.subr.mxu0 0.0
  %2142 = vmatpush1.xpose.msra.mxu0 0.0
  %2143 = vmatprep.subr.mxu0 0.0
  %2144 = vmatpush1.xpose.msra.mxu0 0.0
  %2145 = vmatprep.subr.mxu0 0.0
  %2146 = vmatpush1.xpose.msra.mxu0 0.0
  %2147 = vmatprep.subr.mxu0 0.0
  %2148 = vmatpush1.xpose.msra.mxu0 0.0
  %2149 = vmatprep.subr.mxu0 0.0
  %2150 = vmatpush1.xpose.msra.mxu0 0.0
  %2151 = vmatprep.subr.mxu0 0.0
  %2152 = vmatpush1.xpose.msra.mxu0 0.0
  %2153 = vmatprep.subr.mxu0 0.0
  %2154 = vmatpush1.xpose.msra.mxu0 0.0
  %2155 = vmatprep.subr.mxu0 0.0
  %2156 = vmatpush1.xpose.msra.mxu0 0.0
  %2157 = vmatprep.subr.mxu0 0.0
  %2158 = vmatpush1.xpose.msra.mxu0 0.0
  %2159 = vmatprep.subr.mxu0 0.0
  %2160 = vmatpush1.xpose.msra.mxu0 0.0
  %2161 = vmatprep.subr.mxu0 0.0
  %2162 = vmatpush1.xpose.msra.mxu0 0.0
  %2163 = vmatprep.subr.mxu0 0.0
  %2164 = vmatpush1.xpose.msra.mxu0 0.0
  %2165 = vmatprep.subr.mxu0 0.0
  %2166 = vmatpush1.xpose.msra.mxu0 0.0
  %2167 = vmatprep.subr.mxu0 0.0
  %2168 = vmatpush1.xpose.msra.mxu0 0.0
  %2169 = vmatprep.subr.mxu0 0.0
  %2170 = vmatpush1.xpose.msra.mxu0 0.0
  %2171 = vmatprep.subr.mxu0 0.0
  %2172 = vmatpush1.xpose.msra.mxu0 0.0
  %2173 = vmatprep.mubr.f32.mxu0 0.0
  %2174 = vmatmul.mubr.f32.gmra.mrb[0].mxu0 %v2014
  %v2175 = vpop.f32.mrb[0].mxu0
  %v2176 = vadd.f32 0.0, %v2175
  %v2177 = vpop.f32.mrb[0].mxu0
  %2178 = vmatprep.mubr.f32.mxu0 0.0
  %2179 = vmatmul.mubr.f32.gmra.mrb[0].mxu0 %v2017
  %v2180 = vpop.f32.mrb[0].mxu0
  %v2181 = vadd.f32 0.0, %v2180
  %v2182 = vpop.f32.mrb[0].mxu0
  %2183 = vmatprep.mubr.f32.mxu0 0.0
  %2184 = vmatmul.mubr.f32.gmra.mrb[0].mxu0 %v2020
  %v2185 = vpop.f32.mrb[0].mxu0
  %v2186 = vadd.f32 0.0, %v2185
  %v2187 = vpop.f32.mrb[0].mxu0
  %2188 = vmatprep.mubr.f32.mxu0 0.0
  %2189 = vmatmul.mubr.f32.gmra.mrb[0].mxu0 %v2023
  %v2190 = vpop.f32.mrb[0].mxu0
  %v2191 = vadd.f32 0.0, %v2190
  %v2192 = vpop.f32.mrb[0].mxu0
  %2193 = vmatprep.mubr.f32.mxu0 0.0
  %2194 = vmatmul.mubr.f32.gmra.mrb[0].mxu0 %v2026
  %v2195 = vpop.f32.mrb[0].mxu0
  %v2196 = vadd.f32 0.0, %v2195
  %v2197 = vpop.f32.mrb[0].mxu0
  %2198 = vmatprep.mubr.f32.mxu0 0.0
  %2199 = vmatmul.mubr.f32.gmra.mrb[0].mxu0 %v2029
  %v2200 = vpop.f32.mrb[0].mxu0
  %v2201 = vadd.f32 0.0, %v2200
  %v2202 = vpop.f32.mrb[0].mxu0
  %2203 = vmatprep.mubr.f32.mxu0 0.0
  %2204 = vmatmul.mubr.f32.gmra.mrb[0].mxu0 %v2032
  %v2205 = vpop.f32.mrb[0].mxu0
  %v2206 = vadd.f32 0.0, %v2205
  %v2207 = vpop.f32.mrb[0].mxu0
  %2208 = vmatprep.mubr.f32.mxu0 0.0
  %2209 = vmatmul.mubr.f32.gmra.mrb[0].mxu0 %v2035
  %v2210 = vpop.f32.mrb[0].mxu0
  %v2211 = vadd.f32 0.0, %v2210
  %v2212 = vpop.f32.mrb[0].mxu0
  %2213 = vmatprep.mubr.f32.mxu0 0.0
  %2214 = vmatmul.mubr.f32.gmra.mrb[0].mxu0 %v2038
  %v2215 = vpop.f32.mrb[0].mxu0
  %v2216 = vadd.f32 0.0, %v2215
  %v2217 = vpop.f32.mrb[0].mxu0
  %2218 = vmatprep.mubr.f32.mxu0 0.0
  %2219 = vmatmul.mubr.f32.gmra.mrb[0].mxu0 %v2041
  %v2220 = vpop.f32.mrb[0].mxu0
  %v2221 = vadd.f32 0.0, %v2220
  %v2222 = vpop.f32.mrb[0].mxu0
  %2223 = vmatprep.mubr.f32.mxu0 0.0
  %2224 = vmatmul.mubr.f32.gmra.mrb[0].mxu0 %v2044
  %v2225 = vpop.f32.mrb[0].mxu0
  %v2226 = vadd.f32 0.0, %v2225
  %v2227 = vpop.f32.mrb[0].mxu0
  %2228 = vmatprep.mubr.f32.mxu0 0.0
  %2229 = vmatmul.mubr.f32.gmra.mrb[0].mxu0 %v2047
  %v2230 = vpop.f32.mrb[0].mxu0
  %v2231 = vadd.f32 0.0, %v2230
  %v2232 = vpop.f32.mrb[0].mxu0
  %2233 = vmatprep.mubr.f32.mxu0 0.0
  %2234 = vmatmul.mubr.f32.gmra.mrb[0].mxu0 %v2050
  %v2235 = vpop.f32.mrb[0].mxu0
  %v2236 = vadd.f32 0.0, %v2235
  %v2237 = vpop.f32.mrb[0].mxu0
  %2238 = vmatprep.mubr.f32.mxu0 0.0
  %2239 = vmatmul.mubr.f32.gmra.mrb[0].mxu0 %v2053
  %v2240 = vpop.f32.mrb[0].mxu0
  %v2241 = vadd.f32 0.0, %v2240
  %v2242 = vpop.f32.mrb[0].mxu0
  %2243 = vmatprep.mubr.f32.mxu0 0.0
  %2244 = vmatmul.mubr.f32.gmra.mrb[0].mxu0 %v2056
  %v2245 = vpop.f32.mrb[0].mxu0
  %v2246 = vadd.f32 0.0, %v2245
  %v2247 = vpop.f32.mrb[0].mxu0
  %2248 = vmatprep.mubr.f32.mxu0 0.0
  %2249 = vmatmul.mubr.f32.gmra.mrb[0].mxu0 %v2059
  %v2250 = vpop.f32.mrb[0].mxu0
  %v2251 = vadd.f32 0.0, %v2250
  %v2252 = vpop.f32.mrb[0].mxu0
  %2253 = vdwg.mxu0
  %v2254 = vmul.f32 %v2176, 0.25
  %v2255 = vmul.f32 %v2181, 0.25
  %v2256 = vmul.f32 %v2186, 0.25
  %v2257 = vmul.f32 %v2191, 0.25
  %v2258 = vmul.f32 %v2196, 0.25
  %v2259 = vmul.f32 %v2201, 0.25
  %v2260 = vmul.f32 %v2206, 0.25
  %v2261 = vmul.f32 %v2211, 0.25
  %v2262 = vmul.f32 %v2216, 0.25
  %v2263 = vmul.f32 %v2221, 0.25
  %v2264 = vmul.f32 %v2226, 0.25
  %v2265 = vmul.f32 %v2231, 0.25
  %v2266 = vmul.f32 %v2236, 0.25
  %v2267 = vmul.f32 %v2241, 0.25
  %v2268 = vmul.f32 %v2246, 0.25
  %v2269 = vmul.f32 %v2251, 0.25
  %s2270 = scalar_lea.vmem %s25, 128
  %v2271 = vld [vmem:[%s2270] sm:$0xff]
  %v2272 = vld [vmem:[%s2270 + $0x8] sm:$0xff]
  %v2273 = vld [vmem:[%s2270 + $0x10] sm:$0xff]
  %v2274 = vld [vmem:[%s2270 + $0x18] sm:$0xff]
  %v2275 = vld [vmem:[%s2270 + $0x20] sm:$0xff]
  %v2276 = vld [vmem:[%s2270 + $0x28] sm:$0xff]
  %v2277 = vld [vmem:[%s2270 + $0x30] sm:$0xff]
  %v2278 = vld [vmem:[%s2270 + $0x38] sm:$0xff]
  %v2279 = vld [vmem:[%s2270 + $0x40] sm:$0xff]
  %v2280 = vld [vmem:[%s2270 + $0x48] sm:$0xff]
  %v2281 = vld [vmem:[%s2270 + $0x50] sm:$0xff]
  %v2282 = vld [vmem:[%s2270 + $0x58] sm:$0xff]
  %v2283 = vld [vmem:[%s2270 + $0x60] sm:$0xff]
  %v2284 = vld [vmem:[%s2270 + $0x68] sm:$0xff]
  %v2285 = vld [vmem:[%s2270 + $0x70] sm:$0xff]
  %v2286 = vld [vmem:[%s2270 + $0x78] sm:$0xff]
  %v2287 = vadd.f32 %v2254, %v2271
  %v2288 = vadd.f32 %v2255, %v2272
  %v2289 = vadd.f32 %v2256, %v2273
  %v2290 = vadd.f32 %v2257, %v2274
  %v2291 = vadd.f32 %v2258, %v2275
  %v2292 = vadd.f32 %v2259, %v2276
  %v2293 = vadd.f32 %v2260, %v2277
  %v2294 = vadd.f32 %v2261, %v2278
  %v2295 = vadd.f32 %v2262, %v2279
  %v2296 = vadd.f32 %v2263, %v2280
  %v2297 = vadd.f32 %v2264, %v2281
  %v2298 = vadd.f32 %v2265, %v2282
  %v2299 = vadd.f32 %v2266, %v2283
  %v2300 = vadd.f32 %v2267, %v2284
  %v2301 = vadd.f32 %v2268, %v2285
  %v2302 = vadd.f32 %v2269, %v2286
  %2303 = vmax.xlane.f32.xlu0 %v2287
  %v2304 = vpop.xlane.xlu0 %2303
  %2305 = vmax.xlane.f32.xlu0 %v2288
  %v2306 = vpop.xlane.xlu0 %2305
  %2307 = vmax.xlane.f32.xlu0 %v2289
  %v2308 = vpop.xlane.xlu0 %2307
  %2309 = vmax.xlane.f32.xlu0 %v2290
  %v2310 = vpop.xlane.xlu0 %2309
  %2311 = vmax.xlane.f32.xlu0 %v2291
  %v2312 = vpop.xlane.xlu0 %2311
  %2313 = vmax.xlane.f32.xlu0 %v2292
  %v2314 = vpop.xlane.xlu0 %2313
  %2315 = vmax.xlane.f32.xlu0 %v2293
  %v2316 = vpop.xlane.xlu0 %2315
  %2317 = vmax.xlane.f32.xlu0 %v2294
  %v2318 = vpop.xlane.xlu0 %2317
  %2319 = vmax.xlane.f32.xlu0 %v2295
  %v2320 = vpop.xlane.xlu0 %2319
  %2321 = vmax.xlane.f32.xlu0 %v2296
  %v2322 = vpop.xlane.xlu0 %2321
  %2323 = vmax.xlane.f32.xlu0 %v2297
  %v2324 = vpop.xlane.xlu0 %2323
  %2325 = vmax.xlane.f32.xlu0 %v2298
  %v2326 = vpop.xlane.xlu0 %2325
  %2327 = vmax.xlane.f32.xlu0 %v2299
  %v2328 = vpop.xlane.xlu0 %2327
  %2329 = vmax.xlane.f32.xlu0 %v2300
  %v2330 = vpop.xlane.xlu0 %2329
  %2331 = vmax.xlane.f32.xlu0 %v2301
  %v2332 = vpop.xlane.xlu0 %2331
  %2333 = vmax.xlane.f32.xlu0 %v2302
  %v2334 = vpop.xlane.xlu0 %2333
  %v2335 = vsub.f32 %v2287, %v2304
  %v2336 = vsub.f32 %v2288, %v2306
  %v2337 = vsub.f32 %v2289, %v2308
  %v2338 = vsub.f32 %v2290, %v2310
  %v2339 = vsub.f32 %v2291, %v2312
  %v2340 = vsub.f32 %v2292, %v2314
  %v2341 = vsub.f32 %v2293, %v2316
  %v2342 = vsub.f32 %v2294, %v2318
  %v2343 = vsub.f32 %v2295, %v2320
  %v2344 = vsub.f32 %v2296, %v2322
  %v2345 = vsub.f32 %v2297, %v2324
  %v2346 = vsub.f32 %v2298, %v2326
  %v2347 = vsub.f32 %v2299, %v2328
  %v2348 = vsub.f32 %v2300, %v2330
  %v2349 = vsub.f32 %v2301, %v2332
  %v2350 = vsub.f32 %v2302, %v2334
  %v2351 = vmul.f32 %v2335, 1.442695
  %v2352 = vpow.pop %v2351
  %v2353 = vmul.f32 %v2336, 1.442695
  %v2354 = vpow.pop %v2353
  %v2355 = vmul.f32 %v2337, 1.442695
  %v2356 = vpow.pop %v2355
  %v2357 = vmul.f32 %v2338, 1.442695
  %v2358 = vpow.pop %v2357
  %v2359 = vmul.f32 %v2339, 1.442695
  %v2360 = vpow.pop %v2359
  %v2361 = vmul.f32 %v2340, 1.442695
  %v2362 = vpow.pop %v2361
  %v2363 = vmul.f32 %v2341, 1.442695
  %v2364 = vpow.pop %v2363
  %v2365 = vmul.f32 %v2342, 1.442695
  %v2366 = vpow.pop %v2365
  %v2367 = vmul.f32 %v2343, 1.442695
  %v2368 = vpow.pop %v2367
  %v2369 = vmul.f32 %v2344, 1.442695
  %v2370 = vpow.pop %v2369
  %v2371 = vmul.f32 %v2345, 1.442695
  %v2372 = vpow.pop %v2371
  %v2373 = vmul.f32 %v2346, 1.442695
  %v2374 = vpow.pop %v2373
  %v2375 = vmul.f32 %v2347, 1.442695
  %v2376 = vpow.pop %v2375
  %v2377 = vmul.f32 %v2348, 1.442695
  %v2378 = vpow.pop %v2377
  %v2379 = vmul.f32 %v2349, 1.442695
  %v2380 = vpow.pop %v2379
  %v2381 = vmul.f32 %v2350, 1.442695
  %v2382 = vpow.pop %v2381
  %2383 = vadd.xlane.f32.xlu0 %v2352
  %v2384 = vpop.xlane.xlu0 %2383
  %2385 = vadd.xlane.f32.xlu0 %v2354
  %v2386 = vpop.xlane.xlu0 %2385
  %2387 = vadd.xlane.f32.xlu0 %v2356
  %v2388 = vpop.xlane.xlu0 %2387
  %2389 = vadd.xlane.f32.xlu0 %v2358
  %v2390 = vpop.xlane.xlu0 %2389
  %2391 = vadd.xlane.f32.xlu0 %v2360
  %v2392 = vpop.xlane.xlu0 %2391
  %2393 = vadd.xlane.f32.xlu0 %v2362
  %v2394 = vpop.xlane.xlu0 %2393
  %2395 = vadd.xlane.f32.xlu0 %v2364
  %v2396 = vpop.xlane.xlu0 %2395
  %2397 = vadd.xlane.f32.xlu0 %v2366
  %v2398 = vpop.xlane.xlu0 %2397
  %2399 = vadd.xlane.f32.xlu0 %v2368
  %v2400 = vpop.xlane.xlu0 %2399
  %2401 = vadd.xlane.f32.xlu0 %v2370
  %v2402 = vpop.xlane.xlu0 %2401
  %2403 = vadd.xlane.f32.xlu0 %v2372
  %v2404 = vpop.xlane.xlu0 %2403
  %2405 = vadd.xlane.f32.xlu0 %v2374
  %v2406 = vpop.xlane.xlu0 %2405
  %2407 = vadd.xlane.f32.xlu0 %v2376
  %v2408 = vpop.xlane.xlu0 %2407
  %2409 = vadd.xlane.f32.xlu0 %v2378
  %v2410 = vpop.xlane.xlu0 %2409
  %2411 = vadd.xlane.f32.xlu0 %v2380
  %v2412 = vpop.xlane.xlu0 %2411
  %2413 = vadd.xlane.f32.xlu0 %v2382
  %v2414 = vpop.xlane.xlu0 %2413
  %v2415 = vrcp.pop %v2384
  %v2416 = vmul.f32 %v2352, %v2415
  %v2417 = vrcp.pop %v2386
  %v2418 = vmul.f32 %v2354, %v2417
  %v2419 = vrcp.pop %v2388
  %v2420 = vmul.f32 %v2356, %v2419
  %v2421 = vrcp.pop %v2390
  %v2422 = vmul.f32 %v2358, %v2421
  %v2423 = vrcp.pop %v2392
  %v2424 = vmul.f32 %v2360, %v2423
  %v2425 = vrcp.pop %v2394
  %v2426 = vmul.f32 %v2362, %v2425
  %v2427 = vrcp.pop %v2396
  %v2428 = vmul.f32 %v2364, %v2427
  %v2429 = vrcp.pop %v2398
  %v2430 = vmul.f32 %v2366, %v2429
  %v2431 = vrcp.pop %v2400
  %v2432 = vmul.f32 %v2368, %v2431
  %v2433 = vrcp.pop %v2402
  %v2434 = vmul.f32 %v2370, %v2433
  %v2435 = vrcp.pop %v2404
  %v2436 = vmul.f32 %v2372, %v2435
  %v2437 = vrcp.pop %v2406
  %v2438 = vmul.f32 %v2374, %v2437
  %v2439 = vrcp.pop %v2408
  %v2440 = vmul.f32 %v2376, %v2439
  %v2441 = vrcp.pop %v2410
  %v2442 = vmul.f32 %v2378, %v2441
  %v2443 = vrcp.pop %v2412
  %v2444 = vmul.f32 %v2380, %v2443
  %v2445 = vrcp.pop %v2414
  %v2446 = vmul.f32 %v2382, %v2445
  %2447 = vmatprep.subr.mxu0 0.0
  %2448 = vmatpush1.msra.mxu0 %v1935
  %2449 = vmatprep.subr.mxu0 0.0
  %2450 = vmatpush1.msra.mxu0 %v1940
  %2451 = vmatprep.subr.mxu0 0.0
  %2452 = vmatpush1.msra.mxu0 %v1945
  %2453 = vmatprep.subr.mxu0 0.0
  %2454 = vmatpush1.msra.mxu0 %v1950
  %2455 = vmatprep.subr.mxu0 0.0
  %2456 = vmatpush1.msra.mxu0 %v1955
  %2457 = vmatprep.subr.mxu0 0.0
  %2458 = vmatpush1.msra.mxu0 %v1960
  %2459 = vmatprep.subr.mxu0 0.0
  %2460 = vmatpush1.msra.mxu0 %v1965
  %2461 = vmatprep.subr.mxu0 0.0
  %2462 = vmatpush1.msra.mxu0 %v1970
  %2463 = vmatprep.subr.mxu0 0.0
  %2464 = vmatpush1.msra.mxu0 %v1975
  %2465 = vmatprep.subr.mxu0 0.0
  %2466 = vmatpush1.msra.mxu0 %v1980
  %2467 = vmatprep.subr.mxu0 0.0
  %2468 = vmatpush1.msra.mxu0 %v1985
  %2469 = vmatprep.subr.mxu0 0.0
  %2470 = vmatpush1.msra.mxu0 %v1990
  %2471 = vmatprep.subr.mxu0 0.0
  %2472 = vmatpush1.msra.mxu0 %v1995
  %2473 = vmatprep.subr.mxu0 0.0
  %2474 = vmatpush1.msra.mxu0 %v2000
  %2475 = vmatprep.subr.mxu0 0.0
  %2476 = vmatpush1.msra.mxu0 %v2005
  %2477 = vmatprep.subr.mxu0 0.0
  %2478 = vmatpush1.msra.mxu0 %v2010
  %2479 = vmatprep.subr.mxu0 0.0
  %2480 = vmatpush1.msra.mxu0 0.0
  %2481 = vmatprep.subr.mxu0 0.0
  %2482 = vmatpush1.msra.mxu0 0.0
  %2483 = vmatprep.subr.mxu0 0.0
  %2484 = vmatpush1.msra.mxu0 0.0
  %2485 = vmatprep.subr.mxu0 0.0
  %2486 = vmatpush1.msra.mxu0 0.0
  %2487 = vmatprep.subr.mxu0 0.0
  %2488 = vmatpush1.msra.mxu0 0.0
  %2489 = vmatprep.subr.mxu0 0.0
  %2490 = vmatpush1.msra.mxu0 0.0
  %2491 = vmatprep.subr.mxu0 0.0
  %2492 = vmatpush1.msra.mxu0 0.0
  %2493 = vmatprep.subr.mxu0 0.0
  %2494 = vmatpush1.msra.mxu0 0.0
  %2495 = vmatprep.subr.mxu0 0.0
  %2496 = vmatpush1.msra.mxu0 0.0
  %2497 = vmatprep.subr.mxu0 0.0
  %2498 = vmatpush1.msra.mxu0 0.0
  %2499 = vmatprep.subr.mxu0 0.0
  %2500 = vmatpush1.msra.mxu0 0.0
  %2501 = vmatprep.subr.mxu0 0.0
  %2502 = vmatpush1.msra.mxu0 0.0
  %2503 = vmatprep.subr.mxu0 0.0
  %2504 = vmatpush1.msra.mxu0 0.0
  %2505 = vmatprep.subr.mxu0 0.0
  %2506 = vmatpush1.msra.mxu0 0.0
  %2507 = vmatprep.subr.mxu0 0.0
  %2508 = vmatpush1.msra.mxu0 0.0
  %2509 = vmatprep.subr.mxu0 0.0
  %2510 = vmatpush1.msra.mxu0 0.0
  %2511 = vmatprep.mubr.f32.mxu0 0.0
  %2512 = vmatmul.mubr.f32.gmra.mrb[0].mxu0 %v2416
  %v2513 = vpop.f32.mrb[0].mxu0
  %v2514 = vadd.f32 0.0, %v2513
  %v2515 = vpop.f32.mrb[0].mxu0
  %2516 = vmatprep.mubr.f32.mxu0 0.0
  %2517 = vmatmul.mubr.f32.gmra.mrb[0].mxu0 %v2418
  %v2518 = vpop.f32.mrb[0].mxu0
  %v2519 = vadd.f32 0.0, %v2518
  %v2520 = vpop.f32.mrb[0].mxu0
  %2521 = vmatprep.mubr.f32.mxu0 0.0
  %2522 = vmatmul.mubr.f32.gmra.mrb[0].mxu0 %v2420
  %v2523 = vpop.f32.mrb[0].mxu0
  %v2524 = vadd.f32 0.0, %v2523
  %v2525 = vpop.f32.mrb[0].mxu0
  %2526 = vmatprep.mubr.f32.mxu0 0.0
  %2527 = vmatmul.mubr.f32.gmra.mrb[0].mxu0 %v2422
  %v2528 = vpop.f32.mrb[0].mxu0
  %v2529 = vadd.f32 0.0, %v2528
  %v2530 = vpop.f32.mrb[0].mxu0
  %2531 = vmatprep.mubr.f32.mxu0 0.0
  %2532 = vmatmul.mubr.f32.gmra.mrb[0].mxu0 %v2424
  %v2533 = vpop.f32.mrb[0].mxu0
  %v2534 = vadd.f32 0.0, %v2533
  %v2535 = vpop.f32.mrb[0].mxu0
  %2536 = vmatprep.mubr.f32.mxu0 0.0
  %2537 = vmatmul.mubr.f32.gmra.mrb[0].mxu0 %v2426
  %v2538 = vpop.f32.mrb[0].mxu0
  %v2539 = vadd.f32 0.0, %v2538
  %v2540 = vpop.f32.mrb[0].mxu0
  %2541 = vmatprep.mubr.f32.mxu0 0.0
  %2542 = vmatmul.mubr.f32.gmra.mrb[0].mxu0 %v2428
  %v2543 = vpop.f32.mrb[0].mxu0
  %v2544 = vadd.f32 0.0, %v2543
  %v2545 = vpop.f32.mrb[0].mxu0
  %2546 = vmatprep.mubr.f32.mxu0 0.0
  %2547 = vmatmul.mubr.f32.gmra.mrb[0].mxu0 %v2430
  %v2548 = vpop.f32.mrb[0].mxu0
  %v2549 = vadd.f32 0.0, %v2548
  %v2550 = vpop.f32.mrb[0].mxu0
  %2551 = vmatprep.mubr.f32.mxu0 0.0
  %2552 = vmatmul.mubr.f32.gmra.mrb[0].mxu0 %v2432
  %v2553 = vpop.f32.mrb[0].mxu0
  %v2554 = vadd.f32 0.0, %v2553
  %v2555 = vpop.f32.mrb[0].mxu0
  %2556 = vmatprep.mubr.f32.mxu0 0.0
  %2557 = vmatmul.mubr.f32.gmra.mrb[0].mxu0 %v2434
  %v2558 = vpop.f32.mrb[0].mxu0
  %v2559 = vadd.f32 0.0, %v2558
  %v2560 = vpop.f32.mrb[0].mxu0
  %2561 = vmatprep.mubr.f32.mxu0 0.0
  %2562 = vmatmul.mubr.f32.gmra.mrb[0].mxu0 %v2436
  %v2563 = vpop.f32.mrb[0].mxu0
  %v2564 = vadd.f32 0.0, %v2563
  %v2565 = vpop.f32.mrb[0].mxu0
  %2566 = vmatprep.mubr.f32.mxu0 0.0
  %2567 = vmatmul.mubr.f32.gmra.mrb[0].mxu0 %v2438
  %v2568 = vpop.f32.mrb[0].mxu0
  %v2569 = vadd.f32 0.0, %v2568
  %v2570 = vpop.f32.mrb[0].mxu0
  %2571 = vmatprep.mubr.f32.mxu0 0.0
  %2572 = vmatmul.mubr.f32.gmra.mrb[0].mxu0 %v2440
  %v2573 = vpop.f32.mrb[0].mxu0
  %v2574 = vadd.f32 0.0, %v2573
  %v2575 = vpop.f32.mrb[0].mxu0
  %2576 = vmatprep.mubr.f32.mxu0 0.0
  %2577 = vmatmul.mubr.f32.gmra.mrb[0].mxu0 %v2442
  %v2578 = vpop.f32.mrb[0].mxu0
  %v2579 = vadd.f32 0.0, %v2578
  %v2580 = vpop.f32.mrb[0].mxu0
  %2581 = vmatprep.mubr.f32.mxu0 0.0
  %2582 = vmatmul.mubr.f32.gmra.mrb[0].mxu0 %v2444
  %v2583 = vpop.f32.mrb[0].mxu0
  %v2584 = vadd.f32 0.0, %v2583
  %v2585 = vpop.f32.mrb[0].mxu0
  %2586 = vmatprep.mubr.f32.mxu0 0.0
  %2587 = vmatmul.mubr.f32.gmra.mrb[0].mxu0 %v2446
  %v2588 = vpop.f32.mrb[0].mxu0
  %v2589 = vadd.f32 0.0, %v2588
  %v2590 = vpop.f32.mrb[0].mxu0
  %2591 = vdwg.mxu0
  %s2592 = scalar_lea.vmem %s21, 16
  %v2593 = vld [vmem:[%s2592] sm:$0xff]
  %v2594 = vld [vmem:[%s2592 + $0x8] sm:$0xff]
  %v2596 = vsel %vm958, %v2514, 0
  %v2599 = vsel %vm958, %v2519, 0
  %v2602 = vsel %vm958, %v2524, 0
  %v2605 = vsel %vm958, %v2529, 0
  %v2608 = vsel %vm958, %v2534, 0
  %v2611 = vsel %vm958, %v2539, 0
  %v2614 = vsel %vm958, %v2544, 0
  %v2617 = vsel %vm958, %v2549, 0
  %v2620 = vsel %vm958, %v2554, 0
  %v2623 = vsel %vm958, %v2559, 0
  %v2626 = vsel %vm958, %v2564, 0
  %v2629 = vsel %vm958, %v2569, 0
  %v2632 = vsel %vm958, %v2574, 0
  %v2635 = vsel %vm958, %v2579, 0
  %v2638 = vsel %vm958, %v2584, 0
  %v2641 = vsel %vm958, %v2589, 0
  %2643 = vmatprep.subr.mxu0 0.0
  %2644 = vmatpush1.msra.mxu0 %v2593
  %2645 = vmatprep.subr.mxu0 0.0
  %2646 = vmatpush1.msra.mxu0 %v2594
  %2647 = vmatprep.subr.mxu0 0.0
  %2648 = vmatpush1.msra.mxu0 0.0
  %2649 = vmatprep.subr.mxu0 0.0
  %2650 = vmatpush1.msra.mxu0 0.0
  %2651 = vmatprep.subr.mxu0 0.0
  %2652 = vmatpush1.msra.mxu0 0.0
  %2653 = vmatprep.subr.mxu0 0.0
  %2654 = vmatpush1.msra.mxu0 0.0
  %2655 = vmatprep.subr.mxu0 0.0
  %2656 = vmatpush1.msra.mxu0 0.0
  %2657 = vmatprep.subr.mxu0 0.0
  %2658 = vmatpush1.msra.mxu0 0.0
  %2659 = vmatprep.subr.mxu0 0.0
  %2660 = vmatpush1.msra.mxu0 0.0
  %2661 = vmatprep.subr.mxu0 0.0
  %2662 = vmatpush1.msra.mxu0 0.0
  %2663 = vmatprep.subr.mxu0 0.0
  %2664 = vmatpush1.msra.mxu0 0.0
  %2665 = vmatprep.subr.mxu0 0.0
  %2666 = vmatpush1.msra.mxu0 0.0
  %2667 = vmatprep.subr.mxu0 0.0
  %2668 = vmatpush1.msra.mxu0 0.0
  %2669 = vmatprep.subr.mxu0 0.0
  %2670 = vmatpush1.msra.mxu0 0.0
  %2671 = vmatprep.subr.mxu0 0.0
  %2672 = vmatpush1.msra.mxu0 0.0
  %2673 = vmatprep.subr.mxu0 0.0
  %2674 = vmatpush1.msra.mxu0 0.0
  %2675 = vmatprep.subr.mxu0 0.0
  %2676 = vmatpush1.msra.mxu0 0.0
  %2677 = vmatprep.subr.mxu0 0.0
  %2678 = vmatpush1.msra.mxu0 0.0
  %2679 = vmatprep.subr.mxu0 0.0
  %2680 = vmatpush1.msra.mxu0 0.0
  %2681 = vmatprep.subr.mxu0 0.0
  %2682 = vmatpush1.msra.mxu0 0.0
  %2683 = vmatprep.subr.mxu0 0.0
  %2684 = vmatpush1.msra.mxu0 0.0
  %2685 = vmatprep.subr.mxu0 0.0
  %2686 = vmatpush1.msra.mxu0 0.0
  %2687 = vmatprep.subr.mxu0 0.0
  %2688 = vmatpush1.msra.mxu0 0.0
  %2689 = vmatprep.subr.mxu0 0.0
  %2690 = vmatpush1.msra.mxu0 0.0
  %2691 = vmatprep.subr.mxu0 0.0
  %2692 = vmatpush1.msra.mxu0 0.0
  %2693 = vmatprep.subr.mxu0 0.0
  %2694 = vmatpush1.msra.mxu0 0.0
  %2695 = vmatprep.subr.mxu0 0.0
  %2696 = vmatpush1.msra.mxu0 0.0
  %2697 = vmatprep.subr.mxu0 0.0
  %2698 = vmatpush1.msra.mxu0 0.0
  %2699 = vmatprep.subr.mxu0 0.0
  %2700 = vmatpush1.msra.mxu0 0.0
  %2701 = vmatprep.subr.mxu0 0.0
  %2702 = vmatpush1.msra.mxu0 0.0
  %2703 = vmatprep.subr.mxu0 0.0
  %2704 = vmatpush1.msra.mxu0 0.0
  %2705 = vmatprep.subr.mxu0 0.0
  %2706 = vmatpush1.msra.mxu0 0.0
  %2707 = vmatprep.mubr.f32.mxu0 0.0
  %2708 = vmatmul.mubr.f32.gmra.mrb[0].mxu0 %v2596
  %v2709 = vpop.f32.mrb[0].mxu0
  %v2710 = vadd.f32 0.0, %v2709
  %v2711 = vpop.f32.mrb[0].mxu0
  %2712 = vmatprep.mubr.f32.mxu0 0.0
  %2713 = vmatmul.mubr.f32.gmra.mrb[0].mxu0 %v2599
  %v2714 = vpop.f32.mrb[0].mxu0
  %v2715 = vadd.f32 0.0, %v2714
  %v2716 = vpop.f32.mrb[0].mxu0
  %2717 = vmatprep.mubr.f32.mxu0 0.0
  %2718 = vmatmul.mubr.f32.gmra.mrb[0].mxu0 %v2602
  %v2719 = vpop.f32.mrb[0].mxu0
  %v2720 = vadd.f32 0.0, %v2719
  %v2721 = vpop.f32.mrb[0].mxu0
  %2722 = vmatprep.mubr.f32.mxu0 0.0
  %2723 = vmatmul.mubr.f32.gmra.mrb[0].mxu0 %v2605
  %v2724 = vpop.f32.mrb[0].mxu0
  %v2725 = vadd.f32 0.0, %v2724
  %v2726 = vpop.f32.mrb[0].mxu0
  %2727 = vmatprep.mubr.f32.mxu0 0.0
  %2728 = vmatmul.mubr.f32.gmra.mrb[0].mxu0 %v2608
  %v2729 = vpop.f32.mrb[0].mxu0
  %v2730 = vadd.f32 0.0, %v2729
  %v2731 = vpop.f32.mrb[0].mxu0
  %2732 = vmatprep.mubr.f32.mxu0 0.0
  %2733 = vmatmul.mubr.f32.gmra.mrb[0].mxu0 %v2611
  %v2734 = vpop.f32.mrb[0].mxu0
  %v2735 = vadd.f32 0.0, %v2734
  %v2736 = vpop.f32.mrb[0].mxu0
  %2737 = vmatprep.mubr.f32.mxu0 0.0
  %2738 = vmatmul.mubr.f32.gmra.mrb[0].mxu0 %v2614
  %v2739 = vpop.f32.mrb[0].mxu0
  %v2740 = vadd.f32 0.0, %v2739
  %v2741 = vpop.f32.mrb[0].mxu0
  %2742 = vmatprep.mubr.f32.mxu0 0.0
  %2743 = vmatmul.mubr.f32.gmra.mrb[0].mxu0 %v2617
  %v2744 = vpop.f32.mrb[0].mxu0
  %v2745 = vadd.f32 0.0, %v2744
  %v2746 = vpop.f32.mrb[0].mxu0
  %2747 = vmatprep.mubr.f32.mxu0 0.0
  %2748 = vmatmul.mubr.f32.gmra.mrb[0].mxu0 %v2620
  %v2749 = vpop.f32.mrb[0].mxu0
  %v2750 = vadd.f32 0.0, %v2749
  %v2751 = vpop.f32.mrb[0].mxu0
  %2752 = vmatprep.mubr.f32.mxu0 0.0
  %2753 = vmatmul.mubr.f32.gmra.mrb[0].mxu0 %v2623
  %v2754 = vpop.f32.mrb[0].mxu0
  %v2755 = vadd.f32 0.0, %v2754
  %v2756 = vpop.f32.mrb[0].mxu0
  %2757 = vmatprep.mubr.f32.mxu0 0.0
  %2758 = vmatmul.mubr.f32.gmra.mrb[0].mxu0 %v2626
  %v2759 = vpop.f32.mrb[0].mxu0
  %v2760 = vadd.f32 0.0, %v2759
  %v2761 = vpop.f32.mrb[0].mxu0
  %2762 = vmatprep.mubr.f32.mxu0 0.0
  %2763 = vmatmul.mubr.f32.gmra.mrb[0].mxu0 %v2629
  %v2764 = vpop.f32.mrb[0].mxu0
  %v2765 = vadd.f32 0.0, %v2764
  %v2766 = vpop.f32.mrb[0].mxu0
  %2767 = vmatprep.mubr.f32.mxu0 0.0
  %2768 = vmatmul.mubr.f32.gmra.mrb[0].mxu0 %v2632
  %v2769 = vpop.f32.mrb[0].mxu0
  %v2770 = vadd.f32 0.0, %v2769
  %v2771 = vpop.f32.mrb[0].mxu0
  %2772 = vmatprep.mubr.f32.mxu0 0.0
  %2773 = vmatmul.mubr.f32.gmra.mrb[0].mxu0 %v2635
  %v2774 = vpop.f32.mrb[0].mxu0
  %v2775 = vadd.f32 0.0, %v2774
  %v2776 = vpop.f32.mrb[0].mxu0
  %2777 = vmatprep.mubr.f32.mxu0 0.0
  %2778 = vmatmul.mubr.f32.gmra.mrb[0].mxu0 %v2638
  %v2779 = vpop.f32.mrb[0].mxu0
  %v2780 = vadd.f32 0.0, %v2779
  %v2781 = vpop.f32.mrb[0].mxu0
  %2782 = vmatprep.mubr.f32.mxu0 0.0
  %2783 = vmatmul.mubr.f32.gmra.mrb[0].mxu0 %v2641
  %v2784 = vpop.f32.mrb[0].mxu0
  %v2785 = vadd.f32 0.0, %v2784
  %v2786 = vpop.f32.mrb[0].mxu0
  %2787 = vdwg.mxu0
  %v2789 = vsel %vm958, %v1459, 0
  %v2792 = vsel %vm958, %v1464, 0
  %v2795 = vsel %vm958, %v1469, 0
  %v2798 = vsel %vm958, %v1474, 0
  %v2801 = vsel %vm958, %v1479, 0
  %v2804 = vsel %vm958, %v1484, 0
  %v2807 = vsel %vm958, %v1489, 0
  %v2810 = vsel %vm958, %v1494, 0
  %v2813 = vsel %vm958, %v1499, 0
  %v2816 = vsel %vm958, %v1504, 0
  %v2819 = vsel %vm958, %v1509, 0
  %v2822 = vsel %vm958, %v1514, 0
  %v2825 = vsel %vm958, %v1519, 0
  %v2828 = vsel %vm958, %v1524, 0
  %v2831 = vsel %vm958, %v1529, 0
  %v2834 = vsel %vm958, %v1534, 0
  %2836 = vmatprep.subr.mxu0 0.0
  %2837 = vmatpush1.msra.mxu0 %v1537
  %2838 = vmatprep.subr.mxu0 0.0
  %2839 = vmatpush1.msra.mxu0 %v1538
  %2840 = vmatprep.subr.mxu0 0.0
  %2841 = vmatpush1.msra.mxu0 0.0
  %2842 = vmatprep.subr.mxu0 0.0
  %2843 = vmatpush1.msra.mxu0 0.0
  %2844 = vmatprep.subr.mxu0 0.0
  %2845 = vmatpush1.msra.mxu0 0.0
  %2846 = vmatprep.subr.mxu0 0.0
  %2847 = vmatpush1.msra.mxu0 0.0
  %2848 = vmatprep.subr.mxu0 0.0
  %2849 = vmatpush1.msra.mxu0 0.0
  %2850 = vmatprep.subr.mxu0 0.0
  %2851 = vmatpush1.msra.mxu0 0.0
  %2852 = vmatprep.subr.mxu0 0.0
  %2853 = vmatpush1.msra.mxu0 0.0
  %2854 = vmatprep.subr.mxu0 0.0
  %2855 = vmatpush1.msra.mxu0 0.0
  %2856 = vmatprep.subr.mxu0 0.0
  %2857 = vmatpush1.msra.mxu0 0.0
  %2858 = vmatprep.subr.mxu0 0.0
  %2859 = vmatpush1.msra.mxu0 0.0
  %2860 = vmatprep.subr.mxu0 0.0
  %2861 = vmatpush1.msra.mxu0 0.0
  %2862 = vmatprep.subr.mxu0 0.0
  %2863 = vmatpush1.msra.mxu0 0.0
  %2864 = vmatprep.subr.mxu0 0.0
  %2865 = vmatpush1.msra.mxu0 0.0
  %2866 = vmatprep.subr.mxu0 0.0
  %2867 = vmatpush1.msra.mxu0 0.0
  %2868 = vmatprep.subr.mxu0 0.0
  %2869 = vmatpush1.msra.mxu0 0.0
  %2870 = vmatprep.subr.mxu0 0.0
  %2871 = vmatpush1.msra.mxu0 0.0
  %2872 = vmatprep.subr.mxu0 0.0
  %2873 = vmatpush1.msra.mxu0 0.0
  %2874 = vmatprep.subr.mxu0 0.0
  %2875 = vmatpush1.msra.mxu0 0.0
  %2876 = vmatprep.subr.mxu0 0.0
  %2877 = vmatpush1.msra.mxu0 0.0
  %2878 = vmatprep.subr.mxu0 0.0
  %2879 = vmatpush1.msra.mxu0 0.0
  %2880 = vmatprep.subr.mxu0 0.0
  %2881 = vmatpush1.msra.mxu0 0.0
  %2882 = vmatprep.subr.mxu0 0.0
  %2883 = vmatpush1.msra.mxu0 0.0
  %2884 = vmatprep.subr.mxu0 0.0
  %2885 = vmatpush1.msra.mxu0 0.0
  %2886 = vmatprep.subr.mxu0 0.0
  %2887 = vmatpush1.msra.mxu0 0.0
  %2888 = vmatprep.subr.mxu0 0.0
  %2889 = vmatpush1.msra.mxu0 0.0
  %2890 = vmatprep.subr.mxu0 0.0
  %2891 = vmatpush1.msra.mxu0 0.0
  %2892 = vmatprep.subr.mxu0 0.0
  %2893 = vmatpush1.msra.mxu0 0.0
  %2894 = vmatprep.subr.mxu0 0.0
  %2895 = vmatpush1.msra.mxu0 0.0
  %2896 = vmatprep.subr.mxu0 0.0
  %2897 = vmatpush1.msra.mxu0 0.0
  %2898 = vmatprep.subr.mxu0 0.0
  %2899 = vmatpush1.msra.mxu0 0.0
  %2900 = vmatprep.mubr.f32.mxu0 0.0
  %2901 = vmatmul.mubr.f32.gmra.mrb[0].mxu0 %v2789
  %v2902 = vpop.f32.mrb[0].mxu0
  %v2903 = vadd.f32 %v2710, %v2902
  %v2904 = vpop.f32.mrb[0].mxu0
  %2905 = vmatprep.mubr.f32.mxu0 0.0
  %2906 = vmatmul.mubr.f32.gmra.mrb[0].mxu0 %v2792
  %v2907 = vpop.f32.mrb[0].mxu0
  %v2908 = vadd.f32 %v2715, %v2907
  %v2909 = vpop.f32.mrb[0].mxu0
  %2910 = vmatprep.mubr.f32.mxu0 0.0
  %2911 = vmatmul.mubr.f32.gmra.mrb[0].mxu0 %v2795
  %v2912 = vpop.f32.mrb[0].mxu0
  %v2913 = vadd.f32 %v2720, %v2912
  %v2914 = vpop.f32.mrb[0].mxu0
  %2915 = vmatprep.mubr.f32.mxu0 0.0
  %2916 = vmatmul.mubr.f32.gmra.mrb[0].mxu0 %v2798
  %v2917 = vpop.f32.mrb[0].mxu0
  %v2918 = vadd.f32 %v2725, %v2917
  %v2919 = vpop.f32.mrb[0].mxu0
  %2920 = vmatprep.mubr.f32.mxu0 0.0
  %2921 = vmatmul.mubr.f32.gmra.mrb[0].mxu0 %v2801
  %v2922 = vpop.f32.mrb[0].mxu0
  %v2923 = vadd.f32 %v2730, %v2922
  %v2924 = vpop.f32.mrb[0].mxu0
  %2925 = vmatprep.mubr.f32.mxu0 0.0
  %2926 = vmatmul.mubr.f32.gmra.mrb[0].mxu0 %v2804
  %v2927 = vpop.f32.mrb[0].mxu0
  %v2928 = vadd.f32 %v2735, %v2927
  %v2929 = vpop.f32.mrb[0].mxu0
  %2930 = vmatprep.mubr.f32.mxu0 0.0
  %2931 = vmatmul.mubr.f32.gmra.mrb[0].mxu0 %v2807
  %v2932 = vpop.f32.mrb[0].mxu0
  %v2933 = vadd.f32 %v2740, %v2932
  %v2934 = vpop.f32.mrb[0].mxu0
  %2935 = vmatprep.mubr.f32.mxu0 0.0
  %2936 = vmatmul.mubr.f32.gmra.mrb[0].mxu0 %v2810
  %v2937 = vpop.f32.mrb[0].mxu0
  %v2938 = vadd.f32 %v2745, %v2937
  %v2939 = vpop.f32.mrb[0].mxu0
  %2940 = vmatprep.mubr.f32.mxu0 0.0
  %2941 = vmatmul.mubr.f32.gmra.mrb[0].mxu0 %v2813
  %v2942 = vpop.f32.mrb[0].mxu0
  %v2943 = vadd.f32 %v2750, %v2942
  %v2944 = vpop.f32.mrb[0].mxu0
  %2945 = vmatprep.mubr.f32.mxu0 0.0
  %2946 = vmatmul.mubr.f32.gmra.mrb[0].mxu0 %v2816
  %v2947 = vpop.f32.mrb[0].mxu0
  %v2948 = vadd.f32 %v2755, %v2947
  %v2949 = vpop.f32.mrb[0].mxu0
  %2950 = vmatprep.mubr.f32.mxu0 0.0
  %2951 = vmatmul.mubr.f32.gmra.mrb[0].mxu0 %v2819
  %v2952 = vpop.f32.mrb[0].mxu0
  %v2953 = vadd.f32 %v2760, %v2952
  %v2954 = vpop.f32.mrb[0].mxu0
  %2955 = vmatprep.mubr.f32.mxu0 0.0
  %2956 = vmatmul.mubr.f32.gmra.mrb[0].mxu0 %v2822
  %v2957 = vpop.f32.mrb[0].mxu0
  %v2958 = vadd.f32 %v2765, %v2957
  %v2959 = vpop.f32.mrb[0].mxu0
  %2960 = vmatprep.mubr.f32.mxu0 0.0
  %2961 = vmatmul.mubr.f32.gmra.mrb[0].mxu0 %v2825
  %v2962 = vpop.f32.mrb[0].mxu0
  %v2963 = vadd.f32 %v2770, %v2962
  %v2964 = vpop.f32.mrb[0].mxu0
  %2965 = vmatprep.mubr.f32.mxu0 0.0
  %2966 = vmatmul.mubr.f32.gmra.mrb[0].mxu0 %v2828
  %v2967 = vpop.f32.mrb[0].mxu0
  %v2968 = vadd.f32 %v2775, %v2967
  %v2969 = vpop.f32.mrb[0].mxu0
  %2970 = vmatprep.mubr.f32.mxu0 0.0
  %2971 = vmatmul.mubr.f32.gmra.mrb[0].mxu0 %v2831
  %v2972 = vpop.f32.mrb[0].mxu0
  %v2973 = vadd.f32 %v2780, %v2972
  %v2974 = vpop.f32.mrb[0].mxu0
  %2975 = vmatprep.mubr.f32.mxu0 0.0
  %2976 = vmatmul.mubr.f32.gmra.mrb[0].mxu0 %v2834
  %v2977 = vpop.f32.mrb[0].mxu0
  %v2978 = vadd.f32 %v2785, %v2977
  %v2979 = vpop.f32.mrb[0].mxu0
  %2980 = vdwg.mxu0
  %v2981 = vld [vmem:[%s23] sm:$0x1]
  %v2983 = vlaneseq
  %v2984 = vshrl.u32 %v2983, 7
  %v2985 = vsub.s32 0, %v2984
  %v2986 = vrot.slane %v2981, %v2985
  %v2988 = vadd.f32 %v2903, %v2986
  %v2989 = vadd.f32 %v2908, %v2986
  %v2990 = vadd.f32 %v2913, %v2986
  %v2991 = vadd.f32 %v2918, %v2986
  %v2992 = vadd.f32 %v2923, %v2986
  %v2993 = vadd.f32 %v2928, %v2986
  %v2994 = vadd.f32 %v2933, %v2986
  %v2995 = vadd.f32 %v2938, %v2986
  %v2996 = vadd.f32 %v2943, %v2986
  %v2997 = vadd.f32 %v2948, %v2986
  %v2998 = vadd.f32 %v2953, %v2986
  %v2999 = vadd.f32 %v2958, %v2986
  %v3000 = vadd.f32 %v2963, %v2986
  %v3001 = vadd.f32 %v2968, %v2986
  %v3002 = vadd.f32 %v2973, %v2986
  %v3003 = vadd.f32 %v2978, %v2986
  %v3004 = vld [vmem:[%s27] sm:$0xff]
  %v3005 = vld [vmem:[%s27 + $0x8] sm:$0xff]
  %v3006 = vld [vmem:[%s27 + $0x10] sm:$0xff]
  %v3007 = vld [vmem:[%s27 + $0x18] sm:$0xff]
  %v3008 = vld [vmem:[%s29] sm:$0x1]
  %v3010 = vlaneseq
  %v3011 = vshrl.u32 %v3010, 7
  %v3012 = vsub.s32 0, %v3011
  %v3013 = vrot.slane %v3008, %v3012
  %v3016 = vsel %vm186, %v2988, 0
  %v3019 = vsel %vm186, %v2989, 0
  %v3022 = vsel %vm186, %v2990, 0
  %v3025 = vsel %vm186, %v2991, 0
  %v3028 = vsel %vm186, %v2992, 0
  %v3031 = vsel %vm186, %v2993, 0
  %v3034 = vsel %vm186, %v2994, 0
  %v3037 = vsel %vm186, %v2995, 0
  %v3040 = vsel %vm186, %v2996, 0
  %v3043 = vsel %vm186, %v2997, 0
  %v3046 = vsel %vm186, %v2998, 0
  %v3049 = vsel %vm186, %v2999, 0
  %v3052 = vsel %vm186, %v3000, 0
  %v3055 = vsel %vm186, %v3001, 0
  %v3058 = vsel %vm186, %v3002, 0
  %v3061 = vsel %vm186, %v3003, 0
  %3063 = vmatprep.subr.mxu0 0.0
  %3064 = vmatpush1.msra.mxu0 %v3004
  %3065 = vmatprep.subr.mxu0 0.0
  %3066 = vmatpush1.msra.mxu0 %v3005
  %3067 = vmatprep.subr.mxu0 0.0
  %3068 = vmatpush1.msra.mxu0 %v3006
  %3069 = vmatprep.subr.mxu0 0.0
  %3070 = vmatpush1.msra.mxu0 %v3007
  %3071 = vmatprep.subr.mxu0 0.0
  %3072 = vmatpush1.msra.mxu0 0.0
  %3073 = vmatprep.subr.mxu0 0.0
  %3074 = vmatpush1.msra.mxu0 0.0
  %3075 = vmatprep.subr.mxu0 0.0
  %3076 = vmatpush1.msra.mxu0 0.0
  %3077 = vmatprep.subr.mxu0 0.0
  %3078 = vmatpush1.msra.mxu0 0.0
  %3079 = vmatprep.subr.mxu0 0.0
  %3080 = vmatpush1.msra.mxu0 0.0
  %3081 = vmatprep.subr.mxu0 0.0
  %3082 = vmatpush1.msra.mxu0 0.0
  %3083 = vmatprep.subr.mxu0 0.0
  %3084 = vmatpush1.msra.mxu0 0.0
  %3085 = vmatprep.subr.mxu0 0.0
  %3086 = vmatpush1.msra.mxu0 0.0
  %3087 = vmatprep.subr.mxu0 0.0
  %3088 = vmatpush1.msra.mxu0 0.0
  %3089 = vmatprep.subr.mxu0 0.0
  %3090 = vmatpush1.msra.mxu0 0.0
  %3091 = vmatprep.subr.mxu0 0.0
  %3092 = vmatpush1.msra.mxu0 0.0
  %3093 = vmatprep.subr.mxu0 0.0
  %3094 = vmatpush1.msra.mxu0 0.0
  %3095 = vmatprep.subr.mxu0 0.0
  %3096 = vmatpush1.msra.mxu0 0.0
  %3097 = vmatprep.subr.mxu0 0.0
  %3098 = vmatpush1.msra.mxu0 0.0
  %3099 = vmatprep.subr.mxu0 0.0
  %3100 = vmatpush1.msra.mxu0 0.0
  %3101 = vmatprep.subr.mxu0 0.0
  %3102 = vmatpush1.msra.mxu0 0.0
  %3103 = vmatprep.subr.mxu0 0.0
  %3104 = vmatpush1.msra.mxu0 0.0
  %3105 = vmatprep.subr.mxu0 0.0
  %3106 = vmatpush1.msra.mxu0 0.0
  %3107 = vmatprep.subr.mxu0 0.0
  %3108 = vmatpush1.msra.mxu0 0.0
  %3109 = vmatprep.subr.mxu0 0.0
  %3110 = vmatpush1.msra.mxu0 0.0
  %3111 = vmatprep.subr.mxu0 0.0
  %3112 = vmatpush1.msra.mxu0 0.0
  %3113 = vmatprep.subr.mxu0 0.0
  %3114 = vmatpush1.msra.mxu0 0.0
  %3115 = vmatprep.subr.mxu0 0.0
  %3116 = vmatpush1.msra.mxu0 0.0
  %3117 = vmatprep.subr.mxu0 0.0
  %3118 = vmatpush1.msra.mxu0 0.0
  %3119 = vmatprep.subr.mxu0 0.0
  %3120 = vmatpush1.msra.mxu0 0.0
  %3121 = vmatprep.subr.mxu0 0.0
  %3122 = vmatpush1.msra.mxu0 0.0
  %3123 = vmatprep.subr.mxu0 0.0
  %3124 = vmatpush1.msra.mxu0 0.0
  %3125 = vmatprep.subr.mxu0 0.0
  %3126 = vmatpush1.msra.mxu0 0.0
  %3127 = vmatprep.mubr.f32.mxu0 0.0
  %3128 = vmatmul.mubr.f32.gmra.mrb[0].mxu0 %v3016
  %v3129 = vpop.f32.mrb[0].mxu0
  %v3130 = vadd.f32 %v3013, %v3129
  %v3131 = vpop.f32.mrb[0].mxu0
  %3132 = vmatprep.mubr.f32.mxu0 0.0
  %3133 = vmatmul.mubr.f32.gmra.mrb[0].mxu0 %v3019
  %v3134 = vpop.f32.mrb[0].mxu0
  %v3135 = vadd.f32 %v3013, %v3134
  %v3136 = vpop.f32.mrb[0].mxu0
  %3137 = vmatprep.mubr.f32.mxu0 0.0
  %3138 = vmatmul.mubr.f32.gmra.mrb[0].mxu0 %v3022
  %v3139 = vpop.f32.mrb[0].mxu0
  %v3140 = vadd.f32 %v3013, %v3139
  %v3141 = vpop.f32.mrb[0].mxu0
  %3142 = vmatprep.mubr.f32.mxu0 0.0
  %3143 = vmatmul.mubr.f32.gmra.mrb[0].mxu0 %v3025
  %v3144 = vpop.f32.mrb[0].mxu0
  %v3145 = vadd.f32 %v3013, %v3144
  %v3146 = vpop.f32.mrb[0].mxu0
  %3147 = vmatprep.mubr.f32.mxu0 0.0
  %3148 = vmatmul.mubr.f32.gmra.mrb[0].mxu0 %v3028
  %v3149 = vpop.f32.mrb[0].mxu0
  %v3150 = vadd.f32 %v3013, %v3149
  %v3151 = vpop.f32.mrb[0].mxu0
  %3152 = vmatprep.mubr.f32.mxu0 0.0
  %3153 = vmatmul.mubr.f32.gmra.mrb[0].mxu0 %v3031
  %v3154 = vpop.f32.mrb[0].mxu0
  %v3155 = vadd.f32 %v3013, %v3154
  %v3156 = vpop.f32.mrb[0].mxu0
  %3157 = vmatprep.mubr.f32.mxu0 0.0
  %3158 = vmatmul.mubr.f32.gmra.mrb[0].mxu0 %v3034
  %v3159 = vpop.f32.mrb[0].mxu0
  %v3160 = vadd.f32 %v3013, %v3159
  %v3161 = vpop.f32.mrb[0].mxu0
  %3162 = vmatprep.mubr.f32.mxu0 0.0
  %3163 = vmatmul.mubr.f32.gmra.mrb[0].mxu0 %v3037
  %v3164 = vpop.f32.mrb[0].mxu0
  %v3165 = vadd.f32 %v3013, %v3164
  %v3166 = vpop.f32.mrb[0].mxu0
  %3167 = vmatprep.mubr.f32.mxu0 0.0
  %3168 = vmatmul.mubr.f32.gmra.mrb[0].mxu0 %v3040
  %v3169 = vpop.f32.mrb[0].mxu0
  %v3170 = vadd.f32 %v3013, %v3169
  %v3171 = vpop.f32.mrb[0].mxu0
  %3172 = vmatprep.mubr.f32.mxu0 0.0
  %3173 = vmatmul.mubr.f32.gmra.mrb[0].mxu0 %v3043
  %v3174 = vpop.f32.mrb[0].mxu0
  %v3175 = vadd.f32 %v3013, %v3174
  %v3176 = vpop.f32.mrb[0].mxu0
  %3177 = vmatprep.mubr.f32.mxu0 0.0
  %3178 = vmatmul.mubr.f32.gmra.mrb[0].mxu0 %v3046
  %v3179 = vpop.f32.mrb[0].mxu0
  %v3180 = vadd.f32 %v3013, %v3179
  %v3181 = vpop.f32.mrb[0].mxu0
  %3182 = vmatprep.mubr.f32.mxu0 0.0
  %3183 = vmatmul.mubr.f32.gmra.mrb[0].mxu0 %v3049
  %v3184 = vpop.f32.mrb[0].mxu0
  %v3185 = vadd.f32 %v3013, %v3184
  %v3186 = vpop.f32.mrb[0].mxu0
  %3187 = vmatprep.mubr.f32.mxu0 0.0
  %3188 = vmatmul.mubr.f32.gmra.mrb[0].mxu0 %v3052
  %v3189 = vpop.f32.mrb[0].mxu0
  %v3190 = vadd.f32 %v3013, %v3189
  %v3191 = vpop.f32.mrb[0].mxu0
  %3192 = vmatprep.mubr.f32.mxu0 0.0
  %3193 = vmatmul.mubr.f32.gmra.mrb[0].mxu0 %v3055
  %v3194 = vpop.f32.mrb[0].mxu0
  %v3195 = vadd.f32 %v3013, %v3194
  %v3196 = vpop.f32.mrb[0].mxu0
  %3197 = vmatprep.mubr.f32.mxu0 0.0
  %3198 = vmatmul.mubr.f32.gmra.mrb[0].mxu0 %v3058
  %v3199 = vpop.f32.mrb[0].mxu0
  %v3200 = vadd.f32 %v3013, %v3199
  %v3201 = vpop.f32.mrb[0].mxu0
  %3202 = vmatprep.mubr.f32.mxu0 0.0
  %3203 = vmatmul.mubr.f32.gmra.mrb[0].mxu0 %v3061
  %v3204 = vpop.f32.mrb[0].mxu0
  %v3205 = vadd.f32 %v3013, %v3204
  %v3206 = vpop.f32.mrb[0].mxu0
  %3207 = vdwg.mxu0
  %v3208 = vmul.f32 %v3130, 0.5
  %v3209 = vmul.f32 %v3135, 0.5
  %v3210 = vmul.f32 %v3140, 0.5
  %v3211 = vmul.f32 %v3145, 0.5
  %v3212 = vmul.f32 %v3150, 0.5
  %v3213 = vmul.f32 %v3155, 0.5
  %v3214 = vmul.f32 %v3160, 0.5
  %v3215 = vmul.f32 %v3165, 0.5
  %v3216 = vmul.f32 %v3170, 0.5
  %v3217 = vmul.f32 %v3175, 0.5
  %v3218 = vmul.f32 %v3180, 0.5
  %v3219 = vmul.f32 %v3185, 0.5
  %v3220 = vmul.f32 %v3190, 0.5
  %v3221 = vmul.f32 %v3195, 0.5
  %v3222 = vmul.f32 %v3200, 0.5
  %v3223 = vmul.f32 %v3205, 0.5
  %v3224 = vmul.f32 %v3130, 0.70710677
  %v3225 = vmul.f32 %v3135, 0.70710677
  %v3226 = vmul.f32 %v3140, 0.70710677
  %v3227 = vmul.f32 %v3145, 0.70710677
  %v3228 = vmul.f32 %v3150, 0.70710677
  %v3229 = vmul.f32 %v3155, 0.70710677
  %v3230 = vmul.f32 %v3160, 0.70710677
  %v3231 = vmul.f32 %v3165, 0.70710677
  %v3232 = vmul.f32 %v3170, 0.70710677
  %v3233 = vmul.f32 %v3175, 0.70710677
  %v3234 = vmul.f32 %v3180, 0.70710677
  %v3235 = vmul.f32 %v3185, 0.70710677
  %v3236 = vmul.f32 %v3190, 0.70710677
  %v3237 = vmul.f32 %v3195, 0.70710677
  %v3238 = vmul.f32 %v3200, 0.70710677
  %v3239 = vmul.f32 %v3205, 0.70710677
  %v3240 = verf.f32.pop %v3224
  %v3241 = verf.f32.pop %v3225
  %v3242 = verf.f32.pop %v3226
  %v3243 = verf.f32.pop %v3227
  %v3244 = verf.f32.pop %v3228
  %v3245 = verf.f32.pop %v3229
  %v3246 = verf.f32.pop %v3230
  %v3247 = verf.f32.pop %v3231
  %v3248 = verf.f32.pop %v3232
  %v3249 = verf.f32.pop %v3233
  %v3250 = verf.f32.pop %v3234
  %v3251 = verf.f32.pop %v3235
  %v3252 = verf.f32.pop %v3236
  %v3253 = verf.f32.pop %v3237
  %v3254 = verf.f32.pop %v3238
  %v3255 = verf.f32.pop %v3239
  %v3256 = vadd.f32 %v3240, 1.0
  %v3257 = vadd.f32 %v3241, 1.0
  %v3258 = vadd.f32 %v3242, 1.0
  %v3259 = vadd.f32 %v3243, 1.0
  %v3260 = vadd.f32 %v3244, 1.0
  %v3261 = vadd.f32 %v3245, 1.0
  %v3262 = vadd.f32 %v3246, 1.0
  %v3263 = vadd.f32 %v3247, 1.0
  %v3264 = vadd.f32 %v3248, 1.0
  %v3265 = vadd.f32 %v3249, 1.0
  %v3266 = vadd.f32 %v3250, 1.0
  %v3267 = vadd.f32 %v3251, 1.0
  %v3268 = vadd.f32 %v3252, 1.0
  %v3269 = vadd.f32 %v3253, 1.0
  %v3270 = vadd.f32 %v3254, 1.0
  %v3271 = vadd.f32 %v3255, 1.0
  %v3272 = vmul.f32 %v3208, %v3256
  %v3273 = vmul.f32 %v3209, %v3257
  %v3274 = vmul.f32 %v3210, %v3258
  %v3275 = vmul.f32 %v3211, %v3259
  %v3276 = vmul.f32 %v3212, %v3260
  %v3277 = vmul.f32 %v3213, %v3261
  %v3278 = vmul.f32 %v3214, %v3262
  %v3279 = vmul.f32 %v3215, %v3263
  %v3280 = vmul.f32 %v3216, %v3264
  %v3281 = vmul.f32 %v3217, %v3265
  %v3282 = vmul.f32 %v3218, %v3266
  %v3283 = vmul.f32 %v3219, %v3267
  %v3284 = vmul.f32 %v3220, %v3268
  %v3285 = vmul.f32 %v3221, %v3269
  %v3286 = vmul.f32 %v3222, %v3270
  %v3287 = vmul.f32 %v3223, %v3271
  %v3288 = vld [vmem:[%s31] sm:$0xff]
  %vm3289 = vcmask 64512
  %v3291 = vsel %vm3289, %v3272, 0
  %v3294 = vsel %vm3289, %v3273, 0
  %v3297 = vsel %vm3289, %v3274, 0
  %v3300 = vsel %vm3289, %v3275, 0
  %v3303 = vsel %vm3289, %v3276, 0
  %v3306 = vsel %vm3289, %v3277, 0
  %v3309 = vsel %vm3289, %v3278, 0
  %v3312 = vsel %vm3289, %v3279, 0
  %v3315 = vsel %vm3289, %v3280, 0
  %v3318 = vsel %vm3289, %v3281, 0
  %v3321 = vsel %vm3289, %v3282, 0
  %v3324 = vsel %vm3289, %v3283, 0
  %v3327 = vsel %vm3289, %v3284, 0
  %v3330 = vsel %vm3289, %v3285, 0
  %v3333 = vsel %vm3289, %v3286, 0
  %v3336 = vsel %vm3289, %v3287, 0
  %3338 = vmatprep.subr.mxu0 0.0
  %3339 = vmatpush1.msra.mxu0 %v3288
  %3340 = vmatprep.subr.mxu0 0.0
  %3341 = vmatpush1.msra.mxu0 0.0
  %3342 = vmatprep.subr.mxu0 0.0
  %3343 = vmatpush1.msra.mxu0 0.0
  %3344 = vmatprep.subr.mxu0 0.0
  %3345 = vmatpush1.msra.mxu0 0.0
  %3346 = vmatprep.subr.mxu0 0.0
  %3347 = vmatpush1.msra.mxu0 0.0
  %3348 = vmatprep.subr.mxu0 0.0
  %3349 = vmatpush1.msra.mxu0 0.0
  %3350 = vmatprep.subr.mxu0 0.0
  %3351 = vmatpush1.msra.mxu0 0.0
  %3352 = vmatprep.subr.mxu0 0.0
  %3353 = vmatpush1.msra.mxu0 0.0
  %3354 = vmatprep.subr.mxu0 0.0
  %3355 = vmatpush1.msra.mxu0 0.0
  %3356 = vmatprep.subr.mxu0 0.0
  %3357 = vmatpush1.msra.mxu0 0.0
  %3358 = vmatprep.subr.mxu0 0.0
  %3359 = vmatpush1.msra.mxu0 0.0
  %3360 = vmatprep.subr.mxu0 0.0
  %3361 = vmatpush1.msra.mxu0 0.0
  %3362 = vmatprep.subr.mxu0 0.0
  %3363 = vmatpush1.msra.mxu0 0.0
  %3364 = vmatprep.subr.mxu0 0.0
  %3365 = vmatpush1.msra.mxu0 0.0
  %3366 = vmatprep.subr.mxu0 0.0
  %3367 = vmatpush1.msra.mxu0 0.0
  %3368 = vmatprep.subr.mxu0 0.0
  %3369 = vmatpush1.msra.mxu0 0.0
  %3370 = vmatprep.subr.mxu0 0.0
  %3371 = vmatpush1.msra.mxu0 0.0
  %3372 = vmatprep.subr.mxu0 0.0
  %3373 = vmatpush1.msra.mxu0 0.0
  %3374 = vmatprep.subr.mxu0 0.0
  %3375 = vmatpush1.msra.mxu0 0.0
  %3376 = vmatprep.subr.mxu0 0.0
  %3377 = vmatpush1.msra.mxu0 0.0
  %3378 = vmatprep.subr.mxu0 0.0
  %3379 = vmatpush1.msra.mxu0 0.0
  %3380 = vmatprep.subr.mxu0 0.0
  %3381 = vmatpush1.msra.mxu0 0.0
  %3382 = vmatprep.subr.mxu0 0.0
  %3383 = vmatpush1.msra.mxu0 0.0
  %3384 = vmatprep.subr.mxu0 0.0
  %3385 = vmatpush1.msra.mxu0 0.0
  %3386 = vmatprep.subr.mxu0 0.0
  %3387 = vmatpush1.msra.mxu0 0.0
  %3388 = vmatprep.subr.mxu0 0.0
  %3389 = vmatpush1.msra.mxu0 0.0
  %3390 = vmatprep.subr.mxu0 0.0
  %3391 = vmatpush1.msra.mxu0 0.0
  %3392 = vmatprep.subr.mxu0 0.0
  %3393 = vmatpush1.msra.mxu0 0.0
  %3394 = vmatprep.subr.mxu0 0.0
  %3395 = vmatpush1.msra.mxu0 0.0
  %3396 = vmatprep.subr.mxu0 0.0
  %3397 = vmatpush1.msra.mxu0 0.0
  %3398 = vmatprep.subr.mxu0 0.0
  %3399 = vmatpush1.msra.mxu0 0.0
  %3400 = vmatprep.subr.mxu0 0.0
  %3401 = vmatpush1.msra.mxu0 0.0
  %3402 = vmatprep.mubr.f32.mxu0 0.0
  %3403 = vmatmul.mubr.f32.gmra.mrb[0].mxu0 %v3291
  %v3404 = vpop.f32.mrb[0].mxu0
  %v3405 = vadd.f32 0.0, %v3404
  %v3406 = vpop.f32.mrb[0].mxu0
  %3407 = vmatprep.mubr.f32.mxu0 0.0
  %3408 = vmatmul.mubr.f32.gmra.mrb[0].mxu0 %v3294
  %v3409 = vpop.f32.mrb[0].mxu0
  %v3410 = vadd.f32 0.0, %v3409
  %v3411 = vpop.f32.mrb[0].mxu0
  %3412 = vmatprep.mubr.f32.mxu0 0.0
  %3413 = vmatmul.mubr.f32.gmra.mrb[0].mxu0 %v3297
  %v3414 = vpop.f32.mrb[0].mxu0
  %v3415 = vadd.f32 0.0, %v3414
  %v3416 = vpop.f32.mrb[0].mxu0
  %3417 = vmatprep.mubr.f32.mxu0 0.0
  %3418 = vmatmul.mubr.f32.gmra.mrb[0].mxu0 %v3300
  %v3419 = vpop.f32.mrb[0].mxu0
  %v3420 = vadd.f32 0.0, %v3419
  %v3421 = vpop.f32.mrb[0].mxu0
  %3422 = vmatprep.mubr.f32.mxu0 0.0
  %3423 = vmatmul.mubr.f32.gmra.mrb[0].mxu0 %v3303
  %v3424 = vpop.f32.mrb[0].mxu0
  %v3425 = vadd.f32 0.0, %v3424
  %v3426 = vpop.f32.mrb[0].mxu0
  %3427 = vmatprep.mubr.f32.mxu0 0.0
  %3428 = vmatmul.mubr.f32.gmra.mrb[0].mxu0 %v3306
  %v3429 = vpop.f32.mrb[0].mxu0
  %v3430 = vadd.f32 0.0, %v3429
  %v3431 = vpop.f32.mrb[0].mxu0
  %3432 = vmatprep.mubr.f32.mxu0 0.0
  %3433 = vmatmul.mubr.f32.gmra.mrb[0].mxu0 %v3309
  %v3434 = vpop.f32.mrb[0].mxu0
  %v3435 = vadd.f32 0.0, %v3434
  %v3436 = vpop.f32.mrb[0].mxu0
  %3437 = vmatprep.mubr.f32.mxu0 0.0
  %3438 = vmatmul.mubr.f32.gmra.mrb[0].mxu0 %v3312
  %v3439 = vpop.f32.mrb[0].mxu0
  %v3440 = vadd.f32 0.0, %v3439
  %v3441 = vpop.f32.mrb[0].mxu0
  %3442 = vmatprep.mubr.f32.mxu0 0.0
  %3443 = vmatmul.mubr.f32.gmra.mrb[0].mxu0 %v3315
  %v3444 = vpop.f32.mrb[0].mxu0
  %v3445 = vadd.f32 0.0, %v3444
  %v3446 = vpop.f32.mrb[0].mxu0
  %3447 = vmatprep.mubr.f32.mxu0 0.0
  %3448 = vmatmul.mubr.f32.gmra.mrb[0].mxu0 %v3318
  %v3449 = vpop.f32.mrb[0].mxu0
  %v3450 = vadd.f32 0.0, %v3449
  %v3451 = vpop.f32.mrb[0].mxu0
  %3452 = vmatprep.mubr.f32.mxu0 0.0
  %3453 = vmatmul.mubr.f32.gmra.mrb[0].mxu0 %v3321
  %v3454 = vpop.f32.mrb[0].mxu0
  %v3455 = vadd.f32 0.0, %v3454
  %v3456 = vpop.f32.mrb[0].mxu0
  %3457 = vmatprep.mubr.f32.mxu0 0.0
  %3458 = vmatmul.mubr.f32.gmra.mrb[0].mxu0 %v3324
  %v3459 = vpop.f32.mrb[0].mxu0
  %v3460 = vadd.f32 0.0, %v3459
  %v3461 = vpop.f32.mrb[0].mxu0
  %3462 = vmatprep.mubr.f32.mxu0 0.0
  %3463 = vmatmul.mubr.f32.gmra.mrb[0].mxu0 %v3327
  %v3464 = vpop.f32.mrb[0].mxu0
  %v3465 = vadd.f32 0.0, %v3464
  %v3466 = vpop.f32.mrb[0].mxu0
  %3467 = vmatprep.mubr.f32.mxu0 0.0
  %3468 = vmatmul.mubr.f32.gmra.mrb[0].mxu0 %v3330
  %v3469 = vpop.f32.mrb[0].mxu0
  %v3470 = vadd.f32 0.0, %v3469
  %v3471 = vpop.f32.mrb[0].mxu0
  %3472 = vmatprep.mubr.f32.mxu0 0.0
  %3473 = vmatmul.mubr.f32.gmra.mrb[0].mxu0 %v3333
  %v3474 = vpop.f32.mrb[0].mxu0
  %v3475 = vadd.f32 0.0, %v3474
  %v3476 = vpop.f32.mrb[0].mxu0
  %3477 = vmatprep.mubr.f32.mxu0 0.0
  %3478 = vmatmul.mubr.f32.gmra.mrb[0].mxu0 %v3336
  %v3479 = vpop.f32.mrb[0].mxu0
  %v3480 = vadd.f32 0.0, %v3479
  %v3481 = vpop.f32.mrb[0].mxu0
  %3482 = vdwg.mxu0
  %v3483 = vadd.f32 %v2988, %v3405
  %v3484 = vadd.f32 %v2989, %v3410
  %v3485 = vadd.f32 %v2990, %v3415
  %v3486 = vadd.f32 %v2991, %v3420
  %v3487 = vadd.f32 %v2992, %v3425
  %v3488 = vadd.f32 %v2993, %v3430
  %v3489 = vadd.f32 %v2994, %v3435
  %v3490 = vadd.f32 %v2995, %v3440
  %v3491 = vadd.f32 %v2996, %v3445
  %v3492 = vadd.f32 %v2997, %v3450
  %v3493 = vadd.f32 %v2998, %v3455
  %v3494 = vadd.f32 %v2999, %v3460
  %v3495 = vadd.f32 %v3000, %v3465
  %v3496 = vadd.f32 %v3001, %v3470
  %v3497 = vadd.f32 %v3002, %v3475
  %v3498 = vadd.f32 %v3003, %v3480
  %v3499 = vld [vmem:[%s33] sm:$0x1]
  %v3501 = vlaneseq
  %v3502 = vshrl.u32 %v3501, 7
  %v3503 = vsub.s32 0, %v3502
  %v3504 = vrot.slane %v3499, %v3503
  %v3506 = vadd.f32 %v3483, %v3504
  %v3507 = vadd.f32 %v3484, %v3504
  %v3508 = vadd.f32 %v3485, %v3504
  %v3509 = vadd.f32 %v3486, %v3504
  %v3510 = vadd.f32 %v3487, %v3504
  %v3511 = vadd.f32 %v3488, %v3504
  %v3512 = vadd.f32 %v3489, %v3504
  %v3513 = vadd.f32 %v3490, %v3504
  %v3514 = vadd.f32 %v3491, %v3504
  %v3515 = vadd.f32 %v3492, %v3504
  %v3516 = vadd.f32 %v3493, %v3504
  %v3517 = vadd.f32 %v3494, %v3504
  %v3518 = vadd.f32 %v3495, %v3504
  %v3519 = vadd.f32 %v3496, %v3504
  %v3520 = vadd.f32 %v3497, %v3504
  %v3521 = vadd.f32 %v3498, %v3504
  %v3522 = vadd.f32 %v154, %v3506
  %v3523 = vadd.f32 %v155, %v3507
  %v3524 = vadd.f32 %v156, %v3508
  %v3525 = vadd.f32 %v157, %v3509
  %v3526 = vadd.f32 %v158, %v3510
  %v3527 = vadd.f32 %v159, %v3511
  %v3528 = vadd.f32 %v160, %v3512
  %v3529 = vadd.f32 %v161, %v3513
  %v3530 = vadd.f32 %v162, %v3514
  %v3531 = vadd.f32 %v163, %v3515
  %v3532 = vadd.f32 %v164, %v3516
  %v3533 = vadd.f32 %v165, %v3517
  %v3534 = vadd.f32 %v166, %v3518
  %v3535 = vadd.f32 %v167, %v3519
  %v3536 = vadd.f32 %v168, %v3520
  %v3537 = vadd.f32 %v169, %v3521
  %3538 = vst.msk [vmem:[#allocation2] sm:$0xff] %vm186, 0.0
  %3539 = vst.msk [vmem:[#allocation2 + $0x8] sm:$0xff] %vm186, 0.0
  %3540 = vst.msk [vmem:[#allocation2 + $0x10] sm:$0xff] %vm186, 0.0
  %3541 = vst.msk [vmem:[#allocation2 + $0x18] sm:$0xff] %vm186, 0.0
  %3542 = vst.msk [vmem:[#allocation2 + $0x20] sm:$0xff] %vm186, 0.0
  %3543 = vst.msk [vmem:[#allocation2 + $0x28] sm:$0xff] %vm186, 0.0
  %3544 = vst.msk [vmem:[#allocation2 + $0x30] sm:$0xff] %vm186, 0.0
  %3545 = vst.msk [vmem:[#allocation2 + $0x38] sm:$0xff] %vm186, 0.0
  %3546 = vst.msk [vmem:[#allocation2 + $0x40] sm:$0xff] %vm186, 0.0
  %3547 = vst.msk [vmem:[#allocation2 + $0x48] sm:$0xff] %vm186, 0.0
  %3548 = vst.msk [vmem:[#allocation2 + $0x50] sm:$0xff] %vm186, 0.0
  %3549 = vst.msk [vmem:[#allocation2 + $0x58] sm:$0xff] %vm186, 0.0
  %3550 = vst.msk [vmem:[#allocation2 + $0x60] sm:$0xff] %vm186, 0.0
  %3551 = vst.msk [vmem:[#allocation2 + $0x68] sm:$0xff] %vm186, 0.0
  %3552 = vst.msk [vmem:[#allocation2 + $0x70] sm:$0xff] %vm186, 0.0
  %3553 = vst.msk [vmem:[#allocation2 + $0x78] sm:$0xff] %vm186, 0.0
  %3554 = vst.msk [vmem:[#allocation2 + $0x80] sm:$0xff] %vm186, 0.0
  %3555 = vst.msk [vmem:[#allocation2 + $0x88] sm:$0xff] %vm186, 0.0
  %3556 = vst.msk [vmem:[#allocation2 + $0x90] sm:$0xff] %vm186, 0.0
  %3557 = vst.msk [vmem:[#allocation2 + $0x98] sm:$0xff] %vm186, 0.0
  %3558 = vst.msk [vmem:[#allocation2 + $0xa0] sm:$0xff] %vm186, 0.0
  %3559 = vst.msk [vmem:[#allocation2 + $0xa8] sm:$0xff] %vm186, 0.0
  %3560 = vst.msk [vmem:[#allocation2 + $0x10] sm:$0xff] %vm186, %v3522
  %3561 = vst.msk [vmem:[#allocation2 + $0x18] sm:$0xff] %vm186, %v3523
  %3562 = vst.msk [vmem:[#allocation2 + $0x20] sm:$0xff] %vm186, %v3524
  %3563 = vst.msk [vmem:[#allocation2 + $0x28] sm:$0xff] %vm186, %v3525
  %3564 = vst.msk [vmem:[#allocation2 + $0x30] sm:$0xff] %vm186, %v3526
  %3565 = vst.msk [vmem:[#allocation2 + $0x38] sm:$0xff] %vm186, %v3527
  %3566 = vst.msk [vmem:[#allocation2 + $0x40] sm:$0xff] %vm186, %v3528
  %3567 = vst.msk [vmem:[#allocation2 + $0x48] sm:$0xff] %vm186, %v3529
  %3568 = vst.msk [vmem:[#allocation2 + $0x60] sm:$0xff] %vm186, %v3530
  %3569 = vst.msk [vmem:[#allocation2 + $0x68] sm:$0xff] %vm186, %v3531
  %3570 = vst.msk [vmem:[#allocation2 + $0x70] sm:$0xff] %vm186, %v3532
  %3571 = vst.msk [vmem:[#allocation2 + $0x78] sm:$0xff] %vm186, %v3533
  %3572 = vst.msk [vmem:[#allocation2 + $0x80] sm:$0xff] %vm186, %v3534
  %3573 = vst.msk [vmem:[#allocation2 + $0x88] sm:$0xff] %vm186, %v3535
  %3574 = vst.msk [vmem:[#allocation2 + $0x90] sm:$0xff] %vm186, %v3536
  %3575 = vst.msk [vmem:[#allocation2 + $0x98] sm:$0xff] %vm186, %v3537
  %v3576 = vld [vmem:[#allocation2 + $0x7] sm:$0xff]
  %v3577 = vld [vmem:[#allocation2 + $0xf] sm:$0xff]
  %v3578 = vld [vmem:[#allocation2 + $0x17] sm:$0xff]
  %v3579 = vld [vmem:[#allocation2 + $0x1f] sm:$0xff]
  %v3580 = vld [vmem:[#allocation2 + $0x27] sm:$0xff]
  %v3581 = vld [vmem:[#allocation2 + $0x2f] sm:$0xff]
  %v3582 = vld [vmem:[#allocation2 + $0x37] sm:$0xff]
  %v3583 = vld [vmem:[#allocation2 + $0x3f] sm:$0xff]
  %v3584 = vld [vmem:[%s35] sm:$0x1]
  %v3586 = vlaneseq
  %v3587 = vshrl.u32 %v3586, 7
  %v3588 = vsub.s32 0, %v3587
  %v3589 = vrot.slane %v3584, %v3588
  %v3591 = vmul.f32 %v3576, %v3589
  %v3592 = vmul.f32 %v3577, %v3589
  %v3593 = vmul.f32 %v3578, %v3589
  %v3594 = vmul.f32 %v3579, %v3589
  %v3595 = vmul.f32 %v3580, %v3589
  %v3596 = vmul.f32 %v3581, %v3589
  %v3597 = vmul.f32 %v3582, %v3589
  %v3598 = vmul.f32 %v3583, %v3589
  %v3599 = vadd.f32 %v3591, 0.0
  %v3600 = vadd.f32 %v3592, 0.0
  %v3601 = vadd.f32 %v3593, 0.0
  %v3602 = vadd.f32 %v3594, 0.0
  %v3603 = vadd.f32 %v3595, 0.0
  %v3604 = vadd.f32 %v3596, 0.0
  %v3605 = vadd.f32 %v3597, 0.0
  %v3606 = vadd.f32 %v3598, 0.0
  %v3607 = vld [vmem:[#allocation2 + $0x47] sm:$0xff]
  %s3608 = scalar_lea.vmem %s35, 3
  %v3609 = vld [vmem:[%s3608] sm:$0x1]
  %v3611 = vlaneseq
  %v3612 = vshrl.u32 %v3611, 7
  %v3613 = vsub.s32 0, %v3612
  %v3614 = vrot.slane %v3609, %v3613
  %v3616 = vmul.f32 %v3577, %v3614
  %v3617 = vmul.f32 %v3578, %v3614
  %v3618 = vmul.f32 %v3579, %v3614
  %v3619 = vmul.f32 %v3580, %v3614
  %v3620 = vmul.f32 %v3581, %v3614
  %v3621 = vmul.f32 %v3582, %v3614
  %v3622 = vmul.f32 %v3583, %v3614
  %v3623 = vmul.f32 %v3607, %v3614
  %v3624 = vadd.f32 %v3599, %v3616
  %v3625 = vadd.f32 %v3600, %v3617
  %v3626 = vadd.f32 %v3601, %v3618
  %v3627 = vadd.f32 %v3602, %v3619
  %v3628 = vadd.f32 %v3603, %v3620
  %v3629 = vadd.f32 %v3604, %v3621
  %v3630 = vadd.f32 %v3605, %v3622
  %v3631 = vadd.f32 %v3606, %v3623
  %v3632 = vld [vmem:[#allocation2 + $0x4f] sm:$0xff]
  %s3633 = scalar_lea.vmem %s35, 6
  %v3634 = vld [vmem:[%s3633] sm:$0x1]
  %v3636 = vlaneseq
  %v3637 = vshrl.u32 %v3636, 7
  %v3638 = vsub.s32 0, %v3637
  %v3639 = vrot.slane %v3634, %v3638
  %v3641 = vmul.f32 %v3578, %v3639
  %v3642 = vmul.f32 %v3579, %v3639
  %v3643 = vmul.f32 %v3580, %v3639
  %v3644 = vmul.f32 %v3581, %v3639
  %v3645 = vmul.f32 %v3582, %v3639
  %v3646 = vmul.f32 %v3583, %v3639
  %v3647 = vmul.f32 %v3607, %v3639
  %v3648 = vmul.f32 %v3632, %v3639
  %v3649 = vadd.f32 %v3624, %v3641
  %v3650 = vadd.f32 %v3625, %v3642
  %v3651 = vadd.f32 %v3626, %v3643
  %v3652 = vadd.f32 %v3627, %v3644
  %v3653 = vadd.f32 %v3628, %v3645
  %v3654 = vadd.f32 %v3629, %v3646
  %v3655 = vadd.f32 %v3630, %v3647
  %v3656 = vadd.f32 %v3631, %v3648
  %v3657 = vld [vmem:[%s39] sm:$0xff]
  %v3658 = vld [vmem:[%s39 + $0x8] sm:$0xff]
  %v3659 = vld [vmem:[%s39 + $0x10] sm:$0xff]
  %v3660 = vld [vmem:[%s39 + $0x18] sm:$0xff]
  %v3661 = vld [vmem:[%s39 + $0x20] sm:$0xff]
  %v3662 = vld [vmem:[%s39 + $0x28] sm:$0xff]
  %v3663 = vld [vmem:[%s39 + $0x30] sm:$0xff]
  %v3664 = vld [vmem:[%s39 + $0x38] sm:$0xff]
  %3666 = vset.pattern.permute.xlu0 0
  %3667 = vperm.xlu0 %3666, %v3657
  %v3668 = vpop.permute.xlu0 %3667
  %3671 = vset.pattern.permute.xlu0 0
  %3672 = vperm.xlu0 %3671, %v3658
  %v3673 = vpop.permute.xlu0 %3672
  %3676 = vset.pattern.permute.xlu0 0
  %3677 = vperm.xlu0 %3676, %v3659
  %v3678 = vpop.permute.xlu0 %3677
  %3681 = vset.pattern.permute.xlu0 0
  %3682 = vperm.xlu0 %3681, %v3660
  %v3683 = vpop.permute.xlu0 %3682
  %3686 = vset.pattern.permute.xlu0 0
  %3687 = vperm.xlu0 %3686, %v3661
  %v3688 = vpop.permute.xlu0 %3687
  %3691 = vset.pattern.permute.xlu0 0
  %3692 = vperm.xlu0 %3691, %v3662
  %v3693 = vpop.permute.xlu0 %3692
  %3696 = vset.pattern.permute.xlu0 0
  %3697 = vperm.xlu0 %3696, %v3663
  %v3698 = vpop.permute.xlu0 %3697
  %3701 = vset.pattern.permute.xlu0 0
  %3702 = vperm.xlu0 %3701, %v3664
  %v3703 = vpop.permute.xlu0 %3702
  %v3705 = vmul.f32 %v3649, %v3668
  %v3706 = vmul.f32 %v3650, %v3673
  %v3707 = vmul.f32 %v3651, %v3678
  %v3708 = vmul.f32 %v3652, %v3683
  %v3709 = vmul.f32 %v3653, %v3688
  %v3710 = vmul.f32 %v3654, %v3693
  %v3711 = vmul.f32 %v3655, %v3698
  %v3712 = vmul.f32 %v3656, %v3703
  %v3713 = vadd.f32 %v3705, 0.0
  %v3714 = vadd.f32 %v3706, 0.0
  %v3715 = vadd.f32 %v3707, 0.0
  %v3716 = vadd.f32 %v3708, 0.0
  %v3717 = vadd.f32 %v3709, 0.0
  %v3718 = vadd.f32 %v3710, 0.0
  %v3719 = vadd.f32 %v3711, 0.0
  %v3720 = vadd.f32 %v3712, 0.0
  %v3721 = vld [vmem:[#allocation2 + $0x8] sm:$0xff]
  %v3722 = vld [vmem:[#allocation2 + $0x10] sm:$0xff]
  %v3723 = vld [vmem:[#allocation2 + $0x18] sm:$0xff]
  %v3724 = vld [vmem:[#allocation2 + $0x20] sm:$0xff]
  %v3725 = vld [vmem:[#allocation2 + $0x28] sm:$0xff]
  %v3726 = vld [vmem:[#allocation2 + $0x30] sm:$0xff]
  %v3727 = vld [vmem:[#allocation2 + $0x38] sm:$0xff]
  %v3728 = vld [vmem:[#allocation2 + $0x40] sm:$0xff]
  %s3729 = scalar_lea.vmem %s35, 1
  %v3730 = vld [vmem:[%s3729] sm:$0x1]
  %v3732 = vlaneseq
  %v3733 = vshrl.u32 %v3732, 7
  %v3734 = vsub.s32 0, %v3733
  %v3735 = vrot.slane %v3730, %v3734
  %v3737 = vmul.f32 %v3721, %v3735
  %v3738 = vmul.f32 %v3722, %v3735
  %v3739 = vmul.f32 %v3723, %v3735
  %v3740 = vmul.f32 %v3724, %v3735
  %v3741 = vmul.f32 %v3725, %v3735
  %v3742 = vmul.f32 %v3726, %v3735
  %v3743 = vmul.f32 %v3727, %v3735
  %v3744 = vmul.f32 %v3728, %v3735
  %v3745 = vadd.f32 %v3737, 0.0
  %v3746 = vadd.f32 %v3738, 0.0
  %v3747 = vadd.f32 %v3739, 0.0
  %v3748 = vadd.f32 %v3740, 0.0
  %v3749 = vadd.f32 %v3741, 0.0
  %v3750 = vadd.f32 %v3742, 0.0
  %v3751 = vadd.f32 %v3743, 0.0
  %v3752 = vadd.f32 %v3744, 0.0
  %v3753 = vld [vmem:[#allocation2 + $0x48] sm:$0xff]
  %s3754 = scalar_lea.vmem %s35, 4
  %v3755 = vld [vmem:[%s3754] sm:$0x1]
  %v3757 = vlaneseq
  %v3758 = vshrl.u32 %v3757, 7
  %v3759 = vsub.s32 0, %v3758
  %v3760 = vrot.slane %v3755, %v3759
  %v3762 = vmul.f32 %v3722, %v3760
  %v3763 = vmul.f32 %v3723, %v3760
  %v3764 = vmul.f32 %v3724, %v3760
  %v3765 = vmul.f32 %v3725, %v3760
  %v3766 = vmul.f32 %v3726, %v3760
  %v3767 = vmul.f32 %v3727, %v3760
  %v3768 = vmul.f32 %v3728, %v3760
  %v3769 = vmul.f32 %v3753, %v3760
  %v3770 = vadd.f32 %v3745, %v3762
  %v3771 = vadd.f32 %v3746, %v3763
  %v3772 = vadd.f32 %v3747, %v3764
  %v3773 = vadd.f32 %v3748, %v3765
  %v3774 = vadd.f32 %v3749, %v3766
  %v3775 = vadd.f32 %v3750, %v3767
  %v3776 = vadd.f32 %v3751, %v3768
  %v3777 = vadd.f32 %v3752, %v3769
  %v3778 = vld [vmem:[#allocation2 + $0x50] sm:$0xff]
  %s3779 = scalar_lea.vmem %s35, 7
  %v3780 = vld [vmem:[%s3779] sm:$0x1]
  %v3782 = vlaneseq
  %v3783 = vshrl.u32 %v3782, 7
  %v3784 = vsub.s32 0, %v3783
  %v3785 = vrot.slane %v3780, %v3784
  %v3787 = vmul.f32 %v3723, %v3785
  %v3788 = vmul.f32 %v3724, %v3785
  %v3789 = vmul.f32 %v3725, %v3785
  %v3790 = vmul.f32 %v3726, %v3785
  %v3791 = vmul.f32 %v3727, %v3785
  %v3792 = vmul.f32 %v3728, %v3785
  %v3793 = vmul.f32 %v3753, %v3785
  %v3794 = vmul.f32 %v3778, %v3785
  %v3795 = vadd.f32 %v3770, %v3787
  %v3796 = vadd.f32 %v3771, %v3788
  %v3797 = vadd.f32 %v3772, %v3789
  %v3798 = vadd.f32 %v3773, %v3790
  %v3799 = vadd.f32 %v3774, %v3791
  %v3800 = vadd.f32 %v3775, %v3792
  %v3801 = vadd.f32 %v3776, %v3793
  %v3802 = vadd.f32 %v3777, %v3794
  %v3803 = vadd.f32 %v3713, %v3795
  %v3804 = vadd.f32 %v3714, %v3796
  %v3805 = vadd.f32 %v3715, %v3797
  %v3806 = vadd.f32 %v3716, %v3798
  %v3807 = vadd.f32 %v3717, %v3799
  %v3808 = vadd.f32 %v3718, %v3800
  %v3809 = vadd.f32 %v3719, %v3801
  %v3810 = vadd.f32 %v3720, %v3802
  %v3811 = vld [vmem:[#allocation2 + $0x9] sm:$0xff]
  %v3812 = vld [vmem:[#allocation2 + $0x11] sm:$0xff]
  %v3813 = vld [vmem:[#allocation2 + $0x19] sm:$0xff]
  %v3814 = vld [vmem:[#allocation2 + $0x21] sm:$0xff]
  %v3815 = vld [vmem:[#allocation2 + $0x29] sm:$0xff]
  %v3816 = vld [vmem:[#allocation2 + $0x31] sm:$0xff]
  %v3817 = vld [vmem:[#allocation2 + $0x39] sm:$0xff]
  %v3818 = vld [vmem:[#allocation2 + $0x41] sm:$0xff]
  %s3819 = scalar_lea.vmem %s35, 2
  %v3820 = vld [vmem:[%s3819] sm:$0x1]
  %v3822 = vlaneseq
  %v3823 = vshrl.u32 %v3822, 7
  %v3824 = vsub.s32 0, %v3823
  %v3825 = vrot.slane %v3820, %v3824
  %v3827 = vmul.f32 %v3811, %v3825
  %v3828 = vmul.f32 %v3812, %v3825
  %v3829 = vmul.f32 %v3813, %v3825
  %v3830 = vmul.f32 %v3814, %v3825
  %v3831 = vmul.f32 %v3815, %v3825
  %v3832 = vmul.f32 %v3816, %v3825
  %v3833 = vmul.f32 %v3817, %v3825
  %v3834 = vmul.f32 %v3818, %v3825
  %v3835 = vadd.f32 %v3827, 0.0
  %v3836 = vadd.f32 %v3828, 0.0
  %v3837 = vadd.f32 %v3829, 0.0
  %v3838 = vadd.f32 %v3830, 0.0
  %v3839 = vadd.f32 %v3831, 0.0
  %v3840 = vadd.f32 %v3832, 0.0
  %v3841 = vadd.f32 %v3833, 0.0
  %v3842 = vadd.f32 %v3834, 0.0
  %v3843 = vld [vmem:[#allocation2 + $0x49] sm:$0xff]
  %s3844 = scalar_lea.vmem %s35, 5
  %v3845 = vld [vmem:[%s3844] sm:$0x1]
  %v3847 = vlaneseq
  %v3848 = vshrl.u32 %v3847, 7
  %v3849 = vsub.s32 0, %v3848
  %v3850 = vrot.slane %v3845, %v3849
  %v3852 = vmul.f32 %v3812, %v3850
  %v3853 = vmul.f32 %v3813, %v3850
  %v3854 = vmul.f32 %v3814, %v3850
  %v3855 = vmul.f32 %v3815, %v3850
  %v3856 = vmul.f32 %v3816, %v3850
  %v3857 = vmul.f32 %v3817, %v3850
  %v3858 = vmul.f32 %v3818, %v3850
  %v3859 = vmul.f32 %v3843, %v3850
  %v3860 = vadd.f32 %v3835, %v3852
  %v3861 = vadd.f32 %v3836, %v3853
  %v3862 = vadd.f32 %v3837, %v3854
  %v3863 = vadd.f32 %v3838, %v3855
  %v3864 = vadd.f32 %v3839, %v3856
  %v3865 = vadd.f32 %v3840, %v3857
  %v3866 = vadd.f32 %v3841, %v3858
  %v3867 = vadd.f32 %v3842, %v3859
  %v3868 = vld [vmem:[#allocation2 + $0x51] sm:$0xff]
  %s3869 = scalar_lea.vmem %s35, 8
  %v3870 = vld [vmem:[%s3869] sm:$0x1]
  %v3872 = vlaneseq
  %v3873 = vshrl.u32 %v3872, 7
  %v3874 = vsub.s32 0, %v3873
  %v3875 = vrot.slane %v3870, %v3874
  %v3877 = vmul.f32 %v3813, %v3875
  %v3878 = vmul.f32 %v3814, %v3875
  %v3879 = vmul.f32 %v3815, %v3875
  %v3880 = vmul.f32 %v3816, %v3875
  %v3881 = vmul.f32 %v3817, %v3875
  %v3882 = vmul.f32 %v3818, %v3875
  %v3883 = vmul.f32 %v3843, %v3875
  %v3884 = vmul.f32 %v3868, %v3875
  %v3885 = vadd.f32 %v3860, %v3877
  %v3886 = vadd.f32 %v3861, %v3878
  %v3887 = vadd.f32 %v3862, %v3879
  %v3888 = vadd.f32 %v3863, %v3880
  %v3889 = vadd.f32 %v3864, %v3881
  %v3890 = vadd.f32 %v3865, %v3882
  %v3891 = vadd.f32 %v3866, %v3883
  %v3892 = vadd.f32 %v3867, %v3884
  %s3893 = scalar_lea.vmem %s39, 64
  %v3894 = vld [vmem:[%s3893] sm:$0xff]
  %v3895 = vld [vmem:[%s3893 + $0x8] sm:$0xff]
  %v3896 = vld [vmem:[%s3893 + $0x10] sm:$0xff]
  %v3897 = vld [vmem:[%s3893 + $0x18] sm:$0xff]
  %v3898 = vld [vmem:[%s3893 + $0x20] sm:$0xff]
  %v3899 = vld [vmem:[%s3893 + $0x28] sm:$0xff]
  %v3900 = vld [vmem:[%s3893 + $0x30] sm:$0xff]
  %v3901 = vld [vmem:[%s3893 + $0x38] sm:$0xff]
  %3903 = vset.pattern.permute.xlu0 0
  %3904 = vperm.xlu0 %3903, %v3894
  %v3905 = vpop.permute.xlu0 %3904
  %3908 = vset.pattern.permute.xlu0 0
  %3909 = vperm.xlu0 %3908, %v3895
  %v3910 = vpop.permute.xlu0 %3909
  %3913 = vset.pattern.permute.xlu0 0
  %3914 = vperm.xlu0 %3913, %v3896
  %v3915 = vpop.permute.xlu0 %3914
  %3918 = vset.pattern.permute.xlu0 0
  %3919 = vperm.xlu0 %3918, %v3897
  %v3920 = vpop.permute.xlu0 %3919
  %3923 = vset.pattern.permute.xlu0 0
  %3924 = vperm.xlu0 %3923, %v3898
  %v3925 = vpop.permute.xlu0 %3924
  %3928 = vset.pattern.permute.xlu0 0
  %3929 = vperm.xlu0 %3928, %v3899
  %v3930 = vpop.permute.xlu0 %3929
  %3933 = vset.pattern.permute.xlu0 0
  %3934 = vperm.xlu0 %3933, %v3900
  %v3935 = vpop.permute.xlu0 %3934
  %3938 = vset.pattern.permute.xlu0 0
  %3939 = vperm.xlu0 %3938, %v3901
  %v3940 = vpop.permute.xlu0 %3939
  %v3942 = vmul.f32 %v3885, %v3905
  %v3943 = vmul.f32 %v3886, %v3910
  %v3944 = vmul.f32 %v3887, %v3915
  %v3945 = vmul.f32 %v3888, %v3920
  %v3946 = vmul.f32 %v3889, %v3925
  %v3947 = vmul.f32 %v3890, %v3930
  %v3948 = vmul.f32 %v3891, %v3935
  %v3949 = vmul.f32 %v3892, %v3940
  %v3950 = vadd.f32 %v3803, %v3942
  %v3951 = vadd.f32 %v3804, %v3943
  %v3952 = vadd.f32 %v3805, %v3944
  %v3953 = vadd.f32 %v3806, %v3945
  %v3954 = vadd.f32 %v3807, %v3946
  %v3955 = vadd.f32 %v3808, %v3947
  %v3956 = vadd.f32 %v3809, %v3948
  %v3957 = vadd.f32 %v3810, %v3949
  %v3958 = vld [vmem:[%s37] sm:$0x1]
  %v3960 = vlaneseq
  %v3961 = vshrl.u32 %v3960, 7
  %v3962 = vsub.s32 0, %v3961
  %v3963 = vrot.slane %v3958, %v3962
  %v3965 = vadd.f32 %v3950, %v3963
  %v3966 = vadd.f32 %v3951, %v3963
  %v3967 = vadd.f32 %v3952, %v3963
  %v3968 = vadd.f32 %v3953, %v3963
  %v3969 = vadd.f32 %v3954, %v3963
  %v3970 = vadd.f32 %v3955, %v3963
  %v3971 = vadd.f32 %v3956, %v3963
  %v3972 = vadd.f32 %v3957, %v3963
  %3973 = vst.msk [vmem:[#allocation3] sm:$0xff] %vm186, %v3965
  %3974 = vst.msk [vmem:[#allocation3 + $0x8] sm:$0xff] %vm186, %v3966
  %3975 = vst.msk [vmem:[#allocation3 + $0x10] sm:$0xff] %vm186, %v3967
  %3976 = vst.msk [vmem:[#allocation3 + $0x18] sm:$0xff] %vm186, %v3968
  %3977 = vst.msk [vmem:[#allocation3 + $0x20] sm:$0xff] %vm186, %v3969
  %3978 = vst.msk [vmem:[#allocation3 + $0x28] sm:$0xff] %vm186, %v3970
  %3979 = vst.msk [vmem:[#allocation3 + $0x30] sm:$0xff] %vm186, %v3971
  %3980 = vst.msk [vmem:[#allocation3 + $0x38] sm:$0xff] %vm186, %v3972
  %v3981 = vld [vmem:[#allocation2 + $0x57] sm:$0xff]
  %v3982 = vld [vmem:[#allocation2 + $0x5f] sm:$0xff]
  %v3983 = vld [vmem:[#allocation2 + $0x67] sm:$0xff]
  %v3984 = vld [vmem:[#allocation2 + $0x6f] sm:$0xff]
  %v3985 = vld [vmem:[#allocation2 + $0x77] sm:$0xff]
  %v3986 = vld [vmem:[#allocation2 + $0x7f] sm:$0xff]
  %v3987 = vld [vmem:[#allocation2 + $0x87] sm:$0xff]
  %v3988 = vld [vmem:[#allocation2 + $0x8f] sm:$0xff]
  %v3989 = vld [vmem:[%s35] sm:$0x1]
  %v3991 = vlaneseq
  %v3992 = vshrl.u32 %v3991, 7
  %v3993 = vsub.s32 0, %v3992
  %v3994 = vrot.slane %v3989, %v3993
  %v3996 = vmul.f32 %v3981, %v3994
  %v3997 = vmul.f32 %v3982, %v3994
  %v3998 = vmul.f32 %v3983, %v3994
  %v3999 = vmul.f32 %v3984, %v3994
  %v4000 = vmul.f32 %v3985, %v3994
  %v4001 = vmul.f32 %v3986, %v3994
  %v4002 = vmul.f32 %v3987, %v3994
  %v4003 = vmul.f32 %v3988, %v3994
  %v4004 = vadd.f32 %v3996, 0.0
  %v4005 = vadd.f32 %v3997, 0.0
  %v4006 = vadd.f32 %v3998, 0.0
  %v4007 = vadd.f32 %v3999, 0.0
  %v4008 = vadd.f32 %v4000, 0.0
  %v4009 = vadd.f32 %v4001, 0.0
  %v4010 = vadd.f32 %v4002, 0.0
  %v4011 = vadd.f32 %v4003, 0.0
  %v4012 = vld [vmem:[#allocation2 + $0x97] sm:$0xff]
  %v4013 = vld [vmem:[%s3608] sm:$0x1]
  %v4015 = vlaneseq
  %v4016 = vshrl.u32 %v4015, 7
  %v4017 = vsub.s32 0, %v4016
  %v4018 = vrot.slane %v4013, %v4017
  %v4020 = vmul.f32 %v3982, %v4018
  %v4021 = vmul.f32 %v3983, %v4018
  %v4022 = vmul.f32 %v3984, %v4018
  %v4023 = vmul.f32 %v3985, %v4018
  %v4024 = vmul.f32 %v3986, %v4018
  %v4025 = vmul.f32 %v3987, %v4018
  %v4026 = vmul.f32 %v3988, %v4018
  %v4027 = vmul.f32 %v4012, %v4018
  %v4028 = vadd.f32 %v4004, %v4020
  %v4029 = vadd.f32 %v4005, %v4021
  %v4030 = vadd.f32 %v4006, %v4022
  %v4031 = vadd.f32 %v4007, %v4023
  %v4032 = vadd.f32 %v4008, %v4024
  %v4033 = vadd.f32 %v4009, %v4025
  %v4034 = vadd.f32 %v4010, %v4026
  %v4035 = vadd.f32 %v4011, %v4027
  %v4036 = vld [vmem:[#allocation2 + $0x9f] sm:$0xff]
  %v4037 = vld [vmem:[%s3633] sm:$0x1]
  %v4039 = vlaneseq
  %v4040 = vshrl.u32 %v4039, 7
  %v4041 = vsub.s32 0, %v4040
  %v4042 = vrot.slane %v4037, %v4041
  %v4044 = vmul.f32 %v3983, %v4042
  %v4045 = vmul.f32 %v3984, %v4042
  %v4046 = vmul.f32 %v3985, %v4042
  %v4047 = vmul.f32 %v3986, %v4042
  %v4048 = vmul.f32 %v3987, %v4042
  %v4049 = vmul.f32 %v3988, %v4042
  %v4050 = vmul.f32 %v4012, %v4042
  %v4051 = vmul.f32 %v4036, %v4042
  %v4052 = vadd.f32 %v4028, %v4044
  %v4053 = vadd.f32 %v4029, %v4045
  %v4054 = vadd.f32 %v4030, %v4046
  %v4055 = vadd.f32 %v4031, %v4047
  %v4056 = vadd.f32 %v4032, %v4048
  %v4057 = vadd.f32 %v4033, %v4049
  %v4058 = vadd.f32 %v4034, %v4050
  %v4059 = vadd.f32 %v4035, %v4051
  %v4060 = vld [vmem:[%s39] sm:$0xff]
  %v4061 = vld [vmem:[%s39 + $0x8] sm:$0xff]
  %v4062 = vld [vmem:[%s39 + $0x10] sm:$0xff]
  %v4063 = vld [vmem:[%s39 + $0x18] sm:$0xff]
  %v4064 = vld [vmem:[%s39 + $0x20] sm:$0xff]
  %v4065 = vld [vmem:[%s39 + $0x28] sm:$0xff]
  %v4066 = vld [vmem:[%s39 + $0x30] sm:$0xff]
  %v4067 = vld [vmem:[%s39 + $0x38] sm:$0xff]
  %4069 = vset.pattern.permute.xlu0 0
  %4070 = vperm.xlu0 %4069, %v4060
  %v4071 = vpop.permute.xlu0 %4070
  %4074 = vset.pattern.permute.xlu0 0
  %4075 = vperm.xlu0 %4074, %v4061
  %v4076 = vpop.permute.xlu0 %4075
  %4079 = vset.pattern.permute.xlu0 0
  %4080 = vperm.xlu0 %4079, %v4062
  %v4081 = vpop.permute.xlu0 %4080
  %4084 = vset.pattern.permute.xlu0 0
  %4085 = vperm.xlu0 %4084, %v4063
  %v4086 = vpop.permute.xlu0 %4085
  %4089 = vset.pattern.permute.xlu0 0
  %4090 = vperm.xlu0 %4089, %v4064
  %v4091 = vpop.permute.xlu0 %4090
  %4094 = vset.pattern.permute.xlu0 0
  %4095 = vperm.xlu0 %4094, %v4065
  %v4096 = vpop.permute.xlu0 %4095
  %4099 = vset.pattern.permute.xlu0 0
  %4100 = vperm.xlu0 %4099, %v4066
  %v4101 = vpop.permute.xlu0 %4100
  %4104 = vset.pattern.permute.xlu0 0
  %4105 = vperm.xlu0 %4104, %v4067
  %v4106 = vpop.permute.xlu0 %4105
  %v4108 = vmul.f32 %v4052, %v4071
  %v4109 = vmul.f32 %v4053, %v4076
  %v4110 = vmul.f32 %v4054, %v4081
  %v4111 = vmul.f32 %v4055, %v4086
  %v4112 = vmul.f32 %v4056, %v4091
  %v4113 = vmul.f32 %v4057, %v4096
  %v4114 = vmul.f32 %v4058, %v4101
  %v4115 = vmul.f32 %v4059, %v4106
  %v4116 = vadd.f32 %v4108, 0.0
  %v4117 = vadd.f32 %v4109, 0.0
  %v4118 = vadd.f32 %v4110, 0.0
  %v4119 = vadd.f32 %v4111, 0.0
  %v4120 = vadd.f32 %v4112, 0.0
  %v4121 = vadd.f32 %v4113, 0.0
  %v4122 = vadd.f32 %v4114, 0.0
  %v4123 = vadd.f32 %v4115, 0.0
  %v4124 = vld [vmem:[#allocation2 + $0x58] sm:$0xff]
  %v4125 = vld [vmem:[#allocation2 + $0x60] sm:$0xff]
  %v4126 = vld [vmem:[#allocation2 + $0x68] sm:$0xff]
  %v4127 = vld [vmem:[#allocation2 + $0x70] sm:$0xff]
  %v4128 = vld [vmem:[#allocation2 + $0x78] sm:$0xff]
  %v4129 = vld [vmem:[#allocation2 + $0x80] sm:$0xff]
  %v4130 = vld [vmem:[#allocation2 + $0x88] sm:$0xff]
  %v4131 = vld [vmem:[#allocation2 + $0x90] sm:$0xff]
  %v4132 = vld [vmem:[%s3729] sm:$0x1]
  %v4134 = vlaneseq
  %v4135 = vshrl.u32 %v4134, 7
  %v4136 = vsub.s32 0, %v4135
  %v4137 = vrot.slane %v4132, %v4136
  %v4139 = vmul.f32 %v4124, %v4137
  %v4140 = vmul.f32 %v4125, %v4137
  %v4141 = vmul.f32 %v4126, %v4137
  %v4142 = vmul.f32 %v4127, %v4137
  %v4143 = vmul.f32 %v4128, %v4137
  %v4144 = vmul.f32 %v4129, %v4137
  %v4145 = vmul.f32 %v4130, %v4137
  %v4146 = vmul.f32 %v4131, %v4137
  %v4147 = vadd.f32 %v4139, 0.0
  %v4148 = vadd.f32 %v4140, 0.0
  %v4149 = vadd.f32 %v4141, 0.0
  %v4150 = vadd.f32 %v4142, 0.0
  %v4151 = vadd.f32 %v4143, 0.0
  %v4152 = vadd.f32 %v4144, 0.0
  %v4153 = vadd.f32 %v4145, 0.0
  %v4154 = vadd.f32 %v4146, 0.0
  %v4155 = vld [vmem:[#allocation2 + $0x98] sm:$0xff]
  %v4156 = vld [vmem:[%s3754] sm:$0x1]
  %v4158 = vlaneseq
  %v4159 = vshrl.u32 %v4158, 7
  %v4160 = vsub.s32 0, %v4159
  %v4161 = vrot.slane %v4156, %v4160
  %v4163 = vmul.f32 %v4125, %v4161
  %v4164 = vmul.f32 %v4126, %v4161
  %v4165 = vmul.f32 %v4127, %v4161
  %v4166 = vmul.f32 %v4128, %v4161
  %v4167 = vmul.f32 %v4129, %v4161
  %v4168 = vmul.f32 %v4130, %v4161
  %v4169 = vmul.f32 %v4131, %v4161
  %v4170 = vmul.f32 %v4155, %v4161
  %v4171 = vadd.f32 %v4147, %v4163
  %v4172 = vadd.f32 %v4148, %v4164
  %v4173 = vadd.f32 %v4149, %v4165
  %v4174 = vadd.f32 %v4150, %v4166
  %v4175 = vadd.f32 %v4151, %v4167
  %v4176 = vadd.f32 %v4152, %v4168
  %v4177 = vadd.f32 %v4153, %v4169
  %v4178 = vadd.f32 %v4154, %v4170
  %v4179 = vld [vmem:[#allocation2 + $0xa0] sm:$0xff]
  %v4180 = vld [vmem:[%s3779] sm:$0x1]
  %v4182 = vlaneseq
  %v4183 = vshrl.u32 %v4182, 7
  %v4184 = vsub.s32 0, %v4183
  %v4185 = vrot.slane %v4180, %v4184
  %v4187 = vmul.f32 %v4126, %v4185
  %v4188 = vmul.f32 %v4127, %v4185
  %v4189 = vmul.f32 %v4128, %v4185
  %v4190 = vmul.f32 %v4129, %v4185
  %v4191 = vmul.f32 %v4130, %v4185
  %v4192 = vmul.f32 %v4131, %v4185
  %v4193 = vmul.f32 %v4155, %v4185
  %v4194 = vmul.f32 %v4179, %v4185
  %v4195 = vadd.f32 %v4171, %v4187
  %v4196 = vadd.f32 %v4172, %v4188
  %v4197 = vadd.f32 %v4173, %v4189
  %v4198 = vadd.f32 %v4174, %v4190
  %v4199 = vadd.f32 %v4175, %v4191
  %v4200 = vadd.f32 %v4176, %v4192
  %v4201 = vadd.f32 %v4177, %v4193
  %v4202 = vadd.f32 %v4178, %v4194
  %v4203 = vadd.f32 %v4116, %v4195
  %v4204 = vadd.f32 %v4117, %v4196
  %v4205 = vadd.f32 %v4118, %v4197
  %v4206 = vadd.f32 %v4119, %v4198
  %v4207 = vadd.f32 %v4120, %v4199
  %v4208 = vadd.f32 %v4121, %v4200
  %v4209 = vadd.f32 %v4122, %v4201
  %v4210 = vadd.f32 %v4123, %v4202
  %v4211 = vld [vmem:[#allocation2 + $0x59] sm:$0xff]
  %v4212 = vld [vmem:[#allocation2 + $0x61] sm:$0xff]
  %v4213 = vld [vmem:[#allocation2 + $0x69] sm:$0xff]
  %v4214 = vld [vmem:[#allocation2 + $0x71] sm:$0xff]
  %v4215 = vld [vmem:[#allocation2 + $0x79] sm:$0xff]
  %v4216 = vld [vmem:[#allocation2 + $0x81] sm:$0xff]
  %v4217 = vld [vmem:[#allocation2 + $0x89] sm:$0xff]
  %v4218 = vld [vmem:[#allocation2 + $0x91] sm:$0xff]
  %v4219 = vld [vmem:[%s3819] sm:$0x1]
  %v4221 = vlaneseq
  %v4222 = vshrl.u32 %v4221, 7
  %v4223 = vsub.s32 0, %v4222
  %v4224 = vrot.slane %v4219, %v4223
  %v4226 = vmul.f32 %v4211, %v4224
  %v4227 = vmul.f32 %v4212, %v4224
  %v4228 = vmul.f32 %v4213, %v4224
  %v4229 = vmul.f32 %v4214, %v4224
  %v4230 = vmul.f32 %v4215, %v4224
  %v4231 = vmul.f32 %v4216, %v4224
  %v4232 = vmul.f32 %v4217, %v4224
  %v4233 = vmul.f32 %v4218, %v4224
  %v4234 = vadd.f32 %v4226, 0.0
  %v4235 = vadd.f32 %v4227, 0.0
  %v4236 = vadd.f32 %v4228, 0.0
  %v4237 = vadd.f32 %v4229, 0.0
  %v4238 = vadd.f32 %v4230, 0.0
  %v4239 = vadd.f32 %v4231, 0.0
  %v4240 = vadd.f32 %v4232, 0.0
  %v4241 = vadd.f32 %v4233, 0.0
  %v4242 = vld [vmem:[#allocation2 + $0x99] sm:$0xff]
  %v4243 = vld [vmem:[%s3844] sm:$0x1]
  %v4245 = vlaneseq
  %v4246 = vshrl.u32 %v4245, 7
  %v4247 = vsub.s32 0, %v4246
  %v4248 = vrot.slane %v4243, %v4247
  %v4250 = vmul.f32 %v4212, %v4248
  %v4251 = vmul.f32 %v4213, %v4248
  %v4252 = vmul.f32 %v4214, %v4248
  %v4253 = vmul.f32 %v4215, %v4248
  %v4254 = vmul.f32 %v4216, %v4248
  %v4255 = vmul.f32 %v4217, %v4248
  %v4256 = vmul.f32 %v4218, %v4248
  %v4257 = vmul.f32 %v4242, %v4248
  %v4258 = vadd.f32 %v4234, %v4250
  %v4259 = vadd.f32 %v4235, %v4251
  %v4260 = vadd.f32 %v4236, %v4252
  %v4261 = vadd.f32 %v4237, %v4253
  %v4262 = vadd.f32 %v4238, %v4254
  %v4263 = vadd.f32 %v4239, %v4255
  %v4264 = vadd.f32 %v4240, %v4256
  %v4265 = vadd.f32 %v4241, %v4257
  %v4266 = vld [vmem:[#allocation2 + $0xa1] sm:$0xff]
  %v4267 = vld [vmem:[%s3869] sm:$0x1]
  %v4269 = vlaneseq
  %v4270 = vshrl.u32 %v4269, 7
  %v4271 = vsub.s32 0, %v4270
  %v4272 = vrot.slane %v4267, %v4271
  %v4274 = vmul.f32 %v4213, %v4272
  %v4275 = vmul.f32 %v4214, %v4272
  %v4276 = vmul.f32 %v4215, %v4272
  %v4277 = vmul.f32 %v4216, %v4272
  %v4278 = vmul.f32 %v4217, %v4272
  %v4279 = vmul.f32 %v4218, %v4272
  %v4280 = vmul.f32 %v4242, %v4272
  %v4281 = vmul.f32 %v4266, %v4272
  %v4282 = vadd.f32 %v4258, %v4274
  %v4283 = vadd.f32 %v4259, %v4275
  %v4284 = vadd.f32 %v4260, %v4276
  %v4285 = vadd.f32 %v4261, %v4277
  %v4286 = vadd.f32 %v4262, %v4278
  %v4287 = vadd.f32 %v4263, %v4279
  %v4288 = vadd.f32 %v4264, %v4280
  %v4289 = vadd.f32 %v4265, %v4281
  %v4290 = vld [vmem:[%s3893] sm:$0xff]
  %v4291 = vld [vmem:[%s3893 + $0x8] sm:$0xff]
  %v4292 = vld [vmem:[%s3893 + $0x10] sm:$0xff]
  %v4293 = vld [vmem:[%s3893 + $0x18] sm:$0xff]
  %v4294 = vld [vmem:[%s3893 + $0x20] sm:$0xff]
  %v4295 = vld [vmem:[%s3893 + $0x28] sm:$0xff]
  %v4296 = vld [vmem:[%s3893 + $0x30] sm:$0xff]
  %v4297 = vld [vmem:[%s3893 + $0x38] sm:$0xff]
  %4299 = vset.pattern.permute.xlu0 0
  %4300 = vperm.xlu0 %4299, %v4290
  %v4301 = vpop.permute.xlu0 %4300
  %4304 = vset.pattern.permute.xlu0 0
  %4305 = vperm.xlu0 %4304, %v4291
  %v4306 = vpop.permute.xlu0 %4305
  %4309 = vset.pattern.permute.xlu0 0
  %4310 = vperm.xlu0 %4309, %v4292
  %v4311 = vpop.permute.xlu0 %4310
  %4314 = vset.pattern.permute.xlu0 0
  %4315 = vperm.xlu0 %4314, %v4293
  %v4316 = vpop.permute.xlu0 %4315
  %4319 = vset.pattern.permute.xlu0 0
  %4320 = vperm.xlu0 %4319, %v4294
  %v4321 = vpop.permute.xlu0 %4320
  %4324 = vset.pattern.permute.xlu0 0
  %4325 = vperm.xlu0 %4324, %v4295
  %v4326 = vpop.permute.xlu0 %4325
  %4329 = vset.pattern.permute.xlu0 0
  %4330 = vperm.xlu0 %4329, %v4296
  %v4331 = vpop.permute.xlu0 %4330
  %4334 = vset.pattern.permute.xlu0 0
  %4335 = vperm.xlu0 %4334, %v4297
  %v4336 = vpop.permute.xlu0 %4335
  %v4338 = vmul.f32 %v4282, %v4301
  %v4339 = vmul.f32 %v4283, %v4306
  %v4340 = vmul.f32 %v4284, %v4311
  %v4341 = vmul.f32 %v4285, %v4316
  %v4342 = vmul.f32 %v4286, %v4321
  %v4343 = vmul.f32 %v4287, %v4326
  %v4344 = vmul.f32 %v4288, %v4331
  %v4345 = vmul.f32 %v4289, %v4336
  %v4346 = vadd.f32 %v4203, %v4338
  %v4347 = vadd.f32 %v4204, %v4339
  %v4348 = vadd.f32 %v4205, %v4340
  %v4349 = vadd.f32 %v4206, %v4341
  %v4350 = vadd.f32 %v4207, %v4342
  %v4351 = vadd.f32 %v4208, %v4343
  %v4352 = vadd.f32 %v4209, %v4344
  %v4353 = vadd.f32 %v4210, %v4345
  %v4354 = vld [vmem:[%s37] sm:$0x1]
  %v4356 = vlaneseq
  %v4357 = vshrl.u32 %v4356, 7
  %v4358 = vsub.s32 0, %v4357
  %v4359 = vrot.slane %v4354, %v4358
  %v4361 = vadd.f32 %v4346, %v4359
  %v4362 = vadd.f32 %v4347, %v4359
  %v4363 = vadd.f32 %v4348, %v4359
  %v4364 = vadd.f32 %v4349, %v4359
  %v4365 = vadd.f32 %v4350, %v4359
  %v4366 = vadd.f32 %v4351, %v4359
  %v4367 = vadd.f32 %v4352, %v4359
  %v4368 = vadd.f32 %v4353, %v4359
  %4369 = vst.msk [vmem:[#allocation3 + $0x40] sm:$0xff] %vm186, %v4361
  %4370 = vst.msk [vmem:[#allocation3 + $0x48] sm:$0xff] %vm186, %v4362
  %4371 = vst.msk [vmem:[#allocation3 + $0x50] sm:$0xff] %vm186, %v4363
  %4372 = vst.msk [vmem:[#allocation3 + $0x58] sm:$0xff] %vm186, %v4364
  %4373 = vst.msk [vmem:[#allocation3 + $0x60] sm:$0xff] %vm186, %v4365
  %4374 = vst.msk [vmem:[#allocation3 + $0x68] sm:$0xff] %vm186, %v4366
  %4375 = vst.msk [vmem:[#allocation3 + $0x70] sm:$0xff] %vm186, %v4367
  %4376 = vst.msk [vmem:[#allocation3 + $0x78] sm:$0xff] %vm186, %v4368
  %v4377 = vld [vmem:[#allocation3] sm:$0xff]
  %v4378 = vld [vmem:[#allocation3 + $0x8] sm:$0xff]
  %v4379 = vld [vmem:[#allocation3 + $0x10] sm:$0xff]
  %v4380 = vld [vmem:[#allocation3 + $0x18] sm:$0xff]
  %v4381 = vld [vmem:[#allocation3 + $0x20] sm:$0xff]
  %v4382 = vld [vmem:[#allocation3 + $0x28] sm:$0xff]
  %v4383 = vld [vmem:[#allocation3 + $0x30] sm:$0xff]
  %v4384 = vld [vmem:[#allocation3 + $0x38] sm:$0xff]
  %v4385 = vld [vmem:[#allocation3 + $0x40] sm:$0xff]
  %v4386 = vld [vmem:[#allocation3 + $0x48] sm:$0xff]
  %v4387 = vld [vmem:[#allocation3 + $0x50] sm:$0xff]
  %v4388 = vld [vmem:[#allocation3 + $0x58] sm:$0xff]
  %v4389 = vld [vmem:[#allocation3 + $0x60] sm:$0xff]
  %v4390 = vld [vmem:[#allocation3 + $0x68] sm:$0xff]
  %v4391 = vld [vmem:[#allocation3 + $0x70] sm:$0xff]
  %v4392 = vld [vmem:[#allocation3 + $0x78] sm:$0xff]
  %v4393 = vld [vmem:[%s41] sm:$0xff]
  %v4394 = vld [vmem:[%s41 + $0x8] sm:$0xff]
  %v4395 = vld [vmem:[%s41 + $0x10] sm:$0xff]
  %v4396 = vld [vmem:[%s41 + $0x18] sm:$0xff]
  %v4397 = vld [vmem:[%s43] sm:$0xff]
  %v4398 = vld [vmem:[%s43 + $0x8] sm:$0x3]
  %vm4399 = vcmask 80896
  %v4401 = vsel %vm4399, %v170, 0
  %v4404 = vsel %vm4399, %v171, 0
  %v4407 = vsel %vm4399, %v172, 0
  %v4410 = vsel %vm4399, %v173, 0
  %v4413 = vsel %vm4399, %v174, 0
  %v4416 = vsel %vm4399, %v175, 0
  %v4419 = vsel %vm4399, %v176, 0
  %v4422 = vsel %vm4399, %v177, 0
  %v4425 = vsel %vm4399, %v178, 0
  %v4428 = vsel %vm4399, %v179, 0
  %v4431 = vsel %vm4399, %v180, 0
  %v4434 = vsel %vm4399, %v181, 0
  %v4437 = vsel %vm4399, %v182, 0
  %v4440 = vsel %vm4399, %v183, 0
  %v4443 = vsel %vm4399, %v184, 0
  %v4446 = vsel %vm4399, %v185, 0
  %vm4448 = vcmask 1041408
  %v4450 = vsel %vm4448, %v4398, 0
  %4452 = vmatprep.subr.mxu0 0.0
  %4453 = vmatpush1.msra.mxu0 %v4397
  %4454 = vmatprep.subr.mxu0 0.0
  %4455 = vmatpush1.msra.mxu0 %v4450
  %4456 = vmatprep.subr.mxu0 0.0
  %4457 = vmatpush1.msra.mxu0 0.0
  %4458 = vmatprep.subr.mxu0 0.0
  %4459 = vmatpush1.msra.mxu0 0.0
  %4460 = vmatprep.subr.mxu0 0.0
  %4461 = vmatpush1.msra.mxu0 0.0
  %4462 = vmatprep.subr.mxu0 0.0
  %4463 = vmatpush1.msra.mxu0 0.0
  %4464 = vmatprep.subr.mxu0 0.0
  %4465 = vmatpush1.msra.mxu0 0.0
  %4466 = vmatprep.subr.mxu0 0.0
  %4467 = vmatpush1.msra.mxu0 0.0
  %4468 = vmatprep.subr.mxu0 0.0
  %4469 = vmatpush1.msra.mxu0 0.0
  %4470 = vmatprep.subr.mxu0 0.0
  %4471 = vmatpush1.msra.mxu0 0.0
  %4472 = vmatprep.subr.mxu0 0.0
  %4473 = vmatpush1.msra.mxu0 0.0
  %4474 = vmatprep.subr.mxu0 0.0
  %4475 = vmatpush1.msra.mxu0 0.0
  %4476 = vmatprep.subr.mxu0 0.0
  %4477 = vmatpush1.msra.mxu0 0.0
  %4478 = vmatprep.subr.mxu0 0.0
  %4479 = vmatpush1.msra.mxu0 0.0
  %4480 = vmatprep.subr.mxu0 0.0
  %4481 = vmatpush1.msra.mxu0 0.0
  %4482 = vmatprep.subr.mxu0 0.0
  %4483 = vmatpush1.msra.mxu0 0.0
  %4484 = vmatprep.subr.mxu0 0.0
  %4485 = vmatpush1.msra.mxu0 0.0
  %4486 = vmatprep.subr.mxu0 0.0
  %4487 = vmatpush1.msra.mxu0 0.0
  %4488 = vmatprep.subr.mxu0 0.0
  %4489 = vmatpush1.msra.mxu0 0.0
  %4490 = vmatprep.subr.mxu0 0.0
  %4491 = vmatpush1.msra.mxu0 0.0
  %4492 = vmatprep.subr.mxu0 0.0
  %4493 = vmatpush1.msra.mxu0 0.0
  %4494 = vmatprep.subr.mxu0 0.0
  %4495 = vmatpush1.msra.mxu0 0.0
  %4496 = vmatprep.subr.mxu0 0.0
  %4497 = vmatpush1.msra.mxu0 0.0
  %4498 = vmatprep.subr.mxu0 0.0
  %4499 = vmatpush1.msra.mxu0 0.0
  %4500 = vmatprep.subr.mxu0 0.0
  %4501 = vmatpush1.msra.mxu0 0.0
  %4502 = vmatprep.subr.mxu0 0.0
  %4503 = vmatpush1.msra.mxu0 0.0
  %4504 = vmatprep.subr.mxu0 0.0
  %4505 = vmatpush1.msra.mxu0 0.0
  %4506 = vmatprep.subr.mxu0 0.0
  %4507 = vmatpush1.msra.mxu0 0.0
  %4508 = vmatprep.subr.mxu0 0.0
  %4509 = vmatpush1.msra.mxu0 0.0
  %4510 = vmatprep.subr.mxu0 0.0
  %4511 = vmatpush1.msra.mxu0 0.0
  %4512 = vmatprep.subr.mxu0 0.0
  %4513 = vmatpush1.msra.mxu0 0.0
  %4514 = vmatprep.subr.mxu0 0.0
  %4515 = vmatpush1.msra.mxu0 0.0
  %4516 = vmatprep.mubr.f32.mxu0 0.0
  %4517 = vmatmul.mubr.f32.gmra.mrb[0].mxu0 %v4401
  %v4518 = vpop.f32.mrb[0].mxu0
  %v4519 = vadd.f32 0.0, %v4518
  %v4520 = vpop.f32.mrb[0].mxu0
  %4521 = vmatprep.mubr.f32.mxu0 0.0
  %4522 = vmatmul.mubr.f32.gmra.mrb[0].mxu0 %v4404
  %v4523 = vpop.f32.mrb[0].mxu0
  %v4524 = vadd.f32 0.0, %v4523
  %v4525 = vpop.f32.mrb[0].mxu0
  %4526 = vmatprep.mubr.f32.mxu0 0.0
  %4527 = vmatmul.mubr.f32.gmra.mrb[0].mxu0 %v4407
  %v4528 = vpop.f32.mrb[0].mxu0
  %v4529 = vadd.f32 0.0, %v4528
  %v4530 = vpop.f32.mrb[0].mxu0
  %4531 = vmatprep.mubr.f32.mxu0 0.0
  %4532 = vmatmul.mubr.f32.gmra.mrb[0].mxu0 %v4410
  %v4533 = vpop.f32.mrb[0].mxu0
  %v4534 = vadd.f32 0.0, %v4533
  %v4535 = vpop.f32.mrb[0].mxu0
  %4536 = vmatprep.mubr.f32.mxu0 0.0
  %4537 = vmatmul.mubr.f32.gmra.mrb[0].mxu0 %v4413
  %v4538 = vpop.f32.mrb[0].mxu0
  %v4539 = vadd.f32 0.0, %v4538
  %v4540 = vpop.f32.mrb[0].mxu0
  %4541 = vmatprep.mubr.f32.mxu0 0.0
  %4542 = vmatmul.mubr.f32.gmra.mrb[0].mxu0 %v4416
  %v4543 = vpop.f32.mrb[0].mxu0
  %v4544 = vadd.f32 0.0, %v4543
  %v4545 = vpop.f32.mrb[0].mxu0
  %4546 = vmatprep.mubr.f32.mxu0 0.0
  %4547 = vmatmul.mubr.f32.gmra.mrb[0].mxu0 %v4419
  %v4548 = vpop.f32.mrb[0].mxu0
  %v4549 = vadd.f32 0.0, %v4548
  %v4550 = vpop.f32.mrb[0].mxu0
  %4551 = vmatprep.mubr.f32.mxu0 0.0
  %4552 = vmatmul.mubr.f32.gmra.mrb[0].mxu0 %v4422
  %v4553 = vpop.f32.mrb[0].mxu0
  %v4554 = vadd.f32 0.0, %v4553
  %v4555 = vpop.f32.mrb[0].mxu0
  %4556 = vmatprep.mubr.f32.mxu0 0.0
  %4557 = vmatmul.mubr.f32.gmra.mrb[0].mxu0 %v4425
  %v4558 = vpop.f32.mrb[0].mxu0
  %v4559 = vadd.f32 0.0, %v4558
  %v4560 = vpop.f32.mrb[0].mxu0
  %4561 = vmatprep.mubr.f32.mxu0 0.0
  %4562 = vmatmul.mubr.f32.gmra.mrb[0].mxu0 %v4428
  %v4563 = vpop.f32.mrb[0].mxu0
  %v4564 = vadd.f32 0.0, %v4563
  %v4565 = vpop.f32.mrb[0].mxu0
  %4566 = vmatprep.mubr.f32.mxu0 0.0
  %4567 = vmatmul.mubr.f32.gmra.mrb[0].mxu0 %v4431
  %v4568 = vpop.f32.mrb[0].mxu0
  %v4569 = vadd.f32 0.0, %v4568
  %v4570 = vpop.f32.mrb[0].mxu0
  %4571 = vmatprep.mubr.f32.mxu0 0.0
  %4572 = vmatmul.mubr.f32.gmra.mrb[0].mxu0 %v4434
  %v4573 = vpop.f32.mrb[0].mxu0
  %v4574 = vadd.f32 0.0, %v4573
  %v4575 = vpop.f32.mrb[0].mxu0
  %4576 = vmatprep.mubr.f32.mxu0 0.0
  %4577 = vmatmul.mubr.f32.gmra.mrb[0].mxu0 %v4437
  %v4578 = vpop.f32.mrb[0].mxu0
  %v4579 = vadd.f32 0.0, %v4578
  %v4580 = vpop.f32.mrb[0].mxu0
  %4581 = vmatprep.mubr.f32.mxu0 0.0
  %4582 = vmatmul.mubr.f32.gmra.mrb[0].mxu0 %v4440
  %v4583 = vpop.f32.mrb[0].mxu0
  %v4584 = vadd.f32 0.0, %v4583
  %v4585 = vpop.f32.mrb[0].mxu0
  %4586 = vmatprep.mubr.f32.mxu0 0.0
  %4587 = vmatmul.mubr.f32.gmra.mrb[0].mxu0 %v4443
  %v4588 = vpop.f32.mrb[0].mxu0
  %v4589 = vadd.f32 0.0, %v4588
  %v4590 = vpop.f32.mrb[0].mxu0
  %4591 = vmatprep.mubr.f32.mxu0 0.0
  %4592 = vmatmul.mubr.f32.gmra.mrb[0].mxu0 %v4446
  %v4593 = vpop.f32.mrb[0].mxu0
  %v4594 = vadd.f32 0.0, %v4593
  %v4595 = vpop.f32.mrb[0].mxu0
  %4596 = vdwg.mxu0
  %v4598 = vsel %vm186, %v4377, 0
  %v4601 = vsel %vm186, %v4378, 0
  %v4604 = vsel %vm186, %v4379, 0
  %v4607 = vsel %vm186, %v4380, 0
  %v4610 = vsel %vm186, %v4381, 0
  %v4613 = vsel %vm186, %v4382, 0
  %v4616 = vsel %vm186, %v4383, 0
  %v4619 = vsel %vm186, %v4384, 0
  %v4622 = vsel %vm186, %v4385, 0
  %v4625 = vsel %vm186, %v4386, 0
  %v4628 = vsel %vm186, %v4387, 0
  %v4631 = vsel %vm186, %v4388, 0
  %v4634 = vsel %vm186, %v4389, 0
  %v4637 = vsel %vm186, %v4390, 0
  %v4640 = vsel %vm186, %v4391, 0
  %v4643 = vsel %vm186, %v4392, 0
  %4645 = vmatprep.subr.mxu0 0.0
  %4646 = vmatpush1.msra.mxu0 %v4393
  %4647 = vmatprep.subr.mxu0 0.0
  %4648 = vmatpush1.msra.mxu0 %v4394
  %4649 = vmatprep.subr.mxu0 0.0
  %4650 = vmatpush1.msra.mxu0 %v4395
  %4651 = vmatprep.subr.mxu0 0.0
  %4652 = vmatpush1.msra.mxu0 %v4396
  %4653 = vmatprep.subr.mxu0 0.0
  %4654 = vmatpush1.msra.mxu0 0.0
  %4655 = vmatprep.subr.mxu0 0.0
  %4656 = vmatpush1.msra.mxu0 0.0
  %4657 = vmatprep.subr.mxu0 0.0
  %4658 = vmatpush1.msra.mxu0 0.0
  %4659 = vmatprep.subr.mxu0 0.0
  %4660 = vmatpush1.msra.mxu0 0.0
  %4661 = vmatprep.subr.mxu0 0.0
  %4662 = vmatpush1.msra.mxu0 0.0
  %4663 = vmatprep.subr.mxu0 0.0
  %4664 = vmatpush1.msra.mxu0 0.0
  %4665 = vmatprep.subr.mxu0 0.0
  %4666 = vmatpush1.msra.mxu0 0.0
  %4667 = vmatprep.subr.mxu0 0.0
  %4668 = vmatpush1.msra.mxu0 0.0
  %4669 = vmatprep.subr.mxu0 0.0
  %4670 = vmatpush1.msra.mxu0 0.0
  %4671 = vmatprep.subr.mxu0 0.0
  %4672 = vmatpush1.msra.mxu0 0.0
  %4673 = vmatprep.subr.mxu0 0.0
  %4674 = vmatpush1.msra.mxu0 0.0
  %4675 = vmatprep.subr.mxu0 0.0
  %4676 = vmatpush1.msra.mxu0 0.0
  %4677 = vmatprep.subr.mxu0 0.0
  %4678 = vmatpush1.msra.mxu0 0.0
  %4679 = vmatprep.subr.mxu0 0.0
  %4680 = vmatpush1.msra.mxu0 0.0
  %4681 = vmatprep.subr.mxu0 0.0
  %4682 = vmatpush1.msra.mxu0 0.0
  %4683 = vmatprep.subr.mxu0 0.0
  %4684 = vmatpush1.msra.mxu0 0.0
  %4685 = vmatprep.subr.mxu0 0.0
  %4686 = vmatpush1.msra.mxu0 0.0
  %4687 = vmatprep.subr.mxu0 0.0
  %4688 = vmatpush1.msra.mxu0 0.0
  %4689 = vmatprep.subr.mxu0 0.0
  %4690 = vmatpush1.msra.mxu0 0.0
  %4691 = vmatprep.subr.mxu0 0.0
  %4692 = vmatpush1.msra.mxu0 0.0
  %4693 = vmatprep.subr.mxu0 0.0
  %4694 = vmatpush1.msra.mxu0 0.0
  %4695 = vmatprep.subr.mxu0 0.0
  %4696 = vmatpush1.msra.mxu0 0.0
  %4697 = vmatprep.subr.mxu0 0.0
  %4698 = vmatpush1.msra.mxu0 0.0
  %4699 = vmatprep.subr.mxu0 0.0
  %4700 = vmatpush1.msra.mxu0 0.0
  %4701 = vmatprep.subr.mxu0 0.0
  %4702 = vmatpush1.msra.mxu0 0.0
  %4703 = vmatprep.subr.mxu0 0.0
  %4704 = vmatpush1.msra.mxu0 0.0
  %4705 = vmatprep.subr.mxu0 0.0
  %4706 = vmatpush1.msra.mxu0 0.0
  %4707 = vmatprep.subr.mxu0 0.0
  %4708 = vmatpush1.msra.mxu0 0.0
  %4709 = vmatprep.mubr.f32.mxu0 0.0
  %4710 = vmatmul.mubr.f32.gmra.mrb[0].mxu0 %v4598
  %v4711 = vpop.f32.mrb[0].mxu0
  %v4712 = vadd.f32 %v4519, %v4711
  %v4713 = vpop.f32.mrb[0].mxu0
  %4714 = vmatprep.mubr.f32.mxu0 0.0
  %4715 = vmatmul.mubr.f32.gmra.mrb[0].mxu0 %v4601
  %v4716 = vpop.f32.mrb[0].mxu0
  %v4717 = vadd.f32 %v4524, %v4716
  %v4718 = vpop.f32.mrb[0].mxu0
  %4719 = vmatprep.mubr.f32.mxu0 0.0
  %4720 = vmatmul.mubr.f32.gmra.mrb[0].mxu0 %v4604
  %v4721 = vpop.f32.mrb[0].mxu0
  %v4722 = vadd.f32 %v4529, %v4721
  %v4723 = vpop.f32.mrb[0].mxu0
  %4724 = vmatprep.mubr.f32.mxu0 0.0
  %4725 = vmatmul.mubr.f32.gmra.mrb[0].mxu0 %v4607
  %v4726 = vpop.f32.mrb[0].mxu0
  %v4727 = vadd.f32 %v4534, %v4726
  %v4728 = vpop.f32.mrb[0].mxu0
  %4729 = vmatprep.mubr.f32.mxu0 0.0
  %4730 = vmatmul.mubr.f32.gmra.mrb[0].mxu0 %v4610
  %v4731 = vpop.f32.mrb[0].mxu0
  %v4732 = vadd.f32 %v4539, %v4731
  %v4733 = vpop.f32.mrb[0].mxu0
  %4734 = vmatprep.mubr.f32.mxu0 0.0
  %4735 = vmatmul.mubr.f32.gmra.mrb[0].mxu0 %v4613
  %v4736 = vpop.f32.mrb[0].mxu0
  %v4737 = vadd.f32 %v4544, %v4736
  %v4738 = vpop.f32.mrb[0].mxu0
  %4739 = vmatprep.mubr.f32.mxu0 0.0
  %4740 = vmatmul.mubr.f32.gmra.mrb[0].mxu0 %v4616
  %v4741 = vpop.f32.mrb[0].mxu0
  %v4742 = vadd.f32 %v4549, %v4741
  %v4743 = vpop.f32.mrb[0].mxu0
  %4744 = vmatprep.mubr.f32.mxu0 0.0
  %4745 = vmatmul.mubr.f32.gmra.mrb[0].mxu0 %v4619
  %v4746 = vpop.f32.mrb[0].mxu0
  %v4747 = vadd.f32 %v4554, %v4746
  %v4748 = vpop.f32.mrb[0].mxu0
  %4749 = vmatprep.mubr.f32.mxu0 0.0
  %4750 = vmatmul.mubr.f32.gmra.mrb[0].mxu0 %v4622
  %v4751 = vpop.f32.mrb[0].mxu0
  %v4752 = vadd.f32 %v4559, %v4751
  %v4753 = vpop.f32.mrb[0].mxu0
  %4754 = vmatprep.mubr.f32.mxu0 0.0
  %4755 = vmatmul.mubr.f32.gmra.mrb[0].mxu0 %v4625
  %v4756 = vpop.f32.mrb[0].mxu0
  %v4757 = vadd.f32 %v4564, %v4756
  %v4758 = vpop.f32.mrb[0].mxu0
  %4759 = vmatprep.mubr.f32.mxu0 0.0
  %4760 = vmatmul.mubr.f32.gmra.mrb[0].mxu0 %v4628
  %v4761 = vpop.f32.mrb[0].mxu0
  %v4762 = vadd.f32 %v4569, %v4761
  %v4763 = vpop.f32.mrb[0].mxu0
  %4764 = vmatprep.mubr.f32.mxu0 0.0
  %4765 = vmatmul.mubr.f32.gmra.mrb[0].mxu0 %v4631
  %v4766 = vpop.f32.mrb[0].mxu0
  %v4767 = vadd.f32 %v4574, %v4766
  %v4768 = vpop.f32.mrb[0].mxu0
  %4769 = vmatprep.mubr.f32.mxu0 0.0
  %4770 = vmatmul.mubr.f32.gmra.mrb[0].mxu0 %v4634
  %v4771 = vpop.f32.mrb[0].mxu0
  %v4772 = vadd.f32 %v4579, %v4771
  %v4773 = vpop.f32.mrb[0].mxu0
  %4774 = vmatprep.mubr.f32.mxu0 0.0
  %4775 = vmatmul.mubr.f32.gmra.mrb[0].mxu0 %v4637
  %v4776 = vpop.f32.mrb[0].mxu0
  %v4777 = vadd.f32 %v4584, %v4776
  %v4778 = vpop.f32.mrb[0].mxu0
  %4779 = vmatprep.mubr.f32.mxu0 0.0
  %4780 = vmatmul.mubr.f32.gmra.mrb[0].mxu0 %v4640
  %v4781 = vpop.f32.mrb[0].mxu0
  %v4782 = vadd.f32 %v4589, %v4781
  %v4783 = vpop.f32.mrb[0].mxu0
  %4784 = vmatprep.mubr.f32.mxu0 0.0
  %4785 = vmatmul.mubr.f32.gmra.mrb[0].mxu0 %v4643
  %v4786 = vpop.f32.mrb[0].mxu0
  %v4787 = vadd.f32 %v4594, %v4786
  %v4788 = vpop.f32.mrb[0].mxu0
  %4789 = vdwg.mxu0
  %v4790 = vld [vmem:[%s45] sm:$0x1]
  %v4792 = vlaneseq
  %v4793 = vshrl.u32 %v4792, 7
  %v4794 = vsub.s32 0, %v4793
  %v4795 = vrot.slane %v4790, %v4794
  %v4797 = vadd.f32 %v4712, %v4795
  %v4798 = vadd.f32 %v4717, %v4795
  %v4799 = vadd.f32 %v4722, %v4795
  %v4800 = vadd.f32 %v4727, %v4795
  %v4801 = vadd.f32 %v4732, %v4795
  %v4802 = vadd.f32 %v4737, %v4795
  %v4803 = vadd.f32 %v4742, %v4795
  %v4804 = vadd.f32 %v4747, %v4795
  %v4805 = vadd.f32 %v4752, %v4795
  %v4806 = vadd.f32 %v4757, %v4795
  %v4807 = vadd.f32 %v4762, %v4795
  %v4808 = vadd.f32 %v4767, %v4795
  %v4809 = vadd.f32 %v4772, %v4795
  %v4810 = vadd.f32 %v4777, %v4795
  %v4811 = vadd.f32 %v4782, %v4795
  %v4812 = vadd.f32 %v4787, %v4795
  %v4813 = vsel %vm186, %v4377, 0.0
  %4814 = vadd.xlane.f32.xlu0 %v4813
  %v4815 = vpop.xlane.xlu0 %4814
  %v4816 = vsel %vm186, %v4378, 0.0
  %4817 = vadd.xlane.f32.xlu0 %v4816
  %v4818 = vpop.xlane.xlu0 %4817
  %v4819 = vsel %vm186, %v4379, 0.0
  %4820 = vadd.xlane.f32.xlu0 %v4819
  %v4821 = vpop.xlane.xlu0 %4820
  %v4822 = vsel %vm186, %v4380, 0.0
  %4823 = vadd.xlane.f32.xlu0 %v4822
  %v4824 = vpop.xlane.xlu0 %4823
  %v4825 = vsel %vm186, %v4381, 0.0
  %4826 = vadd.xlane.f32.xlu0 %v4825
  %v4827 = vpop.xlane.xlu0 %4826
  %v4828 = vsel %vm186, %v4382, 0.0
  %4829 = vadd.xlane.f32.xlu0 %v4828
  %v4830 = vpop.xlane.xlu0 %4829
  %v4831 = vsel %vm186, %v4383, 0.0
  %4832 = vadd.xlane.f32.xlu0 %v4831
  %v4833 = vpop.xlane.xlu0 %4832
  %v4834 = vsel %vm186, %v4384, 0.0
  %4835 = vadd.xlane.f32.xlu0 %v4834
  %v4836 = vpop.xlane.xlu0 %4835
  %v4837 = vsel %vm186, %v4385, 0.0
  %4838 = vadd.xlane.f32.xlu0 %v4837
  %v4839 = vpop.xlane.xlu0 %4838
  %v4840 = vsel %vm186, %v4386, 0.0
  %4841 = vadd.xlane.f32.xlu0 %v4840
  %v4842 = vpop.xlane.xlu0 %4841
  %v4843 = vsel %vm186, %v4387, 0.0
  %4844 = vadd.xlane.f32.xlu0 %v4843
  %v4845 = vpop.xlane.xlu0 %4844
  %v4846 = vsel %vm186, %v4388, 0.0
  %4847 = vadd.xlane.f32.xlu0 %v4846
  %v4848 = vpop.xlane.xlu0 %4847
  %v4849 = vsel %vm186, %v4389, 0.0
  %4850 = vadd.xlane.f32.xlu0 %v4849
  %v4851 = vpop.xlane.xlu0 %4850
  %v4852 = vsel %vm186, %v4390, 0.0
  %4853 = vadd.xlane.f32.xlu0 %v4852
  %v4854 = vpop.xlane.xlu0 %4853
  %v4855 = vsel %vm186, %v4391, 0.0
  %4856 = vadd.xlane.f32.xlu0 %v4855
  %v4857 = vpop.xlane.xlu0 %4856
  %v4858 = vsel %vm186, %v4392, 0.0
  %4859 = vadd.xlane.f32.xlu0 %v4858
  %v4860 = vpop.xlane.xlu0 %4859
  %v4861 = vmul.f32 %v4815, %v235
  %v4862 = vmul.f32 %v4818, %v235
  %v4863 = vmul.f32 %v4821, %v235
  %v4864 = vmul.f32 %v4824, %v235
  %v4865 = vmul.f32 %v4827, %v235
  %v4866 = vmul.f32 %v4830, %v235
  %v4867 = vmul.f32 %v4833, %v235
  %v4868 = vmul.f32 %v4836, %v235
  %v4869 = vmul.f32 %v4839, %v235
  %v4870 = vmul.f32 %v4842, %v235
  %v4871 = vmul.f32 %v4845, %v235
  %v4872 = vmul.f32 %v4848, %v235
  %v4873 = vmul.f32 %v4851, %v235
  %v4874 = vmul.f32 %v4854, %v235
  %v4875 = vmul.f32 %v4857, %v235
  %v4876 = vmul.f32 %v4860, %v235
  %v4877 = vsub.f32 %v4377, %v4861
  %v4878 = vsub.f32 %v4378, %v4862
  %v4879 = vsub.f32 %v4379, %v4863
  %v4880 = vsub.f32 %v4380, %v4864
  %v4881 = vsub.f32 %v4381, %v4865
  %v4882 = vsub.f32 %v4382, %v4866
  %v4883 = vsub.f32 %v4383, %v4867
  %v4884 = vsub.f32 %v4384, %v4868
  %v4885 = vsub.f32 %v4385, %v4869
  %v4886 = vsub.f32 %v4386, %v4870
  %v4887 = vsub.f32 %v4387, %v4871
  %v4888 = vsub.f32 %v4388, %v4872
  %v4889 = vsub.f32 %v4389, %v4873
  %v4890 = vsub.f32 %v4390, %v4874
  %v4891 = vsub.f32 %v4391, %v4875
  %v4892 = vsub.f32 %v4392, %v4876
  %v4893 = vmul.f32 %v4877, %v4877
  %v4894 = vmul.f32 %v4878, %v4878
  %v4895 = vmul.f32 %v4879, %v4879
  %v4896 = vmul.f32 %v4880, %v4880
  %v4897 = vmul.f32 %v4881, %v4881
  %v4898 = vmul.f32 %v4882, %v4882
  %v4899 = vmul.f32 %v4883, %v4883
  %v4900 = vmul.f32 %v4884, %v4884
  %v4901 = vmul.f32 %v4885, %v4885
  %v4902 = vmul.f32 %v4886, %v4886
  %v4903 = vmul.f32 %v4887, %v4887
  %v4904 = vmul.f32 %v4888, %v4888
  %v4905 = vmul.f32 %v4889, %v4889
  %v4906 = vmul.f32 %v4890, %v4890
  %v4907 = vmul.f32 %v4891, %v4891
  %v4908 = vmul.f32 %v4892, %v4892
  %v4909 = vsel %vm186, %v4893, 0.0
  %4910 = vadd.xlane.f32.xlu0 %v4909
  %v4911 = vpop.xlane.xlu0 %4910
  %v4912 = vsel %vm186, %v4894, 0.0
  %4913 = vadd.xlane.f32.xlu0 %v4912
  %v4914 = vpop.xlane.xlu0 %4913
  %v4915 = vsel %vm186, %v4895, 0.0
  %4916 = vadd.xlane.f32.xlu0 %v4915
  %v4917 = vpop.xlane.xlu0 %4916
  %v4918 = vsel %vm186, %v4896, 0.0
  %4919 = vadd.xlane.f32.xlu0 %v4918
  %v4920 = vpop.xlane.xlu0 %4919
  %v4921 = vsel %vm186, %v4897, 0.0
  %4922 = vadd.xlane.f32.xlu0 %v4921
  %v4923 = vpop.xlane.xlu0 %4922
  %v4924 = vsel %vm186, %v4898, 0.0
  %4925 = vadd.xlane.f32.xlu0 %v4924
  %v4926 = vpop.xlane.xlu0 %4925
  %v4927 = vsel %vm186, %v4899, 0.0
  %4928 = vadd.xlane.f32.xlu0 %v4927
  %v4929 = vpop.xlane.xlu0 %4928
  %v4930 = vsel %vm186, %v4900, 0.0
  %4931 = vadd.xlane.f32.xlu0 %v4930
  %v4932 = vpop.xlane.xlu0 %4931
  %v4933 = vsel %vm186, %v4901, 0.0
  %4934 = vadd.xlane.f32.xlu0 %v4933
  %v4935 = vpop.xlane.xlu0 %4934
  %v4936 = vsel %vm186, %v4902, 0.0
  %4937 = vadd.xlane.f32.xlu0 %v4936
  %v4938 = vpop.xlane.xlu0 %4937
  %v4939 = vsel %vm186, %v4903, 0.0
  %4940 = vadd.xlane.f32.xlu0 %v4939
  %v4941 = vpop.xlane.xlu0 %4940
  %v4942 = vsel %vm186, %v4904, 0.0
  %4943 = vadd.xlane.f32.xlu0 %v4942
  %v4944 = vpop.xlane.xlu0 %4943
  %v4945 = vsel %vm186, %v4905, 0.0
  %4946 = vadd.xlane.f32.xlu0 %v4945
  %v4947 = vpop.xlane.xlu0 %4946
  %v4948 = vsel %vm186, %v4906, 0.0
  %4949 = vadd.xlane.f32.xlu0 %v4948
  %v4950 = vpop.xlane.xlu0 %4949
  %v4951 = vsel %vm186, %v4907, 0.0
  %4952 = vadd.xlane.f32.xlu0 %v4951
  %v4953 = vpop.xlane.xlu0 %4952
  %v4954 = vsel %vm186, %v4908, 0.0
  %4955 = vadd.xlane.f32.xlu0 %v4954
  %v4956 = vpop.xlane.xlu0 %4955
  %v4957 = vmul.f32 %v4911, %v235
  %v4958 = vmul.f32 %v4914, %v235
  %v4959 = vmul.f32 %v4917, %v235
  %v4960 = vmul.f32 %v4920, %v235
  %v4961 = vmul.f32 %v4923, %v235
  %v4962 = vmul.f32 %v4926, %v235
  %v4963 = vmul.f32 %v4929, %v235
  %v4964 = vmul.f32 %v4932, %v235
  %v4965 = vmul.f32 %v4935, %v235
  %v4966 = vmul.f32 %v4938, %v235
  %v4967 = vmul.f32 %v4941, %v235
  %v4968 = vmul.f32 %v4944, %v235
  %v4969 = vmul.f32 %v4947, %v235
  %v4970 = vmul.f32 %v4950, %v235
  %v4971 = vmul.f32 %v4953, %v235
  %v4972 = vmul.f32 %v4956, %v235
  %v4973 = vadd.f32 %v4957, 1e-05
  %v4974 = vadd.f32 %v4958, 1e-05
  %v4975 = vadd.f32 %v4959, 1e-05
  %v4976 = vadd.f32 %v4960, 1e-05
  %v4977 = vadd.f32 %v4961, 1e-05
  %v4978 = vadd.f32 %v4962, 1e-05
  %v4979 = vadd.f32 %v4963, 1e-05
  %v4980 = vadd.f32 %v4964, 1e-05
  %v4981 = vadd.f32 %v4965, 1e-05
  %v4982 = vadd.f32 %v4966, 1e-05
  %v4983 = vadd.f32 %v4967, 1e-05
  %v4984 = vadd.f32 %v4968, 1e-05
  %v4985 = vadd.f32 %v4969, 1e-05
  %v4986 = vadd.f32 %v4970, 1e-05
  %v4987 = vadd.f32 %v4971, 1e-05
  %v4988 = vadd.f32 %v4972, 1e-05
  %v4989 = vrsqrt.pop %v4973
  %v4990 = vrsqrt.pop %v4974
  %v4991 = vrsqrt.pop %v4975
  %v4992 = vrsqrt.pop %v4976
  %v4993 = vrsqrt.pop %v4977
  %v4994 = vrsqrt.pop %v4978
  %v4995 = vrsqrt.pop %v4979
  %v4996 = vrsqrt.pop %v4980
  %v4997 = vrsqrt.pop %v4981
  %v4998 = vrsqrt.pop %v4982
  %v4999 = vrsqrt.pop %v4983
  %v5000 = vrsqrt.pop %v4984
  %v5001 = vrsqrt.pop %v4985
  %v5002 = vrsqrt.pop %v4986
  %v5003 = vrsqrt.pop %v4987
  %v5004 = vrsqrt.pop %v4988
  %v5005 = vmul.f32 %v4877, %v4989
  %v5006 = vmul.f32 %v4878, %v4990
  %v5007 = vmul.f32 %v4879, %v4991
  %v5008 = vmul.f32 %v4880, %v4992
  %v5009 = vmul.f32 %v4881, %v4993
  %v5010 = vmul.f32 %v4882, %v4994
  %v5011 = vmul.f32 %v4883, %v4995
  %v5012 = vmul.f32 %v4884, %v4996
  %v5013 = vmul.f32 %v4885, %v4997
  %v5014 = vmul.f32 %v4886, %v4998
  %v5015 = vmul.f32 %v4887, %v4999
  %v5016 = vmul.f32 %v4888, %v5000
  %v5017 = vmul.f32 %v4889, %v5001
  %v5018 = vmul.f32 %v4890, %v5002
  %v5019 = vmul.f32 %v4891, %v5003
  %v5020 = vmul.f32 %v4892, %v5004
  %v5021 = vld [vmem:[%s47] sm:$0x1]
  %v5023 = vlaneseq
  %v5024 = vshrl.u32 %v5023, 7
  %v5025 = vsub.s32 0, %v5024
  %v5026 = vrot.slane %v5021, %v5025
  %v5028 = vmul.f32 %v5005, %v5026
  %v5029 = vmul.f32 %v5006, %v5026
  %v5030 = vmul.f32 %v5007, %v5026
  %v5031 = vmul.f32 %v5008, %v5026
  %v5032 = vmul.f32 %v5009, %v5026
  %v5033 = vmul.f32 %v5010, %v5026
  %v5034 = vmul.f32 %v5011, %v5026
  %v5035 = vmul.f32 %v5012, %v5026
  %v5036 = vmul.f32 %v5013, %v5026
  %v5037 = vmul.f32 %v5014, %v5026
  %v5038 = vmul.f32 %v5015, %v5026
  %v5039 = vmul.f32 %v5016, %v5026
  %v5040 = vmul.f32 %v5017, %v5026
  %v5041 = vmul.f32 %v5018, %v5026
  %v5042 = vmul.f32 %v5019, %v5026
  %v5043 = vmul.f32 %v5020, %v5026
  %v5044 = vld [vmem:[%s49] sm:$0x1]
  %v5046 = vlaneseq
  %v5047 = vshrl.u32 %v5046, 7
  %v5048 = vsub.s32 0, %v5047
  %v5049 = vrot.slane %v5044, %v5048
  %v5051 = vadd.f32 %v5028, %v5049
  %v5052 = vadd.f32 %v5029, %v5049
  %v5053 = vadd.f32 %v5030, %v5049
  %v5054 = vadd.f32 %v5031, %v5049
  %v5055 = vadd.f32 %v5032, %v5049
  %v5056 = vadd.f32 %v5033, %v5049
  %v5057 = vadd.f32 %v5034, %v5049
  %v5058 = vadd.f32 %v5035, %v5049
  %v5059 = vadd.f32 %v5036, %v5049
  %v5060 = vadd.f32 %v5037, %v5049
  %v5061 = vadd.f32 %v5038, %v5049
  %v5062 = vadd.f32 %v5039, %v5049
  %v5063 = vadd.f32 %v5040, %v5049
  %v5064 = vadd.f32 %v5041, %v5049
  %v5065 = vadd.f32 %v5042, %v5049
  %v5066 = vadd.f32 %v5043, %v5049
  %v5067 = vld [vmem:[%s51] sm:$0xff]
  %v5068 = vld [vmem:[%s51 + $0x8] sm:$0xff]
  %v5069 = vld [vmem:[%s51 + $0x10] sm:$0xff]
  %v5070 = vld [vmem:[%s51 + $0x18] sm:$0xff]
  %v5071 = vld [vmem:[%s53] sm:$0x1]
  %v5073 = vlaneseq
  %v5074 = vshrl.u32 %v5073, 7
  %v5075 = vsub.s32 0, %v5074
  %v5076 = vrot.slane %v5071, %v5075
  %v5079 = vsel %vm186, %v5051, 0
  %v5082 = vsel %vm186, %v5052, 0
  %v5085 = vsel %vm186, %v5053, 0
  %v5088 = vsel %vm186, %v5054, 0
  %v5091 = vsel %vm186, %v5055, 0
  %v5094 = vsel %vm186, %v5056, 0
  %v5097 = vsel %vm186, %v5057, 0
  %v5100 = vsel %vm186, %v5058, 0
  %v5103 = vsel %vm186, %v5059, 0
  %v5106 = vsel %vm186, %v5060, 0
  %v5109 = vsel %vm186, %v5061, 0
  %v5112 = vsel %vm186, %v5062, 0
  %v5115 = vsel %vm186, %v5063, 0
  %v5118 = vsel %vm186, %v5064, 0
  %v5121 = vsel %vm186, %v5065, 0
  %v5124 = vsel %vm186, %v5066, 0
  %5126 = vmatprep.subr.mxu0 0.0
  %5127 = vmatpush1.msra.mxu0 %v5067
  %5128 = vmatprep.subr.mxu0 0.0
  %5129 = vmatpush1.msra.mxu0 %v5068
  %5130 = vmatprep.subr.mxu0 0.0
  %5131 = vmatpush1.msra.mxu0 %v5069
  %5132 = vmatprep.subr.mxu0 0.0
  %5133 = vmatpush1.msra.mxu0 %v5070
  %5134 = vmatprep.subr.mxu0 0.0
  %5135 = vmatpush1.msra.mxu0 0.0
  %5136 = vmatprep.subr.mxu0 0.0
  %5137 = vmatpush1.msra.mxu0 0.0
  %5138 = vmatprep.subr.mxu0 0.0
  %5139 = vmatpush1.msra.mxu0 0.0
  %5140 = vmatprep.subr.mxu0 0.0
  %5141 = vmatpush1.msra.mxu0 0.0
  %5142 = vmatprep.subr.mxu0 0.0
  %5143 = vmatpush1.msra.mxu0 0.0
  %5144 = vmatprep.subr.mxu0 0.0
  %5145 = vmatpush1.msra.mxu0 0.0
  %5146 = vmatprep.subr.mxu0 0.0
  %5147 = vmatpush1.msra.mxu0 0.0
  %5148 = vmatprep.subr.mxu0 0.0
  %5149 = vmatpush1.msra.mxu0 0.0
  %5150 = vmatprep.subr.mxu0 0.0
  %5151 = vmatpush1.msra.mxu0 0.0
  %5152 = vmatprep.subr.mxu0 0.0
  %5153 = vmatpush1.msra.mxu0 0.0
  %5154 = vmatprep.subr.mxu0 0.0
  %5155 = vmatpush1.msra.mxu0 0.0
  %5156 = vmatprep.subr.mxu0 0.0
  %5157 = vmatpush1.msra.mxu0 0.0
  %5158 = vmatprep.subr.mxu0 0.0
  %5159 = vmatpush1.msra.mxu0 0.0
  %5160 = vmatprep.subr.mxu0 0.0
  %5161 = vmatpush1.msra.mxu0 0.0
  %5162 = vmatprep.subr.mxu0 0.0
  %5163 = vmatpush1.msra.mxu0 0.0
  %5164 = vmatprep.subr.mxu0 0.0
  %5165 = vmatpush1.msra.mxu0 0.0
  %5166 = vmatprep.subr.mxu0 0.0
  %5167 = vmatpush1.msra.mxu0 0.0
  %5168 = vmatprep.subr.mxu0 0.0
  %5169 = vmatpush1.msra.mxu0 0.0
  %5170 = vmatprep.subr.mxu0 0.0
  %5171 = vmatpush1.msra.mxu0 0.0
  %5172 = vmatprep.subr.mxu0 0.0
  %5173 = vmatpush1.msra.mxu0 0.0
  %5174 = vmatprep.subr.mxu0 0.0
  %5175 = vmatpush1.msra.mxu0 0.0
  %5176 = vmatprep.subr.mxu0 0.0
  %5177 = vmatpush1.msra.mxu0 0.0
  %5178 = vmatprep.subr.mxu0 0.0
  %5179 = vmatpush1.msra.mxu0 0.0
  %5180 = vmatprep.subr.mxu0 0.0
  %5181 = vmatpush1.msra.mxu0 0.0
  %5182 = vmatprep.subr.mxu0 0.0
  %5183 = vmatpush1.msra.mxu0 0.0
  %5184 = vmatprep.subr.mxu0 0.0
  %5185 = vmatpush1.msra.mxu0 0.0
  %5186 = vmatprep.subr.mxu0 0.0
  %5187 = vmatpush1.msra.mxu0 0.0
  %5188 = vmatprep.subr.mxu0 0.0
  %5189 = vmatpush1.msra.mxu0 0.0
  %5190 = vmatprep.mubr.f32.mxu0 0.0
  %5191 = vmatmul.mubr.f32.gmra.mrb[0].mxu0 %v5079
  %v5192 = vpop.f32.mrb[0].mxu0
  %v5193 = vadd.f32 %v5076, %v5192
  %v5194 = vpop.f32.mrb[0].mxu0
  %5195 = vmatprep.mubr.f32.mxu0 0.0
  %5196 = vmatmul.mubr.f32.gmra.mrb[0].mxu0 %v5082
  %v5197 = vpop.f32.mrb[0].mxu0
  %v5198 = vadd.f32 %v5076, %v5197
  %v5199 = vpop.f32.mrb[0].mxu0
  %5200 = vmatprep.mubr.f32.mxu0 0.0
  %5201 = vmatmul.mubr.f32.gmra.mrb[0].mxu0 %v5085
  %v5202 = vpop.f32.mrb[0].mxu0
  %v5203 = vadd.f32 %v5076, %v5202
  %v5204 = vpop.f32.mrb[0].mxu0
  %5205 = vmatprep.mubr.f32.mxu0 0.0
  %5206 = vmatmul.mubr.f32.gmra.mrb[0].mxu0 %v5088
  %v5207 = vpop.f32.mrb[0].mxu0
  %v5208 = vadd.f32 %v5076, %v5207
  %v5209 = vpop.f32.mrb[0].mxu0
  %5210 = vmatprep.mubr.f32.mxu0 0.0
  %5211 = vmatmul.mubr.f32.gmra.mrb[0].mxu0 %v5091
  %v5212 = vpop.f32.mrb[0].mxu0
  %v5213 = vadd.f32 %v5076, %v5212
  %v5214 = vpop.f32.mrb[0].mxu0
  %5215 = vmatprep.mubr.f32.mxu0 0.0
  %5216 = vmatmul.mubr.f32.gmra.mrb[0].mxu0 %v5094
  %v5217 = vpop.f32.mrb[0].mxu0
  %v5218 = vadd.f32 %v5076, %v5217
  %v5219 = vpop.f32.mrb[0].mxu0
  %5220 = vmatprep.mubr.f32.mxu0 0.0
  %5221 = vmatmul.mubr.f32.gmra.mrb[0].mxu0 %v5097
  %v5222 = vpop.f32.mrb[0].mxu0
  %v5223 = vadd.f32 %v5076, %v5222
  %v5224 = vpop.f32.mrb[0].mxu0
  %5225 = vmatprep.mubr.f32.mxu0 0.0
  %5226 = vmatmul.mubr.f32.gmra.mrb[0].mxu0 %v5100
  %v5227 = vpop.f32.mrb[0].mxu0
  %v5228 = vadd.f32 %v5076, %v5227
  %v5229 = vpop.f32.mrb[0].mxu0
  %5230 = vmatprep.mubr.f32.mxu0 0.0
  %5231 = vmatmul.mubr.f32.gmra.mrb[0].mxu0 %v5103
  %v5232 = vpop.f32.mrb[0].mxu0
  %v5233 = vadd.f32 %v5076, %v5232
  %v5234 = vpop.f32.mrb[0].mxu0
  %5235 = vmatprep.mubr.f32.mxu0 0.0
  %5236 = vmatmul.mubr.f32.gmra.mrb[0].mxu0 %v5106
  %v5237 = vpop.f32.mrb[0].mxu0
  %v5238 = vadd.f32 %v5076, %v5237
  %v5239 = vpop.f32.mrb[0].mxu0
  %5240 = vmatprep.mubr.f32.mxu0 0.0
  %5241 = vmatmul.mubr.f32.gmra.mrb[0].mxu0 %v5109
  %v5242 = vpop.f32.mrb[0].mxu0
  %v5243 = vadd.f32 %v5076, %v5242
  %v5244 = vpop.f32.mrb[0].mxu0
  %5245 = vmatprep.mubr.f32.mxu0 0.0
  %5246 = vmatmul.mubr.f32.gmra.mrb[0].mxu0 %v5112
  %v5247 = vpop.f32.mrb[0].mxu0
  %v5248 = vadd.f32 %v5076, %v5247
  %v5249 = vpop.f32.mrb[0].mxu0
  %5250 = vmatprep.mubr.f32.mxu0 0.0
  %5251 = vmatmul.mubr.f32.gmra.mrb[0].mxu0 %v5115
  %v5252 = vpop.f32.mrb[0].mxu0
  %v5253 = vadd.f32 %v5076, %v5252
  %v5254 = vpop.f32.mrb[0].mxu0
  %5255 = vmatprep.mubr.f32.mxu0 0.0
  %5256 = vmatmul.mubr.f32.gmra.mrb[0].mxu0 %v5118
  %v5257 = vpop.f32.mrb[0].mxu0
  %v5258 = vadd.f32 %v5076, %v5257
  %v5259 = vpop.f32.mrb[0].mxu0
  %5260 = vmatprep.mubr.f32.mxu0 0.0
  %5261 = vmatmul.mubr.f32.gmra.mrb[0].mxu0 %v5121
  %v5262 = vpop.f32.mrb[0].mxu0
  %v5263 = vadd.f32 %v5076, %v5262
  %v5264 = vpop.f32.mrb[0].mxu0
  %5265 = vmatprep.mubr.f32.mxu0 0.0
  %5266 = vmatmul.mubr.f32.gmra.mrb[0].mxu0 %v5124
  %v5267 = vpop.f32.mrb[0].mxu0
  %v5268 = vadd.f32 %v5076, %v5267
  %v5269 = vpop.f32.mrb[0].mxu0
  %5270 = vdwg.mxu0
  %v5271 = vmul.f32 %v5193, 0.5
  %v5272 = vmul.f32 %v5198, 0.5
  %v5273 = vmul.f32 %v5203, 0.5
  %v5274 = vmul.f32 %v5208, 0.5
  %v5275 = vmul.f32 %v5213, 0.5
  %v5276 = vmul.f32 %v5218, 0.5
  %v5277 = vmul.f32 %v5223, 0.5
  %v5278 = vmul.f32 %v5228, 0.5
  %v5279 = vmul.f32 %v5233, 0.5
  %v5280 = vmul.f32 %v5238, 0.5
  %v5281 = vmul.f32 %v5243, 0.5
  %v5282 = vmul.f32 %v5248, 0.5
  %v5283 = vmul.f32 %v5253, 0.5
  %v5284 = vmul.f32 %v5258, 0.5
  %v5285 = vmul.f32 %v5263, 0.5
  %v5286 = vmul.f32 %v5268, 0.5
  %v5287 = vmul.f32 %v5193, 0.70710677
  %v5288 = vmul.f32 %v5198, 0.70710677
  %v5289 = vmul.f32 %v5203, 0.70710677
  %v5290 = vmul.f32 %v5208, 0.70710677
  %v5291 = vmul.f32 %v5213, 0.70710677
  %v5292 = vmul.f32 %v5218, 0.70710677
  %v5293 = vmul.f32 %v5223, 0.70710677
  %v5294 = vmul.f32 %v5228, 0.70710677
  %v5295 = vmul.f32 %v5233, 0.70710677
  %v5296 = vmul.f32 %v5238, 0.70710677
  %v5297 = vmul.f32 %v5243, 0.70710677
  %v5298 = vmul.f32 %v5248, 0.70710677
  %v5299 = vmul.f32 %v5253, 0.70710677
  %v5300 = vmul.f32 %v5258, 0.70710677
  %v5301 = vmul.f32 %v5263, 0.70710677
  %v5302 = vmul.f32 %v5268, 0.70710677
  %v5303 = verf.f32.pop %v5287
  %v5304 = verf.f32.pop %v5288
  %v5305 = verf.f32.pop %v5289
  %v5306 = verf.f32.pop %v5290
  %v5307 = verf.f32.pop %v5291
  %v5308 = verf.f32.pop %v5292
  %v5309 = verf.f32.pop %v5293
  %v5310 = verf.f32.pop %v5294
  %v5311 = verf.f32.pop %v5295
  %v5312 = verf.f32.pop %v5296
  %v5313 = verf.f32.pop %v5297
  %v5314 = verf.f32.pop %v5298
  %v5315 = verf.f32.pop %v5299
  %v5316 = verf.f32.pop %v5300
  %v5317 = verf.f32.pop %v5301
  %v5318 = verf.f32.pop %v5302
  %v5319 = vadd.f32 %v5303, 1.0
  %v5320 = vadd.f32 %v5304, 1.0
  %v5321 = vadd.f32 %v5305, 1.0
  %v5322 = vadd.f32 %v5306, 1.0
  %v5323 = vadd.f32 %v5307, 1.0
  %v5324 = vadd.f32 %v5308, 1.0
  %v5325 = vadd.f32 %v5309, 1.0
  %v5326 = vadd.f32 %v5310, 1.0
  %v5327 = vadd.f32 %v5311, 1.0
  %v5328 = vadd.f32 %v5312, 1.0
  %v5329 = vadd.f32 %v5313, 1.0
  %v5330 = vadd.f32 %v5314, 1.0
  %v5331 = vadd.f32 %v5315, 1.0
  %v5332 = vadd.f32 %v5316, 1.0
  %v5333 = vadd.f32 %v5317, 1.0
  %v5334 = vadd.f32 %v5318, 1.0
  %v5335 = vmul.f32 %v5271, %v5319
  %v5336 = vmul.f32 %v5272, %v5320
  %v5337 = vmul.f32 %v5273, %v5321
  %v5338 = vmul.f32 %v5274, %v5322
  %v5339 = vmul.f32 %v5275, %v5323
  %v5340 = vmul.f32 %v5276, %v5324
  %v5341 = vmul.f32 %v5277, %v5325
  %v5342 = vmul.f32 %v5278, %v5326
  %v5343 = vmul.f32 %v5279, %v5327
  %v5344 = vmul.f32 %v5280, %v5328
  %v5345 = vmul.f32 %v5281, %v5329
  %v5346 = vmul.f32 %v5282, %v5330
  %v5347 = vmul.f32 %v5283, %v5331
  %v5348 = vmul.f32 %v5284, %v5332
  %v5349 = vmul.f32 %v5285, %v5333
  %v5350 = vmul.f32 %v5286, %v5334
  %v5351 = vld [vmem:[%s55] sm:$0xff]
  %v5352 = vld [vmem:[%s55 + $0x8] sm:$0xff]
  %v5353 = vld [vmem:[%s55 + $0x10] sm:$0xff]
  %v5354 = vld [vmem:[%s55 + $0x18] sm:$0xff]
  %v5355 = vld [vmem:[%s55 + $0x20] sm:$0xff]
  %v5356 = vld [vmem:[%s55 + $0x28] sm:$0xff]
  %v5357 = vld [vmem:[%s55 + $0x30] sm:$0xff]
  %v5358 = vld [vmem:[%s55 + $0x38] sm:$0xff]
  %v5359 = vld [vmem:[%s55 + $0x40] sm:$0xff]
  %v5360 = vld [vmem:[%s55 + $0x48] sm:$0xff]
  %v5361 = vld [vmem:[%s55 + $0x50] sm:$0xff]
  %v5362 = vld [vmem:[%s55 + $0x58] sm:$0xff]
  %v5363 = vld [vmem:[%s55 + $0x60] sm:$0xff]
  %v5364 = vld [vmem:[%s55 + $0x68] sm:$0xff]
  %v5365 = vld [vmem:[%s55 + $0x70] sm:$0xff]
  %v5366 = vld [vmem:[%s55 + $0x78] sm:$0xff]
  %v5367 = vld [vmem:[%s57] sm:$0x1]
  %v5369 = vlaneseq
  %v5370 = vshrl.u32 %v5369, 7
  %v5371 = vsub.s32 0, %v5370
  %v5372 = vrot.slane %v5367, %v5371
  %5374 = vmatprep.subr.mxu0 0.0
  %5375 = vmatpush1.msra.mxu0 %v5351
  %5376 = vmatprep.subr.mxu0 0.0
  %5377 = vmatpush1.msra.mxu0 %v5352
  %5378 = vmatprep.subr.mxu0 0.0
  %5379 = vmatpush1.msra.mxu0 %v5353
  %5380 = vmatprep.subr.mxu0 0.0
  %5381 = vmatpush1.msra.mxu0 %v5354
  %5382 = vmatprep.subr.mxu0 0.0
  %5383 = vmatpush1.msra.mxu0 %v5355
  %5384 = vmatprep.subr.mxu0 0.0
  %5385 = vmatpush1.msra.mxu0 %v5356
  %5386 = vmatprep.subr.mxu0 0.0
  %5387 = vmatpush1.msra.mxu0 %v5357
  %5388 = vmatprep.subr.mxu0 0.0
  %5389 = vmatpush1.msra.mxu0 %v5358
  %5390 = vmatprep.subr.mxu0 0.0
  %5391 = vmatpush1.msra.mxu0 %v5359
  %5392 = vmatprep.subr.mxu0 0.0
  %5393 = vmatpush1.msra.mxu0 %v5360
  %5394 = vmatprep.subr.mxu0 0.0
  %5395 = vmatpush1.msra.mxu0 %v5361
  %5396 = vmatprep.subr.mxu0 0.0
  %5397 = vmatpush1.msra.mxu0 %v5362
  %5398 = vmatprep.subr.mxu0 0.0
  %5399 = vmatpush1.msra.mxu0 %v5363
  %5400 = vmatprep.subr.mxu0 0.0
  %5401 = vmatpush1.msra.mxu0 %v5364
  %5402 = vmatprep.subr.mxu0 0.0
  %5403 = vmatpush1.msra.mxu0 %v5365
  %5404 = vmatprep.subr.mxu0 0.0
  %5405 = vmatpush1.msra.mxu0 %v5366
  %5406 = vmatprep.subr.mxu0 0.0
  %5407 = vmatpush1.msra.mxu0 0.0
  %5408 = vmatprep.subr.mxu0 0.0
  %5409 = vmatpush1.msra.mxu0 0.0
  %5410 = vmatprep.subr.mxu0 0.0
  %5411 = vmatpush1.msra.mxu0 0.0
  %5412 = vmatprep.subr.mxu0 0.0
  %5413 = vmatpush1.msra.mxu0 0.0
  %5414 = vmatprep.subr.mxu0 0.0
  %5415 = vmatpush1.msra.mxu0 0.0
  %5416 = vmatprep.subr.mxu0 0.0
  %5417 = vmatpush1.msra.mxu0 0.0
  %5418 = vmatprep.subr.mxu0 0.0
  %5419 = vmatpush1.msra.mxu0 0.0
  %5420 = vmatprep.subr.mxu0 0.0
  %5421 = vmatpush1.msra.mxu0 0.0
  %5422 = vmatprep.subr.mxu0 0.0
  %5423 = vmatpush1.msra.mxu0 0.0
  %5424 = vmatprep.subr.mxu0 0.0
  %5425 = vmatpush1.msra.mxu0 0.0
  %5426 = vmatprep.subr.mxu0 0.0
  %5427 = vmatpush1.msra.mxu0 0.0
  %5428 = vmatprep.subr.mxu0 0.0
  %5429 = vmatpush1.msra.mxu0 0.0
  %5430 = vmatprep.subr.mxu0 0.0
  %5431 = vmatpush1.msra.mxu0 0.0
  %5432 = vmatprep.subr.mxu0 0.0
  %5433 = vmatpush1.msra.mxu0 0.0
  %5434 = vmatprep.subr.mxu0 0.0
  %5435 = vmatpush1.msra.mxu0 0.0
  %5436 = vmatprep.subr.mxu0 0.0
  %5437 = vmatpush1.msra.mxu0 0.0
  %5438 = vmatprep.mubr.f32.mxu0 0.0
  %5439 = vmatmul.mubr.f32.gmra.mrb[0].mxu0 %v5335
  %v5440 = vpop.f32.mrb[0].mxu0
  %v5441 = vadd.f32 %v5372, %v5440
  %v5442 = vpop.f32.mrb[0].mxu0
  %5443 = vmatprep.mubr.f32.mxu0 0.0
  %5444 = vmatmul.mubr.f32.gmra.mrb[0].mxu0 %v5336
  %v5445 = vpop.f32.mrb[0].mxu0
  %v5446 = vadd.f32 %v5372, %v5445
  %v5447 = vpop.f32.mrb[0].mxu0
  %5448 = vmatprep.mubr.f32.mxu0 0.0
  %5449 = vmatmul.mubr.f32.gmra.mrb[0].mxu0 %v5337
  %v5450 = vpop.f32.mrb[0].mxu0
  %v5451 = vadd.f32 %v5372, %v5450
  %v5452 = vpop.f32.mrb[0].mxu0
  %5453 = vmatprep.mubr.f32.mxu0 0.0
  %5454 = vmatmul.mubr.f32.gmra.mrb[0].mxu0 %v5338
  %v5455 = vpop.f32.mrb[0].mxu0
  %v5456 = vadd.f32 %v5372, %v5455
  %v5457 = vpop.f32.mrb[0].mxu0
  %5458 = vmatprep.mubr.f32.mxu0 0.0
  %5459 = vmatmul.mubr.f32.gmra.mrb[0].mxu0 %v5339
  %v5460 = vpop.f32.mrb[0].mxu0
  %v5461 = vadd.f32 %v5372, %v5460
  %v5462 = vpop.f32.mrb[0].mxu0
  %5463 = vmatprep.mubr.f32.mxu0 0.0
  %5464 = vmatmul.mubr.f32.gmra.mrb[0].mxu0 %v5340
  %v5465 = vpop.f32.mrb[0].mxu0
  %v5466 = vadd.f32 %v5372, %v5465
  %v5467 = vpop.f32.mrb[0].mxu0
  %5468 = vmatprep.mubr.f32.mxu0 0.0
  %5469 = vmatmul.mubr.f32.gmra.mrb[0].mxu0 %v5341
  %v5470 = vpop.f32.mrb[0].mxu0
  %v5471 = vadd.f32 %v5372, %v5470
  %v5472 = vpop.f32.mrb[0].mxu0
  %5473 = vmatprep.mubr.f32.mxu0 0.0
  %5474 = vmatmul.mubr.f32.gmra.mrb[0].mxu0 %v5342
  %v5475 = vpop.f32.mrb[0].mxu0
  %v5476 = vadd.f32 %v5372, %v5475
  %v5477 = vpop.f32.mrb[0].mxu0
  %5478 = vmatprep.mubr.f32.mxu0 0.0
  %5479 = vmatmul.mubr.f32.gmra.mrb[0].mxu0 %v5343
  %v5480 = vpop.f32.mrb[0].mxu0
  %v5481 = vadd.f32 %v5372, %v5480
  %v5482 = vpop.f32.mrb[0].mxu0
  %5483 = vmatprep.mubr.f32.mxu0 0.0
  %5484 = vmatmul.mubr.f32.gmra.mrb[0].mxu0 %v5344
  %v5485 = vpop.f32.mrb[0].mxu0
  %v5486 = vadd.f32 %v5372, %v5485
  %v5487 = vpop.f32.mrb[0].mxu0
  %5488 = vmatprep.mubr.f32.mxu0 0.0
  %5489 = vmatmul.mubr.f32.gmra.mrb[0].mxu0 %v5345
  %v5490 = vpop.f32.mrb[0].mxu0
  %v5491 = vadd.f32 %v5372, %v5490
  %v5492 = vpop.f32.mrb[0].mxu0
  %5493 = vmatprep.mubr.f32.mxu0 0.0
  %5494 = vmatmul.mubr.f32.gmra.mrb[0].mxu0 %v5346
  %v5495 = vpop.f32.mrb[0].mxu0
  %v5496 = vadd.f32 %v5372, %v5495
  %v5497 = vpop.f32.mrb[0].mxu0
  %5498 = vmatprep.mubr.f32.mxu0 0.0
  %5499 = vmatmul.mubr.f32.gmra.mrb[0].mxu0 %v5347
  %v5500 = vpop.f32.mrb[0].mxu0
  %v5501 = vadd.f32 %v5372, %v5500
  %v5502 = vpop.f32.mrb[0].mxu0
  %5503 = vmatprep.mubr.f32.mxu0 0.0
  %5504 = vmatmul.mubr.f32.gmra.mrb[0].mxu0 %v5348
  %v5505 = vpop.f32.mrb[0].mxu0
  %v5506 = vadd.f32 %v5372, %v5505
  %v5507 = vpop.f32.mrb[0].mxu0
  %5508 = vmatprep.mubr.f32.mxu0 0.0
  %5509 = vmatmul.mubr.f32.gmra.mrb[0].mxu0 %v5349
  %v5510 = vpop.f32.mrb[0].mxu0
  %v5511 = vadd.f32 %v5372, %v5510
  %v5512 = vpop.f32.mrb[0].mxu0
  %5513 = vmatprep.mubr.f32.mxu0 0.0
  %5514 = vmatmul.mubr.f32.gmra.mrb[0].mxu0 %v5350
  %v5515 = vpop.f32.mrb[0].mxu0
  %v5516 = vadd.f32 %v5372, %v5515
  %v5517 = vpop.f32.mrb[0].mxu0
  %5518 = vdwg.mxu0
  %v5519 = vld [vmem:[%s59] sm:$0xff]
  %v5520 = vld [vmem:[%s59 + $0x8] sm:$0xff]
  %v5521 = vld [vmem:[%s59 + $0x10] sm:$0xff]
  %v5522 = vld [vmem:[%s59 + $0x18] sm:$0xff]
  %v5523 = vld [vmem:[%s61] sm:$0x1]
  %v5525 = vlaneseq
  %v5526 = vshrl.u32 %v5525, 7
  %v5527 = vsub.s32 0, %v5526
  %v5528 = vrot.slane %v5523, %v5527
  %5530 = vmatprep.subr.mxu0 0.0
  %5531 = vmatpush1.msra.mxu0 %v5519
  %5532 = vmatprep.subr.mxu0 0.0
  %5533 = vmatpush1.msra.mxu0 %v5520
  %5534 = vmatprep.subr.mxu0 0.0
  %5535 = vmatpush1.msra.mxu0 %v5521
  %5536 = vmatprep.subr.mxu0 0.0
  %5537 = vmatpush1.msra.mxu0 %v5522
  %5538 = vmatprep.subr.mxu0 0.0
  %5539 = vmatpush1.msra.mxu0 0.0
  %5540 = vmatprep.subr.mxu0 0.0
  %5541 = vmatpush1.msra.mxu0 0.0
  %5542 = vmatprep.subr.mxu0 0.0
  %5543 = vmatpush1.msra.mxu0 0.0
  %5544 = vmatprep.subr.mxu0 0.0
  %5545 = vmatpush1.msra.mxu0 0.0
  %5546 = vmatprep.subr.mxu0 0.0
  %5547 = vmatpush1.msra.mxu0 0.0
  %5548 = vmatprep.subr.mxu0 0.0
  %5549 = vmatpush1.msra.mxu0 0.0
  %5550 = vmatprep.subr.mxu0 0.0
  %5551 = vmatpush1.msra.mxu0 0.0
  %5552 = vmatprep.subr.mxu0 0.0
  %5553 = vmatpush1.msra.mxu0 0.0
  %5554 = vmatprep.subr.mxu0 0.0
  %5555 = vmatpush1.msra.mxu0 0.0
  %5556 = vmatprep.subr.mxu0 0.0
  %5557 = vmatpush1.msra.mxu0 0.0
  %5558 = vmatprep.subr.mxu0 0.0
  %5559 = vmatpush1.msra.mxu0 0.0
  %5560 = vmatprep.subr.mxu0 0.0
  %5561 = vmatpush1.msra.mxu0 0.0
  %5562 = vmatprep.subr.mxu0 0.0
  %5563 = vmatpush1.msra.mxu0 0.0
  %5564 = vmatprep.subr.mxu0 0.0
  %5565 = vmatpush1.msra.mxu0 0.0
  %5566 = vmatprep.subr.mxu0 0.0
  %5567 = vmatpush1.msra.mxu0 0.0
  %5568 = vmatprep.subr.mxu0 0.0
  %5569 = vmatpush1.msra.mxu0 0.0
  %5570 = vmatprep.subr.mxu0 0.0
  %5571 = vmatpush1.msra.mxu0 0.0
  %5572 = vmatprep.subr.mxu0 0.0
  %5573 = vmatpush1.msra.mxu0 0.0
  %5574 = vmatprep.subr.mxu0 0.0
  %5575 = vmatpush1.msra.mxu0 0.0
  %5576 = vmatprep.subr.mxu0 0.0
  %5577 = vmatpush1.msra.mxu0 0.0
  %5578 = vmatprep.subr.mxu0 0.0
  %5579 = vmatpush1.msra.mxu0 0.0
  %5580 = vmatprep.subr.mxu0 0.0
  %5581 = vmatpush1.msra.mxu0 0.0
  %5582 = vmatprep.subr.mxu0 0.0
  %5583 = vmatpush1.msra.mxu0 0.0
  %5584 = vmatprep.subr.mxu0 0.0
  %5585 = vmatpush1.msra.mxu0 0.0
  %5586 = vmatprep.subr.mxu0 0.0
  %5587 = vmatpush1.msra.mxu0 0.0
  %5588 = vmatprep.subr.mxu0 0.0
  %5589 = vmatpush1.msra.mxu0 0.0
  %5590 = vmatprep.subr.mxu0 0.0
  %5591 = vmatpush1.msra.mxu0 0.0
  %5592 = vmatprep.subr.mxu0 0.0
  %5593 = vmatpush1.msra.mxu0 0.0
  %5594 = vmatprep.mubr.f32.mxu0 0.0
  %5595 = vmatmul.mubr.f32.gmra.mrb[0].mxu0 %v4598
  %v5596 = vpop.f32.mrb[0].mxu0
  %v5597 = vadd.f32 %v5528, %v5596
  %v5598 = vpop.f32.mrb[0].mxu0
  %5599 = vmatprep.mubr.f32.mxu0 0.0
  %5600 = vmatmul.mubr.f32.gmra.mrb[0].mxu0 %v4601
  %v5601 = vpop.f32.mrb[0].mxu0
  %v5602 = vadd.f32 %v5528, %v5601
  %v5603 = vpop.f32.mrb[0].mxu0
  %5604 = vmatprep.mubr.f32.mxu0 0.0
  %5605 = vmatmul.mubr.f32.gmra.mrb[0].mxu0 %v4604
  %v5606 = vpop.f32.mrb[0].mxu0
  %v5607 = vadd.f32 %v5528, %v5606
  %v5608 = vpop.f32.mrb[0].mxu0
  %5609 = vmatprep.mubr.f32.mxu0 0.0
  %5610 = vmatmul.mubr.f32.gmra.mrb[0].mxu0 %v4607
  %v5611 = vpop.f32.mrb[0].mxu0
  %v5612 = vadd.f32 %v5528, %v5611
  %v5613 = vpop.f32.mrb[0].mxu0
  %5614 = vmatprep.mubr.f32.mxu0 0.0
  %5615 = vmatmul.mubr.f32.gmra.mrb[0].mxu0 %v4610
  %v5616 = vpop.f32.mrb[0].mxu0
  %v5617 = vadd.f32 %v5528, %v5616
  %v5618 = vpop.f32.mrb[0].mxu0
  %5619 = vmatprep.mubr.f32.mxu0 0.0
  %5620 = vmatmul.mubr.f32.gmra.mrb[0].mxu0 %v4613
  %v5621 = vpop.f32.mrb[0].mxu0
  %v5622 = vadd.f32 %v5528, %v5621
  %v5623 = vpop.f32.mrb[0].mxu0
  %5624 = vmatprep.mubr.f32.mxu0 0.0
  %5625 = vmatmul.mubr.f32.gmra.mrb[0].mxu0 %v4616
  %v5626 = vpop.f32.mrb[0].mxu0
  %v5627 = vadd.f32 %v5528, %v5626
  %v5628 = vpop.f32.mrb[0].mxu0
  %5629 = vmatprep.mubr.f32.mxu0 0.0
  %5630 = vmatmul.mubr.f32.gmra.mrb[0].mxu0 %v4619
  %v5631 = vpop.f32.mrb[0].mxu0
  %v5632 = vadd.f32 %v5528, %v5631
  %v5633 = vpop.f32.mrb[0].mxu0
  %5634 = vmatprep.mubr.f32.mxu0 0.0
  %5635 = vmatmul.mubr.f32.gmra.mrb[0].mxu0 %v4622
  %v5636 = vpop.f32.mrb[0].mxu0
  %v5637 = vadd.f32 %v5528, %v5636
  %v5638 = vpop.f32.mrb[0].mxu0
  %5639 = vmatprep.mubr.f32.mxu0 0.0
  %5640 = vmatmul.mubr.f32.gmra.mrb[0].mxu0 %v4625
  %v5641 = vpop.f32.mrb[0].mxu0
  %v5642 = vadd.f32 %v5528, %v5641
  %v5643 = vpop.f32.mrb[0].mxu0
  %5644 = vmatprep.mubr.f32.mxu0 0.0
  %5645 = vmatmul.mubr.f32.gmra.mrb[0].mxu0 %v4628
  %v5646 = vpop.f32.mrb[0].mxu0
  %v5647 = vadd.f32 %v5528, %v5646
  %v5648 = vpop.f32.mrb[0].mxu0
  %5649 = vmatprep.mubr.f32.mxu0 0.0
  %5650 = vmatmul.mubr.f32.gmra.mrb[0].mxu0 %v4631
  %v5651 = vpop.f32.mrb[0].mxu0
  %v5652 = vadd.f32 %v5528, %v5651
  %v5653 = vpop.f32.mrb[0].mxu0
  %5654 = vmatprep.mubr.f32.mxu0 0.0
  %5655 = vmatmul.mubr.f32.gmra.mrb[0].mxu0 %v4634
  %v5656 = vpop.f32.mrb[0].mxu0
  %v5657 = vadd.f32 %v5528, %v5656
  %v5658 = vpop.f32.mrb[0].mxu0
  %5659 = vmatprep.mubr.f32.mxu0 0.0
  %5660 = vmatmul.mubr.f32.gmra.mrb[0].mxu0 %v4637
  %v5661 = vpop.f32.mrb[0].mxu0
  %v5662 = vadd.f32 %v5528, %v5661
  %v5663 = vpop.f32.mrb[0].mxu0
  %5664 = vmatprep.mubr.f32.mxu0 0.0
  %5665 = vmatmul.mubr.f32.gmra.mrb[0].mxu0 %v4640
  %v5666 = vpop.f32.mrb[0].mxu0
  %v5667 = vadd.f32 %v5528, %v5666
  %v5668 = vpop.f32.mrb[0].mxu0
  %5669 = vmatprep.mubr.f32.mxu0 0.0
  %5670 = vmatmul.mubr.f32.gmra.mrb[0].mxu0 %v4643
  %v5671 = vpop.f32.mrb[0].mxu0
  %v5672 = vadd.f32 %v5528, %v5671
  %v5673 = vpop.f32.mrb[0].mxu0
  %5674 = vdwg.mxu0
  %v5675 = vmul.f32 %v5597, 0.5
  %v5676 = vmul.f32 %v5602, 0.5
  %v5677 = vmul.f32 %v5607, 0.5
  %v5678 = vmul.f32 %v5612, 0.5
  %v5679 = vmul.f32 %v5617, 0.5
  %v5680 = vmul.f32 %v5622, 0.5
  %v5681 = vmul.f32 %v5627, 0.5
  %v5682 = vmul.f32 %v5632, 0.5
  %v5683 = vmul.f32 %v5637, 0.5
  %v5684 = vmul.f32 %v5642, 0.5
  %v5685 = vmul.f32 %v5647, 0.5
  %v5686 = vmul.f32 %v5652, 0.5
  %v5687 = vmul.f32 %v5657, 0.5
  %v5688 = vmul.f32 %v5662, 0.5
  %v5689 = vmul.f32 %v5667, 0.5
  %v5690 = vmul.f32 %v5672, 0.5
  %v5691 = vmul.f32 %v5597, 0.70710677
  %v5692 = vmul.f32 %v5602, 0.70710677
  %v5693 = vmul.f32 %v5607, 0.70710677
  %v5694 = vmul.f32 %v5612, 0.70710677
  %v5695 = vmul.f32 %v5617, 0.70710677
  %v5696 = vmul.f32 %v5622, 0.70710677
  %v5697 = vmul.f32 %v5627, 0.70710677
  %v5698 = vmul.f32 %v5632, 0.70710677
  %v5699 = vmul.f32 %v5637, 0.70710677
  %v5700 = vmul.f32 %v5642, 0.70710677
  %v5701 = vmul.f32 %v5647, 0.70710677
  %v5702 = vmul.f32 %v5652, 0.70710677
  %v5703 = vmul.f32 %v5657, 0.70710677
  %v5704 = vmul.f32 %v5662, 0.70710677
  %v5705 = vmul.f32 %v5667, 0.70710677
  %v5706 = vmul.f32 %v5672, 0.70710677
  %v5707 = verf.f32.pop %v5691
  %v5708 = verf.f32.pop %v5692
  %v5709 = verf.f32.pop %v5693
  %v5710 = verf.f32.pop %v5694
  %v5711 = verf.f32.pop %v5695
  %v5712 = verf.f32.pop %v5696
  %v5713 = verf.f32.pop %v5697
  %v5714 = verf.f32.pop %v5698
  %v5715 = verf.f32.pop %v5699
  %v5716 = verf.f32.pop %v5700
  %v5717 = verf.f32.pop %v5701
  %v5718 = verf.f32.pop %v5702
  %v5719 = verf.f32.pop %v5703
  %v5720 = verf.f32.pop %v5704
  %v5721 = verf.f32.pop %v5705
  %v5722 = verf.f32.pop %v5706
  %v5723 = vadd.f32 %v5707, 1.0
  %v5724 = vadd.f32 %v5708, 1.0
  %v5725 = vadd.f32 %v5709, 1.0
  %v5726 = vadd.f32 %v5710, 1.0
  %v5727 = vadd.f32 %v5711, 1.0
  %v5728 = vadd.f32 %v5712, 1.0
  %v5729 = vadd.f32 %v5713, 1.0
  %v5730 = vadd.f32 %v5714, 1.0
  %v5731 = vadd.f32 %v5715, 1.0
  %v5732 = vadd.f32 %v5716, 1.0
  %v5733 = vadd.f32 %v5717, 1.0
  %v5734 = vadd.f32 %v5718, 1.0
  %v5735 = vadd.f32 %v5719, 1.0
  %v5736 = vadd.f32 %v5720, 1.0
  %v5737 = vadd.f32 %v5721, 1.0
  %v5738 = vadd.f32 %v5722, 1.0
  %v5739 = vmul.f32 %v5675, %v5723
  %v5740 = vmul.f32 %v5676, %v5724
  %v5741 = vmul.f32 %v5677, %v5725
  %v5742 = vmul.f32 %v5678, %v5726
  %v5743 = vmul.f32 %v5679, %v5727
  %v5744 = vmul.f32 %v5680, %v5728
  %v5745 = vmul.f32 %v5681, %v5729
  %v5746 = vmul.f32 %v5682, %v5730
  %v5747 = vmul.f32 %v5683, %v5731
  %v5748 = vmul.f32 %v5684, %v5732
  %v5749 = vmul.f32 %v5685, %v5733
  %v5750 = vmul.f32 %v5686, %v5734
  %v5751 = vmul.f32 %v5687, %v5735
  %v5752 = vmul.f32 %v5688, %v5736
  %v5753 = vmul.f32 %v5689, %v5737
  %v5754 = vmul.f32 %v5690, %v5738
  %v5755 = vld [vmem:[%s63] sm:$0xff]
  %v5756 = vld [vmem:[%s65] sm:$0x1]
  %v5758 = vlaneseq
  %v5759 = vshrl.u32 %v5758, 7
  %v5760 = vsub.s32 0, %v5759
  %v5761 = vrot.slane %v5756, %v5760
  %v5764 = vsel %vm3289, %v5739, 0
  %v5767 = vsel %vm3289, %v5740, 0
  %v5770 = vsel %vm3289, %v5741, 0
  %v5773 = vsel %vm3289, %v5742, 0
  %v5776 = vsel %vm3289, %v5743, 0
  %v5779 = vsel %vm3289, %v5744, 0
  %v5782 = vsel %vm3289, %v5745, 0
  %v5785 = vsel %vm3289, %v5746, 0
  %v5788 = vsel %vm3289, %v5747, 0
  %v5791 = vsel %vm3289, %v5748, 0
  %v5794 = vsel %vm3289, %v5749, 0
  %v5797 = vsel %vm3289, %v5750, 0
  %v5800 = vsel %vm3289, %v5751, 0
  %v5803 = vsel %vm3289, %v5752, 0
  %v5806 = vsel %vm3289, %v5753, 0
  %v5809 = vsel %vm3289, %v5754, 0
  %5811 = vmatprep.subr.mxu0 0.0
  %5812 = vmatpush1.msra.mxu0 %v5755
  %5813 = vmatprep.subr.mxu0 0.0
  %5814 = vmatpush1.msra.mxu0 0.0
  %5815 = vmatprep.subr.mxu0 0.0
  %5816 = vmatpush1.msra.mxu0 0.0
  %5817 = vmatprep.subr.mxu0 0.0
  %5818 = vmatpush1.msra.mxu0 0.0
  %5819 = vmatprep.subr.mxu0 0.0
  %5820 = vmatpush1.msra.mxu0 0.0
  %5821 = vmatprep.subr.mxu0 0.0
  %5822 = vmatpush1.msra.mxu0 0.0
  %5823 = vmatprep.subr.mxu0 0.0
  %5824 = vmatpush1.msra.mxu0 0.0
  %5825 = vmatprep.subr.mxu0 0.0
  %5826 = vmatpush1.msra.mxu0 0.0
  %5827 = vmatprep.subr.mxu0 0.0
  %5828 = vmatpush1.msra.mxu0 0.0
  %5829 = vmatprep.subr.mxu0 0.0
  %5830 = vmatpush1.msra.mxu0 0.0
  %5831 = vmatprep.subr.mxu0 0.0
  %5832 = vmatpush1.msra.mxu0 0.0
  %5833 = vmatprep.subr.mxu0 0.0
  %5834 = vmatpush1.msra.mxu0 0.0
  %5835 = vmatprep.subr.mxu0 0.0
  %5836 = vmatpush1.msra.mxu0 0.0
  %5837 = vmatprep.subr.mxu0 0.0
  %5838 = vmatpush1.msra.mxu0 0.0
  %5839 = vmatprep.subr.mxu0 0.0
  %5840 = vmatpush1.msra.mxu0 0.0
  %5841 = vmatprep.subr.mxu0 0.0
  %5842 = vmatpush1.msra.mxu0 0.0
  %5843 = vmatprep.subr.mxu0 0.0
  %5844 = vmatpush1.msra.mxu0 0.0
  %5845 = vmatprep.subr.mxu0 0.0
  %5846 = vmatpush1.msra.mxu0 0.0
  %5847 = vmatprep.subr.mxu0 0.0
  %5848 = vmatpush1.msra.mxu0 0.0
  %5849 = vmatprep.subr.mxu0 0.0
  %5850 = vmatpush1.msra.mxu0 0.0
  %5851 = vmatprep.subr.mxu0 0.0
  %5852 = vmatpush1.msra.mxu0 0.0
  %5853 = vmatprep.subr.mxu0 0.0
  %5854 = vmatpush1.msra.mxu0 0.0
  %5855 = vmatprep.subr.mxu0 0.0
  %5856 = vmatpush1.msra.mxu0 0.0
  %5857 = vmatprep.subr.mxu0 0.0
  %5858 = vmatpush1.msra.mxu0 0.0
  %5859 = vmatprep.subr.mxu0 0.0
  %5860 = vmatpush1.msra.mxu0 0.0
  %5861 = vmatprep.subr.mxu0 0.0
  %5862 = vmatpush1.msra.mxu0 0.0
  %5863 = vmatprep.subr.mxu0 0.0
  %5864 = vmatpush1.msra.mxu0 0.0
  %5865 = vmatprep.subr.mxu0 0.0
  %5866 = vmatpush1.msra.mxu0 0.0
  %5867 = vmatprep.subr.mxu0 0.0
  %5868 = vmatpush1.msra.mxu0 0.0
  %5869 = vmatprep.subr.mxu0 0.0
  %5870 = vmatpush1.msra.mxu0 0.0
  %5871 = vmatprep.subr.mxu0 0.0
  %5872 = vmatpush1.msra.mxu0 0.0
  %5873 = vmatprep.subr.mxu0 0.0
  %5874 = vmatpush1.msra.mxu0 0.0
  %5875 = vmatprep.mubr.f32.mxu0 0.0
  %5876 = vmatmul.mubr.f32.gmra.mrb[0].mxu0 %v5764
  %v5877 = vpop.f32.mrb[0].mxu0
  %v5878 = vadd.f32 %v5761, %v5877
  %v5879 = vpop.f32.mrb[0].mxu0
  %5880 = vmatprep.mubr.f32.mxu0 0.0
  %5881 = vmatmul.mubr.f32.gmra.mrb[0].mxu0 %v5767
  %v5882 = vpop.f32.mrb[0].mxu0
  %v5883 = vadd.f32 %v5761, %v5882
  %v5884 = vpop.f32.mrb[0].mxu0
  %5885 = vmatprep.mubr.f32.mxu0 0.0
  %5886 = vmatmul.mubr.f32.gmra.mrb[0].mxu0 %v5770
  %v5887 = vpop.f32.mrb[0].mxu0
  %v5888 = vadd.f32 %v5761, %v5887
  %v5889 = vpop.f32.mrb[0].mxu0
  %5890 = vmatprep.mubr.f32.mxu0 0.0
  %5891 = vmatmul.mubr.f32.gmra.mrb[0].mxu0 %v5773
  %v5892 = vpop.f32.mrb[0].mxu0
  %v5893 = vadd.f32 %v5761, %v5892
  %v5894 = vpop.f32.mrb[0].mxu0
  %5895 = vmatprep.mubr.f32.mxu0 0.0
  %5896 = vmatmul.mubr.f32.gmra.mrb[0].mxu0 %v5776
  %v5897 = vpop.f32.mrb[0].mxu0
  %v5898 = vadd.f32 %v5761, %v5897
  %v5899 = vpop.f32.mrb[0].mxu0
  %5900 = vmatprep.mubr.f32.mxu0 0.0
  %5901 = vmatmul.mubr.f32.gmra.mrb[0].mxu0 %v5779
  %v5902 = vpop.f32.mrb[0].mxu0
  %v5903 = vadd.f32 %v5761, %v5902
  %v5904 = vpop.f32.mrb[0].mxu0
  %5905 = vmatprep.mubr.f32.mxu0 0.0
  %5906 = vmatmul.mubr.f32.gmra.mrb[0].mxu0 %v5782
  %v5907 = vpop.f32.mrb[0].mxu0
  %v5908 = vadd.f32 %v5761, %v5907
  %v5909 = vpop.f32.mrb[0].mxu0
  %5910 = vmatprep.mubr.f32.mxu0 0.0
  %5911 = vmatmul.mubr.f32.gmra.mrb[0].mxu0 %v5785
  %v5912 = vpop.f32.mrb[0].mxu0
  %v5913 = vadd.f32 %v5761, %v5912
  %v5914 = vpop.f32.mrb[0].mxu0
  %5915 = vmatprep.mubr.f32.mxu0 0.0
  %5916 = vmatmul.mubr.f32.gmra.mrb[0].mxu0 %v5788
  %v5917 = vpop.f32.mrb[0].mxu0
  %v5918 = vadd.f32 %v5761, %v5917
  %v5919 = vpop.f32.mrb[0].mxu0
  %5920 = vmatprep.mubr.f32.mxu0 0.0
  %5921 = vmatmul.mubr.f32.gmra.mrb[0].mxu0 %v5791
  %v5922 = vpop.f32.mrb[0].mxu0
  %v5923 = vadd.f32 %v5761, %v5922
  %v5924 = vpop.f32.mrb[0].mxu0
  %5925 = vmatprep.mubr.f32.mxu0 0.0
  %5926 = vmatmul.mubr.f32.gmra.mrb[0].mxu0 %v5794
  %v5927 = vpop.f32.mrb[0].mxu0
  %v5928 = vadd.f32 %v5761, %v5927
  %v5929 = vpop.f32.mrb[0].mxu0
  %5930 = vmatprep.mubr.f32.mxu0 0.0
  %5931 = vmatmul.mubr.f32.gmra.mrb[0].mxu0 %v5797
  %v5932 = vpop.f32.mrb[0].mxu0
  %v5933 = vadd.f32 %v5761, %v5932
  %v5934 = vpop.f32.mrb[0].mxu0
  %5935 = vmatprep.mubr.f32.mxu0 0.0
  %5936 = vmatmul.mubr.f32.gmra.mrb[0].mxu0 %v5800
  %v5937 = vpop.f32.mrb[0].mxu0
  %v5938 = vadd.f32 %v5761, %v5937
  %v5939 = vpop.f32.mrb[0].mxu0
  %5940 = vmatprep.mubr.f32.mxu0 0.0
  %5941 = vmatmul.mubr.f32.gmra.mrb[0].mxu0 %v5803
  %v5942 = vpop.f32.mrb[0].mxu0
  %v5943 = vadd.f32 %v5761, %v5942
  %v5944 = vpop.f32.mrb[0].mxu0
  %5945 = vmatprep.mubr.f32.mxu0 0.0
  %5946 = vmatmul.mubr.f32.gmra.mrb[0].mxu0 %v5806
  %v5947 = vpop.f32.mrb[0].mxu0
  %v5948 = vadd.f32 %v5761, %v5947
  %v5949 = vpop.f32.mrb[0].mxu0
  %5950 = vmatprep.mubr.f32.mxu0 0.0
  %5951 = vmatmul.mubr.f32.gmra.mrb[0].mxu0 %v5809
  %v5952 = vpop.f32.mrb[0].mxu0
  %v5953 = vadd.f32 %v5761, %v5952
  %v5954 = vpop.f32.mrb[0].mxu0
  %5955 = vdwg.mxu0
  %v5956 = vld [vmem:[%s67] sm:$0xff]
  %v5957 = vld [vmem:[%s67 + $0x8] sm:$0xff]
  %v5958 = vld [vmem:[%s67 + $0x10] sm:$0xff]
  %v5959 = vld [vmem:[%s67 + $0x18] sm:$0xff]
  %v5960 = vld [vmem:[%s69] sm:$0x1]
  %v5962 = vlaneseq
  %v5963 = vshrl.u32 %v5962, 7
  %v5964 = vsub.s32 0, %v5963
  %v5965 = vrot.slane %v5960, %v5964
  %v5968 = vsel %vm186, %v4797, 0
  %v5971 = vsel %vm186, %v4798, 0
  %v5974 = vsel %vm186, %v4799, 0
  %v5977 = vsel %vm186, %v4800, 0
  %v5980 = vsel %vm186, %v4801, 0
  %v5983 = vsel %vm186, %v4802, 0
  %v5986 = vsel %vm186, %v4803, 0
  %v5989 = vsel %vm186, %v4804, 0
  %v5992 = vsel %vm186, %v4805, 0
  %v5995 = vsel %vm186, %v4806, 0
  %v5998 = vsel %vm186, %v4807, 0
  %v6001 = vsel %vm186, %v4808, 0
  %v6004 = vsel %vm186, %v4809, 0
  %v6007 = vsel %vm186, %v4810, 0
  %v6010 = vsel %vm186, %v4811, 0
  %v6013 = vsel %vm186, %v4812, 0
  %6015 = vmatprep.subr.mxu0 0.0
  %6016 = vmatpush1.msra.mxu0 %v5956
  %6017 = vmatprep.subr.mxu0 0.0
  %6018 = vmatpush1.msra.mxu0 %v5957
  %6019 = vmatprep.subr.mxu0 0.0
  %6020 = vmatpush1.msra.mxu0 %v5958
  %6021 = vmatprep.subr.mxu0 0.0
  %6022 = vmatpush1.msra.mxu0 %v5959
  %6023 = vmatprep.subr.mxu0 0.0
  %6024 = vmatpush1.msra.mxu0 0.0
  %6025 = vmatprep.subr.mxu0 0.0
  %6026 = vmatpush1.msra.mxu0 0.0
  %6027 = vmatprep.subr.mxu0 0.0
  %6028 = vmatpush1.msra.mxu0 0.0
  %6029 = vmatprep.subr.mxu0 0.0
  %6030 = vmatpush1.msra.mxu0 0.0
  %6031 = vmatprep.subr.mxu0 0.0
  %6032 = vmatpush1.msra.mxu0 0.0
  %6033 = vmatprep.subr.mxu0 0.0
  %6034 = vmatpush1.msra.mxu0 0.0
  %6035 = vmatprep.subr.mxu0 0.0
  %6036 = vmatpush1.msra.mxu0 0.0
  %6037 = vmatprep.subr.mxu0 0.0
  %6038 = vmatpush1.msra.mxu0 0.0
  %6039 = vmatprep.subr.mxu0 0.0
  %6040 = vmatpush1.msra.mxu0 0.0
  %6041 = vmatprep.subr.mxu0 0.0
  %6042 = vmatpush1.msra.mxu0 0.0
  %6043 = vmatprep.subr.mxu0 0.0
  %6044 = vmatpush1.msra.mxu0 0.0
  %6045 = vmatprep.subr.mxu0 0.0
  %6046 = vmatpush1.msra.mxu0 0.0
  %6047 = vmatprep.subr.mxu0 0.0
  %6048 = vmatpush1.msra.mxu0 0.0
  %6049 = vmatprep.subr.mxu0 0.0
  %6050 = vmatpush1.msra.mxu0 0.0
  %6051 = vmatprep.subr.mxu0 0.0
  %6052 = vmatpush1.msra.mxu0 0.0
  %6053 = vmatprep.subr.mxu0 0.0
  %6054 = vmatpush1.msra.mxu0 0.0
  %6055 = vmatprep.subr.mxu0 0.0
  %6056 = vmatpush1.msra.mxu0 0.0
  %6057 = vmatprep.subr.mxu0 0.0
  %6058 = vmatpush1.msra.mxu0 0.0
  %6059 = vmatprep.subr.mxu0 0.0
  %6060 = vmatpush1.msra.mxu0 0.0
  %6061 = vmatprep.subr.mxu0 0.0
  %6062 = vmatpush1.msra.mxu0 0.0
  %6063 = vmatprep.subr.mxu0 0.0
  %6064 = vmatpush1.msra.mxu0 0.0
  %6065 = vmatprep.subr.mxu0 0.0
  %6066 = vmatpush1.msra.mxu0 0.0
  %6067 = vmatprep.subr.mxu0 0.0
  %6068 = vmatpush1.msra.mxu0 0.0
  %6069 = vmatprep.subr.mxu0 0.0
  %6070 = vmatpush1.msra.mxu0 0.0
  %6071 = vmatprep.subr.mxu0 0.0
  %6072 = vmatpush1.msra.mxu0 0.0
  %6073 = vmatprep.subr.mxu0 0.0
  %6074 = vmatpush1.msra.mxu0 0.0
  %6075 = vmatprep.subr.mxu0 0.0
  %6076 = vmatpush1.msra.mxu0 0.0
  %6077 = vmatprep.subr.mxu0 0.0
  %6078 = vmatpush1.msra.mxu0 0.0
  %6079 = vmatprep.mubr.f32.mxu0 0.0
  %6080 = vmatmul.mubr.f32.gmra.mrb[0].mxu0 %v5968
  %v6081 = vpop.f32.mrb[0].mxu0
  %v6082 = vadd.f32 %v5965, %v6081
  %v6083 = vpop.f32.mrb[0].mxu0
  %6084 = vmatprep.mubr.f32.mxu0 0.0
  %6085 = vmatmul.mubr.f32.gmra.mrb[0].mxu0 %v5971
  %v6086 = vpop.f32.mrb[0].mxu0
  %v6087 = vadd.f32 %v5965, %v6086
  %v6088 = vpop.f32.mrb[0].mxu0
  %6089 = vmatprep.mubr.f32.mxu0 0.0
  %6090 = vmatmul.mubr.f32.gmra.mrb[0].mxu0 %v5974
  %v6091 = vpop.f32.mrb[0].mxu0
  %v6092 = vadd.f32 %v5965, %v6091
  %v6093 = vpop.f32.mrb[0].mxu0
  %6094 = vmatprep.mubr.f32.mxu0 0.0
  %6095 = vmatmul.mubr.f32.gmra.mrb[0].mxu0 %v5977
  %v6096 = vpop.f32.mrb[0].mxu0
  %v6097 = vadd.f32 %v5965, %v6096
  %v6098 = vpop.f32.mrb[0].mxu0
  %6099 = vmatprep.mubr.f32.mxu0 0.0
  %6100 = vmatmul.mubr.f32.gmra.mrb[0].mxu0 %v5980
  %v6101 = vpop.f32.mrb[0].mxu0
  %v6102 = vadd.f32 %v5965, %v6101
  %v6103 = vpop.f32.mrb[0].mxu0
  %6104 = vmatprep.mubr.f32.mxu0 0.0
  %6105 = vmatmul.mubr.f32.gmra.mrb[0].mxu0 %v5983
  %v6106 = vpop.f32.mrb[0].mxu0
  %v6107 = vadd.f32 %v5965, %v6106
  %v6108 = vpop.f32.mrb[0].mxu0
  %6109 = vmatprep.mubr.f32.mxu0 0.0
  %6110 = vmatmul.mubr.f32.gmra.mrb[0].mxu0 %v5986
  %v6111 = vpop.f32.mrb[0].mxu0
  %v6112 = vadd.f32 %v5965, %v6111
  %v6113 = vpop.f32.mrb[0].mxu0
  %6114 = vmatprep.mubr.f32.mxu0 0.0
  %6115 = vmatmul.mubr.f32.gmra.mrb[0].mxu0 %v5989
  %v6116 = vpop.f32.mrb[0].mxu0
  %v6117 = vadd.f32 %v5965, %v6116
  %v6118 = vpop.f32.mrb[0].mxu0
  %6119 = vmatprep.mubr.f32.mxu0 0.0
  %6120 = vmatmul.mubr.f32.gmra.mrb[0].mxu0 %v5992
  %v6121 = vpop.f32.mrb[0].mxu0
  %v6122 = vadd.f32 %v5965, %v6121
  %v6123 = vpop.f32.mrb[0].mxu0
  %6124 = vmatprep.mubr.f32.mxu0 0.0
  %6125 = vmatmul.mubr.f32.gmra.mrb[0].mxu0 %v5995
  %v6126 = vpop.f32.mrb[0].mxu0
  %v6127 = vadd.f32 %v5965, %v6126
  %v6128 = vpop.f32.mrb[0].mxu0
  %6129 = vmatprep.mubr.f32.mxu0 0.0
  %6130 = vmatmul.mubr.f32.gmra.mrb[0].mxu0 %v5998
  %v6131 = vpop.f32.mrb[0].mxu0
  %v6132 = vadd.f32 %v5965, %v6131
  %v6133 = vpop.f32.mrb[0].mxu0
  %6134 = vmatprep.mubr.f32.mxu0 0.0
  %6135 = vmatmul.mubr.f32.gmra.mrb[0].mxu0 %v6001
  %v6136 = vpop.f32.mrb[0].mxu0
  %v6137 = vadd.f32 %v5965, %v6136
  %v6138 = vpop.f32.mrb[0].mxu0
  %6139 = vmatprep.mubr.f32.mxu0 0.0
  %6140 = vmatmul.mubr.f32.gmra.mrb[0].mxu0 %v6004
  %v6141 = vpop.f32.mrb[0].mxu0
  %v6142 = vadd.f32 %v5965, %v6141
  %v6143 = vpop.f32.mrb[0].mxu0
  %6144 = vmatprep.mubr.f32.mxu0 0.0
  %6145 = vmatmul.mubr.f32.gmra.mrb[0].mxu0 %v6007
  %v6146 = vpop.f32.mrb[0].mxu0
  %v6147 = vadd.f32 %v5965, %v6146
  %v6148 = vpop.f32.mrb[0].mxu0
  %6149 = vmatprep.mubr.f32.mxu0 0.0
  %6150 = vmatmul.mubr.f32.gmra.mrb[0].mxu0 %v6010
  %v6151 = vpop.f32.mrb[0].mxu0
  %v6152 = vadd.f32 %v5965, %v6151
  %v6153 = vpop.f32.mrb[0].mxu0
  %6154 = vmatprep.mubr.f32.mxu0 0.0
  %6155 = vmatmul.mubr.f32.gmra.mrb[0].mxu0 %v6013
  %v6156 = vpop.f32.mrb[0].mxu0
  %v6157 = vadd.f32 %v5965, %v6156
  %v6158 = vpop.f32.mrb[0].mxu0
  %6159 = vdwg.mxu0
  %v6160 = vmul.f32 %v6082, 0.5
  %v6161 = vmul.f32 %v6087, 0.5
  %v6162 = vmul.f32 %v6092, 0.5
  %v6163 = vmul.f32 %v6097, 0.5
  %v6164 = vmul.f32 %v6102, 0.5
  %v6165 = vmul.f32 %v6107, 0.5
  %v6166 = vmul.f32 %v6112, 0.5
  %v6167 = vmul.f32 %v6117, 0.5
  %v6168 = vmul.f32 %v6122, 0.5
  %v6169 = vmul.f32 %v6127, 0.5
  %v6170 = vmul.f32 %v6132, 0.5
  %v6171 = vmul.f32 %v6137, 0.5
  %v6172 = vmul.f32 %v6142, 0.5
  %v6173 = vmul.f32 %v6147, 0.5
  %v6174 = vmul.f32 %v6152, 0.5
  %v6175 = vmul.f32 %v6157, 0.5
  %v6176 = vmul.f32 %v6082, 0.70710677
  %v6177 = vmul.f32 %v6087, 0.70710677
  %v6178 = vmul.f32 %v6092, 0.70710677
  %v6179 = vmul.f32 %v6097, 0.70710677
  %v6180 = vmul.f32 %v6102, 0.70710677
  %v6181 = vmul.f32 %v6107, 0.70710677
  %v6182 = vmul.f32 %v6112, 0.70710677
  %v6183 = vmul.f32 %v6117, 0.70710677
  %v6184 = vmul.f32 %v6122, 0.70710677
  %v6185 = vmul.f32 %v6127, 0.70710677
  %v6186 = vmul.f32 %v6132, 0.70710677
  %v6187 = vmul.f32 %v6137, 0.70710677
  %v6188 = vmul.f32 %v6142, 0.70710677
  %v6189 = vmul.f32 %v6147, 0.70710677
  %v6190 = vmul.f32 %v6152, 0.70710677
  %v6191 = vmul.f32 %v6157, 0.70710677
  %v6192 = verf.f32.pop %v6176
  %v6193 = verf.f32.pop %v6177
  %v6194 = verf.f32.pop %v6178
  %v6195 = verf.f32.pop %v6179
  %v6196 = verf.f32.pop %v6180
  %v6197 = verf.f32.pop %v6181
  %v6198 = verf.f32.pop %v6182
  %v6199 = verf.f32.pop %v6183
  %v6200 = verf.f32.pop %v6184
  %v6201 = verf.f32.pop %v6185
  %v6202 = verf.f32.pop %v6186
  %v6203 = verf.f32.pop %v6187
  %v6204 = verf.f32.pop %v6188
  %v6205 = verf.f32.pop %v6189
  %v6206 = verf.f32.pop %v6190
  %v6207 = verf.f32.pop %v6191
  %v6208 = vadd.f32 %v6192, 1.0
  %v6209 = vadd.f32 %v6193, 1.0
  %v6210 = vadd.f32 %v6194, 1.0
  %v6211 = vadd.f32 %v6195, 1.0
  %v6212 = vadd.f32 %v6196, 1.0
  %v6213 = vadd.f32 %v6197, 1.0
  %v6214 = vadd.f32 %v6198, 1.0
  %v6215 = vadd.f32 %v6199, 1.0
  %v6216 = vadd.f32 %v6200, 1.0
  %v6217 = vadd.f32 %v6201, 1.0
  %v6218 = vadd.f32 %v6202, 1.0
  %v6219 = vadd.f32 %v6203, 1.0
  %v6220 = vadd.f32 %v6204, 1.0
  %v6221 = vadd.f32 %v6205, 1.0
  %v6222 = vadd.f32 %v6206, 1.0
  %v6223 = vadd.f32 %v6207, 1.0
  %v6224 = vmul.f32 %v6160, %v6208
  %v6225 = vmul.f32 %v6161, %v6209
  %v6226 = vmul.f32 %v6162, %v6210
  %v6227 = vmul.f32 %v6163, %v6211
  %v6228 = vmul.f32 %v6164, %v6212
  %v6229 = vmul.f32 %v6165, %v6213
  %v6230 = vmul.f32 %v6166, %v6214
  %v6231 = vmul.f32 %v6167, %v6215
  %v6232 = vmul.f32 %v6168, %v6216
  %v6233 = vmul.f32 %v6169, %v6217
  %v6234 = vmul.f32 %v6170, %v6218
  %v6235 = vmul.f32 %v6171, %v6219
  %v6236 = vmul.f32 %v6172, %v6220
  %v6237 = vmul.f32 %v6173, %v6221
  %v6238 = vmul.f32 %v6174, %v6222
  %v6239 = vmul.f32 %v6175, %v6223
  %v6240 = vld [vmem:[%s71] sm:$0xff]
  %v6241 = vld [vmem:[%s73] sm:$0x1]
  %v6243 = vlaneseq
  %v6244 = vshrl.u32 %v6243, 7
  %v6245 = vsub.s32 0, %v6244
  %v6246 = vrot.slane %v6241, %v6245
  %v6249 = vsel %vm3289, %v6224, 0
  %v6252 = vsel %vm3289, %v6225, 0
  %v6255 = vsel %vm3289, %v6226, 0
  %v6258 = vsel %vm3289, %v6227, 0
  %v6261 = vsel %vm3289, %v6228, 0
  %v6264 = vsel %vm3289, %v6229, 0
  %v6267 = vsel %vm3289, %v6230, 0
  %v6270 = vsel %vm3289, %v6231, 0
  %v6273 = vsel %vm3289, %v6232, 0
  %v6276 = vsel %vm3289, %v6233, 0
  %v6279 = vsel %vm3289, %v6234, 0
  %v6282 = vsel %vm3289, %v6235, 0
  %v6285 = vsel %vm3289, %v6236, 0
  %v6288 = vsel %vm3289, %v6237, 0
  %v6291 = vsel %vm3289, %v6238, 0
  %v6294 = vsel %vm3289, %v6239, 0
  %6296 = vmatprep.subr.mxu0 0.0
  %6297 = vmatpush1.msra.mxu0 %v6240
  %6298 = vmatprep.subr.mxu0 0.0
  %6299 = vmatpush1.msra.mxu0 0.0
  %6300 = vmatprep.subr.mxu0 0.0
  %6301 = vmatpush1.msra.mxu0 0.0
  %6302 = vmatprep.subr.mxu0 0.0
  %6303 = vmatpush1.msra.mxu0 0.0
  %6304 = vmatprep.subr.mxu0 0.0
  %6305 = vmatpush1.msra.mxu0 0.0
  %6306 = vmatprep.subr.mxu0 0.0
  %6307 = vmatpush1.msra.mxu0 0.0
  %6308 = vmatprep.subr.mxu0 0.0
  %6309 = vmatpush1.msra.mxu0 0.0
  %6310 = vmatprep.subr.mxu0 0.0
  %6311 = vmatpush1.msra.mxu0 0.0
  %6312 = vmatprep.subr.mxu0 0.0
  %6313 = vmatpush1.msra.mxu0 0.0
  %6314 = vmatprep.subr.mxu0 0.0
  %6315 = vmatpush1.msra.mxu0 0.0
  %6316 = vmatprep.subr.mxu0 0.0
  %6317 = vmatpush1.msra.mxu0 0.0
  %6318 = vmatprep.subr.mxu0 0.0
  %6319 = vmatpush1.msra.mxu0 0.0
  %6320 = vmatprep.subr.mxu0 0.0
  %6321 = vmatpush1.msra.mxu0 0.0
  %6322 = vmatprep.subr.mxu0 0.0
  %6323 = vmatpush1.msra.mxu0 0.0
  %6324 = vmatprep.subr.mxu0 0.0
  %6325 = vmatpush1.msra.mxu0 0.0
  %6326 = vmatprep.subr.mxu0 0.0
  %6327 = vmatpush1.msra.mxu0 0.0
  %6328 = vmatprep.subr.mxu0 0.0
  %6329 = vmatpush1.msra.mxu0 0.0
  %6330 = vmatprep.subr.mxu0 0.0
  %6331 = vmatpush1.msra.mxu0 0.0
  %6332 = vmatprep.subr.mxu0 0.0
  %6333 = vmatpush1.msra.mxu0 0.0
  %6334 = vmatprep.subr.mxu0 0.0
  %6335 = vmatpush1.msra.mxu0 0.0
  %6336 = vmatprep.subr.mxu0 0.0
  %6337 = vmatpush1.msra.mxu0 0.0
  %6338 = vmatprep.subr.mxu0 0.0
  %6339 = vmatpush1.msra.mxu0 0.0
  %6340 = vmatprep.subr.mxu0 0.0
  %6341 = vmatpush1.msra.mxu0 0.0
  %6342 = vmatprep.subr.mxu0 0.0
  %6343 = vmatpush1.msra.mxu0 0.0
  %6344 = vmatprep.subr.mxu0 0.0
  %6345 = vmatpush1.msra.mxu0 0.0
  %6346 = vmatprep.subr.mxu0 0.0
  %6347 = vmatpush1.msra.mxu0 0.0
  %6348 = vmatprep.subr.mxu0 0.0
  %6349 = vmatpush1.msra.mxu0 0.0
  %6350 = vmatprep.subr.mxu0 0.0
  %6351 = vmatpush1.msra.mxu0 0.0
  %6352 = vmatprep.subr.mxu0 0.0
  %6353 = vmatpush1.msra.mxu0 0.0
  %6354 = vmatprep.subr.mxu0 0.0
  %6355 = vmatpush1.msra.mxu0 0.0
  %6356 = vmatprep.subr.mxu0 0.0
  %6357 = vmatpush1.msra.mxu0 0.0
  %6358 = vmatprep.subr.mxu0 0.0
  %6359 = vmatpush1.msra.mxu0 0.0
  %6360 = vmatprep.mubr.f32.mxu0 0.0
  %6361 = vmatmul.mubr.f32.gmra.mrb[0].mxu0 %v6249
  %v6362 = vpop.f32.mrb[0].mxu0
  %v6363 = vadd.f32 %v6246, %v6362
  %v6364 = vpop.f32.mrb[0].mxu0
  %6365 = vmatprep.mubr.f32.mxu0 0.0
  %6366 = vmatmul.mubr.f32.gmra.mrb[0].mxu0 %v6252
  %v6367 = vpop.f32.mrb[0].mxu0
  %v6368 = vadd.f32 %v6246, %v6367
  %v6369 = vpop.f32.mrb[0].mxu0
  %6370 = vmatprep.mubr.f32.mxu0 0.0
  %6371 = vmatmul.mubr.f32.gmra.mrb[0].mxu0 %v6255
  %v6372 = vpop.f32.mrb[0].mxu0
  %v6373 = vadd.f32 %v6246, %v6372
  %v6374 = vpop.f32.mrb[0].mxu0
  %6375 = vmatprep.mubr.f32.mxu0 0.0
  %6376 = vmatmul.mubr.f32.gmra.mrb[0].mxu0 %v6258
  %v6377 = vpop.f32.mrb[0].mxu0
  %v6378 = vadd.f32 %v6246, %v6377
  %v6379 = vpop.f32.mrb[0].mxu0
  %6380 = vmatprep.mubr.f32.mxu0 0.0
  %6381 = vmatmul.mubr.f32.gmra.mrb[0].mxu0 %v6261
  %v6382 = vpop.f32.mrb[0].mxu0
  %v6383 = vadd.f32 %v6246, %v6382
  %v6384 = vpop.f32.mrb[0].mxu0
  %6385 = vmatprep.mubr.f32.mxu0 0.0
  %6386 = vmatmul.mubr.f32.gmra.mrb[0].mxu0 %v6264
  %v6387 = vpop.f32.mrb[0].mxu0
  %v6388 = vadd.f32 %v6246, %v6387
  %v6389 = vpop.f32.mrb[0].mxu0
  %6390 = vmatprep.mubr.f32.mxu0 0.0
  %6391 = vmatmul.mubr.f32.gmra.mrb[0].mxu0 %v6267
  %v6392 = vpop.f32.mrb[0].mxu0
  %v6393 = vadd.f32 %v6246, %v6392
  %v6394 = vpop.f32.mrb[0].mxu0
  %6395 = vmatprep.mubr.f32.mxu0 0.0
  %6396 = vmatmul.mubr.f32.gmra.mrb[0].mxu0 %v6270
  %v6397 = vpop.f32.mrb[0].mxu0
  %v6398 = vadd.f32 %v6246, %v6397
  %v6399 = vpop.f32.mrb[0].mxu0
  %6400 = vmatprep.mubr.f32.mxu0 0.0
  %6401 = vmatmul.mubr.f32.gmra.mrb[0].mxu0 %v6273
  %v6402 = vpop.f32.mrb[0].mxu0
  %v6403 = vadd.f32 %v6246, %v6402
  %v6404 = vpop.f32.mrb[0].mxu0
  %6405 = vmatprep.mubr.f32.mxu0 0.0
  %6406 = vmatmul.mubr.f32.gmra.mrb[0].mxu0 %v6276
  %v6407 = vpop.f32.mrb[0].mxu0
  %v6408 = vadd.f32 %v6246, %v6407
  %v6409 = vpop.f32.mrb[0].mxu0
  %6410 = vmatprep.mubr.f32.mxu0 0.0
  %6411 = vmatmul.mubr.f32.gmra.mrb[0].mxu0 %v6279
  %v6412 = vpop.f32.mrb[0].mxu0
  %v6413 = vadd.f32 %v6246, %v6412
  %v6414 = vpop.f32.mrb[0].mxu0
  %6415 = vmatprep.mubr.f32.mxu0 0.0
  %6416 = vmatmul.mubr.f32.gmra.mrb[0].mxu0 %v6282
  %v6417 = vpop.f32.mrb[0].mxu0
  %v6418 = vadd.f32 %v6246, %v6417
  %v6419 = vpop.f32.mrb[0].mxu0
  %6420 = vmatprep.mubr.f32.mxu0 0.0
  %6421 = vmatmul.mubr.f32.gmra.mrb[0].mxu0 %v6285
  %v6422 = vpop.f32.mrb[0].mxu0
  %v6423 = vadd.f32 %v6246, %v6422
  %v6424 = vpop.f32.mrb[0].mxu0
  %6425 = vmatprep.mubr.f32.mxu0 0.0
  %6426 = vmatmul.mubr.f32.gmra.mrb[0].mxu0 %v6288
  %v6427 = vpop.f32.mrb[0].mxu0
  %v6428 = vadd.f32 %v6246, %v6427
  %v6429 = vpop.f32.mrb[0].mxu0
  %6430 = vmatprep.mubr.f32.mxu0 0.0
  %6431 = vmatmul.mubr.f32.gmra.mrb[0].mxu0 %v6291
  %v6432 = vpop.f32.mrb[0].mxu0
  %v6433 = vadd.f32 %v6246, %v6432
  %v6434 = vpop.f32.mrb[0].mxu0
  %6435 = vmatprep.mubr.f32.mxu0 0.0
  %6436 = vmatmul.mubr.f32.gmra.mrb[0].mxu0 %v6294
  %v6437 = vpop.f32.mrb[0].mxu0
  %v6438 = vadd.f32 %v6246, %v6437
  %v6439 = vpop.f32.mrb[0].mxu0
  %6440 = vdwg.mxu0
  %v6441 = vadd.f32 %v4377, %v5441
  %v6442 = vadd.f32 %v4378, %v5446
  %v6443 = vadd.f32 %v4379, %v5451
  %v6444 = vadd.f32 %v4380, %v5456
  %v6445 = vadd.f32 %v4381, %v5461
  %v6446 = vadd.f32 %v4382, %v5466
  %v6447 = vadd.f32 %v4383, %v5471
  %v6448 = vadd.f32 %v4384, %v5476
  %v6449 = vadd.f32 %v4385, %v5481
  %v6450 = vadd.f32 %v4386, %v5486
  %v6451 = vadd.f32 %v4387, %v5491
  %v6452 = vadd.f32 %v4388, %v5496
  %v6453 = vadd.f32 %v4389, %v5501
  %v6454 = vadd.f32 %v4390, %v5506
  %v6455 = vadd.f32 %v4391, %v5511
  %v6456 = vadd.f32 %v4392, %v5516
  %v6457 = vmul.f32 %v5878, 0.35
  %v6458 = vmul.f32 %v5883, 0.35
  %v6459 = vmul.f32 %v5888, 0.35
  %v6460 = vmul.f32 %v5893, 0.35
  %v6461 = vmul.f32 %v5898, 0.35
  %v6462 = vmul.f32 %v5903, 0.35
  %v6463 = vmul.f32 %v5908, 0.35
  %v6464 = vmul.f32 %v5913, 0.35
  %v6465 = vmul.f32 %v5918, 0.35
  %v6466 = vmul.f32 %v5923, 0.35
  %v6467 = vmul.f32 %v5928, 0.35
  %v6468 = vmul.f32 %v5933, 0.35
  %v6469 = vmul.f32 %v5938, 0.35
  %v6470 = vmul.f32 %v5943, 0.35
  %v6471 = vmul.f32 %v5948, 0.35
  %v6472 = vmul.f32 %v5953, 0.35
  %v6473 = vadd.f32 %v6441, %v6457
  %v6474 = vadd.f32 %v6442, %v6458
  %v6475 = vadd.f32 %v6443, %v6459
  %v6476 = vadd.f32 %v6444, %v6460
  %v6477 = vadd.f32 %v6445, %v6461
  %v6478 = vadd.f32 %v6446, %v6462
  %v6479 = vadd.f32 %v6447, %v6463
  %v6480 = vadd.f32 %v6448, %v6464
  %v6481 = vadd.f32 %v6449, %v6465
  %v6482 = vadd.f32 %v6450, %v6466
  %v6483 = vadd.f32 %v6451, %v6467
  %v6484 = vadd.f32 %v6452, %v6468
  %v6485 = vadd.f32 %v6453, %v6469
  %v6486 = vadd.f32 %v6454, %v6470
  %v6487 = vadd.f32 %v6455, %v6471
  %v6488 = vadd.f32 %v6456, %v6472
  %v6489 = vmul.f32 %v6363, 0.15
  %v6490 = vmul.f32 %v6368, 0.15
  %v6491 = vmul.f32 %v6373, 0.15
  %v6492 = vmul.f32 %v6378, 0.15
  %v6493 = vmul.f32 %v6383, 0.15
  %v6494 = vmul.f32 %v6388, 0.15
  %v6495 = vmul.f32 %v6393, 0.15
  %v6496 = vmul.f32 %v6398, 0.15
  %v6497 = vmul.f32 %v6403, 0.15
  %v6498 = vmul.f32 %v6408, 0.15
  %v6499 = vmul.f32 %v6413, 0.15
  %v6500 = vmul.f32 %v6418, 0.15
  %v6501 = vmul.f32 %v6423, 0.15
  %v6502 = vmul.f32 %v6428, 0.15
  %v6503 = vmul.f32 %v6433, 0.15
  %v6504 = vmul.f32 %v6438, 0.15
  %v6505 = vadd.f32 %v6473, %v6489
  %v6506 = vadd.f32 %v6474, %v6490
  %v6507 = vadd.f32 %v6475, %v6491
  %v6508 = vadd.f32 %v6476, %v6492
  %v6509 = vadd.f32 %v6477, %v6493
  %v6510 = vadd.f32 %v6478, %v6494
  %v6511 = vadd.f32 %v6479, %v6495
  %v6512 = vadd.f32 %v6480, %v6496
  %v6513 = vadd.f32 %v6481, %v6497
  %v6514 = vadd.f32 %v6482, %v6498
  %v6515 = vadd.f32 %v6483, %v6499
  %v6516 = vadd.f32 %v6484, %v6500
  %v6517 = vadd.f32 %v6485, %v6501
  %v6518 = vadd.f32 %v6486, %v6502
  %v6519 = vadd.f32 %v6487, %v6503
  %v6520 = vadd.f32 %v6488, %v6504
  %6521 = vst.msk [vmem:[%s75] sm:$0xff] %vm186, %v6505
  %6522 = vst.msk [vmem:[%s75 + $0x8] sm:$0xff] %vm186, %v6506
  %6523 = vst.msk [vmem:[%s75 + $0x10] sm:$0xff] %vm186, %v6507
  %6524 = vst.msk [vmem:[%s75 + $0x18] sm:$0xff] %vm186, %v6508
  %6525 = vst.msk [vmem:[%s75 + $0x20] sm:$0xff] %vm186, %v6509
  %6526 = vst.msk [vmem:[%s75 + $0x28] sm:$0xff] %vm186, %v6510
  %6527 = vst.msk [vmem:[%s75 + $0x30] sm:$0xff] %vm186, %v6511
  %6528 = vst.msk [vmem:[%s75 + $0x38] sm:$0xff] %vm186, %v6512
  %6529 = vst.msk [vmem:[%s75 + $0x40] sm:$0xff] %vm186, %v6513
  %6530 = vst.msk [vmem:[%s75 + $0x48] sm:$0xff] %vm186, %v6514
  %6531 = vst.msk [vmem:[%s75 + $0x50] sm:$0xff] %vm186, %v6515
  %6532 = vst.msk [vmem:[%s75 + $0x58] sm:$0xff] %vm186, %v6516
  %6533 = vst.msk [vmem:[%s75 + $0x60] sm:$0xff] %vm186, %v6517
  %6534 = vst.msk [vmem:[%s75 + $0x68] sm:$0xff] %vm186, %v6518
  %6535 = vst.msk [vmem:[%s75 + $0x70] sm:$0xff] %vm186, %v6519
  %6536 = vst.msk [vmem:[%s75 + $0x78] sm:$0xff] %vm186, %v6520
  // Predicated region
  $region150: #{tpu_custom_call.1} parent=0 // pred_check
    _
  $region151: #{tpu_custom_call.1} parent=0 // pred_check_branch
    %6538 = sbr.rel (0) target = $region153
  $region152: #{tpu_custom_call.1} parent=0 // pred_region
    _
  $region153: #{tpu_custom_call.1} parent=0 // pred_fallthru
    _
  // Predicated region
  $region154: #{tpu_custom_call.1} parent=0 // pred_check
    _
  $region155: #{tpu_custom_call.1} parent=0 // pred_check_branch
    %6540 = sbr.rel (0) target = $region157
  $region156: #{tpu_custom_call.1} parent=0 // pred_region
    _
  $region157: #{tpu_custom_call.1} parent=0 // pred_fallthru
    _

</llo_original>
